<compile_context>
chip_gen: v6e
topology: v6e:2x2x1
jax: 0.10.0
libtpu: 0.0.40
codegen_flags: <defaults>
</compile_context>

<pallas_src>
import functools

import numpy as np

import jax
import jax.numpy as jnp
from jax.experimental import pallas as pl
from jax.experimental.pallas import tpu as pltpu

# ------------------------- architecture constants ---------------------------
_KH = 8                      # conv kernel height (width is 1)
_H0, _H1, _H2, _H3 = 200, 98, 47, 21          # H after input / conv1 / conv2 / conv3
_C1, _C2, _C3 = 64, 128, 256                  # channel widths
_WCOLS = 3                   # W stays 3 through the net (kernel/stride/pad = 1/1/0 on W)
_NCLS = 6


def _build_h_idx():
    """Row gather for layer-1 im2col, class-major output-row order (i mod 4)."""
    i_order = np.concatenate([np.arange(r, _H1, 4) for r in range(4)])   # 25,25,24,24 rows
    return (2 * i_order[:, None] + np.arange(_KH)[None, :]).astype(np.int32)   # (98, 8)


_H_IDX = _build_h_idx()

# o1 rows (per sequence, class-major): [0,25)=i%4==0, [25,50)=1, [50,74)=2, [74,98)=3.
# lhs2 rows (per sequence): [0,24) = even output rows (i=2j), [24,47) = odd (i=2j+1).
# Each entry: (dst_row_lo, dst_row_hi, dst_lane_lo, src_row_lo, src_row_hi); src None => zeros
_L2_COPIES = (
    # even output rows, tap t = 0..7 -> lane block t*64
    (1, 24, 0, 74, 97), (0, 1, 0, None, None),
    (0, 24, 64, 0, 24),
    (0, 24, 128, 25, 49),
    (0, 24, 192, 50, 74),
    (0, 24, 256, 74, 98),
    (0, 24, 320, 1, 25),
    (0, 24, 384, 26, 50),
    (0, 23, 448, 51, 74), (23, 24, 448, None, None),
    # odd output rows
    (24, 47, 0, 25, 48),
    (24, 47, 64, 50, 73),
    (24, 47, 128, 74, 97),
    (24, 47, 192, 1, 24),
    (24, 47, 256, 26, 49),
    (24, 47, 320, 51, 74),
    (24, 47, 384, 75, 98),
    (24, 47, 448, 2, 25),
)

# o2 rows (per sequence): [0,24) = even output rows, [24,47) = odd output rows.
# lhs3 rows (per sequence): natural order i = 0..20.  Lane block t*128 per tap.
_L3_COPIES = (
    (1, 21, 0, 24, 44), (0, 1, 0, None, None),
    (0, 21, 128, 0, 21),
    (0, 21, 256, 24, 45),
    (0, 21, 384, 1, 22),
    (0, 21, 512, 25, 46),
    (0, 21, 640, 2, 23),
    (0, 21, 768, 26, 47),
    (0, 21, 896, 3, 24),
)


# ------------------------------ Pallas kernel --------------------------------

def _cnn_fused_kernel(lhs1_ref, w1_ref, s1_ref, t1_ref,
                      w2_ref, s2_ref, t2_ref,
                      w3_ref, s3_ref, t3_ref,
                      cls_ref, gsel_ref, bias_ref,
                      out_ref,
                      o1_ref, lhs2_ref, o2_ref, lhs3_ref,
                      *, n_seq):
    """Fused conv1/2/3 (+BN+ReLU) + classifier.  All intermediates in VMEM."""
    f32 = jnp.float32

    # ---- layer 1: one (B*98, 8) @ (8, 64) matmul (taps in K, batch in M) ----
    a1 = jnp.dot(lhs1_ref[...], w1_ref[...], preferred_element_type=f32)
    o1_ref[...] = jnp.maximum(a1 * s1_ref[...] + t1_ref[...], 0.0)

    # ---- im2col for layer 2: contiguous copies only (class-major order) ----
    for seq in range(n_seq):
        r1, r2 = seq * _H1, seq * _H2
        for d0, d1, l0, src0, src1 in _L2_COPIES:
            if src0 is None:
                lhs2_ref[r2 + d0:r2 + d1, l0:l0 + _C1] = jnp.zeros((d1 - d0, _C1), f32)
            else:
                lhs2_ref[r2 + d0:r2 + d1, l0:l0 + _C1] = o1_ref[r1 + src0:r1 + src1, :]

    # ---- layer 2: (B*47, 512) @ (512, 128), bf16 operands, f32 accumulate ---
    a2 = jnp.dot(lhs2_ref[...].astype(jnp.bfloat16), w2_ref[...],
                 preferred_element_type=f32)
    o2_ref[...] = jnp.maximum(a2 * s2_ref[...] + t2_ref[...], 0.0)

    # ---- im2col for layer 3 -------------------------------------------------
    for seq in range(n_seq):
        r2, r3 = seq * _H2, seq * _H3
        for d0, d1, l0, src0, src1 in _L3_COPIES:
            if src0 is None:
                lhs3_ref[r3 + d0:r3 + d1, l0:l0 + _C2] = jnp.zeros((d1 - d0, _C2), f32)
            else:
                lhs3_ref[r3 + d0:r3 + d1, l0:l0 + _C2] = o2_ref[r2 + src0:r2 + src1, :]

    # ---- layer 3: (B*21, 1024) @ (1024, 256) --------------------------------
    a3 = jnp.dot(lhs3_ref[...].astype(jnp.bfloat16), w3_ref[...],
                 preferred_element_type=f32)
    x3 = jnp.maximum(a3 * s3_ref[...] + t3_ref[...], 0.0)      # (B*21, 256) f32

    # ---- classifier: torch flatten order baked into the lane-dense cls map --
    # logits[n, j] = sum_p sum_c gsel[n, p] * x3[p, c] * cls_map[j, p, c] + b[j]
    gsel = gsel_ref[...]                                        # (N, B*21)
    for j in range(_NCLS):
        prod = x3 * cls_ref[j]                                  # (B*21, 256)
        grp = jnp.dot(gsel, prod, preferred_element_type=f32)   # (N, 256)
        out_ref[:, j:j + 1] = (jnp.sum(grp, axis=1, keepdims=True)
                               + bias_ref[:, j:j + 1])


# -------------------------- load-time weight prep ----------------------------

def prep_params(params, n_batch, eps=1e-5):
    """Fold BN into scale/shift, reorder conv weights for tap-folded matmuls,
    and permute the classifier weights to the kernel's internal layout.
    One-time (load-time) work; `n_batch` is baked into the classifier map."""
    def bn_fold(b, gamma, beta, mean, var):
        s = gamma / jnp.sqrt(var + eps)
        return (s.reshape(1, -1).astype(jnp.float32),
                ((b - mean) * s + beta).reshape(1, -1).astype(jnp.float32))

    kp = {}

    w1, b1, g1, be1, m1, v1 = params["layer1"]
    kp["w1"] = jnp.transpose(w1[:, :, :, 0], (2, 1, 0)).reshape(_KH, _C1).astype(jnp.float32)
    kp["s1"], kp["t1"] = bn_fold(b1, g1, be1, m1, v1)

    w2, b2, g2, be2, m2, v2 = params["layer2"]
    kp["w2"] = jnp.transpose(w2[:, :, :, 0], (2, 1, 0)).reshape(_KH * _C1, _C2).astype(jnp.bfloat16)
    kp["s2"], kp["t2"] = bn_fold(b2, g2, be2, m2, v2)

    w3, b3, g3, be3, m3, v3 = params["layer3"]
    kp["w3"] = jnp.transpose(w3[:, :, :, 0], (2, 1, 0)).reshape(_KH * _C2, _C3).astype(jnp.bfloat16)
    kp["s3"], kp["t3"] = bn_fold(b3, g3, be3, m3, v3)

    wc, bc = params["classifier"]                      # torch: (6, 16128), (6,)
    # torch flatten index of the (N, 256, 21, 3) map is c*63 + h*3 + w.
    m = jnp.transpose(wc.reshape(_NCLS, _C3, _H3, _WCOLS), (0, 3, 2, 1))   # (6, 3, 21, 256)
    m = jnp.tile(m[:, None], (1, n_batch, 1, 1, 1))                        # (6, N, 3, 21, 256)
    kp["cls_map"] = m.reshape(_NCLS, n_batch * _WCOLS * _H3, _C3).astype(jnp.float32)
    kp["gsel"] = jnp.repeat(jnp.eye(n_batch, dtype=jnp.float32),
                            _WCOLS * _H3, axis=1)                          # (N, N*63)
    kp["cls_bias"] = bc.reshape(1, _NCLS).astype(jnp.float32)
    return kp


# ------------------------------- full forward --------------------------------

def cnn_forward(x_nchw, kp):
    """x_nchw: (N, 1, 200, 3) float32 -> logits (N, 6)."""
    N, C, H, W = x_nchw.shape
    assert C == 1 and H == _H0 and W == _WCOLS
    B = N * W

    # NCHW -> one 1-D sequence per (n, w) column, then the tiny layer-1 im2col
    # (class-major output-row order) done on the raw input in XLA.
    xseq = jnp.transpose(x_nchw[:, 0, :, :], (0, 2, 1)).reshape(B, H)      # (B, 200)
    xpad = jnp.pad(xseq, ((0, 0), (1, 1)))                                  # (B, 202)
    lhs1 = xpad[:, _H_IDX].reshape(B * _H1, _KH)                            # (B*98, 8)

    kernel = functools.partial(_cnn_fused_kernel, n_seq=B)
    return pl.pallas_call(
        kernel,
        out_shape=jax.ShapeDtypeStruct((N, _NCLS), jnp.float32),
        scratch_shapes=[
            pltpu.VMEM((B * _H1, _C1), jnp.float32),          # o1
            pltpu.VMEM((B * _H2, _KH * _C1), jnp.float32),    # layer-2 im2col
            pltpu.VMEM((B * _H2, _C2), jnp.float32),          # o2
            pltpu.VMEM((B * _H3, _KH * _C2), jnp.float32),    # layer-3 im2col
        ],
    )(lhs1, kp["w1"], kp["s1"], kp["t1"],
      kp["w2"], kp["s2"], kp["t2"],
      kp["w3"], kp["s3"], kp["t3"],
      kp["cls_map"], kp["gsel"], kp["cls_bias"])


# ------------------------- pure-JAX reference (check) ------------------------

def _reference_forward(x, params, eps=1e-5):
    def conv_bn_relu(y, w, b, g, be, m, v):
        y = jax.lax.conv_general_dilated(
            y, w, window_strides=(2, 1), padding=((1, 1), (0, 0)),
            dimension_numbers=("NCHW", "OIHW", "NCHW"))
        y = y + b.reshape(1, -1, 1, 1)
        y = ((y - m.reshape(1, -1, 1, 1))
             / jnp.sqrt(v.reshape(1, -1, 1, 1) + eps)) * g.reshape(1, -1, 1, 1) \
            + be.reshape(1, -1, 1, 1)
        return jnp.maximum(y, 0.0)

    y = conv_bn_relu(x, *params["layer1"])
    y = conv_bn_relu(y, *params["layer2"])
    y = conv_bn_relu(y, *params["layer3"])
    wc, bc = params["classifier"]
    return y.reshape(y.shape[0], -1) @ wc.T + bc


# ---------------------------------- params ------------------------------------

def make_params(key):
    def conv_layer(k, cout, cin):
        kw, kb = jax.random.split(k)
        w = jax.random.normal(kw, (cout, cin, _KH, 1), jnp.float32) * 0.05
        b = jax.random.normal(kb, (cout,), jnp.float32) * 0.05
        # BatchNorm2d defaults (eval mode): gamma=1, beta=0, mean=0, var=1
        return (w, b, jnp.ones((cout,), jnp.float32), jnp.zeros((cout,), jnp.float32),
                jnp.zeros((cout,), jnp.float32), jnp.ones((cout,), jnp.float32))

    k1, k2, k3, k4, k5 = jax.random.split(key, 5)
    wc = jax.random.normal(k4, (_NCLS, _C3 * _H3 * _WCOLS), jnp.float32) * 0.01
    bc = jax.random.normal(k5, (_NCLS,), jnp.float32) * 0.01
    return {
        "layer1": conv_layer(k1, _C1, 1),
        "layer2": conv_layer(k2, _C2, _C1),
        "layer3": conv_layer(k3, _C3, _C2),
        "classifier": (wc, bc),
    }


if __name__ == "__main__":
    key = jax.random.PRNGKey(0)
    kx, kparams_key = jax.random.split(key)
    # Shapes implied by the module: classifier in_features 16128 = 256*21*3
    # -> input (N, 1, 200, 3).  Small batch N=2.
    x = jax.random.normal(kx, (2, 1, _H0, _WCOLS), jnp.float32)
    params = make_params(kparams_key)

    kp = prep_params(params, n_batch=x.shape[0])          # one-time load-time prep
    logits = jax.jit(cnn_forward)(x, kp)
    logits = jax.block_until_ready(logits)

    assert logits.shape == (2, _NCLS) and logits.dtype == jnp.float32
    assert bool(jnp.all(jnp.isfinite(logits)))

    # loose check vs a pure-JAX f32 reference (kernel uses bf16 MXU operands)
    ref = jax.block_until_ready(jax.jit(_reference_forward)(x, params))
    err = float(jnp.max(jnp.abs(logits - ref)))
    scale = float(jnp.max(jnp.abs(ref))) + 1e-6
    assert err <= 0.15 * scale, f"mismatch vs reference: {err} (scale {scale})"

    print("KERNEL_OK")
</pallas_src>

<mosaic_0001>
module attributes {stable_mosaic.version = 11 : i64} {
  func.func @_cnn_fused_kernel(%arg0: memref<588x8xf32, #tpu.memory_space<vmem>>, %arg1: memref<8x64xf32, #tpu.memory_space<vmem>>, %arg2: memref<1x64xf32, #tpu.memory_space<vmem>>, %arg3: memref<1x64xf32, #tpu.memory_space<vmem>>, %arg4: memref<512x128xbf16, #tpu.memory_space<vmem>>, %arg5: memref<1x128xf32, #tpu.memory_space<vmem>>, %arg6: memref<1x128xf32, #tpu.memory_space<vmem>>, %arg7: memref<1024x256xbf16, #tpu.memory_space<vmem>>, %arg8: memref<1x256xf32, #tpu.memory_space<vmem>>, %arg9: memref<1x256xf32, #tpu.memory_space<vmem>>, %arg10: memref<6x126x256xf32, #tpu.memory_space<vmem>>, %arg11: memref<2x126xf32, #tpu.memory_space<vmem>>, %arg12: memref<1x6xf32, #tpu.memory_space<vmem>>, %arg13: memref<2x6xf32, #tpu.memory_space<vmem>>, %arg14: memref<588x64xf32, #tpu.memory_space<vmem>>, %arg15: memref<282x512xf32, #tpu.memory_space<vmem>>, %arg16: memref<282x128xf32, #tpu.memory_space<vmem>>, %arg17: memref<126x1024xf32, #tpu.memory_space<vmem>>) attributes {dimension_semantics = [], scalar_prefetch = 0 : i64, scratch_operands = 4 : i64, tpu.core_type = #tpu.core_type<tc>} {
    %c0 = arith.constant 0 : index
    %c0_0 = arith.constant 0 : index
    %0 = vector.load %arg0[%c0, %c0_0] : memref<588x8xf32, #tpu.memory_space<vmem>>, vector<588x8xf32>
    %c0_1 = arith.constant 0 : index
    %c0_2 = arith.constant 0 : index
    %1 = vector.load %arg1[%c0_1, %c0_2] : memref<8x64xf32, #tpu.memory_space<vmem>>, vector<8x64xf32>
    %cst = arith.constant dense<0.000000e+00> : vector<588x64xf32>
    %2 = tpu.matmul %0, %1, %cst {dimension_numbers = #tpu.dot_dimension_numbers<[1], [0], [0], [1], [0, 0, 1, 1], [], []>} : vector<588x8xf32>, vector<8x64xf32>, vector<588x64xf32> -> vector<588x64xf32>
    %c0_3 = arith.constant 0 : index
    %c0_4 = arith.constant 0 : index
    %3 = vector.load %arg2[%c0_3, %c0_4] : memref<1x64xf32, #tpu.memory_space<vmem>>, vector<1x64xf32>
    %4 = vector.broadcast %3 : vector<1x64xf32> to vector<588x64xf32>
    %5 = arith.mulf %2, %4 : vector<588x64xf32>
    %c0_5 = arith.constant 0 : index
    %c0_6 = arith.constant 0 : index
    %6 = vector.load %arg3[%c0_5, %c0_6] : memref<1x64xf32, #tpu.memory_space<vmem>>, vector<1x64xf32>
    %7 = vector.broadcast %6 : vector<1x64xf32> to vector<588x64xf32>
    %8 = arith.addf %5, %7 : vector<588x64xf32>
    %cst_7 = arith.constant 0.000000e+00 : f32
    %9 = vector.broadcast %cst_7 : f32 to vector<588x64xf32>
    %10 = arith.maximumf %8, %9 : vector<588x64xf32>
    %c0_8 = arith.constant 0 : index
    %c0_9 = arith.constant 0 : index
    %11 = vector.load %arg14[%c0_8, %c0_9] : memref<588x64xf32, #tpu.memory_space<vmem>>, vector<588x64xf32>
    tpu.vector_store %arg14[%c0_8, %c0_9], %10 {strides = array<i32>} : memref<588x64xf32, #tpu.memory_space<vmem>>, vector<588x64xf32>,
    %c74 = arith.constant 74 : index
    %c0_10 = arith.constant 0 : index
    %12 = vector.load %arg14[%c74, %c0_10] : memref<588x64xf32, #tpu.memory_space<vmem>>, vector<23x64xf32>
    %c1 = arith.constant 1 : index
    %c0_11 = arith.constant 0 : index
    %13 = vector.load %arg15[%c1, %c0_11] : memref<282x512xf32, #tpu.memory_space<vmem>>, vector<23x64xf32>
    tpu.vector_store %arg15[%c1, %c0_11], %12 {strides = array<i32>} : memref<282x512xf32, #tpu.memory_space<vmem>>, vector<23x64xf32>,
    %cst_12 = arith.constant 0.000000e+00 : f32
    %14 = vector.broadcast %cst_12 : f32 to vector<1x64xf32>
    %c0_13 = arith.constant 0 : index
    %c0_14 = arith.constant 0 : index
    %15 = vector.load %arg15[%c0_13, %c0_14] : memref<282x512xf32, #tpu.memory_space<vmem>>, vector<1x64xf32>
    tpu.vector_store %arg15[%c0_13, %c0_14], %14 {strides = array<i32>} : memref<282x512xf32, #tpu.memory_space<vmem>>, vector<1x64xf32>,
    %c0_15 = arith.constant 0 : index
    %c0_16 = arith.constant 0 : index
    %16 = vector.load %arg14[%c0_15, %c0_16] : memref<588x64xf32, #tpu.memory_space<vmem>>, vector<24x64xf32>
    %c0_17 = arith.constant 0 : index
    %c64 = arith.constant 64 : index
    %17 = vector.load %arg15[%c0_17, %c64] : memref<282x512xf32, #tpu.memory_space<vmem>>, vector<24x64xf32>
    tpu.vector_store %arg15[%c0_17, %c64], %16 {strides = array<i32>} : memref<282x512xf32, #tpu.memory_space<vmem>>, vector<24x64xf32>,
    %c25 = arith.constant 25 : index
    %c0_18 = arith.constant 0 : index
    %18 = vector.load %arg14[%c25, %c0_18] : memref<588x64xf32, #tpu.memory_space<vmem>>, vector<24x64xf32>
    %c0_19 = arith.constant 0 : index
    %c128 = arith.constant 128 : index
    %19 = vector.load %arg15[%c0_19, %c128] : memref<282x512xf32, #tpu.memory_space<vmem>>, vector<24x64xf32>
    tpu.vector_store %arg15[%c0_19, %c128], %18 {strides = array<i32>} : memref<282x512xf32, #tpu.memory_space<vmem>>, vector<24x64xf32>,
    %c50 = arith.constant 50 : index
    %c0_20 = arith.constant 0 : index
    %20 = vector.load %arg14[%c50, %c0_20] : memref<588x64xf32, #tpu.memory_space<vmem>>, vector<24x64xf32>
    %c0_21 = arith.constant 0 : index
    %c192 = arith.constant 192 : index
    %21 = vector.load %arg15[%c0_21, %c192] : memref<282x512xf32, #tpu.memory_space<vmem>>, vector<24x64xf32>
    tpu.vector_store %arg15[%c0_21, %c192], %20 {strides = array<i32>} : memref<282x512xf32, #tpu.memory_space<vmem>>, vector<24x64xf32>,
    %c74_22 = arith.constant 74 : index
    %c0_23 = arith.constant 0 : index
    %22 = vector.load %arg14[%c74_22, %c0_23] : memref<588x64xf32, #tpu.memory_space<vmem>>, vector<24x64xf32>
    %c0_24 = arith.constant 0 : index
    %c256 = arith.constant 256 : index
    %23 = vector.load %arg15[%c0_24, %c256] : memref<282x512xf32, #tpu.memory_space<vmem>>, vector<24x64xf32>
    tpu.vector_store %arg15[%c0_24, %c256], %22 {strides = array<i32>} : memref<282x512xf32, #tpu.memory_space<vmem>>, vector<24x64xf32>,
    %c1_25 = arith.constant 1 : index
    %c0_26 = arith.constant 0 : index
    %24 = vector.load %arg14[%c1_25, %c0_26] : memref<588x64xf32, #tpu.memory_space<vmem>>, vector<24x64xf32>
    %c0_27 = arith.constant 0 : index
    %c320 = arith.constant 320 : index
    %25 = vector.load %arg15[%c0_27, %c320] : memref<282x512xf32, #tpu.memory_space<vmem>>, vector<24x64xf32>
    tpu.vector_store %arg15[%c0_27, %c320], %24 {strides = array<i32>} : memref<282x512xf32, #tpu.memory_space<vmem>>, vector<24x64xf32>,
    %c26 = arith.constant 26 : index
    %c0_28 = arith.constant 0 : index
    %26 = vector.load %arg14[%c26, %c0_28] : memref<588x64xf32, #tpu.memory_space<vmem>>, vector<24x64xf32>
    %c0_29 = arith.constant 0 : index
    %c384 = arith.constant 384 : index
    %27 = vector.load %arg15[%c0_29, %c384] : memref<282x512xf32, #tpu.memory_space<vmem>>, vector<24x64xf32>
    tpu.vector_store %arg15[%c0_29, %c384], %26 {strides = array<i32>} : memref<282x512xf32, #tpu.memory_space<vmem>>, vector<24x64xf32>,
    %c51 = arith.constant 51 : index
    %c0_30 = arith.constant 0 : index
    %28 = vector.load %arg14[%c51, %c0_30] : memref<588x64xf32, #tpu.memory_space<vmem>>, vector<23x64xf32>
    %c0_31 = arith.constant 0 : index
    %c448 = arith.constant 448 : index
    %29 = vector.load %arg15[%c0_31, %c448] : memref<282x512xf32, #tpu.memory_space<vmem>>, vector<23x64xf32>
    tpu.vector_store %arg15[%c0_31, %c448], %28 {strides = array<i32>} : memref<282x512xf32, #tpu.memory_space<vmem>>, vector<23x64xf32>,
    %cst_32 = arith.constant 0.000000e+00 : f32
    %30 = vector.broadcast %cst_32 : f32 to vector<1x64xf32>
    %c23 = arith.constant 23 : index
    %c448_33 = arith.constant 448 : index
    %31 = vector.load %arg15[%c23, %c448_33] : memref<282x512xf32, #tpu.memory_space<vmem>>, vector<1x64xf32>
    tpu.vector_store %arg15[%c23, %c448_33], %30 {strides = array<i32>} : memref<282x512xf32, #tpu.memory_space<vmem>>, vector<1x64xf32>,
    %c25_34 = arith.constant 25 : index
    %c0_35 = arith.constant 0 : index
    %32 = vector.load %arg14[%c25_34, %c0_35] : memref<588x64xf32, #tpu.memory_space<vmem>>, vector<23x64xf32>
    %c24 = arith.constant 24 : index
    %c0_36 = arith.constant 0 : index
    %33 = vector.load %arg15[%c24, %c0_36] : memref<282x512xf32, #tpu.memory_space<vmem>>, vector<23x64xf32>
    tpu.vector_store %arg15[%c24, %c0_36], %32 {strides = array<i32>} : memref<282x512xf32, #tpu.memory_space<vmem>>, vector<23x64xf32>,
    %c50_37 = arith.constant 50 : index
    %c0_38 = arith.constant 0 : index
    %34 = vector.load %arg14[%c50_37, %c0_38] : memref<588x64xf32, #tpu.memory_space<vmem>>, vector<23x64xf32>
    %c24_39 = arith.constant 24 : index
    %c64_40 = arith.constant 64 : index
    %35 = vector.load %arg15[%c24_39, %c64_40] : memref<282x512xf32, #tpu.memory_space<vmem>>, vector<23x64xf32>
    tpu.vector_store %arg15[%c24_39, %c64_40], %34 {strides = array<i32>} : memref<282x512xf32, #tpu.memory_space<vmem>>, vector<23x64xf32>,
    %c74_41 = arith.constant 74 : index
    %c0_42 = arith.constant 0 : index
    %36 = vector.load %arg14[%c74_41, %c0_42] : memref<588x64xf32, #tpu.memory_space<vmem>>, vector<23x64xf32>
    %c24_43 = arith.constant 24 : index
    %c128_44 = arith.constant 128 : index
    %37 = vector.load %arg15[%c24_43, %c128_44] : memref<282x512xf32, #tpu.memory_space<vmem>>, vector<23x64xf32>
    tpu.vector_store %arg15[%c24_43, %c128_44], %36 {strides = array<i32>} : memref<282x512xf32, #tpu.memory_space<vmem>>, vector<23x64xf32>,
    %c1_45 = arith.constant 1 : index
    %c0_46 = arith.constant 0 : index
    %38 = vector.load %arg14[%c1_45, %c0_46] : memref<588x64xf32, #tpu.memory_space<vmem>>, vector<23x64xf32>
    %c24_47 = arith.constant 24 : index
    %c192_48 = arith.constant 192 : index
    %39 = vector.load %arg15[%c24_47, %c192_48] : memref<282x512xf32, #tpu.memory_space<vmem>>, vector<23x64xf32>
    tpu.vector_store %arg15[%c24_47, %c192_48], %38 {strides = array<i32>} : memref<282x512xf32, #tpu.memory_space<vmem>>, vector<23x64xf32>,
    %c26_49 = arith.constant 26 : index
    %c0_50 = arith.constant 0 : index
    %40 = vector.load %arg14[%c26_49, %c0_50] : memref<588x64xf32, #tpu.memory_space<vmem>>, vector<23x64xf32>
    %c24_51 = arith.constant 24 : index
    %c256_52 = arith.constant 256 : index
    %41 = vector.load %arg15[%c24_51, %c256_52] : memref<282x512xf32, #tpu.memory_space<vmem>>, vector<23x64xf32>
    tpu.vector_store %arg15[%c24_51, %c256_52], %40 {strides = array<i32>} : memref<282x512xf32, #tpu.memory_space<vmem>>, vector<23x64xf32>,
    %c51_53 = arith.constant 51 : index
    %c0_54 = arith.constant 0 : index
    %42 = vector.load %arg14[%c51_53, %c0_54] : memref<588x64xf32, #tpu.memory_space<vmem>>, vector<23x64xf32>
    %c24_55 = arith.constant 24 : index
    %c320_56 = arith.constant 320 : index
    %43 = vector.load %arg15[%c24_55, %c320_56] : memref<282x512xf32, #tpu.memory_space<vmem>>, vector<23x64xf32>
    tpu.vector_store %arg15[%c24_55, %c320_56], %42 {strides = array<i32>} : memref<282x512xf32, #tpu.memory_space<vmem>>, vector<23x64xf32>,
    %c75 = arith.constant 75 : index
    %c0_57 = arith.constant 0 : index
    %44 = vector.load %arg14[%c75, %c0_57] : memref<588x64xf32, #tpu.memory_space<vmem>>, vector<23x64xf32>
    %c24_58 = arith.constant 24 : index
    %c384_59 = arith.constant 384 : index
    %45 = vector.load %arg15[%c24_58, %c384_59] : memref<282x512xf32, #tpu.memory_space<vmem>>, vector<23x64xf32>
    tpu.vector_store %arg15[%c24_58, %c384_59], %44 {strides = array<i32>} : memref<282x512xf32, #tpu.memory_space<vmem>>, vector<23x64xf32>,
    %c2 = arith.constant 2 : index
    %c0_60 = arith.constant 0 : index
    %46 = vector.load %arg14[%c2, %c0_60] : memref<588x64xf32, #tpu.memory_space<vmem>>, vector<23x64xf32>
    %c24_61 = arith.constant 24 : index
    %c448_62 = arith.constant 448 : index
    %47 = vector.load %arg15[%c24_61, %c448_62] : memref<282x512xf32, #tpu.memory_space<vmem>>, vector<23x64xf32>
    tpu.vector_store %arg15[%c24_61, %c448_62], %46 {strides = array<i32>} : memref<282x512xf32, #tpu.memory_space<vmem>>, vector<23x64xf32>,
    %c172 = arith.constant 172 : index
    %c0_63 = arith.constant 0 : index
    %48 = vector.load %arg14[%c172, %c0_63] : memref<588x64xf32, #tpu.memory_space<vmem>>, vector<23x64xf32>
    %c48 = arith.constant 48 : index
    %c0_64 = arith.constant 0 : index
    %49 = vector.load %arg15[%c48, %c0_64] : memref<282x512xf32, #tpu.memory_space<vmem>>, vector<23x64xf32>
    tpu.vector_store %arg15[%c48, %c0_64], %48 {strides = array<i32>} : memref<282x512xf32, #tpu.memory_space<vmem>>, vector<23x64xf32>,
    %cst_65 = arith.constant 0.000000e+00 : f32
    %50 = vector.broadcast %cst_65 : f32 to vector<1x64xf32>
    %c47 = arith.constant 47 : index
    %c0_66 = arith.constant 0 : index
    %51 = vector.load %arg15[%c47, %c0_66] : memref<282x512xf32, #tpu.memory_space<vmem>>, vector<1x64xf32>
    tpu.vector_store %arg15[%c47, %c0_66], %50 {strides = array<i32>} : memref<282x512xf32, #tpu.memory_space<vmem>>, vector<1x64xf32>,
    %c98 = arith.constant 98 : index
    %c0_67 = arith.constant 0 : index
    %52 = vector.load %arg14[%c98, %c0_67] : memref<588x64xf32, #tpu.memory_space<vmem>>, vector<24x64xf32>
    %c47_68 = arith.constant 47 : index
    %c64_69 = arith.constant 64 : index
    %53 = vector.load %arg15[%c47_68, %c64_69] : memref<282x512xf32, #tpu.memory_space<vmem>>, vector<24x64xf32>
    tpu.vector_store %arg15[%c47_68, %c64_69], %52 {strides = array<i32>} : memref<282x512xf32, #tpu.memory_space<vmem>>, vector<24x64xf32>,
    %c123 = arith.constant 123 : index
    %c0_70 = arith.constant 0 : index
    %54 = vector.load %arg14[%c123, %c0_70] : memref<588x64xf32, #tpu.memory_space<vmem>>, vector<24x64xf32>
    %c47_71 = arith.constant 47 : index
    %c128_72 = arith.constant 128 : index
    %55 = vector.load %arg15[%c47_71, %c128_72] : memref<282x512xf32, #tpu.memory_space<vmem>>, vector<24x64xf32>
    tpu.vector_store %arg15[%c47_71, %c128_72], %54 {strides = array<i32>} : memref<282x512xf32, #tpu.memory_space<vmem>>, vector<24x64xf32>,
    %c148 = arith.constant 148 : index
    %c0_73 = arith.constant 0 : index
    %56 = vector.load %arg14[%c148, %c0_73] : memref<588x64xf32, #tpu.memory_space<vmem>>, vector<24x64xf32>
    %c47_74 = arith.constant 47 : index
    %c192_75 = arith.constant 192 : index
    %57 = vector.load %arg15[%c47_74, %c192_75] : memref<282x512xf32, #tpu.memory_space<vmem>>, vector<24x64xf32>
    tpu.vector_store %arg15[%c47_74, %c192_75], %56 {strides = array<i32>} : memref<282x512xf32, #tpu.memory_space<vmem>>, vector<24x64xf32>,
    %c172_76 = arith.constant 172 : index
    %c0_77 = arith.constant 0 : index
    %58 = vector.load %arg14[%c172_76, %c0_77] : memref<588x64xf32, #tpu.memory_space<vmem>>, vector<24x64xf32>
    %c47_78 = arith.constant 47 : index
    %c256_79 = arith.constant 256 : index
    %59 = vector.load %arg15[%c47_78, %c256_79] : memref<282x512xf32, #tpu.memory_space<vmem>>, vector<24x64xf32>
    tpu.vector_store %arg15[%c47_78, %c256_79], %58 {strides = array<i32>} : memref<282x512xf32, #tpu.memory_space<vmem>>, vector<24x64xf32>,
    %c99 = arith.constant 99 : index
    %c0_80 = arith.constant 0 : index
    %60 = vector.load %arg14[%c99, %c0_80] : memref<588x64xf32, #tpu.memory_space<vmem>>, vector<24x64xf32>
    %c47_81 = arith.constant 47 : index
    %c320_82 = arith.constant 320 : index
    %61 = vector.load %arg15[%c47_81, %c320_82] : memref<282x512xf32, #tpu.memory_space<vmem>>, vector<24x64xf32>
    tpu.vector_store %arg15[%c47_81, %c320_82], %60 {strides = array<i32>} : memref<282x512xf32, #tpu.memory_space<vmem>>, vector<24x64xf32>,
    %c124 = arith.constant 124 : index
    %c0_83 = arith.constant 0 : index
    %62 = vector.load %arg14[%c124, %c0_83] : memref<588x64xf32, #tpu.memory_space<vmem>>, vector<24x64xf32>
    %c47_84 = arith.constant 47 : index
    %c384_85 = arith.constant 384 : index
    %63 = vector.load %arg15[%c47_84, %c384_85] : memref<282x512xf32, #tpu.memory_space<vmem>>, vector<24x64xf32>
    tpu.vector_store %arg15[%c47_84, %c384_85], %62 {strides = array<i32>} : memref<282x512xf32, #tpu.memory_space<vmem>>, vector<24x64xf32>,
    %c149 = arith.constant 149 : index
    %c0_86 = arith.constant 0 : index
    %64 = vector.load %arg14[%c149, %c0_86] : memref<588x64xf32, #tpu.memory_space<vmem>>, vector<23x64xf32>
    %c47_87 = arith.constant 47 : index
    %c448_88 = arith.constant 448 : index
    %65 = vector.load %arg15[%c47_87, %c448_88] : memref<282x512xf32, #tpu.memory_space<vmem>>, vector<23x64xf32>
    tpu.vector_store %arg15[%c47_87, %c448_88], %64 {strides = array<i32>} : memref<282x512xf32, #tpu.memory_space<vmem>>, vector<23x64xf32>,
    %cst_89 = arith.constant 0.000000e+00 : f32
    %66 = vector.broadcast %cst_89 : f32 to vector<1x64xf32>
    %c70 = arith.constant 70 : index
    %c448_90 = arith.constant 448 : index
    %67 = vector.load %arg15[%c70, %c448_90] : memref<282x512xf32, #tpu.memory_space<vmem>>, vector<1x64xf32>
    tpu.vector_store %arg15[%c70, %c448_90], %66 {strides = array<i32>} : memref<282x512xf32, #tpu.memory_space<vmem>>, vector<1x64xf32>,
    %c123_91 = arith.constant 123 : index
    %c0_92 = arith.constant 0 : index
    %68 = vector.load %arg14[%c123_91, %c0_92] : memref<588x64xf32, #tpu.memory_space<vmem>>, vector<23x64xf32>
    %c71 = arith.constant 71 : index
    %c0_93 = arith.constant 0 : index
    %69 = vector.load %arg15[%c71, %c0_93] : memref<282x512xf32, #tpu.memory_space<vmem>>, vector<23x64xf32>
    tpu.vector_store %arg15[%c71, %c0_93], %68 {strides = array<i32>} : memref<282x512xf32, #tpu.memory_space<vmem>>, vector<23x64xf32>,
    %c148_94 = arith.constant 148 : index
    %c0_95 = arith.constant 0 : index
    %70 = vector.load %arg14[%c148_94, %c0_95] : memref<588x64xf32, #tpu.memory_space<vmem>>, vector<23x64xf32>
    %c71_96 = arith.constant 71 : index
    %c64_97 = arith.constant 64 : index
    %71 = vector.load %arg15[%c71_96, %c64_97] : memref<282x512xf32, #tpu.memory_space<vmem>>, vector<23x64xf32>
    tpu.vector_store %arg15[%c71_96, %c64_97], %70 {strides = array<i32>} : memref<282x512xf32, #tpu.memory_space<vmem>>, vector<23x64xf32>,
    %c172_98 = arith.constant 172 : index
    %c0_99 = arith.constant 0 : index
    %72 = vector.load %arg14[%c172_98, %c0_99] : memref<588x64xf32, #tpu.memory_space<vmem>>, vector<23x64xf32>
    %c71_100 = arith.constant 71 : index
    %c128_101 = arith.constant 128 : index
    %73 = vector.load %arg15[%c71_100, %c128_101] : memref<282x512xf32, #tpu.memory_space<vmem>>, vector<23x64xf32>
    tpu.vector_store %arg15[%c71_100, %c128_101], %72 {strides = array<i32>} : memref<282x512xf32, #tpu.memory_space<vmem>>, vector<23x64xf32>,
    %c99_102 = arith.constant 99 : index
    %c0_103 = arith.constant 0 : index
    %74 = vector.load %arg14[%c99_102, %c0_103] : memref<588x64xf32, #tpu.memory_space<vmem>>, vector<23x64xf32>
    %c71_104 = arith.constant 71 : index
    %c192_105 = arith.constant 192 : index
    %75 = vector.load %arg15[%c71_104, %c192_105] : memref<282x512xf32, #tpu.memory_space<vmem>>, vector<23x64xf32>
    tpu.vector_store %arg15[%c71_104, %c192_105], %74 {strides = array<i32>} : memref<282x512xf32, #tpu.memory_space<vmem>>, vector<23x64xf32>,
    %c124_106 = arith.constant 124 : index
    %c0_107 = arith.constant 0 : index
    %76 = vector.load %arg14[%c124_106, %c0_107] : memref<588x64xf32, #tpu.memory_space<vmem>>, vector<23x64xf32>
    %c71_108 = arith.constant 71 : index
    %c256_109 = arith.constant 256 : index
    %77 = vector.load %arg15[%c71_108, %c256_109] : memref<282x512xf32, #tpu.memory_space<vmem>>, vector<23x64xf32>
    tpu.vector_store %arg15[%c71_108, %c256_109], %76 {strides = array<i32>} : memref<282x512xf32, #tpu.memory_space<vmem>>, vector<23x64xf32>,
    %c149_110 = arith.constant 149 : index
    %c0_111 = arith.constant 0 : index
    %78 = vector.load %arg14[%c149_110, %c0_111] : memref<588x64xf32, #tpu.memory_space<vmem>>, vector<23x64xf32>
    %c71_112 = arith.constant 71 : index
    %c320_113 = arith.constant 320 : index
    %79 = vector.load %arg15[%c71_112, %c320_113] : memref<282x512xf32, #tpu.memory_space<vmem>>, vector<23x64xf32>
    tpu.vector_store %arg15[%c71_112, %c320_113], %78 {strides = array<i32>} : memref<282x512xf32, #tpu.memory_space<vmem>>, vector<23x64xf32>,
    %c173 = arith.constant 173 : index
    %c0_114 = arith.constant 0 : index
    %80 = vector.load %arg14[%c173, %c0_114] : memref<588x64xf32, #tpu.memory_space<vmem>>, vector<23x64xf32>
    %c71_115 = arith.constant 71 : index
    %c384_116 = arith.constant 384 : index
    %81 = vector.load %arg15[%c71_115, %c384_116] : memref<282x512xf32, #tpu.memory_space<vmem>>, vector<23x64xf32>
    tpu.vector_store %arg15[%c71_115, %c384_116], %80 {strides = array<i32>} : memref<282x512xf32, #tpu.memory_space<vmem>>, vector<23x64xf32>,
    %c100 = arith.constant 100 : index
    %c0_117 = arith.constant 0 : index
    %82 = vector.load %arg14[%c100, %c0_117] : memref<588x64xf32, #tpu.memory_space<vmem>>, vector<23x64xf32>
    %c71_118 = arith.constant 71 : index
    %c448_119 = arith.constant 448 : index
    %83 = vector.load %arg15[%c71_118, %c448_119] : memref<282x512xf32, #tpu.memory_space<vmem>>, vector<23x64xf32>
    tpu.vector_store %arg15[%c71_118, %c448_119], %82 {strides = array<i32>} : memref<282x512xf32, #tpu.memory_space<vmem>>, vector<23x64xf32>,
    %c270 = arith.constant 270 : index
    %c0_120 = arith.constant 0 : index
    %84 = vector.load %arg14[%c270, %c0_120] : memref<588x64xf32, #tpu.memory_space<vmem>>, vector<23x64xf32>
    %c95 = arith.constant 95 : index
    %c0_121 = arith.constant 0 : index
    %85 = vector.load %arg15[%c95, %c0_121] : memref<282x512xf32, #tpu.memory_space<vmem>>, vector<23x64xf32>
    tpu.vector_store %arg15[%c95, %c0_121], %84 {strides = array<i32>} : memref<282x512xf32, #tpu.memory_space<vmem>>, vector<23x64xf32>,
    %cst_122 = arith.constant 0.000000e+00 : f32
    %86 = vector.broadcast %cst_122 : f32 to vector<1x64xf32>
    %c94 = arith.constant 94 : index
    %c0_123 = arith.constant 0 : index
    %87 = vector.load %arg15[%c94, %c0_123] : memref<282x512xf32, #tpu.memory_space<vmem>>, vector<1x64xf32>
    tpu.vector_store %arg15[%c94, %c0_123], %86 {strides = array<i32>} : memref<282x512xf32, #tpu.memory_space<vmem>>, vector<1x64xf32>,
    %c196 = arith.constant 196 : index
    %c0_124 = arith.constant 0 : index
    %88 = vector.load %arg14[%c196, %c0_124] : memref<588x64xf32, #tpu.memory_space<vmem>>, vector<24x64xf32>
    %c94_125 = arith.constant 94 : index
    %c64_126 = arith.constant 64 : index
    %89 = vector.load %arg15[%c94_125, %c64_126] : memref<282x512xf32, #tpu.memory_space<vmem>>, vector<24x64xf32>
    tpu.vector_store %arg15[%c94_125, %c64_126], %88 {strides = array<i32>} : memref<282x512xf32, #tpu.memory_space<vmem>>, vector<24x64xf32>,
    %c221 = arith.constant 221 : index
    %c0_127 = arith.constant 0 : index
    %90 = vector.load %arg14[%c221, %c0_127] : memref<588x64xf32, #tpu.memory_space<vmem>>, vector<24x64xf32>
    %c94_128 = arith.constant 94 : index
    %c128_129 = arith.constant 128 : index
    %91 = vector.load %arg15[%c94_128, %c128_129] : memref<282x512xf32, #tpu.memory_space<vmem>>, vector<24x64xf32>
    tpu.vector_store %arg15[%c94_128, %c128_129], %90 {strides = array<i32>} : memref<282x512xf32, #tpu.memory_space<vmem>>, vector<24x64xf32>,
    %c246 = arith.constant 246 : index
    %c0_130 = arith.constant 0 : index
    %92 = vector.load %arg14[%c246, %c0_130] : memref<588x64xf32, #tpu.memory_space<vmem>>, vector<24x64xf32>
    %c94_131 = arith.constant 94 : index
    %c192_132 = arith.constant 192 : index
    %93 = vector.load %arg15[%c94_131, %c192_132] : memref<282x512xf32, #tpu.memory_space<vmem>>, vector<24x64xf32>
    tpu.vector_store %arg15[%c94_131, %c192_132], %92 {strides = array<i32>} : memref<282x512xf32, #tpu.memory_space<vmem>>, vector<24x64xf32>,
    %c270_133 = arith.constant 270 : index
    %c0_134 = arith.constant 0 : index
    %94 = vector.load %arg14[%c270_133, %c0_134] : memref<588x64xf32, #tpu.memory_space<vmem>>, vector<24x64xf32>
    %c94_135 = arith.constant 94 : index
    %c256_136 = arith.constant 256 : index
    %95 = vector.load %arg15[%c94_135, %c256_136] : memref<282x512xf32, #tpu.memory_space<vmem>>, vector<24x64xf32>
    tpu.vector_store %arg15[%c94_135, %c256_136], %94 {strides = array<i32>} : memref<282x512xf32, #tpu.memory_space<vmem>>, vector<24x64xf32>,
    %c197 = arith.constant 197 : index
    %c0_137 = arith.constant 0 : index
    %96 = vector.load %arg14[%c197, %c0_137] : memref<588x64xf32, #tpu.memory_space<vmem>>, vector<24x64xf32>
    %c94_138 = arith.constant 94 : index
    %c320_139 = arith.constant 320 : index
    %97 = vector.load %arg15[%c94_138, %c320_139] : memref<282x512xf32, #tpu.memory_space<vmem>>, vector<24x64xf32>
    tpu.vector_store %arg15[%c94_138, %c320_139], %96 {strides = array<i32>} : memref<282x512xf32, #tpu.memory_space<vmem>>, vector<24x64xf32>,
    %c222 = arith.constant 222 : index
    %c0_140 = arith.constant 0 : index
    %98 = vector.load %arg14[%c222, %c0_140] : memref<588x64xf32, #tpu.memory_space<vmem>>, vector<24x64xf32>
    %c94_141 = arith.constant 94 : index
    %c384_142 = arith.constant 384 : index
    %99 = vector.load %arg15[%c94_141, %c384_142] : memref<282x512xf32, #tpu.memory_space<vmem>>, vector<24x64xf32>
    tpu.vector_store %arg15[%c94_141, %c384_142], %98 {strides = array<i32>} : memref<282x512xf32, #tpu.memory_space<vmem>>, vector<24x64xf32>,
    %c247 = arith.constant 247 : index
    %c0_143 = arith.constant 0 : index
    %100 = vector.load %arg14[%c247, %c0_143] : memref<588x64xf32, #tpu.memory_space<vmem>>, vector<23x64xf32>
    %c94_144 = arith.constant 94 : index
    %c448_145 = arith.constant 448 : index
    %101 = vector.load %arg15[%c94_144, %c448_145] : memref<282x512xf32, #tpu.memory_space<vmem>>, vector<23x64xf32>
    tpu.vector_store %arg15[%c94_144, %c448_145], %100 {strides = array<i32>} : memref<282x512xf32, #tpu.memory_space<vmem>>, vector<23x64xf32>,
    %cst_146 = arith.constant 0.000000e+00 : f32
    %102 = vector.broadcast %cst_146 : f32 to vector<1x64xf32>
    %c117 = arith.constant 117 : index
    %c448_147 = arith.constant 448 : index
    %103 = vector.load %arg15[%c117, %c448_147] : memref<282x512xf32, #tpu.memory_space<vmem>>, vector<1x64xf32>
    tpu.vector_store %arg15[%c117, %c448_147], %102 {strides = array<i32>} : memref<282x512xf32, #tpu.memory_space<vmem>>, vector<1x64xf32>,
    %c221_148 = arith.constant 221 : index
    %c0_149 = arith.constant 0 : index
    %104 = vector.load %arg14[%c221_148, %c0_149] : memref<588x64xf32, #tpu.memory_space<vmem>>, vector<23x64xf32>
    %c118 = arith.constant 118 : index
    %c0_150 = arith.constant 0 : index
    %105 = vector.load %arg15[%c118, %c0_150] : memref<282x512xf32, #tpu.memory_space<vmem>>, vector<23x64xf32>
    tpu.vector_store %arg15[%c118, %c0_150], %104 {strides = array<i32>} : memref<282x512xf32, #tpu.memory_space<vmem>>, vector<23x64xf32>,
    %c246_151 = arith.constant 246 : index
    %c0_152 = arith.constant 0 : index
    %106 = vector.load %arg14[%c246_151, %c0_152] : memref<588x64xf32, #tpu.memory_space<vmem>>, vector<23x64xf32>
    %c118_153 = arith.constant 118 : index
    %c64_154 = arith.constant 64 : index
    %107 = vector.load %arg15[%c118_153, %c64_154] : memref<282x512xf32, #tpu.memory_space<vmem>>, vector<23x64xf32>
    tpu.vector_store %arg15[%c118_153, %c64_154], %106 {strides = array<i32>} : memref<282x512xf32, #tpu.memory_space<vmem>>, vector<23x64xf32>,
    %c270_155 = arith.constant 270 : index
    %c0_156 = arith.constant 0 : index
    %108 = vector.load %arg14[%c270_155, %c0_156] : memref<588x64xf32, #tpu.memory_space<vmem>>, vector<23x64xf32>
    %c118_157 = arith.constant 118 : index
    %c128_158 = arith.constant 128 : index
    %109 = vector.load %arg15[%c118_157, %c128_158] : memref<282x512xf32, #tpu.memory_space<vmem>>, vector<23x64xf32>
    tpu.vector_store %arg15[%c118_157, %c128_158], %108 {strides = array<i32>} : memref<282x512xf32, #tpu.memory_space<vmem>>, vector<23x64xf32>,
    %c197_159 = arith.constant 197 : index
    %c0_160 = arith.constant 0 : index
    %110 = vector.load %arg14[%c197_159, %c0_160] : memref<588x64xf32, #tpu.memory_space<vmem>>, vector<23x64xf32>
    %c118_161 = arith.constant 118 : index
    %c192_162 = arith.constant 192 : index
    %111 = vector.load %arg15[%c118_161, %c192_162] : memref<282x512xf32, #tpu.memory_space<vmem>>, vector<23x64xf32>
    tpu.vector_store %arg15[%c118_161, %c192_162], %110 {strides = array<i32>} : memref<282x512xf32, #tpu.memory_space<vmem>>, vector<23x64xf32>,
    %c222_163 = arith.constant 222 : index
    %c0_164 = arith.constant 0 : index
    %112 = vector.load %arg14[%c222_163, %c0_164] : memref<588x64xf32, #tpu.memory_space<vmem>>, vector<23x64xf32>
    %c118_165 = arith.constant 118 : index
    %c256_166 = arith.constant 256 : index
    %113 = vector.load %arg15[%c118_165, %c256_166] : memref<282x512xf32, #tpu.memory_space<vmem>>, vector<23x64xf32>
    tpu.vector_store %arg15[%c118_165, %c256_166], %112 {strides = array<i32>} : memref<282x512xf32, #tpu.memory_space<vmem>>, vector<23x64xf32>,
    %c247_167 = arith.constant 247 : index
    %c0_168 = arith.constant 0 : index
    %114 = vector.load %arg14[%c247_167, %c0_168] : memref<588x64xf32, #tpu.memory_space<vmem>>, vector<23x64xf32>
    %c118_169 = arith.constant 118 : index
    %c320_170 = arith.constant 320 : index
    %115 = vector.load %arg15[%c118_169, %c320_170] : memref<282x512xf32, #tpu.memory_space<vmem>>, vector<23x64xf32>
    tpu.vector_store %arg15[%c118_169, %c320_170], %114 {strides = array<i32>} : memref<282x512xf32, #tpu.memory_space<vmem>>, vector<23x64xf32>,
    %c271 = arith.constant 271 : index
    %c0_171 = arith.constant 0 : index
    %116 = vector.load %arg14[%c271, %c0_171] : memref<588x64xf32, #tpu.memory_space<vmem>>, vector<23x64xf32>
    %c118_172 = arith.constant 118 : index
    %c384_173 = arith.constant 384 : index
    %117 = vector.load %arg15[%c118_172, %c384_173] : memref<282x512xf32, #tpu.memory_space<vmem>>, vector<23x64xf32>
    tpu.vector_store %arg15[%c118_172, %c384_173], %116 {strides = array<i32>} : memref<282x512xf32, #tpu.memory_space<vmem>>, vector<23x64xf32>,
    %c198 = arith.constant 198 : index
    %c0_174 = arith.constant 0 : index
    %118 = vector.load %arg14[%c198, %c0_174] : memref<588x64xf32, #tpu.memory_space<vmem>>, vector<23x64xf32>
    %c118_175 = arith.constant 118 : index
    %c448_176 = arith.constant 448 : index
    %119 = vector.load %arg15[%c118_175, %c448_176] : memref<282x512xf32, #tpu.memory_space<vmem>>, vector<23x64xf32>
    tpu.vector_store %arg15[%c118_175, %c448_176], %118 {strides = array<i32>} : memref<282x512xf32, #tpu.memory_space<vmem>>, vector<23x64xf32>,
    %c368 = arith.constant 368 : index
    %c0_177 = arith.constant 0 : index
    %120 = vector.load %arg14[%c368, %c0_177] : memref<588x64xf32, #tpu.memory_space<vmem>>, vector<23x64xf32>
    %c142 = arith.constant 142 : index
    %c0_178 = arith.constant 0 : index
    %121 = vector.load %arg15[%c142, %c0_178] : memref<282x512xf32, #tpu.memory_space<vmem>>, vector<23x64xf32>
    tpu.vector_store %arg15[%c142, %c0_178], %120 {strides = array<i32>} : memref<282x512xf32, #tpu.memory_space<vmem>>, vector<23x64xf32>,
    %cst_179 = arith.constant 0.000000e+00 : f32
    %122 = vector.broadcast %cst_179 : f32 to vector<1x64xf32>
    %c141 = arith.constant 141 : index
    %c0_180 = arith.constant 0 : index
    %123 = vector.load %arg15[%c141, %c0_180] : memref<282x512xf32, #tpu.memory_space<vmem>>, vector<1x64xf32>
    tpu.vector_store %arg15[%c141, %c0_180], %122 {strides = array<i32>} : memref<282x512xf32, #tpu.memory_space<vmem>>, vector<1x64xf32>,
    %c294 = arith.constant 294 : index
    %c0_181 = arith.constant 0 : index
    %124 = vector.load %arg14[%c294, %c0_181] : memref<588x64xf32, #tpu.memory_space<vmem>>, vector<24x64xf32>
    %c141_182 = arith.constant 141 : index
    %c64_183 = arith.constant 64 : index
    %125 = vector.load %arg15[%c141_182, %c64_183] : memref<282x512xf32, #tpu.memory_space<vmem>>, vector<24x64xf32>
    tpu.vector_store %arg15[%c141_182, %c64_183], %124 {strides = array<i32>} : memref<282x512xf32, #tpu.memory_space<vmem>>, vector<24x64xf32>,
    %c319 = arith.constant 319 : index
    %c0_184 = arith.constant 0 : index
    %126 = vector.load %arg14[%c319, %c0_184] : memref<588x64xf32, #tpu.memory_space<vmem>>, vector<24x64xf32>
    %c141_185 = arith.constant 141 : index
    %c128_186 = arith.constant 128 : index
    %127 = vector.load %arg15[%c141_185, %c128_186] : memref<282x512xf32, #tpu.memory_space<vmem>>, vector<24x64xf32>
    tpu.vector_store %arg15[%c141_185, %c128_186], %126 {strides = array<i32>} : memref<282x512xf32, #tpu.memory_space<vmem>>, vector<24x64xf32>,
    %c344 = arith.constant 344 : index
    %c0_187 = arith.constant 0 : index
    %128 = vector.load %arg14[%c344, %c0_187] : memref<588x64xf32, #tpu.memory_space<vmem>>, vector<24x64xf32>
    %c141_188 = arith.constant 141 : index
    %c192_189 = arith.constant 192 : index
    %129 = vector.load %arg15[%c141_188, %c192_189] : memref<282x512xf32, #tpu.memory_space<vmem>>, vector<24x64xf32>
    tpu.vector_store %arg15[%c141_188, %c192_189], %128 {strides = array<i32>} : memref<282x512xf32, #tpu.memory_space<vmem>>, vector<24x64xf32>,
    %c368_190 = arith.constant 368 : index
    %c0_191 = arith.constant 0 : index
    %130 = vector.load %arg14[%c368_190, %c0_191] : memref<588x64xf32, #tpu.memory_space<vmem>>, vector<24x64xf32>
    %c141_192 = arith.constant 141 : index
    %c256_193 = arith.constant 256 : index
    %131 = vector.load %arg15[%c141_192, %c256_193] : memref<282x512xf32, #tpu.memory_space<vmem>>, vector<24x64xf32>
    tpu.vector_store %arg15[%c141_192, %c256_193], %130 {strides = array<i32>} : memref<282x512xf32, #tpu.memory_space<vmem>>, vector<24x64xf32>,
    %c295 = arith.constant 295 : index
    %c0_194 = arith.constant 0 : index
    %132 = vector.load %arg14[%c295, %c0_194] : memref<588x64xf32, #tpu.memory_space<vmem>>, vector<24x64xf32>
    %c141_195 = arith.constant 141 : index
    %c320_196 = arith.constant 320 : index
    %133 = vector.load %arg15[%c141_195, %c320_196] : memref<282x512xf32, #tpu.memory_space<vmem>>, vector<24x64xf32>
    tpu.vector_store %arg15[%c141_195, %c320_196], %132 {strides = array<i32>} : memref<282x512xf32, #tpu.memory_space<vmem>>, vector<24x64xf32>,
    %c320_197 = arith.constant 320 : index
    %c0_198 = arith.constant 0 : index
    %134 = vector.load %arg14[%c320_197, %c0_198] : memref<588x64xf32, #tpu.memory_space<vmem>>, vector<24x64xf32>
    %c141_199 = arith.constant 141 : index
    %c384_200 = arith.constant 384 : index
    %135 = vector.load %arg15[%c141_199, %c384_200] : memref<282x512xf32, #tpu.memory_space<vmem>>, vector<24x64xf32>
    tpu.vector_store %arg15[%c141_199, %c384_200], %134 {strides = array<i32>} : memref<282x512xf32, #tpu.memory_space<vmem>>, vector<24x64xf32>,
    %c345 = arith.constant 345 : index
    %c0_201 = arith.constant 0 : index
    %136 = vector.load %arg14[%c345, %c0_201] : memref<588x64xf32, #tpu.memory_space<vmem>>, vector<23x64xf32>
    %c141_202 = arith.constant 141 : index
    %c448_203 = arith.constant 448 : index
    %137 = vector.load %arg15[%c141_202, %c448_203] : memref<282x512xf32, #tpu.memory_space<vmem>>, vector<23x64xf32>
    tpu.vector_store %arg15[%c141_202, %c448_203], %136 {strides = array<i32>} : memref<282x512xf32, #tpu.memory_space<vmem>>, vector<23x64xf32>,
    %cst_204 = arith.constant 0.000000e+00 : f32
    %138 = vector.broadcast %cst_204 : f32 to vector<1x64xf32>
    %c164 = arith.constant 164 : index
    %c448_205 = arith.constant 448 : index
    %139 = vector.load %arg15[%c164, %c448_205] : memref<282x512xf32, #tpu.memory_space<vmem>>, vector<1x64xf32>
    tpu.vector_store %arg15[%c164, %c448_205], %138 {strides = array<i32>} : memref<282x512xf32, #tpu.memory_space<vmem>>, vector<1x64xf32>,
    %c319_206 = arith.constant 319 : index
    %c0_207 = arith.constant 0 : index
    %140 = vector.load %arg14[%c319_206, %c0_207] : memref<588x64xf32, #tpu.memory_space<vmem>>, vector<23x64xf32>
    %c165 = arith.constant 165 : index
    %c0_208 = arith.constant 0 : index
    %141 = vector.load %arg15[%c165, %c0_208] : memref<282x512xf32, #tpu.memory_space<vmem>>, vector<23x64xf32>
    tpu.vector_store %arg15[%c165, %c0_208], %140 {strides = array<i32>} : memref<282x512xf32, #tpu.memory_space<vmem>>, vector<23x64xf32>,
    %c344_209 = arith.constant 344 : index
    %c0_210 = arith.constant 0 : index
    %142 = vector.load %arg14[%c344_209, %c0_210] : memref<588x64xf32, #tpu.memory_space<vmem>>, vector<23x64xf32>
    %c165_211 = arith.constant 165 : index
    %c64_212 = arith.constant 64 : index
    %143 = vector.load %arg15[%c165_211, %c64_212] : memref<282x512xf32, #tpu.memory_space<vmem>>, vector<23x64xf32>
    tpu.vector_store %arg15[%c165_211, %c64_212], %142 {strides = array<i32>} : memref<282x512xf32, #tpu.memory_space<vmem>>, vector<23x64xf32>,
    %c368_213 = arith.constant 368 : index
    %c0_214 = arith.constant 0 : index
    %144 = vector.load %arg14[%c368_213, %c0_214] : memref<588x64xf32, #tpu.memory_space<vmem>>, vector<23x64xf32>
    %c165_215 = arith.constant 165 : index
    %c128_216 = arith.constant 128 : index
    %145 = vector.load %arg15[%c165_215, %c128_216] : memref<282x512xf32, #tpu.memory_space<vmem>>, vector<23x64xf32>
    tpu.vector_store %arg15[%c165_215, %c128_216], %144 {strides = array<i32>} : memref<282x512xf32, #tpu.memory_space<vmem>>, vector<23x64xf32>,
    %c295_217 = arith.constant 295 : index
    %c0_218 = arith.constant 0 : index
    %146 = vector.load %arg14[%c295_217, %c0_218] : memref<588x64xf32, #tpu.memory_space<vmem>>, vector<23x64xf32>
    %c165_219 = arith.constant 165 : index
    %c192_220 = arith.constant 192 : index
    %147 = vector.load %arg15[%c165_219, %c192_220] : memref<282x512xf32, #tpu.memory_space<vmem>>, vector<23x64xf32>
    tpu.vector_store %arg15[%c165_219, %c192_220], %146 {strides = array<i32>} : memref<282x512xf32, #tpu.memory_space<vmem>>, vector<23x64xf32>,
    %c320_221 = arith.constant 320 : index
    %c0_222 = arith.constant 0 : index
    %148 = vector.load %arg14[%c320_221, %c0_222] : memref<588x64xf32, #tpu.memory_space<vmem>>, vector<23x64xf32>
    %c165_223 = arith.constant 165 : index
    %c256_224 = arith.constant 256 : index
    %149 = vector.load %arg15[%c165_223, %c256_224] : memref<282x512xf32, #tpu.memory_space<vmem>>, vector<23x64xf32>
    tpu.vector_store %arg15[%c165_223, %c256_224], %148 {strides = array<i32>} : memref<282x512xf32, #tpu.memory_space<vmem>>, vector<23x64xf32>,
    %c345_225 = arith.constant 345 : index
    %c0_226 = arith.constant 0 : index
    %150 = vector.load %arg14[%c345_225, %c0_226] : memref<588x64xf32, #tpu.memory_space<vmem>>, vector<23x64xf32>
    %c165_227 = arith.constant 165 : index
    %c320_228 = arith.constant 320 : index
    %151 = vector.load %arg15[%c165_227, %c320_228] : memref<282x512xf32, #tpu.memory_space<vmem>>, vector<23x64xf32>
    tpu.vector_store %arg15[%c165_227, %c320_228], %150 {strides = array<i32>} : memref<282x512xf32, #tpu.memory_space<vmem>>, vector<23x64xf32>,
    %c369 = arith.constant 369 : index
    %c0_229 = arith.constant 0 : index
    %152 = vector.load %arg14[%c369, %c0_229] : memref<588x64xf32, #tpu.memory_space<vmem>>, vector<23x64xf32>
    %c165_230 = arith.constant 165 : index
    %c384_231 = arith.constant 384 : index
    %153 = vector.load %arg15[%c165_230, %c384_231] : memref<282x512xf32, #tpu.memory_space<vmem>>, vector<23x64xf32>
    tpu.vector_store %arg15[%c165_230, %c384_231], %152 {strides = array<i32>} : memref<282x512xf32, #tpu.memory_space<vmem>>, vector<23x64xf32>,
    %c296 = arith.constant 296 : index
    %c0_232 = arith.constant 0 : index
    %154 = vector.load %arg14[%c296, %c0_232] : memref<588x64xf32, #tpu.memory_space<vmem>>, vector<23x64xf32>
    %c165_233 = arith.constant 165 : index
    %c448_234 = arith.constant 448 : index
    %155 = vector.load %arg15[%c165_233, %c448_234] : memref<282x512xf32, #tpu.memory_space<vmem>>, vector<23x64xf32>
    tpu.vector_store %arg15[%c165_233, %c448_234], %154 {strides = array<i32>} : memref<282x512xf32, #tpu.memory_space<vmem>>, vector<23x64xf32>,
    %c466 = arith.constant 466 : index
    %c0_235 = arith.constant 0 : index
    %156 = vector.load %arg14[%c466, %c0_235] : memref<588x64xf32, #tpu.memory_space<vmem>>, vector<23x64xf32>
    %c189 = arith.constant 189 : index
    %c0_236 = arith.constant 0 : index
    %157 = vector.load %arg15[%c189, %c0_236] : memref<282x512xf32, #tpu.memory_space<vmem>>, vector<23x64xf32>
    tpu.vector_store %arg15[%c189, %c0_236], %156 {strides = array<i32>} : memref<282x512xf32, #tpu.memory_space<vmem>>, vector<23x64xf32>,
    %cst_237 = arith.constant 0.000000e+00 : f32
    %158 = vector.broadcast %cst_237 : f32 to vector<1x64xf32>
    %c188 = arith.constant 188 : index
    %c0_238 = arith.constant 0 : index
    %159 = vector.load %arg15[%c188, %c0_238] : memref<282x512xf32, #tpu.memory_space<vmem>>, vector<1x64xf32>
    tpu.vector_store %arg15[%c188, %c0_238], %158 {strides = array<i32>} : memref<282x512xf32, #tpu.memory_space<vmem>>, vector<1x64xf32>,
    %c392 = arith.constant 392 : index
    %c0_239 = arith.constant 0 : index
    %160 = vector.load %arg14[%c392, %c0_239] : memref<588x64xf32, #tpu.memory_space<vmem>>, vector<24x64xf32>
    %c188_240 = arith.constant 188 : index
    %c64_241 = arith.constant 64 : index
    %161 = vector.load %arg15[%c188_240, %c64_241] : memref<282x512xf32, #tpu.memory_space<vmem>>, vector<24x64xf32>
    tpu.vector_store %arg15[%c188_240, %c64_241], %160 {strides = array<i32>} : memref<282x512xf32, #tpu.memory_space<vmem>>, vector<24x64xf32>,
    %c417 = arith.constant 417 : index
    %c0_242 = arith.constant 0 : index
    %162 = vector.load %arg14[%c417, %c0_242] : memref<588x64xf32, #tpu.memory_space<vmem>>, vector<24x64xf32>
    %c188_243 = arith.constant 188 : index
    %c128_244 = arith.constant 128 : index
    %163 = vector.load %arg15[%c188_243, %c128_244] : memref<282x512xf32, #tpu.memory_space<vmem>>, vector<24x64xf32>
    tpu.vector_store %arg15[%c188_243, %c128_244], %162 {strides = array<i32>} : memref<282x512xf32, #tpu.memory_space<vmem>>, vector<24x64xf32>,
    %c442 = arith.constant 442 : index
    %c0_245 = arith.constant 0 : index
    %164 = vector.load %arg14[%c442, %c0_245] : memref<588x64xf32, #tpu.memory_space<vmem>>, vector<24x64xf32>
    %c188_246 = arith.constant 188 : index
    %c192_247 = arith.constant 192 : index
    %165 = vector.load %arg15[%c188_246, %c192_247] : memref<282x512xf32, #tpu.memory_space<vmem>>, vector<24x64xf32>
    tpu.vector_store %arg15[%c188_246, %c192_247], %164 {strides = array<i32>} : memref<282x512xf32, #tpu.memory_space<vmem>>, vector<24x64xf32>,
    %c466_248 = arith.constant 466 : index
    %c0_249 = arith.constant 0 : index
    %166 = vector.load %arg14[%c466_248, %c0_249] : memref<588x64xf32, #tpu.memory_space<vmem>>, vector<24x64xf32>
    %c188_250 = arith.constant 188 : index
    %c256_251 = arith.constant 256 : index
    %167 = vector.load %arg15[%c188_250, %c256_251] : memref<282x512xf32, #tpu.memory_space<vmem>>, vector<24x64xf32>
    tpu.vector_store %arg15[%c188_250, %c256_251], %166 {strides = array<i32>} : memref<282x512xf32, #tpu.memory_space<vmem>>, vector<24x64xf32>,
    %c393 = arith.constant 393 : index
    %c0_252 = arith.constant 0 : index
    %168 = vector.load %arg14[%c393, %c0_252] : memref<588x64xf32, #tpu.memory_space<vmem>>, vector<24x64xf32>
    %c188_253 = arith.constant 188 : index
    %c320_254 = arith.constant 320 : index
    %169 = vector.load %arg15[%c188_253, %c320_254] : memref<282x512xf32, #tpu.memory_space<vmem>>, vector<24x64xf32>
    tpu.vector_store %arg15[%c188_253, %c320_254], %168 {strides = array<i32>} : memref<282x512xf32, #tpu.memory_space<vmem>>, vector<24x64xf32>,
    %c418 = arith.constant 418 : index
    %c0_255 = arith.constant 0 : index
    %170 = vector.load %arg14[%c418, %c0_255] : memref<588x64xf32, #tpu.memory_space<vmem>>, vector<24x64xf32>
    %c188_256 = arith.constant 188 : index
    %c384_257 = arith.constant 384 : index
    %171 = vector.load %arg15[%c188_256, %c384_257] : memref<282x512xf32, #tpu.memory_space<vmem>>, vector<24x64xf32>
    tpu.vector_store %arg15[%c188_256, %c384_257], %170 {strides = array<i32>} : memref<282x512xf32, #tpu.memory_space<vmem>>, vector<24x64xf32>,
    %c443 = arith.constant 443 : index
    %c0_258 = arith.constant 0 : index
    %172 = vector.load %arg14[%c443, %c0_258] : memref<588x64xf32, #tpu.memory_space<vmem>>, vector<23x64xf32>
    %c188_259 = arith.constant 188 : index
    %c448_260 = arith.constant 448 : index
    %173 = vector.load %arg15[%c188_259, %c448_260] : memref<282x512xf32, #tpu.memory_space<vmem>>, vector<23x64xf32>
    tpu.vector_store %arg15[%c188_259, %c448_260], %172 {strides = array<i32>} : memref<282x512xf32, #tpu.memory_space<vmem>>, vector<23x64xf32>,
    %cst_261 = arith.constant 0.000000e+00 : f32
    %174 = vector.broadcast %cst_261 : f32 to vector<1x64xf32>
    %c211 = arith.constant 211 : index
    %c448_262 = arith.constant 448 : index
    %175 = vector.load %arg15[%c211, %c448_262] : memref<282x512xf32, #tpu.memory_space<vmem>>, vector<1x64xf32>
    tpu.vector_store %arg15[%c211, %c448_262], %174 {strides = array<i32>} : memref<282x512xf32, #tpu.memory_space<vmem>>, vector<1x64xf32>,
    %c417_263 = arith.constant 417 : index
    %c0_264 = arith.constant 0 : index
    %176 = vector.load %arg14[%c417_263, %c0_264] : memref<588x64xf32, #tpu.memory_space<vmem>>, vector<23x64xf32>
    %c212 = arith.constant 212 : index
    %c0_265 = arith.constant 0 : index
    %177 = vector.load %arg15[%c212, %c0_265] : memref<282x512xf32, #tpu.memory_space<vmem>>, vector<23x64xf32>
    tpu.vector_store %arg15[%c212, %c0_265], %176 {strides = array<i32>} : memref<282x512xf32, #tpu.memory_space<vmem>>, vector<23x64xf32>,
    %c442_266 = arith.constant 442 : index
    %c0_267 = arith.constant 0 : index
    %178 = vector.load %arg14[%c442_266, %c0_267] : memref<588x64xf32, #tpu.memory_space<vmem>>, vector<23x64xf32>
    %c212_268 = arith.constant 212 : index
    %c64_269 = arith.constant 64 : index
    %179 = vector.load %arg15[%c212_268, %c64_269] : memref<282x512xf32, #tpu.memory_space<vmem>>, vector<23x64xf32>
    tpu.vector_store %arg15[%c212_268, %c64_269], %178 {strides = array<i32>} : memref<282x512xf32, #tpu.memory_space<vmem>>, vector<23x64xf32>,
    %c466_270 = arith.constant 466 : index
    %c0_271 = arith.constant 0 : index
    %180 = vector.load %arg14[%c466_270, %c0_271] : memref<588x64xf32, #tpu.memory_space<vmem>>, vector<23x64xf32>
    %c212_272 = arith.constant 212 : index
    %c128_273 = arith.constant 128 : index
    %181 = vector.load %arg15[%c212_272, %c128_273] : memref<282x512xf32, #tpu.memory_space<vmem>>, vector<23x64xf32>
    tpu.vector_store %arg15[%c212_272, %c128_273], %180 {strides = array<i32>} : memref<282x512xf32, #tpu.memory_space<vmem>>, vector<23x64xf32>,
    %c393_274 = arith.constant 393 : index
    %c0_275 = arith.constant 0 : index
    %182 = vector.load %arg14[%c393_274, %c0_275] : memref<588x64xf32, #tpu.memory_space<vmem>>, vector<23x64xf32>
    %c212_276 = arith.constant 212 : index
    %c192_277 = arith.constant 192 : index
    %183 = vector.load %arg15[%c212_276, %c192_277] : memref<282x512xf32, #tpu.memory_space<vmem>>, vector<23x64xf32>
    tpu.vector_store %arg15[%c212_276, %c192_277], %182 {strides = array<i32>} : memref<282x512xf32, #tpu.memory_space<vmem>>, vector<23x64xf32>,
    %c418_278 = arith.constant 418 : index
    %c0_279 = arith.constant 0 : index
    %184 = vector.load %arg14[%c418_278, %c0_279] : memref<588x64xf32, #tpu.memory_space<vmem>>, vector<23x64xf32>
    %c212_280 = arith.constant 212 : index
    %c256_281 = arith.constant 256 : index
    %185 = vector.load %arg15[%c212_280, %c256_281] : memref<282x512xf32, #tpu.memory_space<vmem>>, vector<23x64xf32>
    tpu.vector_store %arg15[%c212_280, %c256_281], %184 {strides = array<i32>} : memref<282x512xf32, #tpu.memory_space<vmem>>, vector<23x64xf32>,
    %c443_282 = arith.constant 443 : index
    %c0_283 = arith.constant 0 : index
    %186 = vector.load %arg14[%c443_282, %c0_283] : memref<588x64xf32, #tpu.memory_space<vmem>>, vector<23x64xf32>
    %c212_284 = arith.constant 212 : index
    %c320_285 = arith.constant 320 : index
    %187 = vector.load %arg15[%c212_284, %c320_285] : memref<282x512xf32, #tpu.memory_space<vmem>>, vector<23x64xf32>
    tpu.vector_store %arg15[%c212_284, %c320_285], %186 {strides = array<i32>} : memref<282x512xf32, #tpu.memory_space<vmem>>, vector<23x64xf32>,
    %c467 = arith.constant 467 : index
    %c0_286 = arith.constant 0 : index
    %188 = vector.load %arg14[%c467, %c0_286] : memref<588x64xf32, #tpu.memory_space<vmem>>, vector<23x64xf32>
    %c212_287 = arith.constant 212 : index
    %c384_288 = arith.constant 384 : index
    %189 = vector.load %arg15[%c212_287, %c384_288] : memref<282x512xf32, #tpu.memory_space<vmem>>, vector<23x64xf32>
    tpu.vector_store %arg15[%c212_287, %c384_288], %188 {strides = array<i32>} : memref<282x512xf32, #tpu.memory_space<vmem>>, vector<23x64xf32>,
    %c394 = arith.constant 394 : index
    %c0_289 = arith.constant 0 : index
    %190 = vector.load %arg14[%c394, %c0_289] : memref<588x64xf32, #tpu.memory_space<vmem>>, vector<23x64xf32>
    %c212_290 = arith.constant 212 : index
    %c448_291 = arith.constant 448 : index
    %191 = vector.load %arg15[%c212_290, %c448_291] : memref<282x512xf32, #tpu.memory_space<vmem>>, vector<23x64xf32>
    tpu.vector_store %arg15[%c212_290, %c448_291], %190 {strides = array<i32>} : memref<282x512xf32, #tpu.memory_space<vmem>>, vector<23x64xf32>,
    %c564 = arith.constant 564 : index
    %c0_292 = arith.constant 0 : index
    %192 = vector.load %arg14[%c564, %c0_292] : memref<588x64xf32, #tpu.memory_space<vmem>>, vector<23x64xf32>
    %c236 = arith.constant 236 : index
    %c0_293 = arith.constant 0 : index
    %193 = vector.load %arg15[%c236, %c0_293] : memref<282x512xf32, #tpu.memory_space<vmem>>, vector<23x64xf32>
    tpu.vector_store %arg15[%c236, %c0_293], %192 {strides = array<i32>} : memref<282x512xf32, #tpu.memory_space<vmem>>, vector<23x64xf32>,
    %cst_294 = arith.constant 0.000000e+00 : f32
    %194 = vector.broadcast %cst_294 : f32 to vector<1x64xf32>
    %c235 = arith.constant 235 : index
    %c0_295 = arith.constant 0 : index
    %195 = vector.load %arg15[%c235, %c0_295] : memref<282x512xf32, #tpu.memory_space<vmem>>, vector<1x64xf32>
    tpu.vector_store %arg15[%c235, %c0_295], %194 {strides = array<i32>} : memref<282x512xf32, #tpu.memory_space<vmem>>, vector<1x64xf32>,
    %c490 = arith.constant 490 : index
    %c0_296 = arith.constant 0 : index
    %196 = vector.load %arg14[%c490, %c0_296] : memref<588x64xf32, #tpu.memory_space<vmem>>, vector<24x64xf32>
    %c235_297 = arith.constant 235 : index
    %c64_298 = arith.constant 64 : index
    %197 = vector.load %arg15[%c235_297, %c64_298] : memref<282x512xf32, #tpu.memory_space<vmem>>, vector<24x64xf32>
    tpu.vector_store %arg15[%c235_297, %c64_298], %196 {strides = array<i32>} : memref<282x512xf32, #tpu.memory_space<vmem>>, vector<24x64xf32>,
    %c515 = arith.constant 515 : index
    %c0_299 = arith.constant 0 : index
    %198 = vector.load %arg14[%c515, %c0_299] : memref<588x64xf32, #tpu.memory_space<vmem>>, vector<24x64xf32>
    %c235_300 = arith.constant 235 : index
    %c128_301 = arith.constant 128 : index
    %199 = vector.load %arg15[%c235_300, %c128_301] : memref<282x512xf32, #tpu.memory_space<vmem>>, vector<24x64xf32>
    tpu.vector_store %arg15[%c235_300, %c128_301], %198 {strides = array<i32>} : memref<282x512xf32, #tpu.memory_space<vmem>>, vector<24x64xf32>,
    %c540 = arith.constant 540 : index
    %c0_302 = arith.constant 0 : index
    %200 = vector.load %arg14[%c540, %c0_302] : memref<588x64xf32, #tpu.memory_space<vmem>>, vector<24x64xf32>
    %c235_303 = arith.constant 235 : index
    %c192_304 = arith.constant 192 : index
    %201 = vector.load %arg15[%c235_303, %c192_304] : memref<282x512xf32, #tpu.memory_space<vmem>>, vector<24x64xf32>
    tpu.vector_store %arg15[%c235_303, %c192_304], %200 {strides = array<i32>} : memref<282x512xf32, #tpu.memory_space<vmem>>, vector<24x64xf32>,
    %c564_305 = arith.constant 564 : index
    %c0_306 = arith.constant 0 : index
    %202 = vector.load %arg14[%c564_305, %c0_306] : memref<588x64xf32, #tpu.memory_space<vmem>>, vector<24x64xf32>
    %c235_307 = arith.constant 235 : index
    %c256_308 = arith.constant 256 : index
    %203 = vector.load %arg15[%c235_307, %c256_308] : memref<282x512xf32, #tpu.memory_space<vmem>>, vector<24x64xf32>
    tpu.vector_store %arg15[%c235_307, %c256_308], %202 {strides = array<i32>} : memref<282x512xf32, #tpu.memory_space<vmem>>, vector<24x64xf32>,
    %c491 = arith.constant 491 : index
    %c0_309 = arith.constant 0 : index
    %204 = vector.load %arg14[%c491, %c0_309] : memref<588x64xf32, #tpu.memory_space<vmem>>, vector<24x64xf32>
    %c235_310 = arith.constant 235 : index
    %c320_311 = arith.constant 320 : index
    %205 = vector.load %arg15[%c235_310, %c320_311] : memref<282x512xf32, #tpu.memory_space<vmem>>, vector<24x64xf32>
    tpu.vector_store %arg15[%c235_310, %c320_311], %204 {strides = array<i32>} : memref<282x512xf32, #tpu.memory_space<vmem>>, vector<24x64xf32>,
    %c516 = arith.constant 516 : index
    %c0_312 = arith.constant 0 : index
    %206 = vector.load %arg14[%c516, %c0_312] : memref<588x64xf32, #tpu.memory_space<vmem>>, vector<24x64xf32>
    %c235_313 = arith.constant 235 : index
    %c384_314 = arith.constant 384 : index
    %207 = vector.load %arg15[%c235_313, %c384_314] : memref<282x512xf32, #tpu.memory_space<vmem>>, vector<24x64xf32>
    tpu.vector_store %arg15[%c235_313, %c384_314], %206 {strides = array<i32>} : memref<282x512xf32, #tpu.memory_space<vmem>>, vector<24x64xf32>,
    %c541 = arith.constant 541 : index
    %c0_315 = arith.constant 0 : index
    %208 = vector.load %arg14[%c541, %c0_315] : memref<588x64xf32, #tpu.memory_space<vmem>>, vector<23x64xf32>
    %c235_316 = arith.constant 235 : index
    %c448_317 = arith.constant 448 : index
    %209 = vector.load %arg15[%c235_316, %c448_317] : memref<282x512xf32, #tpu.memory_space<vmem>>, vector<23x64xf32>
    tpu.vector_store %arg15[%c235_316, %c448_317], %208 {strides = array<i32>} : memref<282x512xf32, #tpu.memory_space<vmem>>, vector<23x64xf32>,
    %cst_318 = arith.constant 0.000000e+00 : f32
    %210 = vector.broadcast %cst_318 : f32 to vector<1x64xf32>
    %c258 = arith.constant 258 : index
    %c448_319 = arith.constant 448 : index
    %211 = vector.load %arg15[%c258, %c448_319] : memref<282x512xf32, #tpu.memory_space<vmem>>, vector<1x64xf32>
    tpu.vector_store %arg15[%c258, %c448_319], %210 {strides = array<i32>} : memref<282x512xf32, #tpu.memory_space<vmem>>, vector<1x64xf32>,
    %c515_320 = arith.constant 515 : index
    %c0_321 = arith.constant 0 : index
    %212 = vector.load %arg14[%c515_320, %c0_321] : memref<588x64xf32, #tpu.memory_space<vmem>>, vector<23x64xf32>
    %c259 = arith.constant 259 : index
    %c0_322 = arith.constant 0 : index
    %213 = vector.load %arg15[%c259, %c0_322] : memref<282x512xf32, #tpu.memory_space<vmem>>, vector<23x64xf32>
    tpu.vector_store %arg15[%c259, %c0_322], %212 {strides = array<i32>} : memref<282x512xf32, #tpu.memory_space<vmem>>, vector<23x64xf32>,
    %c540_323 = arith.constant 540 : index
    %c0_324 = arith.constant 0 : index
    %214 = vector.load %arg14[%c540_323, %c0_324] : memref<588x64xf32, #tpu.memory_space<vmem>>, vector<23x64xf32>
    %c259_325 = arith.constant 259 : index
    %c64_326 = arith.constant 64 : index
    %215 = vector.load %arg15[%c259_325, %c64_326] : memref<282x512xf32, #tpu.memory_space<vmem>>, vector<23x64xf32>
    tpu.vector_store %arg15[%c259_325, %c64_326], %214 {strides = array<i32>} : memref<282x512xf32, #tpu.memory_space<vmem>>, vector<23x64xf32>,
    %c564_327 = arith.constant 564 : index
    %c0_328 = arith.constant 0 : index
    %216 = vector.load %arg14[%c564_327, %c0_328] : memref<588x64xf32, #tpu.memory_space<vmem>>, vector<23x64xf32>
    %c259_329 = arith.constant 259 : index
    %c128_330 = arith.constant 128 : index
    %217 = vector.load %arg15[%c259_329, %c128_330] : memref<282x512xf32, #tpu.memory_space<vmem>>, vector<23x64xf32>
    tpu.vector_store %arg15[%c259_329, %c128_330], %216 {strides = array<i32>} : memref<282x512xf32, #tpu.memory_space<vmem>>, vector<23x64xf32>,
    %c491_331 = arith.constant 491 : index
    %c0_332 = arith.constant 0 : index
    %218 = vector.load %arg14[%c491_331, %c0_332] : memref<588x64xf32, #tpu.memory_space<vmem>>, vector<23x64xf32>
    %c259_333 = arith.constant 259 : index
    %c192_334 = arith.constant 192 : index
    %219 = vector.load %arg15[%c259_333, %c192_334] : memref<282x512xf32, #tpu.memory_space<vmem>>, vector<23x64xf32>
    tpu.vector_store %arg15[%c259_333, %c192_334], %218 {strides = array<i32>} : memref<282x512xf32, #tpu.memory_space<vmem>>, vector<23x64xf32>,
    %c516_335 = arith.constant 516 : index
    %c0_336 = arith.constant 0 : index
    %220 = vector.load %arg14[%c516_335, %c0_336] : memref<588x64xf32, #tpu.memory_space<vmem>>, vector<23x64xf32>
    %c259_337 = arith.constant 259 : index
    %c256_338 = arith.constant 256 : index
    %221 = vector.load %arg15[%c259_337, %c256_338] : memref<282x512xf32, #tpu.memory_space<vmem>>, vector<23x64xf32>
    tpu.vector_store %arg15[%c259_337, %c256_338], %220 {strides = array<i32>} : memref<282x512xf32, #tpu.memory_space<vmem>>, vector<23x64xf32>,
    %c541_339 = arith.constant 541 : index
    %c0_340 = arith.constant 0 : index
    %222 = vector.load %arg14[%c541_339, %c0_340] : memref<588x64xf32, #tpu.memory_space<vmem>>, vector<23x64xf32>
    %c259_341 = arith.constant 259 : index
    %c320_342 = arith.constant 320 : index
    %223 = vector.load %arg15[%c259_341, %c320_342] : memref<282x512xf32, #tpu.memory_space<vmem>>, vector<23x64xf32>
    tpu.vector_store %arg15[%c259_341, %c320_342], %222 {strides = array<i32>} : memref<282x512xf32, #tpu.memory_space<vmem>>, vector<23x64xf32>,
    %c565 = arith.constant 565 : index
    %c0_343 = arith.constant 0 : index
    %224 = vector.load %arg14[%c565, %c0_343] : memref<588x64xf32, #tpu.memory_space<vmem>>, vector<23x64xf32>
    %c259_344 = arith.constant 259 : index
    %c384_345 = arith.constant 384 : index
    %225 = vector.load %arg15[%c259_344, %c384_345] : memref<282x512xf32, #tpu.memory_space<vmem>>, vector<23x64xf32>
    tpu.vector_store %arg15[%c259_344, %c384_345], %224 {strides = array<i32>} : memref<282x512xf32, #tpu.memory_space<vmem>>, vector<23x64xf32>,
    %c492 = arith.constant 492 : index
    %c0_346 = arith.constant 0 : index
    %226 = vector.load %arg14[%c492, %c0_346] : memref<588x64xf32, #tpu.memory_space<vmem>>, vector<23x64xf32>
    %c259_347 = arith.constant 259 : index
    %c448_348 = arith.constant 448 : index
    %227 = vector.load %arg15[%c259_347, %c448_348] : memref<282x512xf32, #tpu.memory_space<vmem>>, vector<23x64xf32>
    tpu.vector_store %arg15[%c259_347, %c448_348], %226 {strides = array<i32>} : memref<282x512xf32, #tpu.memory_space<vmem>>, vector<23x64xf32>,
    %c0_349 = arith.constant 0 : index
    %c0_350 = arith.constant 0 : index
    %228 = vector.load %arg15[%c0_349, %c0_350] : memref<282x512xf32, #tpu.memory_space<vmem>>, vector<282x512xf32>
    %229 = arith.truncf %228 : vector<282x512xf32> to vector<282x512xbf16>
    %c0_351 = arith.constant 0 : index
    %c0_352 = arith.constant 0 : index
    %230 = vector.load %arg4[%c0_351, %c0_352] : memref<512x128xbf16, #tpu.memory_space<vmem>>, vector<512x128xbf16>
    %cst_353 = arith.constant dense<0.000000e+00> : vector<282x128xf32>
    %231 = tpu.matmul %229, %230, %cst_353 {dimension_numbers = #tpu.dot_dimension_numbers<[1], [0], [0], [1], [0, 0, 1, 1], [], []>} : vector<282x512xbf16>, vector<512x128xbf16>, vector<282x128xf32> -> vector<282x128xf32>
    %c0_354 = arith.constant 0 : index
    %c0_355 = arith.constant 0 : index
    %232 = vector.load %arg5[%c0_354, %c0_355] : memref<1x128xf32, #tpu.memory_space<vmem>>, vector<1x128xf32>
    %233 = vector.broadcast %232 : vector<1x128xf32> to vector<282x128xf32>
    %234 = arith.mulf %231, %233 : vector<282x128xf32>
    %c0_356 = arith.constant 0 : index
    %c0_357 = arith.constant 0 : index
    %235 = vector.load %arg6[%c0_356, %c0_357] : memref<1x128xf32, #tpu.memory_space<vmem>>, vector<1x128xf32>
    %236 = vector.broadcast %235 : vector<1x128xf32> to vector<282x128xf32>
    %237 = arith.addf %234, %236 : vector<282x128xf32>
    %cst_358 = arith.constant 0.000000e+00 : f32
    %238 = vector.broadcast %cst_358 : f32 to vector<282x128xf32>
    %239 = arith.maximumf %237, %238 : vector<282x128xf32>
    %c0_359 = arith.constant 0 : index
    %c0_360 = arith.constant 0 : index
    %240 = vector.load %arg16[%c0_359, %c0_360] : memref<282x128xf32, #tpu.memory_space<vmem>>, vector<282x128xf32>
    tpu.vector_store %arg16[%c0_359, %c0_360], %239 {strides = array<i32>} : memref<282x128xf32, #tpu.memory_space<vmem>>, vector<282x128xf32>,
    %c24_361 = arith.constant 24 : index
    %c0_362 = arith.constant 0 : index
    %241 = vector.load %arg16[%c24_361, %c0_362] : memref<282x128xf32, #tpu.memory_space<vmem>>, vector<20x128xf32>
    %c1_363 = arith.constant 1 : index
    %c0_364 = arith.constant 0 : index
    %242 = vector.load %arg17[%c1_363, %c0_364] : memref<126x1024xf32, #tpu.memory_space<vmem>>, vector<20x128xf32>
    tpu.vector_store %arg17[%c1_363, %c0_364], %241 {strides = array<i32>} : memref<126x1024xf32, #tpu.memory_space<vmem>>, vector<20x128xf32>,
    %cst_365 = arith.constant 0.000000e+00 : f32
    %243 = vector.broadcast %cst_365 : f32 to vector<1x128xf32>
    %c0_366 = arith.constant 0 : index
    %c0_367 = arith.constant 0 : index
    %244 = vector.load %arg17[%c0_366, %c0_367] : memref<126x1024xf32, #tpu.memory_space<vmem>>, vector<1x128xf32>
    tpu.vector_store %arg17[%c0_366, %c0_367], %243 {strides = array<i32>} : memref<126x1024xf32, #tpu.memory_space<vmem>>, vector<1x128xf32>,
    %c0_368 = arith.constant 0 : index
    %c0_369 = arith.constant 0 : index
    %245 = vector.load %arg16[%c0_368, %c0_369] : memref<282x128xf32, #tpu.memory_space<vmem>>, vector<21x128xf32>
    %c0_370 = arith.constant 0 : index
    %c128_371 = arith.constant 128 : index
    %246 = vector.load %arg17[%c0_370, %c128_371] : memref<126x1024xf32, #tpu.memory_space<vmem>>, vector<21x128xf32>
    tpu.vector_store %arg17[%c0_370, %c128_371], %245 {strides = array<i32>} : memref<126x1024xf32, #tpu.memory_space<vmem>>, vector<21x128xf32>,
    %c24_372 = arith.constant 24 : index
    %c0_373 = arith.constant 0 : index
    %247 = vector.load %arg16[%c24_372, %c0_373] : memref<282x128xf32, #tpu.memory_space<vmem>>, vector<21x128xf32>
    %c0_374 = arith.constant 0 : index
    %c256_375 = arith.constant 256 : index
    %248 = vector.load %arg17[%c0_374, %c256_375] : memref<126x1024xf32, #tpu.memory_space<vmem>>, vector<21x128xf32>
    tpu.vector_store %arg17[%c0_374, %c256_375], %247 {strides = array<i32>} : memref<126x1024xf32, #tpu.memory_space<vmem>>, vector<21x128xf32>,
    %c1_376 = arith.constant 1 : index
    %c0_377 = arith.constant 0 : index
    %249 = vector.load %arg16[%c1_376, %c0_377] : memref<282x128xf32, #tpu.memory_space<vmem>>, vector<21x128xf32>
    %c0_378 = arith.constant 0 : index
    %c384_379 = arith.constant 384 : index
    %250 = vector.load %arg17[%c0_378, %c384_379] : memref<126x1024xf32, #tpu.memory_space<vmem>>, vector<21x128xf32>
    tpu.vector_store %arg17[%c0_378, %c384_379], %249 {strides = array<i32>} : memref<126x1024xf32, #tpu.memory_space<vmem>>, vector<21x128xf32>,
    %c25_380 = arith.constant 25 : index
    %c0_381 = arith.constant 0 : index
    %251 = vector.load %arg16[%c25_380, %c0_381] : memref<282x128xf32, #tpu.memory_space<vmem>>, vector<21x128xf32>
    %c0_382 = arith.constant 0 : index
    %c512 = arith.constant 512 : index
    %252 = vector.load %arg17[%c0_382, %c512] : memref<126x1024xf32, #tpu.memory_space<vmem>>, vector<21x128xf32>
    tpu.vector_store %arg17[%c0_382, %c512], %251 {strides = array<i32>} : memref<126x1024xf32, #tpu.memory_space<vmem>>, vector<21x128xf32>,
    %c2_383 = arith.constant 2 : index
    %c0_384 = arith.constant 0 : index
    %253 = vector.load %arg16[%c2_383, %c0_384] : memref<282x128xf32, #tpu.memory_space<vmem>>, vector<21x128xf32>
    %c0_385 = arith.constant 0 : index
    %c640 = arith.constant 640 : index
    %254 = vector.load %arg17[%c0_385, %c640] : memref<126x1024xf32, #tpu.memory_space<vmem>>, vector<21x128xf32>
    tpu.vector_store %arg17[%c0_385, %c640], %253 {strides = array<i32>} : memref<126x1024xf32, #tpu.memory_space<vmem>>, vector<21x128xf32>,
    %c26_386 = arith.constant 26 : index
    %c0_387 = arith.constant 0 : index
    %255 = vector.load %arg16[%c26_386, %c0_387] : memref<282x128xf32, #tpu.memory_space<vmem>>, vector<21x128xf32>
    %c0_388 = arith.constant 0 : index
    %c768 = arith.constant 768 : index
    %256 = vector.load %arg17[%c0_388, %c768] : memref<126x1024xf32, #tpu.memory_space<vmem>>, vector<21x128xf32>
    tpu.vector_store %arg17[%c0_388, %c768], %255 {strides = array<i32>} : memref<126x1024xf32, #tpu.memory_space<vmem>>, vector<21x128xf32>,
    %c3 = arith.constant 3 : index
    %c0_389 = arith.constant 0 : index
    %257 = vector.load %arg16[%c3, %c0_389] : memref<282x128xf32, #tpu.memory_space<vmem>>, vector<21x128xf32>
    %c0_390 = arith.constant 0 : index
    %c896 = arith.constant 896 : index
    %258 = vector.load %arg17[%c0_390, %c896] : memref<126x1024xf32, #tpu.memory_space<vmem>>, vector<21x128xf32>
    tpu.vector_store %arg17[%c0_390, %c896], %257 {strides = array<i32>} : memref<126x1024xf32, #tpu.memory_space<vmem>>, vector<21x128xf32>,
    %c71_391 = arith.constant 71 : index
    %c0_392 = arith.constant 0 : index
    %259 = vector.load %arg16[%c71_391, %c0_392] : memref<282x128xf32, #tpu.memory_space<vmem>>, vector<20x128xf32>
    %c22 = arith.constant 22 : index
    %c0_393 = arith.constant 0 : index
    %260 = vector.load %arg17[%c22, %c0_393] : memref<126x1024xf32, #tpu.memory_space<vmem>>, vector<20x128xf32>
    tpu.vector_store %arg17[%c22, %c0_393], %259 {strides = array<i32>} : memref<126x1024xf32, #tpu.memory_space<vmem>>, vector<20x128xf32>,
    %cst_394 = arith.constant 0.000000e+00 : f32
    %261 = vector.broadcast %cst_394 : f32 to vector<1x128xf32>
    %c21 = arith.constant 21 : index
    %c0_395 = arith.constant 0 : index
    %262 = vector.load %arg17[%c21, %c0_395] : memref<126x1024xf32, #tpu.memory_space<vmem>>, vector<1x128xf32>
    tpu.vector_store %arg17[%c21, %c0_395], %261 {strides = array<i32>} : memref<126x1024xf32, #tpu.memory_space<vmem>>, vector<1x128xf32>,
    %c47_396 = arith.constant 47 : index
    %c0_397 = arith.constant 0 : index
    %263 = vector.load %arg16[%c47_396, %c0_397] : memref<282x128xf32, #tpu.memory_space<vmem>>, vector<21x128xf32>
    %c21_398 = arith.constant 21 : index
    %c128_399 = arith.constant 128 : index
    %264 = vector.load %arg17[%c21_398, %c128_399] : memref<126x1024xf32, #tpu.memory_space<vmem>>, vector<21x128xf32>
    tpu.vector_store %arg17[%c21_398, %c128_399], %263 {strides = array<i32>} : memref<126x1024xf32, #tpu.memory_space<vmem>>, vector<21x128xf32>,
    %c71_400 = arith.constant 71 : index
    %c0_401 = arith.constant 0 : index
    %265 = vector.load %arg16[%c71_400, %c0_401] : memref<282x128xf32, #tpu.memory_space<vmem>>, vector<21x128xf32>
    %c21_402 = arith.constant 21 : index
    %c256_403 = arith.constant 256 : index
    %266 = vector.load %arg17[%c21_402, %c256_403] : memref<126x1024xf32, #tpu.memory_space<vmem>>, vector<21x128xf32>
    tpu.vector_store %arg17[%c21_402, %c256_403], %265 {strides = array<i32>} : memref<126x1024xf32, #tpu.memory_space<vmem>>, vector<21x128xf32>,
    %c48_404 = arith.constant 48 : index
    %c0_405 = arith.constant 0 : index
    %267 = vector.load %arg16[%c48_404, %c0_405] : memref<282x128xf32, #tpu.memory_space<vmem>>, vector<21x128xf32>
    %c21_406 = arith.constant 21 : index
    %c384_407 = arith.constant 384 : index
    %268 = vector.load %arg17[%c21_406, %c384_407] : memref<126x1024xf32, #tpu.memory_space<vmem>>, vector<21x128xf32>
    tpu.vector_store %arg17[%c21_406, %c384_407], %267 {strides = array<i32>} : memref<126x1024xf32, #tpu.memory_space<vmem>>, vector<21x128xf32>,
    %c72 = arith.constant 72 : index
    %c0_408 = arith.constant 0 : index
    %269 = vector.load %arg16[%c72, %c0_408] : memref<282x128xf32, #tpu.memory_space<vmem>>, vector<21x128xf32>
    %c21_409 = arith.constant 21 : index
    %c512_410 = arith.constant 512 : index
    %270 = vector.load %arg17[%c21_409, %c512_410] : memref<126x1024xf32, #tpu.memory_space<vmem>>, vector<21x128xf32>
    tpu.vector_store %arg17[%c21_409, %c512_410], %269 {strides = array<i32>} : memref<126x1024xf32, #tpu.memory_space<vmem>>, vector<21x128xf32>,
    %c49 = arith.constant 49 : index
    %c0_411 = arith.constant 0 : index
    %271 = vector.load %arg16[%c49, %c0_411] : memref<282x128xf32, #tpu.memory_space<vmem>>, vector<21x128xf32>
    %c21_412 = arith.constant 21 : index
    %c640_413 = arith.constant 640 : index
    %272 = vector.load %arg17[%c21_412, %c640_413] : memref<126x1024xf32, #tpu.memory_space<vmem>>, vector<21x128xf32>
    tpu.vector_store %arg17[%c21_412, %c640_413], %271 {strides = array<i32>} : memref<126x1024xf32, #tpu.memory_space<vmem>>, vector<21x128xf32>,
    %c73 = arith.constant 73 : index
    %c0_414 = arith.constant 0 : index
    %273 = vector.load %arg16[%c73, %c0_414] : memref<282x128xf32, #tpu.memory_space<vmem>>, vector<21x128xf32>
    %c21_415 = arith.constant 21 : index
    %c768_416 = arith.constant 768 : index
    %274 = vector.load %arg17[%c21_415, %c768_416] : memref<126x1024xf32, #tpu.memory_space<vmem>>, vector<21x128xf32>
    tpu.vector_store %arg17[%c21_415, %c768_416], %273 {strides = array<i32>} : memref<126x1024xf32, #tpu.memory_space<vmem>>, vector<21x128xf32>,
    %c50_417 = arith.constant 50 : index
    %c0_418 = arith.constant 0 : index
    %275 = vector.load %arg16[%c50_417, %c0_418] : memref<282x128xf32, #tpu.memory_space<vmem>>, vector<21x128xf32>
    %c21_419 = arith.constant 21 : index
    %c896_420 = arith.constant 896 : index
    %276 = vector.load %arg17[%c21_419, %c896_420] : memref<126x1024xf32, #tpu.memory_space<vmem>>, vector<21x128xf32>
    tpu.vector_store %arg17[%c21_419, %c896_420], %275 {strides = array<i32>} : memref<126x1024xf32, #tpu.memory_space<vmem>>, vector<21x128xf32>,
    %c118_421 = arith.constant 118 : index
    %c0_422 = arith.constant 0 : index
    %277 = vector.load %arg16[%c118_421, %c0_422] : memref<282x128xf32, #tpu.memory_space<vmem>>, vector<20x128xf32>
    %c43 = arith.constant 43 : index
    %c0_423 = arith.constant 0 : index
    %278 = vector.load %arg17[%c43, %c0_423] : memref<126x1024xf32, #tpu.memory_space<vmem>>, vector<20x128xf32>
    tpu.vector_store %arg17[%c43, %c0_423], %277 {strides = array<i32>} : memref<126x1024xf32, #tpu.memory_space<vmem>>, vector<20x128xf32>,
    %cst_424 = arith.constant 0.000000e+00 : f32
    %279 = vector.broadcast %cst_424 : f32 to vector<1x128xf32>
    %c42 = arith.constant 42 : index
    %c0_425 = arith.constant 0 : index
    %280 = vector.load %arg17[%c42, %c0_425] : memref<126x1024xf32, #tpu.memory_space<vmem>>, vector<1x128xf32>
    tpu.vector_store %arg17[%c42, %c0_425], %279 {strides = array<i32>} : memref<126x1024xf32, #tpu.memory_space<vmem>>, vector<1x128xf32>,
    %c94_426 = arith.constant 94 : index
    %c0_427 = arith.constant 0 : index
    %281 = vector.load %arg16[%c94_426, %c0_427] : memref<282x128xf32, #tpu.memory_space<vmem>>, vector<21x128xf32>
    %c42_428 = arith.constant 42 : index
    %c128_429 = arith.constant 128 : index
    %282 = vector.load %arg17[%c42_428, %c128_429] : memref<126x1024xf32, #tpu.memory_space<vmem>>, vector<21x128xf32>
    tpu.vector_store %arg17[%c42_428, %c128_429], %281 {strides = array<i32>} : memref<126x1024xf32, #tpu.memory_space<vmem>>, vector<21x128xf32>,
    %c118_430 = arith.constant 118 : index
    %c0_431 = arith.constant 0 : index
    %283 = vector.load %arg16[%c118_430, %c0_431] : memref<282x128xf32, #tpu.memory_space<vmem>>, vector<21x128xf32>
    %c42_432 = arith.constant 42 : index
    %c256_433 = arith.constant 256 : index
    %284 = vector.load %arg17[%c42_432, %c256_433] : memref<126x1024xf32, #tpu.memory_space<vmem>>, vector<21x128xf32>
    tpu.vector_store %arg17[%c42_432, %c256_433], %283 {strides = array<i32>} : memref<126x1024xf32, #tpu.memory_space<vmem>>, vector<21x128xf32>,
    %c95_434 = arith.constant 95 : index
    %c0_435 = arith.constant 0 : index
    %285 = vector.load %arg16[%c95_434, %c0_435] : memref<282x128xf32, #tpu.memory_space<vmem>>, vector<21x128xf32>
    %c42_436 = arith.constant 42 : index
    %c384_437 = arith.constant 384 : index
    %286 = vector.load %arg17[%c42_436, %c384_437] : memref<126x1024xf32, #tpu.memory_space<vmem>>, vector<21x128xf32>
    tpu.vector_store %arg17[%c42_436, %c384_437], %285 {strides = array<i32>} : memref<126x1024xf32, #tpu.memory_space<vmem>>, vector<21x128xf32>,
    %c119 = arith.constant 119 : index
    %c0_438 = arith.constant 0 : index
    %287 = vector.load %arg16[%c119, %c0_438] : memref<282x128xf32, #tpu.memory_space<vmem>>, vector<21x128xf32>
    %c42_439 = arith.constant 42 : index
    %c512_440 = arith.constant 512 : index
    %288 = vector.load %arg17[%c42_439, %c512_440] : memref<126x1024xf32, #tpu.memory_space<vmem>>, vector<21x128xf32>
    tpu.vector_store %arg17[%c42_439, %c512_440], %287 {strides = array<i32>} : memref<126x1024xf32, #tpu.memory_space<vmem>>, vector<21x128xf32>,
    %c96 = arith.constant 96 : index
    %c0_441 = arith.constant 0 : index
    %289 = vector.load %arg16[%c96, %c0_441] : memref<282x128xf32, #tpu.memory_space<vmem>>, vector<21x128xf32>
    %c42_442 = arith.constant 42 : index
    %c640_443 = arith.constant 640 : index
    %290 = vector.load %arg17[%c42_442, %c640_443] : memref<126x1024xf32, #tpu.memory_space<vmem>>, vector<21x128xf32>
    tpu.vector_store %arg17[%c42_442, %c640_443], %289 {strides = array<i32>} : memref<126x1024xf32, #tpu.memory_space<vmem>>, vector<21x128xf32>,
    %c120 = arith.constant 120 : index
    %c0_444 = arith.constant 0 : index
    %291 = vector.load %arg16[%c120, %c0_444] : memref<282x128xf32, #tpu.memory_space<vmem>>, vector<21x128xf32>
    %c42_445 = arith.constant 42 : index
    %c768_446 = arith.constant 768 : index
    %292 = vector.load %arg17[%c42_445, %c768_446] : memref<126x1024xf32, #tpu.memory_space<vmem>>, vector<21x128xf32>
    tpu.vector_store %arg17[%c42_445, %c768_446], %291 {strides = array<i32>} : memref<126x1024xf32, #tpu.memory_space<vmem>>, vector<21x128xf32>,
    %c97 = arith.constant 97 : index
    %c0_447 = arith.constant 0 : index
    %293 = vector.load %arg16[%c97, %c0_447] : memref<282x128xf32, #tpu.memory_space<vmem>>, vector<21x128xf32>
    %c42_448 = arith.constant 42 : index
    %c896_449 = arith.constant 896 : index
    %294 = vector.load %arg17[%c42_448, %c896_449] : memref<126x1024xf32, #tpu.memory_space<vmem>>, vector<21x128xf32>
    tpu.vector_store %arg17[%c42_448, %c896_449], %293 {strides = array<i32>} : memref<126x1024xf32, #tpu.memory_space<vmem>>, vector<21x128xf32>,
    %c165_450 = arith.constant 165 : index
    %c0_451 = arith.constant 0 : index
    %295 = vector.load %arg16[%c165_450, %c0_451] : memref<282x128xf32, #tpu.memory_space<vmem>>, vector<20x128xf32>
    %c64_452 = arith.constant 64 : index
    %c0_453 = arith.constant 0 : index
    %296 = vector.load %arg17[%c64_452, %c0_453] : memref<126x1024xf32, #tpu.memory_space<vmem>>, vector<20x128xf32>
    tpu.vector_store %arg17[%c64_452, %c0_453], %295 {strides = array<i32>} : memref<126x1024xf32, #tpu.memory_space<vmem>>, vector<20x128xf32>,
    %cst_454 = arith.constant 0.000000e+00 : f32
    %297 = vector.broadcast %cst_454 : f32 to vector<1x128xf32>
    %c63 = arith.constant 63 : index
    %c0_455 = arith.constant 0 : index
    %298 = vector.load %arg17[%c63, %c0_455] : memref<126x1024xf32, #tpu.memory_space<vmem>>, vector<1x128xf32>
    tpu.vector_store %arg17[%c63, %c0_455], %297 {strides = array<i32>} : memref<126x1024xf32, #tpu.memory_space<vmem>>, vector<1x128xf32>,
    %c141_456 = arith.constant 141 : index
    %c0_457 = arith.constant 0 : index
    %299 = vector.load %arg16[%c141_456, %c0_457] : memref<282x128xf32, #tpu.memory_space<vmem>>, vector<21x128xf32>
    %c63_458 = arith.constant 63 : index
    %c128_459 = arith.constant 128 : index
    %300 = vector.load %arg17[%c63_458, %c128_459] : memref<126x1024xf32, #tpu.memory_space<vmem>>, vector<21x128xf32>
    tpu.vector_store %arg17[%c63_458, %c128_459], %299 {strides = array<i32>} : memref<126x1024xf32, #tpu.memory_space<vmem>>, vector<21x128xf32>,
    %c165_460 = arith.constant 165 : index
    %c0_461 = arith.constant 0 : index
    %301 = vector.load %arg16[%c165_460, %c0_461] : memref<282x128xf32, #tpu.memory_space<vmem>>, vector<21x128xf32>
    %c63_462 = arith.constant 63 : index
    %c256_463 = arith.constant 256 : index
    %302 = vector.load %arg17[%c63_462, %c256_463] : memref<126x1024xf32, #tpu.memory_space<vmem>>, vector<21x128xf32>
    tpu.vector_store %arg17[%c63_462, %c256_463], %301 {strides = array<i32>} : memref<126x1024xf32, #tpu.memory_space<vmem>>, vector<21x128xf32>,
    %c142_464 = arith.constant 142 : index
    %c0_465 = arith.constant 0 : index
    %303 = vector.load %arg16[%c142_464, %c0_465] : memref<282x128xf32, #tpu.memory_space<vmem>>, vector<21x128xf32>
    %c63_466 = arith.constant 63 : index
    %c384_467 = arith.constant 384 : index
    %304 = vector.load %arg17[%c63_466, %c384_467] : memref<126x1024xf32, #tpu.memory_space<vmem>>, vector<21x128xf32>
    tpu.vector_store %arg17[%c63_466, %c384_467], %303 {strides = array<i32>} : memref<126x1024xf32, #tpu.memory_space<vmem>>, vector<21x128xf32>,
    %c166 = arith.constant 166 : index
    %c0_468 = arith.constant 0 : index
    %305 = vector.load %arg16[%c166, %c0_468] : memref<282x128xf32, #tpu.memory_space<vmem>>, vector<21x128xf32>
    %c63_469 = arith.constant 63 : index
    %c512_470 = arith.constant 512 : index
    %306 = vector.load %arg17[%c63_469, %c512_470] : memref<126x1024xf32, #tpu.memory_space<vmem>>, vector<21x128xf32>
    tpu.vector_store %arg17[%c63_469, %c512_470], %305 {strides = array<i32>} : memref<126x1024xf32, #tpu.memory_space<vmem>>, vector<21x128xf32>,
    %c143 = arith.constant 143 : index
    %c0_471 = arith.constant 0 : index
    %307 = vector.load %arg16[%c143, %c0_471] : memref<282x128xf32, #tpu.memory_space<vmem>>, vector<21x128xf32>
    %c63_472 = arith.constant 63 : index
    %c640_473 = arith.constant 640 : index
    %308 = vector.load %arg17[%c63_472, %c640_473] : memref<126x1024xf32, #tpu.memory_space<vmem>>, vector<21x128xf32>
    tpu.vector_store %arg17[%c63_472, %c640_473], %307 {strides = array<i32>} : memref<126x1024xf32, #tpu.memory_space<vmem>>, vector<21x128xf32>,
    %c167 = arith.constant 167 : index
    %c0_474 = arith.constant 0 : index
    %309 = vector.load %arg16[%c167, %c0_474] : memref<282x128xf32, #tpu.memory_space<vmem>>, vector<21x128xf32>
    %c63_475 = arith.constant 63 : index
    %c768_476 = arith.constant 768 : index
    %310 = vector.load %arg17[%c63_475, %c768_476] : memref<126x1024xf32, #tpu.memory_space<vmem>>, vector<21x128xf32>
    tpu.vector_store %arg17[%c63_475, %c768_476], %309 {strides = array<i32>} : memref<126x1024xf32, #tpu.memory_space<vmem>>, vector<21x128xf32>,
    %c144 = arith.constant 144 : index
    %c0_477 = arith.constant 0 : index
    %311 = vector.load %arg16[%c144, %c0_477] : memref<282x128xf32, #tpu.memory_space<vmem>>, vector<21x128xf32>
    %c63_478 = arith.constant 63 : index
    %c896_479 = arith.constant 896 : index
    %312 = vector.load %arg17[%c63_478, %c896_479] : memref<126x1024xf32, #tpu.memory_space<vmem>>, vector<21x128xf32>
    tpu.vector_store %arg17[%c63_478, %c896_479], %311 {strides = array<i32>} : memref<126x1024xf32, #tpu.memory_space<vmem>>, vector<21x128xf32>,
    %c212_480 = arith.constant 212 : index
    %c0_481 = arith.constant 0 : index
    %313 = vector.load %arg16[%c212_480, %c0_481] : memref<282x128xf32, #tpu.memory_space<vmem>>, vector<20x128xf32>
    %c85 = arith.constant 85 : index
    %c0_482 = arith.constant 0 : index
    %314 = vector.load %arg17[%c85, %c0_482] : memref<126x1024xf32, #tpu.memory_space<vmem>>, vector<20x128xf32>
    tpu.vector_store %arg17[%c85, %c0_482], %313 {strides = array<i32>} : memref<126x1024xf32, #tpu.memory_space<vmem>>, vector<20x128xf32>,
    %cst_483 = arith.constant 0.000000e+00 : f32
    %315 = vector.broadcast %cst_483 : f32 to vector<1x128xf32>
    %c84 = arith.constant 84 : index
    %c0_484 = arith.constant 0 : index
    %316 = vector.load %arg17[%c84, %c0_484] : memref<126x1024xf32, #tpu.memory_space<vmem>>, vector<1x128xf32>
    tpu.vector_store %arg17[%c84, %c0_484], %315 {strides = array<i32>} : memref<126x1024xf32, #tpu.memory_space<vmem>>, vector<1x128xf32>,
    %c188_485 = arith.constant 188 : index
    %c0_486 = arith.constant 0 : index
    %317 = vector.load %arg16[%c188_485, %c0_486] : memref<282x128xf32, #tpu.memory_space<vmem>>, vector<21x128xf32>
    %c84_487 = arith.constant 84 : index
    %c128_488 = arith.constant 128 : index
    %318 = vector.load %arg17[%c84_487, %c128_488] : memref<126x1024xf32, #tpu.memory_space<vmem>>, vector<21x128xf32>
    tpu.vector_store %arg17[%c84_487, %c128_488], %317 {strides = array<i32>} : memref<126x1024xf32, #tpu.memory_space<vmem>>, vector<21x128xf32>,
    %c212_489 = arith.constant 212 : index
    %c0_490 = arith.constant 0 : index
    %319 = vector.load %arg16[%c212_489, %c0_490] : memref<282x128xf32, #tpu.memory_space<vmem>>, vector<21x128xf32>
    %c84_491 = arith.constant 84 : index
    %c256_492 = arith.constant 256 : index
    %320 = vector.load %arg17[%c84_491, %c256_492] : memref<126x1024xf32, #tpu.memory_space<vmem>>, vector<21x128xf32>
    tpu.vector_store %arg17[%c84_491, %c256_492], %319 {strides = array<i32>} : memref<126x1024xf32, #tpu.memory_space<vmem>>, vector<21x128xf32>,
    %c189_493 = arith.constant 189 : index
    %c0_494 = arith.constant 0 : index
    %321 = vector.load %arg16[%c189_493, %c0_494] : memref<282x128xf32, #tpu.memory_space<vmem>>, vector<21x128xf32>
    %c84_495 = arith.constant 84 : index
    %c384_496 = arith.constant 384 : index
    %322 = vector.load %arg17[%c84_495, %c384_496] : memref<126x1024xf32, #tpu.memory_space<vmem>>, vector<21x128xf32>
    tpu.vector_store %arg17[%c84_495, %c384_496], %321 {strides = array<i32>} : memref<126x1024xf32, #tpu.memory_space<vmem>>, vector<21x128xf32>,
    %c213 = arith.constant 213 : index
    %c0_497 = arith.constant 0 : index
    %323 = vector.load %arg16[%c213, %c0_497] : memref<282x128xf32, #tpu.memory_space<vmem>>, vector<21x128xf32>
    %c84_498 = arith.constant 84 : index
    %c512_499 = arith.constant 512 : index
    %324 = vector.load %arg17[%c84_498, %c512_499] : memref<126x1024xf32, #tpu.memory_space<vmem>>, vector<21x128xf32>
    tpu.vector_store %arg17[%c84_498, %c512_499], %323 {strides = array<i32>} : memref<126x1024xf32, #tpu.memory_space<vmem>>, vector<21x128xf32>,
    %c190 = arith.constant 190 : index
    %c0_500 = arith.constant 0 : index
    %325 = vector.load %arg16[%c190, %c0_500] : memref<282x128xf32, #tpu.memory_space<vmem>>, vector<21x128xf32>
    %c84_501 = arith.constant 84 : index
    %c640_502 = arith.constant 640 : index
    %326 = vector.load %arg17[%c84_501, %c640_502] : memref<126x1024xf32, #tpu.memory_space<vmem>>, vector<21x128xf32>
    tpu.vector_store %arg17[%c84_501, %c640_502], %325 {strides = array<i32>} : memref<126x1024xf32, #tpu.memory_space<vmem>>, vector<21x128xf32>,
    %c214 = arith.constant 214 : index
    %c0_503 = arith.constant 0 : index
    %327 = vector.load %arg16[%c214, %c0_503] : memref<282x128xf32, #tpu.memory_space<vmem>>, vector<21x128xf32>
    %c84_504 = arith.constant 84 : index
    %c768_505 = arith.constant 768 : index
    %328 = vector.load %arg17[%c84_504, %c768_505] : memref<126x1024xf32, #tpu.memory_space<vmem>>, vector<21x128xf32>
    tpu.vector_store %arg17[%c84_504, %c768_505], %327 {strides = array<i32>} : memref<126x1024xf32, #tpu.memory_space<vmem>>, vector<21x128xf32>,
    %c191 = arith.constant 191 : index
    %c0_506 = arith.constant 0 : index
    %329 = vector.load %arg16[%c191, %c0_506] : memref<282x128xf32, #tpu.memory_space<vmem>>, vector<21x128xf32>
    %c84_507 = arith.constant 84 : index
    %c896_508 = arith.constant 896 : index
    %330 = vector.load %arg17[%c84_507, %c896_508] : memref<126x1024xf32, #tpu.memory_space<vmem>>, vector<21x128xf32>
    tpu.vector_store %arg17[%c84_507, %c896_508], %329 {strides = array<i32>} : memref<126x1024xf32, #tpu.memory_space<vmem>>, vector<21x128xf32>,
    %c259_509 = arith.constant 259 : index
    %c0_510 = arith.constant 0 : index
    %331 = vector.load %arg16[%c259_509, %c0_510] : memref<282x128xf32, #tpu.memory_space<vmem>>, vector<20x128xf32>
    %c106 = arith.constant 106 : index
    %c0_511 = arith.constant 0 : index
    %332 = vector.load %arg17[%c106, %c0_511] : memref<126x1024xf32, #tpu.memory_space<vmem>>, vector<20x128xf32>
    tpu.vector_store %arg17[%c106, %c0_511], %331 {strides = array<i32>} : memref<126x1024xf32, #tpu.memory_space<vmem>>, vector<20x128xf32>,
    %cst_512 = arith.constant 0.000000e+00 : f32
    %333 = vector.broadcast %cst_512 : f32 to vector<1x128xf32>
    %c105 = arith.constant 105 : index
    %c0_513 = arith.constant 0 : index
    %334 = vector.load %arg17[%c105, %c0_513] : memref<126x1024xf32, #tpu.memory_space<vmem>>, vector<1x128xf32>
    tpu.vector_store %arg17[%c105, %c0_513], %333 {strides = array<i32>} : memref<126x1024xf32, #tpu.memory_space<vmem>>, vector<1x128xf32>,
    %c235_514 = arith.constant 235 : index
    %c0_515 = arith.constant 0 : index
    %335 = vector.load %arg16[%c235_514, %c0_515] : memref<282x128xf32, #tpu.memory_space<vmem>>, vector<21x128xf32>
    %c105_516 = arith.constant 105 : index
    %c128_517 = arith.constant 128 : index
    %336 = vector.load %arg17[%c105_516, %c128_517] : memref<126x1024xf32, #tpu.memory_space<vmem>>, vector<21x128xf32>
    tpu.vector_store %arg17[%c105_516, %c128_517], %335 {strides = array<i32>} : memref<126x1024xf32, #tpu.memory_space<vmem>>, vector<21x128xf32>,
    %c259_518 = arith.constant 259 : index
    %c0_519 = arith.constant 0 : index
    %337 = vector.load %arg16[%c259_518, %c0_519] : memref<282x128xf32, #tpu.memory_space<vmem>>, vector<21x128xf32>
    %c105_520 = arith.constant 105 : index
    %c256_521 = arith.constant 256 : index
    %338 = vector.load %arg17[%c105_520, %c256_521] : memref<126x1024xf32, #tpu.memory_space<vmem>>, vector<21x128xf32>
    tpu.vector_store %arg17[%c105_520, %c256_521], %337 {strides = array<i32>} : memref<126x1024xf32, #tpu.memory_space<vmem>>, vector<21x128xf32>,
    %c236_522 = arith.constant 236 : index
    %c0_523 = arith.constant 0 : index
    %339 = vector.load %arg16[%c236_522, %c0_523] : memref<282x128xf32, #tpu.memory_space<vmem>>, vector<21x128xf32>
    %c105_524 = arith.constant 105 : index
    %c384_525 = arith.constant 384 : index
    %340 = vector.load %arg17[%c105_524, %c384_525] : memref<126x1024xf32, #tpu.memory_space<vmem>>, vector<21x128xf32>
    tpu.vector_store %arg17[%c105_524, %c384_525], %339 {strides = array<i32>} : memref<126x1024xf32, #tpu.memory_space<vmem>>, vector<21x128xf32>,
    %c260 = arith.constant 260 : index
    %c0_526 = arith.constant 0 : index
    %341 = vector.load %arg16[%c260, %c0_526] : memref<282x128xf32, #tpu.memory_space<vmem>>, vector<21x128xf32>
    %c105_527 = arith.constant 105 : index
    %c512_528 = arith.constant 512 : index
    %342 = vector.load %arg17[%c105_527, %c512_528] : memref<126x1024xf32, #tpu.memory_space<vmem>>, vector<21x128xf32>
    tpu.vector_store %arg17[%c105_527, %c512_528], %341 {strides = array<i32>} : memref<126x1024xf32, #tpu.memory_space<vmem>>, vector<21x128xf32>,
    %c237 = arith.constant 237 : index
    %c0_529 = arith.constant 0 : index
    %343 = vector.load %arg16[%c237, %c0_529] : memref<282x128xf32, #tpu.memory_space<vmem>>, vector<21x128xf32>
    %c105_530 = arith.constant 105 : index
    %c640_531 = arith.constant 640 : index
    %344 = vector.load %arg17[%c105_530, %c640_531] : memref<126x1024xf32, #tpu.memory_space<vmem>>, vector<21x128xf32>
    tpu.vector_store %arg17[%c105_530, %c640_531], %343 {strides = array<i32>} : memref<126x1024xf32, #tpu.memory_space<vmem>>, vector<21x128xf32>,
    %c261 = arith.constant 261 : index
    %c0_532 = arith.constant 0 : index
    %345 = vector.load %arg16[%c261, %c0_532] : memref<282x128xf32, #tpu.memory_space<vmem>>, vector<21x128xf32>
    %c105_533 = arith.constant 105 : index
    %c768_534 = arith.constant 768 : index
    %346 = vector.load %arg17[%c105_533, %c768_534] : memref<126x1024xf32, #tpu.memory_space<vmem>>, vector<21x128xf32>
    tpu.vector_store %arg17[%c105_533, %c768_534], %345 {strides = array<i32>} : memref<126x1024xf32, #tpu.memory_space<vmem>>, vector<21x128xf32>,
    %c238 = arith.constant 238 : index
    %c0_535 = arith.constant 0 : index
    %347 = vector.load %arg16[%c238, %c0_535] : memref<282x128xf32, #tpu.memory_space<vmem>>, vector<21x128xf32>
    %c105_536 = arith.constant 105 : index
    %c896_537 = arith.constant 896 : index
    %348 = vector.load %arg17[%c105_536, %c896_537] : memref<126x1024xf32, #tpu.memory_space<vmem>>, vector<21x128xf32>
    tpu.vector_store %arg17[%c105_536, %c896_537], %347 {strides = array<i32>} : memref<126x1024xf32, #tpu.memory_space<vmem>>, vector<21x128xf32>,
    %c0_538 = arith.constant 0 : index
    %c0_539 = arith.constant 0 : index
    %349 = vector.load %arg17[%c0_538, %c0_539] : memref<126x1024xf32, #tpu.memory_space<vmem>>, vector<126x1024xf32>
    %350 = arith.truncf %349 : vector<126x1024xf32> to vector<126x1024xbf16>
    %c0_540 = arith.constant 0 : index
    %c0_541 = arith.constant 0 : index
    %351 = vector.load %arg7[%c0_540, %c0_541] : memref<1024x256xbf16, #tpu.memory_space<vmem>>, vector<1024x256xbf16>
    %cst_542 = arith.constant dense<0.000000e+00> : vector<126x256xf32>
    %352 = tpu.matmul %350, %351, %cst_542 {dimension_numbers = #tpu.dot_dimension_numbers<[1], [0], [0], [1], [0, 0, 1, 1], [], []>} : vector<126x1024xbf16>, vector<1024x256xbf16>, vector<126x256xf32> -> vector<126x256xf32>
    %c0_543 = arith.constant 0 : index
    %c0_544 = arith.constant 0 : index
    %353 = vector.load %arg8[%c0_543, %c0_544] : memref<1x256xf32, #tpu.memory_space<vmem>>, vector<1x256xf32>
    %354 = vector.broadcast %353 : vector<1x256xf32> to vector<126x256xf32>
    %355 = arith.mulf %352, %354 : vector<126x256xf32>
    %c0_545 = arith.constant 0 : index
    %c0_546 = arith.constant 0 : index
    %356 = vector.load %arg9[%c0_545, %c0_546] : memref<1x256xf32, #tpu.memory_space<vmem>>, vector<1x256xf32>
    %357 = vector.broadcast %356 : vector<1x256xf32> to vector<126x256xf32>
    %358 = arith.addf %355, %357 : vector<126x256xf32>
    %cst_547 = arith.constant 0.000000e+00 : f32
    %359 = vector.broadcast %cst_547 : f32 to vector<126x256xf32>
    %360 = arith.maximumf %358, %359 : vector<126x256xf32>
    %c0_548 = arith.constant 0 : index
    %c0_549 = arith.constant 0 : index
    %361 = vector.load %arg11[%c0_548, %c0_549] : memref<2x126xf32, #tpu.memory_space<vmem>>, vector<2x126xf32>
    %c0_550 = arith.constant 0 : index
    %c0_551 = arith.constant 0 : index
    %c0_552 = arith.constant 0 : index
    %362 = vector.load %arg10[%c0_550, %c0_551, %c0_552] : memref<6x126x256xf32, #tpu.memory_space<vmem>>, vector<1x126x256xf32>
    %363 = vector.shape_cast %362 : vector<1x126x256xf32> to vector<126x256xf32>
    %364 = arith.mulf %360, %363 : vector<126x256xf32>
    %cst_553 = arith.constant dense<0.000000e+00> : vector<2x256xf32>
    %365 = tpu.matmul %361, %364, %cst_553 {dimension_numbers = #tpu.dot_dimension_numbers<[1], [0], [0], [1], [0, 0, 1, 1], [], []>} : vector<2x126xf32>, vector<126x256xf32>, vector<2x256xf32> -> vector<2x256xf32>
    %cst_554 = arith.constant dense<0.000000e+00> : vector<2xf32>
    %366 = vector.multi_reduction <add>, %365, %cst_554 [1] : vector<2x256xf32> to vector<2xf32>
    %367 = vector.shape_cast %366 : vector<2xf32> to vector<2x1xf32>
    %c0_555 = arith.constant 0 : index
    %c0_556 = arith.constant 0 : index
    %368 = vector.load %arg12[%c0_555, %c0_556] : memref<1x6xf32, #tpu.memory_space<vmem>>, vector<1x1xf32>
    %369 = vector.broadcast %368 : vector<1x1xf32> to vector<2x1xf32>
    %370 = arith.addf %367, %369 : vector<2x1xf32>
    %c0_557 = arith.constant 0 : index
    %c0_558 = arith.constant 0 : index
    %371 = vector.load %arg13[%c0_557, %c0_558] : memref<2x6xf32, #tpu.memory_space<vmem>>, vector<2x1xf32>
    tpu.vector_store %arg13[%c0_557, %c0_558], %370 {strides = array<i32>} : memref<2x6xf32, #tpu.memory_space<vmem>>, vector<2x1xf32>,
    %c1_559 = arith.constant 1 : index
    %c0_560 = arith.constant 0 : index
    %c0_561 = arith.constant 0 : index
    %372 = vector.load %arg10[%c1_559, %c0_560, %c0_561] : memref<6x126x256xf32, #tpu.memory_space<vmem>>, vector<1x126x256xf32>
    %373 = vector.shape_cast %372 : vector<1x126x256xf32> to vector<126x256xf32>
    %374 = arith.mulf %360, %373 : vector<126x256xf32>
    %cst_562 = arith.constant dense<0.000000e+00> : vector<2x256xf32>
    %375 = tpu.matmul %361, %374, %cst_562 {dimension_numbers = #tpu.dot_dimension_numbers<[1], [0], [0], [1], [0, 0, 1, 1], [], []>} : vector<2x126xf32>, vector<126x256xf32>, vector<2x256xf32> -> vector<2x256xf32>
    %cst_563 = arith.constant dense<0.000000e+00> : vector<2xf32>
    %376 = vector.multi_reduction <add>, %375, %cst_563 [1] : vector<2x256xf32> to vector<2xf32>
    %377 = vector.shape_cast %376 : vector<2xf32> to vector<2x1xf32>
    %c0_564 = arith.constant 0 : index
    %c1_565 = arith.constant 1 : index
    %378 = vector.load %arg12[%c0_564, %c1_565] : memref<1x6xf32, #tpu.memory_space<vmem>>, vector<1x1xf32>
    %379 = vector.broadcast %378 : vector<1x1xf32> to vector<2x1xf32>
    %380 = arith.addf %377, %379 : vector<2x1xf32>
    %c0_566 = arith.constant 0 : index
    %c1_567 = arith.constant 1 : index
    %381 = vector.load %arg13[%c0_566, %c1_567] : memref<2x6xf32, #tpu.memory_space<vmem>>, vector<2x1xf32>
    tpu.vector_store %arg13[%c0_566, %c1_567], %380 {strides = array<i32>} : memref<2x6xf32, #tpu.memory_space<vmem>>, vector<2x1xf32>,
    %c2_568 = arith.constant 2 : index
    %c0_569 = arith.constant 0 : index
    %c0_570 = arith.constant 0 : index
    %382 = vector.load %arg10[%c2_568, %c0_569, %c0_570] : memref<6x126x256xf32, #tpu.memory_space<vmem>>, vector<1x126x256xf32>
    %383 = vector.shape_cast %382 : vector<1x126x256xf32> to vector<126x256xf32>
    %384 = arith.mulf %360, %383 : vector<126x256xf32>
    %cst_571 = arith.constant dense<0.000000e+00> : vector<2x256xf32>
    %385 = tpu.matmul %361, %384, %cst_571 {dimension_numbers = #tpu.dot_dimension_numbers<[1], [0], [0], [1], [0, 0, 1, 1], [], []>} : vector<2x126xf32>, vector<126x256xf32>, vector<2x256xf32> -> vector<2x256xf32>
    %cst_572 = arith.constant dense<0.000000e+00> : vector<2xf32>
    %386 = vector.multi_reduction <add>, %385, %cst_572 [1] : vector<2x256xf32> to vector<2xf32>
    %387 = vector.shape_cast %386 : vector<2xf32> to vector<2x1xf32>
    %c0_573 = arith.constant 0 : index
    %c2_574 = arith.constant 2 : index
    %388 = vector.load %arg12[%c0_573, %c2_574] : memref<1x6xf32, #tpu.memory_space<vmem>>, vector<1x1xf32>
    %389 = vector.broadcast %388 : vector<1x1xf32> to vector<2x1xf32>
    %390 = arith.addf %387, %389 : vector<2x1xf32>
    %c0_575 = arith.constant 0 : index
    %c2_576 = arith.constant 2 : index
    %391 = vector.load %arg13[%c0_575, %c2_576] : memref<2x6xf32, #tpu.memory_space<vmem>>, vector<2x1xf32>
    tpu.vector_store %arg13[%c0_575, %c2_576], %390 {strides = array<i32>} : memref<2x6xf32, #tpu.memory_space<vmem>>, vector<2x1xf32>,
    %c3_577 = arith.constant 3 : index
    %c0_578 = arith.constant 0 : index
    %c0_579 = arith.constant 0 : index
    %392 = vector.load %arg10[%c3_577, %c0_578, %c0_579] : memref<6x126x256xf32, #tpu.memory_space<vmem>>, vector<1x126x256xf32>
    %393 = vector.shape_cast %392 : vector<1x126x256xf32> to vector<126x256xf32>
    %394 = arith.mulf %360, %393 : vector<126x256xf32>
    %cst_580 = arith.constant dense<0.000000e+00> : vector<2x256xf32>
    %395 = tpu.matmul %361, %394, %cst_580 {dimension_numbers = #tpu.dot_dimension_numbers<[1], [0], [0], [1], [0, 0, 1, 1], [], []>} : vector<2x126xf32>, vector<126x256xf32>, vector<2x256xf32> -> vector<2x256xf32>
    %cst_581 = arith.constant dense<0.000000e+00> : vector<2xf32>
    %396 = vector.multi_reduction <add>, %395, %cst_581 [1] : vector<2x256xf32> to vector<2xf32>
    %397 = vector.shape_cast %396 : vector<2xf32> to vector<2x1xf32>
    %c0_582 = arith.constant 0 : index
    %c3_583 = arith.constant 3 : index
    %398 = vector.load %arg12[%c0_582, %c3_583] : memref<1x6xf32, #tpu.memory_space<vmem>>, vector<1x1xf32>
    %399 = vector.broadcast %398 : vector<1x1xf32> to vector<2x1xf32>
    %400 = arith.addf %397, %399 : vector<2x1xf32>
    %c0_584 = arith.constant 0 : index
    %c3_585 = arith.constant 3 : index
    %401 = vector.load %arg13[%c0_584, %c3_585] : memref<2x6xf32, #tpu.memory_space<vmem>>, vector<2x1xf32>
    tpu.vector_store %arg13[%c0_584, %c3_585], %400 {strides = array<i32>} : memref<2x6xf32, #tpu.memory_space<vmem>>, vector<2x1xf32>,
    %c4 = arith.constant 4 : index
    %c0_586 = arith.constant 0 : index
    %c0_587 = arith.constant 0 : index
    %402 = vector.load %arg10[%c4, %c0_586, %c0_587] : memref<6x126x256xf32, #tpu.memory_space<vmem>>, vector<1x126x256xf32>
    %403 = vector.shape_cast %402 : vector<1x126x256xf32> to vector<126x256xf32>
    %404 = arith.mulf %360, %403 : vector<126x256xf32>
    %cst_588 = arith.constant dense<0.000000e+00> : vector<2x256xf32>
    %405 = tpu.matmul %361, %404, %cst_588 {dimension_numbers = #tpu.dot_dimension_numbers<[1], [0], [0], [1], [0, 0, 1, 1], [], []>} : vector<2x126xf32>, vector<126x256xf32>, vector<2x256xf32> -> vector<2x256xf32>
    %cst_589 = arith.constant dense<0.000000e+00> : vector<2xf32>
    %406 = vector.multi_reduction <add>, %405, %cst_589 [1] : vector<2x256xf32> to vector<2xf32>
    %407 = vector.shape_cast %406 : vector<2xf32> to vector<2x1xf32>
    %c0_590 = arith.constant 0 : index
    %c4_591 = arith.constant 4 : index
    %408 = vector.load %arg12[%c0_590, %c4_591] : memref<1x6xf32, #tpu.memory_space<vmem>>, vector<1x1xf32>
    %409 = vector.broadcast %408 : vector<1x1xf32> to vector<2x1xf32>
    %410 = arith.addf %407, %409 : vector<2x1xf32>
    %c0_592 = arith.constant 0 : index
    %c4_593 = arith.constant 4 : index
    %411 = vector.load %arg13[%c0_592, %c4_593] : memref<2x6xf32, #tpu.memory_space<vmem>>, vector<2x1xf32>
    tpu.vector_store %arg13[%c0_592, %c4_593], %410 {strides = array<i32>} : memref<2x6xf32, #tpu.memory_space<vmem>>, vector<2x1xf32>,
    %c5 = arith.constant 5 : index
    %c0_594 = arith.constant 0 : index
    %c0_595 = arith.constant 0 : index
    %412 = vector.load %arg10[%c5, %c0_594, %c0_595] : memref<6x126x256xf32, #tpu.memory_space<vmem>>, vector<1x126x256xf32>
    %413 = vector.shape_cast %412 : vector<1x126x256xf32> to vector<126x256xf32>
    %414 = arith.mulf %360, %413 : vector<126x256xf32>
    %cst_596 = arith.constant dense<0.000000e+00> : vector<2x256xf32>
    %415 = tpu.matmul %361, %414, %cst_596 {dimension_numbers = #tpu.dot_dimension_numbers<[1], [0], [0], [1], [0, 0, 1, 1], [], []>} : vector<2x126xf32>, vector<126x256xf32>, vector<2x256xf32> -> vector<2x256xf32>
    %cst_597 = arith.constant dense<0.000000e+00> : vector<2xf32>
    %416 = vector.multi_reduction <add>, %415, %cst_597 [1] : vector<2x256xf32> to vector<2xf32>
    %417 = vector.shape_cast %416 : vector<2xf32> to vector<2x1xf32>
    %c0_598 = arith.constant 0 : index
    %c5_599 = arith.constant 5 : index
    %418 = vector.load %arg12[%c0_598, %c5_599] : memref<1x6xf32, #tpu.memory_space<vmem>>, vector<1x1xf32>
    %419 = vector.broadcast %418 : vector<1x1xf32> to vector<2x1xf32>
    %420 = arith.addf %417, %419 : vector<2x1xf32>
    %c0_600 = arith.constant 0 : index
    %c5_601 = arith.constant 5 : index
    %421 = vector.load %arg13[%c0_600, %c5_601] : memref<2x6xf32, #tpu.memory_space<vmem>>, vector<2x1xf32>
    tpu.vector_store %arg13[%c0_600, %c5_601], %420 {strides = array<i32>} : memref<2x6xf32, #tpu.memory_space<vmem>>, vector<2x1xf32>,
    return
  }
}

</mosaic_0001>

<llo_original>
// kernel: cnn_forward.1
$region0: #{cnn_forward.1}
  #allocation0 [shape = 'u32[]', space=smem, size = 0x4, offset = 0x4, fixed_abs, tag = 'smem constant byte address 0x4 - core index']
  #allocation1 [shape = 'u32[144,128]{1,0:T(1,128)}', space=vmem, size = 0x12000, scoped, tag = 'internal scratch']
  #allocation2 [shape = 'f32[588,64]{1,0:T(8,128)}', space=vmem, size = 0x4a000, scoped, tag = 'scratch operand']
  #allocation3 [shape = 'f32[282,512]{1,0:T(8,128)}', space=vmem, size = 0x90000, scoped, tag = 'scratch operand']
  #allocation4 [shape = 'f32[282,128]{1,0:T(8,128)}', space=vmem, size = 0x24000, scoped, tag = 'scratch operand']
  #allocation5 [shape = 'f32[126,1024]{1,0:T(8,128)}', space=vmem, size = 0x80000, scoped, tag = 'scratch operand']
  %s0 = inlined_call_operand.vmem [shape: f32[588,8], index: 0, kind: input, shape index: {}]
  %s1 = inlined_call_operand.vmem [shape: f32[8,64], index: 1, kind: input, shape index: {}]
  %s2 = inlined_call_operand.vmem [shape: f32[1,64], index: 2, kind: input, shape index: {}]
  %s3 = inlined_call_operand.vmem [shape: f32[1,64], index: 3, kind: input, shape index: {}]
  %s4 = inlined_call_operand.vmem [shape: bf16[512,128], index: 4, kind: input, shape index: {}]
  %s5 = inlined_call_operand.vmem [shape: f32[1,128], index: 5, kind: input, shape index: {}]
  %s6 = inlined_call_operand.vmem [shape: f32[1,128], index: 6, kind: input, shape index: {}]
  %s7 = inlined_call_operand.vmem [shape: bf16[1024,256], index: 7, kind: input, shape index: {}]
  %s8 = inlined_call_operand.vmem [shape: f32[1,256], index: 8, kind: input, shape index: {}]
  %s9 = inlined_call_operand.vmem [shape: f32[1,256], index: 9, kind: input, shape index: {}]
  %s10 = inlined_call_operand.vmem [shape: f32[6,126,256], index: 10, kind: input, shape index: {}]
  %s11 = inlined_call_operand.vmem [shape: f32[2,126], index: 11, kind: input, shape index: {}]
  %s12 = inlined_call_operand.vmem [shape: f32[1,6], index: 12, kind: input, shape index: {}]
  %s13 = inlined_call_operand.hbm [shape: f32[2,6], index: 13, kind: output, shape index: {}]
  %s14 = sld [smem:[#allocation0]]
  $region62: #{cnn_forward.1} parent=0
    _
  %s16 = ssub.s32 1, %s14
  %s17 = scalar_select 0, %s16, %s14
  $region1: #{cnn_forward.1} parent=0
    #allocation6 [shape = 'u8[1024]{0}', space=vmem, size = 0x400, scoped, tag = 'output window, operand 0, single buffered']
    #allocation7 [shape = 's32[1]{0}', space=sflag, size = 0x4, scoped, tag = 'scoped memory for cnn_forward.1']
    %18 = vsyncpa [#allocation7], 0
    // Predicated region
    $region2: #{cnn_forward.1} parent=1 // pred_check
      _
    $region3: #{cnn_forward.1} parent=1 // pred_check_branch
      %20 = sbr.rel (0) target = $region5
    $region4: #{cnn_forward.1} parent=1 // pred_region
      _
    $region5: #{cnn_forward.1} parent=1 // pred_fallthru
      _
    // Predicated region
    $region6: #{cnn_forward.1} parent=1 // pred_check
      _
    $region7: #{cnn_forward.1} parent=1 // pred_check_branch
      %22 = sbr.rel (0) target = $region9
    $region8: #{cnn_forward.1} parent=1 // pred_region
      _
    $region9: #{cnn_forward.1} parent=1 // pred_fallthru
      _
    // Predicated region
    $region10: #{cnn_forward.1} parent=1 // pred_check
      _
    $region11: #{cnn_forward.1} parent=1 // pred_check_branch
      %24 = sbr.rel (0) target = $region13
    $region12: #{cnn_forward.1} parent=1 // pred_region
      _
    $region13: #{cnn_forward.1} parent=1 // pred_fallthru
      _
    // Predicated region
    $region14: #{cnn_forward.1} parent=1 // pred_check
      _
    $region15: #{cnn_forward.1} parent=1 // pred_check_branch
      %26 = sbr.rel (0) target = $region17
    $region16: #{cnn_forward.1} parent=1 // pred_region
      _
    $region17: #{cnn_forward.1} parent=1 // pred_fallthru
      _
    // Predicated region
    $region18: #{cnn_forward.1} parent=1 // pred_check
      _
    $region19: #{cnn_forward.1} parent=1 // pred_check_branch
      %28 = sbr.rel (0) target = $region21
    $region20: #{cnn_forward.1} parent=1 // pred_region
      _
    $region21: #{cnn_forward.1} parent=1 // pred_fallthru
      _
    // Predicated region
    $region22: #{cnn_forward.1} parent=1 // pred_check
      _
    $region23: #{cnn_forward.1} parent=1 // pred_check_branch
      %30 = sbr.rel (0) target = $region25
    $region24: #{cnn_forward.1} parent=1 // pred_region
      _
    $region25: #{cnn_forward.1} parent=1 // pred_fallthru
      _
    // Predicated region
    $region26: #{cnn_forward.1} parent=1 // pred_check
      _
    $region27: #{cnn_forward.1} parent=1 // pred_check_branch
      %32 = sbr.rel (0) target = $region29
    $region28: #{cnn_forward.1} parent=1 // pred_region
      _
    $region29: #{cnn_forward.1} parent=1 // pred_fallthru
      _
    // Predicated region
    $region30: #{cnn_forward.1} parent=1 // pred_check
      _
    $region31: #{cnn_forward.1} parent=1 // pred_check_branch
      %34 = sbr.rel (0) target = $region33
    $region32: #{cnn_forward.1} parent=1 // pred_region
      _
    $region33: #{cnn_forward.1} parent=1 // pred_fallthru
      _
    // Predicated region
    $region34: #{cnn_forward.1} parent=1 // pred_check
      _
    $region35: #{cnn_forward.1} parent=1 // pred_check_branch
      %36 = sbr.rel (0) target = $region37
    $region36: #{cnn_forward.1} parent=1 // pred_region
      _
    $region37: #{cnn_forward.1} parent=1 // pred_fallthru
      _
    // Predicated region
    $region38: #{cnn_forward.1} parent=1 // pred_check
      _
    $region39: #{cnn_forward.1} parent=1 // pred_check_branch
      %38 = sbr.rel (0) target = $region41
    $region40: #{cnn_forward.1} parent=1 // pred_region
      _
    $region41: #{cnn_forward.1} parent=1 // pred_fallthru
      _
    // Predicated region
    $region42: #{cnn_forward.1} parent=1 // pred_check
      _
    $region43: #{cnn_forward.1} parent=1 // pred_check_branch
      %40 = sbr.rel (0) target = $region45
    $region44: #{cnn_forward.1} parent=1 // pred_region
      _
    $region45: #{cnn_forward.1} parent=1 // pred_fallthru
      _
    // Predicated region
    $region46: #{cnn_forward.1} parent=1 // pred_check
      _
    $region47: #{cnn_forward.1} parent=1 // pred_check_branch
      %42 = sbr.rel (0) target = $region49
    $region48: #{cnn_forward.1} parent=1 // pred_region
      _
    $region49: #{cnn_forward.1} parent=1 // pred_fallthru
      _
    // Predicated region
    $region50: #{cnn_forward.1} parent=1 // pred_check
      _
    $region51: #{cnn_forward.1} parent=1 // pred_check_branch
      %44 = sbr.rel (0) target = $region53
    $region52: #{cnn_forward.1} parent=1 // pred_region
      _
    $region53: #{cnn_forward.1} parent=1 // pred_fallthru
      _
    %v46 = vld [vmem:[%s0] sm:$0xff]
    %v47 = vld [vmem:[%s0 + $0x8] sm:$0xff]
    %v48 = vld [vmem:[%s0 + $0x10] sm:$0xff]
    %v49 = vld [vmem:[%s0 + $0x18] sm:$0xff]
    %v50 = vld [vmem:[%s0 + $0x20] sm:$0xff]
    %v51 = vld [vmem:[%s0 + $0x28] sm:$0xff]
    %v52 = vld [vmem:[%s0 + $0x30] sm:$0xff]
    %v53 = vld [vmem:[%s0 + $0x38] sm:$0xff]
    %v54 = vld [vmem:[%s0 + $0x40] sm:$0xff]
    %v55 = vld [vmem:[%s0 + $0x48] sm:$0xff]
    %v56 = vld [vmem:[%s0 + $0x50] sm:$0xff]
    %v57 = vld [vmem:[%s0 + $0x58] sm:$0xff]
    %v58 = vld [vmem:[%s0 + $0x60] sm:$0xff]
    %v59 = vld [vmem:[%s0 + $0x68] sm:$0xff]
    %v60 = vld [vmem:[%s0 + $0x70] sm:$0xff]
    %v61 = vld [vmem:[%s0 + $0x78] sm:$0xff]
    %v62 = vld [vmem:[%s0 + $0x80] sm:$0xff]
    %v63 = vld [vmem:[%s0 + $0x88] sm:$0xff]
    %v64 = vld [vmem:[%s0 + $0x90] sm:$0xff]
    %v65 = vld [vmem:[%s0 + $0x98] sm:$0xff]
    %v66 = vld [vmem:[%s0 + $0xa0] sm:$0xff]
    %v67 = vld [vmem:[%s0 + $0xa8] sm:$0xff]
    %v68 = vld [vmem:[%s0 + $0xb0] sm:$0xff]
    %v69 = vld [vmem:[%s0 + $0xb8] sm:$0xff]
    %v70 = vld [vmem:[%s0 + $0xc0] sm:$0xff]
    %v71 = vld [vmem:[%s0 + $0xc8] sm:$0xff]
    %v72 = vld [vmem:[%s0 + $0xd0] sm:$0xff]
    %v73 = vld [vmem:[%s0 + $0xd8] sm:$0xff]
    %v74 = vld [vmem:[%s0 + $0xe0] sm:$0xff]
    %v75 = vld [vmem:[%s0 + $0xe8] sm:$0xff]
    %v76 = vld [vmem:[%s0 + $0xf0] sm:$0xff]
    %v77 = vld [vmem:[%s0 + $0xf8] sm:$0xff]
    %v78 = vld [vmem:[%s0 + $0x100] sm:$0xff]
    %v79 = vld [vmem:[%s0 + $0x108] sm:$0xff]
    %v80 = vld [vmem:[%s0 + $0x110] sm:$0xff]
    %v81 = vld [vmem:[%s0 + $0x118] sm:$0xff]
    %v82 = vld [vmem:[%s0 + $0x120] sm:$0xff]
    %v83 = vld [vmem:[%s0 + $0x128] sm:$0xff]
    %v84 = vld [vmem:[%s0 + $0x130] sm:$0xff]
    %v85 = vld [vmem:[%s0 + $0x138] sm:$0xff]
    %v86 = vld [vmem:[%s0 + $0x140] sm:$0xff]
    %v87 = vld [vmem:[%s0 + $0x148] sm:$0xff]
    %v88 = vld [vmem:[%s0 + $0x150] sm:$0xff]
    %v89 = vld [vmem:[%s0 + $0x158] sm:$0xff]
    %v90 = vld [vmem:[%s0 + $0x160] sm:$0xff]
    %v91 = vld [vmem:[%s0 + $0x168] sm:$0xff]
    %v92 = vld [vmem:[%s0 + $0x170] sm:$0xff]
    %v93 = vld [vmem:[%s0 + $0x178] sm:$0xff]
    %v94 = vld [vmem:[%s0 + $0x180] sm:$0xff]
    %v95 = vld [vmem:[%s0 + $0x188] sm:$0xff]
    %v96 = vld [vmem:[%s0 + $0x190] sm:$0xff]
    %v97 = vld [vmem:[%s0 + $0x198] sm:$0xff]
    %v98 = vld [vmem:[%s0 + $0x1a0] sm:$0xff]
    %v99 = vld [vmem:[%s0 + $0x1a8] sm:$0xff]
    %v100 = vld [vmem:[%s0 + $0x1b0] sm:$0xff]
    %v101 = vld [vmem:[%s0 + $0x1b8] sm:$0xff]
    %v102 = vld [vmem:[%s0 + $0x1c0] sm:$0xff]
    %v103 = vld [vmem:[%s0 + $0x1c8] sm:$0xff]
    %v104 = vld [vmem:[%s0 + $0x1d0] sm:$0xff]
    %v105 = vld [vmem:[%s0 + $0x1d8] sm:$0xff]
    %v106 = vld [vmem:[%s0 + $0x1e0] sm:$0xff]
    %v107 = vld [vmem:[%s0 + $0x1e8] sm:$0xff]
    %v108 = vld [vmem:[%s0 + $0x1f0] sm:$0xff]
    %v109 = vld [vmem:[%s0 + $0x1f8] sm:$0xff]
    %v110 = vld [vmem:[%s0 + $0x200] sm:$0xff]
    %v111 = vld [vmem:[%s0 + $0x208] sm:$0xff]
    %v112 = vld [vmem:[%s0 + $0x210] sm:$0xff]
    %v113 = vld [vmem:[%s0 + $0x218] sm:$0xff]
    %v114 = vld [vmem:[%s0 + $0x220] sm:$0xff]
    %v115 = vld [vmem:[%s0 + $0x228] sm:$0xff]
    %v116 = vld [vmem:[%s0 + $0x230] sm:$0xff]
    %v117 = vld [vmem:[%s0 + $0x238] sm:$0xff]
    %v118 = vld [vmem:[%s0 + $0x240] sm:$0xff]
    %v119 = vld [vmem:[%s0 + $0x248] sm:$0xf]
    %v120 = vld [vmem:[%s1] sm:$0xff]
    %vm121 = vcmask 64512
    %v123 = vsel %vm121, %v46, 0
    %v126 = vsel %vm121, %v47, 0
    %v129 = vsel %vm121, %v48, 0
    %v132 = vsel %vm121, %v49, 0
    %v135 = vsel %vm121, %v50, 0
    %v138 = vsel %vm121, %v51, 0
    %v141 = vsel %vm121, %v52, 0
    %v144 = vsel %vm121, %v53, 0
    %v147 = vsel %vm121, %v54, 0
    %v150 = vsel %vm121, %v55, 0
    %v153 = vsel %vm121, %v56, 0
    %v156 = vsel %vm121, %v57, 0
    %v159 = vsel %vm121, %v58, 0
    %v162 = vsel %vm121, %v59, 0
    %v165 = vsel %vm121, %v60, 0
    %v168 = vsel %vm121, %v61, 0
    %v171 = vsel %vm121, %v62, 0
    %v174 = vsel %vm121, %v63, 0
    %v177 = vsel %vm121, %v64, 0
    %v180 = vsel %vm121, %v65, 0
    %v183 = vsel %vm121, %v66, 0
    %v186 = vsel %vm121, %v67, 0
    %v189 = vsel %vm121, %v68, 0
    %v192 = vsel %vm121, %v69, 0
    %v195 = vsel %vm121, %v70, 0
    %v198 = vsel %vm121, %v71, 0
    %v201 = vsel %vm121, %v72, 0
    %v204 = vsel %vm121, %v73, 0
    %v207 = vsel %vm121, %v74, 0
    %v210 = vsel %vm121, %v75, 0
    %v213 = vsel %vm121, %v76, 0
    %v216 = vsel %vm121, %v77, 0
    %v219 = vsel %vm121, %v78, 0
    %v222 = vsel %vm121, %v79, 0
    %v225 = vsel %vm121, %v80, 0
    %v228 = vsel %vm121, %v81, 0
    %v231 = vsel %vm121, %v82, 0
    %v234 = vsel %vm121, %v83, 0
    %v237 = vsel %vm121, %v84, 0
    %v240 = vsel %vm121, %v85, 0
    %v243 = vsel %vm121, %v86, 0
    %v246 = vsel %vm121, %v87, 0
    %v249 = vsel %vm121, %v88, 0
    %v252 = vsel %vm121, %v89, 0
    %v255 = vsel %vm121, %v90, 0
    %v258 = vsel %vm121, %v91, 0
    %v261 = vsel %vm121, %v92, 0
    %v264 = vsel %vm121, %v93, 0
    %v267 = vsel %vm121, %v94, 0
    %v270 = vsel %vm121, %v95, 0
    %v273 = vsel %vm121, %v96, 0
    %v276 = vsel %vm121, %v97, 0
    %v279 = vsel %vm121, %v98, 0
    %v282 = vsel %vm121, %v99, 0
    %v285 = vsel %vm121, %v100, 0
    %v288 = vsel %vm121, %v101, 0
    %v291 = vsel %vm121, %v102, 0
    %v294 = vsel %vm121, %v103, 0
    %v297 = vsel %vm121, %v104, 0
    %v300 = vsel %vm121, %v105, 0
    %v303 = vsel %vm121, %v106, 0
    %v306 = vsel %vm121, %v107, 0
    %v309 = vsel %vm121, %v108, 0
    %v312 = vsel %vm121, %v109, 0
    %v315 = vsel %vm121, %v110, 0
    %v318 = vsel %vm121, %v111, 0
    %v321 = vsel %vm121, %v112, 0
    %v324 = vsel %vm121, %v113, 0
    %v327 = vsel %vm121, %v114, 0
    %v330 = vsel %vm121, %v115, 0
    %v333 = vsel %vm121, %v116, 0
    %v336 = vsel %vm121, %v117, 0
    %v339 = vsel %vm121, %v118, 0
    %v342 = vsel %vm121, %v119, 0
    %344 = vmatprep.subr.mxu0 0.0
    %345 = vmatpush1.msra.mxu0 0.0
    %346 = vmatprep.subr.mxu0 0.0
    %347 = vmatpush1.msra.mxu0 0.0
    %348 = vmatprep.subr.mxu0 0.0
    %349 = vmatpush1.msra.mxu0 0.0
    %350 = vmatprep.subr.mxu0 0.0
    %351 = vmatpush1.msra.mxu0 0.0
    %352 = vmatprep.subr.mxu0 0.0
    %353 = vmatpush1.msra.mxu0 0.0
    %354 = vmatprep.subr.mxu0 0.0
    %355 = vmatpush1.msra.mxu0 0.0
    %356 = vmatprep.subr.mxu0 0.0
    %357 = vmatpush1.msra.mxu0 0.0
    %358 = vmatprep.subr.mxu0 0.0
    %359 = vmatpush1.msra.mxu0 0.0
    %360 = vmatprep.subr.mxu0 0.0
    %361 = vmatpush1.msra.mxu0 0.0
    %362 = vmatprep.subr.mxu0 0.0
    %363 = vmatpush1.msra.mxu0 0.0
    %364 = vmatprep.subr.mxu0 0.0
    %365 = vmatpush1.msra.mxu0 0.0
    %366 = vmatprep.subr.mxu0 0.0
    %367 = vmatpush1.msra.mxu0 0.0
    %368 = vmatprep.subr.mxu0 0.0
    %369 = vmatpush1.msra.mxu0 0.0
    %370 = vmatprep.subr.mxu0 0.0
    %371 = vmatpush1.msra.mxu0 0.0
    %372 = vmatprep.subr.mxu0 0.0
    %373 = vmatpush1.msra.mxu0 0.0
    %374 = vmatprep.subr.mxu0 0.0
    %375 = vmatpush1.msra.mxu0 %v120
    %376 = vmatprep.subr.mxu0 0.0
    %377 = vmatpush2.msra.mxu0 0.0
    %378 = vmatprep.subr.mxu0 0.0
    %379 = vmatpush2.msra.mxu0 0.0
    %380 = vmatprep.subr.mxu0 0.0
    %381 = vmatpush2.msra.mxu0 0.0
    %382 = vmatprep.subr.mxu0 0.0
    %383 = vmatpush2.msra.mxu0 0.0
    %384 = vmatprep.subr.mxu0 0.0
    %385 = vmatpush2.msra.mxu0 0.0
    %386 = vmatprep.subr.mxu0 0.0
    %387 = vmatpush2.msra.mxu0 0.0
    %388 = vmatprep.subr.mxu0 0.0
    %389 = vmatpush2.msra.mxu0 0.0
    %390 = vmatprep.subr.mxu0 0.0
    %391 = vmatpush2.msra.mxu0 0.0
    %392 = vmatprep.subr.mxu0 0.0
    %393 = vmatpush2.msra.mxu0 0.0
    %394 = vmatprep.subr.mxu0 0.0
    %395 = vmatpush2.msra.mxu0 0.0
    %396 = vmatprep.subr.mxu0 0.0
    %397 = vmatpush2.msra.mxu0 0.0
    %398 = vmatprep.subr.mxu0 0.0
    %399 = vmatpush2.msra.mxu0 0.0
    %400 = vmatprep.subr.mxu0 0.0
    %401 = vmatpush2.msra.mxu0 0.0
    %402 = vmatprep.subr.mxu0 0.0
    %403 = vmatpush2.msra.mxu0 0.0
    %404 = vmatprep.subr.mxu0 0.0
    %405 = vmatpush2.msra.mxu0 0.0
    %406 = vmatprep.subr.mxu0 0.0
    %407 = vmatpush2.msra.mxu0 0.0
    %408 = vmatprep.mubr.f32.mxu0 0.0
    %409 = vmatmul.mubr.f32.gmra.mxu0 %v123
    %v410 = vpop.f32.mrf.mxu0
    %v411 = vadd.f32 0.0, %v410
    %v412 = vpop.f32.mrf.mxu0
    %413 = vmatprep.mubr.f32.mxu0 0.0
    %414 = vmatmul.mubr.f32.gmra.mxu0 %v126
    %v415 = vpop.f32.mrf.mxu0
    %v416 = vadd.f32 0.0, %v415
    %v417 = vpop.f32.mrf.mxu0
    %418 = vmatprep.mubr.f32.mxu0 0.0
    %419 = vmatmul.mubr.f32.gmra.mxu0 %v129
    %v420 = vpop.f32.mrf.mxu0
    %v421 = vadd.f32 0.0, %v420
    %v422 = vpop.f32.mrf.mxu0
    %423 = vmatprep.mubr.f32.mxu0 0.0
    %424 = vmatmul.mubr.f32.gmra.mxu0 %v132
    %v425 = vpop.f32.mrf.mxu0
    %v426 = vadd.f32 0.0, %v425
    %v427 = vpop.f32.mrf.mxu0
    %428 = vmatprep.mubr.f32.mxu0 0.0
    %429 = vmatmul.mubr.f32.gmra.mxu0 %v135
    %v430 = vpop.f32.mrf.mxu0
    %v431 = vadd.f32 0.0, %v430
    %v432 = vpop.f32.mrf.mxu0
    %433 = vmatprep.mubr.f32.mxu0 0.0
    %434 = vmatmul.mubr.f32.gmra.mxu0 %v138
    %v435 = vpop.f32.mrf.mxu0
    %v436 = vadd.f32 0.0, %v435
    %v437 = vpop.f32.mrf.mxu0
    %438 = vmatprep.mubr.f32.mxu0 0.0
    %439 = vmatmul.mubr.f32.gmra.mxu0 %v141
    %v440 = vpop.f32.mrf.mxu0
    %v441 = vadd.f32 0.0, %v440
    %v442 = vpop.f32.mrf.mxu0
    %443 = vmatprep.mubr.f32.mxu0 0.0
    %444 = vmatmul.mubr.f32.gmra.mxu0 %v144
    %v445 = vpop.f32.mrf.mxu0
    %v446 = vadd.f32 0.0, %v445
    %v447 = vpop.f32.mrf.mxu0
    %448 = vmatprep.mubr.f32.mxu0 0.0
    %449 = vmatmul.mubr.f32.gmra.mxu0 %v147
    %v450 = vpop.f32.mrf.mxu0
    %v451 = vadd.f32 0.0, %v450
    %v452 = vpop.f32.mrf.mxu0
    %453 = vmatprep.mubr.f32.mxu0 0.0
    %454 = vmatmul.mubr.f32.gmra.mxu0 %v150
    %v455 = vpop.f32.mrf.mxu0
    %v456 = vadd.f32 0.0, %v455
    %v457 = vpop.f32.mrf.mxu0
    %458 = vmatprep.mubr.f32.mxu0 0.0
    %459 = vmatmul.mubr.f32.gmra.mxu0 %v153
    %v460 = vpop.f32.mrf.mxu0
    %v461 = vadd.f32 0.0, %v460
    %v462 = vpop.f32.mrf.mxu0
    %463 = vmatprep.mubr.f32.mxu0 0.0
    %464 = vmatmul.mubr.f32.gmra.mxu0 %v156
    %v465 = vpop.f32.mrf.mxu0
    %v466 = vadd.f32 0.0, %v465
    %v467 = vpop.f32.mrf.mxu0
    %468 = vmatprep.mubr.f32.mxu0 0.0
    %469 = vmatmul.mubr.f32.gmra.mxu0 %v159
    %v470 = vpop.f32.mrf.mxu0
    %v471 = vadd.f32 0.0, %v470
    %v472 = vpop.f32.mrf.mxu0
    %473 = vmatprep.mubr.f32.mxu0 0.0
    %474 = vmatmul.mubr.f32.gmra.mxu0 %v162
    %v475 = vpop.f32.mrf.mxu0
    %v476 = vadd.f32 0.0, %v475
    %v477 = vpop.f32.mrf.mxu0
    %478 = vmatprep.mubr.f32.mxu0 0.0
    %479 = vmatmul.mubr.f32.gmra.mxu0 %v165
    %v480 = vpop.f32.mrf.mxu0
    %v481 = vadd.f32 0.0, %v480
    %v482 = vpop.f32.mrf.mxu0
    %483 = vmatprep.mubr.f32.mxu0 0.0
    %484 = vmatmul.mubr.f32.gmra.mxu0 %v168
    %v485 = vpop.f32.mrf.mxu0
    %v486 = vadd.f32 0.0, %v485
    %v487 = vpop.f32.mrf.mxu0
    %488 = vmatprep.mubr.f32.mxu0 0.0
    %489 = vmatmul.mubr.f32.gmra.mxu0 %v171
    %v490 = vpop.f32.mrf.mxu0
    %v491 = vadd.f32 0.0, %v490
    %v492 = vpop.f32.mrf.mxu0
    %493 = vmatprep.mubr.f32.mxu0 0.0
    %494 = vmatmul.mubr.f32.gmra.mxu0 %v174
    %v495 = vpop.f32.mrf.mxu0
    %v496 = vadd.f32 0.0, %v495
    %v497 = vpop.f32.mrf.mxu0
    %498 = vmatprep.mubr.f32.mxu0 0.0
    %499 = vmatmul.mubr.f32.gmra.mxu0 %v177
    %v500 = vpop.f32.mrf.mxu0
    %v501 = vadd.f32 0.0, %v500
    %v502 = vpop.f32.mrf.mxu0
    %503 = vmatprep.mubr.f32.mxu0 0.0
    %504 = vmatmul.mubr.f32.gmra.mxu0 %v180
    %v505 = vpop.f32.mrf.mxu0
    %v506 = vadd.f32 0.0, %v505
    %v507 = vpop.f32.mrf.mxu0
    %508 = vmatprep.mubr.f32.mxu0 0.0
    %509 = vmatmul.mubr.f32.gmra.mxu0 %v183
    %v510 = vpop.f32.mrf.mxu0
    %v511 = vadd.f32 0.0, %v510
    %v512 = vpop.f32.mrf.mxu0
    %513 = vmatprep.mubr.f32.mxu0 0.0
    %514 = vmatmul.mubr.f32.gmra.mxu0 %v186
    %v515 = vpop.f32.mrf.mxu0
    %v516 = vadd.f32 0.0, %v515
    %v517 = vpop.f32.mrf.mxu0
    %518 = vmatprep.mubr.f32.mxu0 0.0
    %519 = vmatmul.mubr.f32.gmra.mxu0 %v189
    %v520 = vpop.f32.mrf.mxu0
    %v521 = vadd.f32 0.0, %v520
    %v522 = vpop.f32.mrf.mxu0
    %523 = vmatprep.mubr.f32.mxu0 0.0
    %524 = vmatmul.mubr.f32.gmra.mxu0 %v192
    %v525 = vpop.f32.mrf.mxu0
    %v526 = vadd.f32 0.0, %v525
    %v527 = vpop.f32.mrf.mxu0
    %528 = vmatprep.mubr.f32.mxu0 0.0
    %529 = vmatmul.mubr.f32.gmra.mxu0 %v195
    %v530 = vpop.f32.mrf.mxu0
    %v531 = vadd.f32 0.0, %v530
    %v532 = vpop.f32.mrf.mxu0
    %533 = vmatprep.mubr.f32.mxu0 0.0
    %534 = vmatmul.mubr.f32.gmra.mxu0 %v198
    %v535 = vpop.f32.mrf.mxu0
    %v536 = vadd.f32 0.0, %v535
    %v537 = vpop.f32.mrf.mxu0
    %538 = vmatprep.mubr.f32.mxu0 0.0
    %539 = vmatmul.mubr.f32.gmra.mxu0 %v201
    %v540 = vpop.f32.mrf.mxu0
    %v541 = vadd.f32 0.0, %v540
    %v542 = vpop.f32.mrf.mxu0
    %543 = vmatprep.mubr.f32.mxu0 0.0
    %544 = vmatmul.mubr.f32.gmra.mxu0 %v204
    %v545 = vpop.f32.mrf.mxu0
    %v546 = vadd.f32 0.0, %v545
    %v547 = vpop.f32.mrf.mxu0
    %548 = vmatprep.mubr.f32.mxu0 0.0
    %549 = vmatmul.mubr.f32.gmra.mxu0 %v207
    %v550 = vpop.f32.mrf.mxu0
    %v551 = vadd.f32 0.0, %v550
    %v552 = vpop.f32.mrf.mxu0
    %553 = vmatprep.mubr.f32.mxu0 0.0
    %554 = vmatmul.mubr.f32.gmra.mxu0 %v210
    %v555 = vpop.f32.mrf.mxu0
    %v556 = vadd.f32 0.0, %v555
    %v557 = vpop.f32.mrf.mxu0
    %558 = vmatprep.mubr.f32.mxu0 0.0
    %559 = vmatmul.mubr.f32.gmra.mxu0 %v213
    %v560 = vpop.f32.mrf.mxu0
    %v561 = vadd.f32 0.0, %v560
    %v562 = vpop.f32.mrf.mxu0
    %563 = vmatprep.mubr.f32.mxu0 0.0
    %564 = vmatmul.mubr.f32.gmra.mxu0 %v216
    %v565 = vpop.f32.mrf.mxu0
    %v566 = vadd.f32 0.0, %v565
    %v567 = vpop.f32.mrf.mxu0
    %568 = vmatprep.mubr.f32.mxu0 0.0
    %569 = vmatmul.mubr.f32.gmra.mxu0 %v219
    %v570 = vpop.f32.mrf.mxu0
    %v571 = vadd.f32 0.0, %v570
    %v572 = vpop.f32.mrf.mxu0
    %573 = vmatprep.mubr.f32.mxu0 0.0
    %574 = vmatmul.mubr.f32.gmra.mxu0 %v222
    %v575 = vpop.f32.mrf.mxu0
    %v576 = vadd.f32 0.0, %v575
    %v577 = vpop.f32.mrf.mxu0
    %578 = vmatprep.mubr.f32.mxu0 0.0
    %579 = vmatmul.mubr.f32.gmra.mxu0 %v225
    %v580 = vpop.f32.mrf.mxu0
    %v581 = vadd.f32 0.0, %v580
    %v582 = vpop.f32.mrf.mxu0
    %583 = vmatprep.mubr.f32.mxu0 0.0
    %584 = vmatmul.mubr.f32.gmra.mxu0 %v228
    %v585 = vpop.f32.mrf.mxu0
    %v586 = vadd.f32 0.0, %v585
    %v587 = vpop.f32.mrf.mxu0
    %588 = vmatprep.mubr.f32.mxu0 0.0
    %589 = vmatmul.mubr.f32.gmra.mxu0 %v231
    %v590 = vpop.f32.mrf.mxu0
    %v591 = vadd.f32 0.0, %v590
    %v592 = vpop.f32.mrf.mxu0
    %593 = vmatprep.mubr.f32.mxu0 0.0
    %594 = vmatmul.mubr.f32.gmra.mxu0 %v234
    %v595 = vpop.f32.mrf.mxu0
    %v596 = vadd.f32 0.0, %v595
    %v597 = vpop.f32.mrf.mxu0
    %598 = vmatprep.mubr.f32.mxu0 0.0
    %599 = vmatmul.mubr.f32.gmra.mxu0 %v237
    %v600 = vpop.f32.mrf.mxu0
    %v601 = vadd.f32 0.0, %v600
    %v602 = vpop.f32.mrf.mxu0
    %603 = vmatprep.mubr.f32.mxu0 0.0
    %604 = vmatmul.mubr.f32.gmra.mxu0 %v240
    %v605 = vpop.f32.mrf.mxu0
    %v606 = vadd.f32 0.0, %v605
    %v607 = vpop.f32.mrf.mxu0
    %608 = vmatprep.mubr.f32.mxu0 0.0
    %609 = vmatmul.mubr.f32.gmra.mxu0 %v243
    %v610 = vpop.f32.mrf.mxu0
    %v611 = vadd.f32 0.0, %v610
    %v612 = vpop.f32.mrf.mxu0
    %613 = vmatprep.mubr.f32.mxu0 0.0
    %614 = vmatmul.mubr.f32.gmra.mxu0 %v246
    %v615 = vpop.f32.mrf.mxu0
    %v616 = vadd.f32 0.0, %v615
    %v617 = vpop.f32.mrf.mxu0
    %618 = vmatprep.mubr.f32.mxu0 0.0
    %619 = vmatmul.mubr.f32.gmra.mxu0 %v249
    %v620 = vpop.f32.mrf.mxu0
    %v621 = vadd.f32 0.0, %v620
    %v622 = vpop.f32.mrf.mxu0
    %623 = vmatprep.mubr.f32.mxu0 0.0
    %624 = vmatmul.mubr.f32.gmra.mxu0 %v252
    %v625 = vpop.f32.mrf.mxu0
    %v626 = vadd.f32 0.0, %v625
    %v627 = vpop.f32.mrf.mxu0
    %628 = vmatprep.mubr.f32.mxu0 0.0
    %629 = vmatmul.mubr.f32.gmra.mxu0 %v255
    %v630 = vpop.f32.mrf.mxu0
    %v631 = vadd.f32 0.0, %v630
    %v632 = vpop.f32.mrf.mxu0
    %633 = vmatprep.mubr.f32.mxu0 0.0
    %634 = vmatmul.mubr.f32.gmra.mxu0 %v258
    %v635 = vpop.f32.mrf.mxu0
    %v636 = vadd.f32 0.0, %v635
    %v637 = vpop.f32.mrf.mxu0
    %638 = vmatprep.mubr.f32.mxu0 0.0
    %639 = vmatmul.mubr.f32.gmra.mxu0 %v261
    %v640 = vpop.f32.mrf.mxu0
    %v641 = vadd.f32 0.0, %v640
    %v642 = vpop.f32.mrf.mxu0
    %643 = vmatprep.mubr.f32.mxu0 0.0
    %644 = vmatmul.mubr.f32.gmra.mxu0 %v264
    %v645 = vpop.f32.mrf.mxu0
    %v646 = vadd.f32 0.0, %v645
    %v647 = vpop.f32.mrf.mxu0
    %648 = vmatprep.mubr.f32.mxu0 0.0
    %649 = vmatmul.mubr.f32.gmra.mxu0 %v267
    %v650 = vpop.f32.mrf.mxu0
    %v651 = vadd.f32 0.0, %v650
    %v652 = vpop.f32.mrf.mxu0
    %653 = vmatprep.mubr.f32.mxu0 0.0
    %654 = vmatmul.mubr.f32.gmra.mxu0 %v270
    %v655 = vpop.f32.mrf.mxu0
    %v656 = vadd.f32 0.0, %v655
    %v657 = vpop.f32.mrf.mxu0
    %658 = vmatprep.mubr.f32.mxu0 0.0
    %659 = vmatmul.mubr.f32.gmra.mxu0 %v273
    %v660 = vpop.f32.mrf.mxu0
    %v661 = vadd.f32 0.0, %v660
    %v662 = vpop.f32.mrf.mxu0
    %663 = vmatprep.mubr.f32.mxu0 0.0
    %664 = vmatmul.mubr.f32.gmra.mxu0 %v276
    %v665 = vpop.f32.mrf.mxu0
    %v666 = vadd.f32 0.0, %v665
    %v667 = vpop.f32.mrf.mxu0
    %668 = vmatprep.mubr.f32.mxu0 0.0
    %669 = vmatmul.mubr.f32.gmra.mxu0 %v279
    %v670 = vpop.f32.mrf.mxu0
    %v671 = vadd.f32 0.0, %v670
    %v672 = vpop.f32.mrf.mxu0
    %673 = vmatprep.mubr.f32.mxu0 0.0
    %674 = vmatmul.mubr.f32.gmra.mxu0 %v282
    %v675 = vpop.f32.mrf.mxu0
    %v676 = vadd.f32 0.0, %v675
    %v677 = vpop.f32.mrf.mxu0
    %678 = vmatprep.mubr.f32.mxu0 0.0
    %679 = vmatmul.mubr.f32.gmra.mxu0 %v285
    %v680 = vpop.f32.mrf.mxu0
    %v681 = vadd.f32 0.0, %v680
    %v682 = vpop.f32.mrf.mxu0
    %683 = vmatprep.mubr.f32.mxu0 0.0
    %684 = vmatmul.mubr.f32.gmra.mxu0 %v288
    %v685 = vpop.f32.mrf.mxu0
    %v686 = vadd.f32 0.0, %v685
    %v687 = vpop.f32.mrf.mxu0
    %688 = vmatprep.mubr.f32.mxu0 0.0
    %689 = vmatmul.mubr.f32.gmra.mxu0 %v291
    %v690 = vpop.f32.mrf.mxu0
    %v691 = vadd.f32 0.0, %v690
    %v692 = vpop.f32.mrf.mxu0
    %693 = vmatprep.mubr.f32.mxu0 0.0
    %694 = vmatmul.mubr.f32.gmra.mxu0 %v294
    %v695 = vpop.f32.mrf.mxu0
    %v696 = vadd.f32 0.0, %v695
    %v697 = vpop.f32.mrf.mxu0
    %698 = vmatprep.mubr.f32.mxu0 0.0
    %699 = vmatmul.mubr.f32.gmra.mxu0 %v297
    %v700 = vpop.f32.mrf.mxu0
    %v701 = vadd.f32 0.0, %v700
    %v702 = vpop.f32.mrf.mxu0
    %703 = vmatprep.mubr.f32.mxu0 0.0
    %704 = vmatmul.mubr.f32.gmra.mxu0 %v300
    %v705 = vpop.f32.mrf.mxu0
    %v706 = vadd.f32 0.0, %v705
    %v707 = vpop.f32.mrf.mxu0
    %708 = vmatprep.mubr.f32.mxu0 0.0
    %709 = vmatmul.mubr.f32.gmra.mxu0 %v303
    %v710 = vpop.f32.mrf.mxu0
    %v711 = vadd.f32 0.0, %v710
    %v712 = vpop.f32.mrf.mxu0
    %713 = vmatprep.mubr.f32.mxu0 0.0
    %714 = vmatmul.mubr.f32.gmra.mxu0 %v306
    %v715 = vpop.f32.mrf.mxu0
    %v716 = vadd.f32 0.0, %v715
    %v717 = vpop.f32.mrf.mxu0
    %718 = vmatprep.mubr.f32.mxu0 0.0
    %719 = vmatmul.mubr.f32.gmra.mxu0 %v309
    %v720 = vpop.f32.mrf.mxu0
    %v721 = vadd.f32 0.0, %v720
    %v722 = vpop.f32.mrf.mxu0
    %723 = vmatprep.mubr.f32.mxu0 0.0
    %724 = vmatmul.mubr.f32.gmra.mxu0 %v312
    %v725 = vpop.f32.mrf.mxu0
    %v726 = vadd.f32 0.0, %v725
    %v727 = vpop.f32.mrf.mxu0
    %728 = vmatprep.mubr.f32.mxu0 0.0
    %729 = vmatmul.mubr.f32.gmra.mxu0 %v315
    %v730 = vpop.f32.mrf.mxu0
    %v731 = vadd.f32 0.0, %v730
    %v732 = vpop.f32.mrf.mxu0
    %733 = vmatprep.mubr.f32.mxu0 0.0
    %734 = vmatmul.mubr.f32.gmra.mxu0 %v318
    %v735 = vpop.f32.mrf.mxu0
    %v736 = vadd.f32 0.0, %v735
    %v737 = vpop.f32.mrf.mxu0
    %738 = vmatprep.mubr.f32.mxu0 0.0
    %739 = vmatmul.mubr.f32.gmra.mxu0 %v321
    %v740 = vpop.f32.mrf.mxu0
    %v741 = vadd.f32 0.0, %v740
    %v742 = vpop.f32.mrf.mxu0
    %743 = vmatprep.mubr.f32.mxu0 0.0
    %744 = vmatmul.mubr.f32.gmra.mxu0 %v324
    %v745 = vpop.f32.mrf.mxu0
    %v746 = vadd.f32 0.0, %v745
    %v747 = vpop.f32.mrf.mxu0
    %748 = vmatprep.mubr.f32.mxu0 0.0
    %749 = vmatmul.mubr.f32.gmra.mxu0 %v327
    %v750 = vpop.f32.mrf.mxu0
    %v751 = vadd.f32 0.0, %v750
    %v752 = vpop.f32.mrf.mxu0
    %753 = vmatprep.mubr.f32.mxu0 0.0
    %754 = vmatmul.mubr.f32.gmra.mxu0 %v330
    %v755 = vpop.f32.mrf.mxu0
    %v756 = vadd.f32 0.0, %v755
    %v757 = vpop.f32.mrf.mxu0
    %758 = vmatprep.mubr.f32.mxu0 0.0
    %759 = vmatmul.mubr.f32.gmra.mxu0 %v333
    %v760 = vpop.f32.mrf.mxu0
    %v761 = vadd.f32 0.0, %v760
    %v762 = vpop.f32.mrf.mxu0
    %763 = vmatprep.mubr.f32.mxu0 0.0
    %764 = vmatmul.mubr.f32.gmra.mxu0 %v336
    %v765 = vpop.f32.mrf.mxu0
    %v766 = vadd.f32 0.0, %v765
    %v767 = vpop.f32.mrf.mxu0
    %768 = vmatprep.mubr.f32.mxu0 0.0
    %769 = vmatmul.mubr.f32.gmra.mxu0 %v339
    %v770 = vpop.f32.mrf.mxu0
    %v771 = vadd.f32 0.0, %v770
    %v772 = vpop.f32.mrf.mxu0
    %773 = vmatprep.mubr.f32.mxu0 0.0
    %774 = vmatmul.mubr.f32.gmra.mxu0 %v342
    %v775 = vpop.f32.mrf.mxu0
    %v776 = vadd.f32 0.0, %v775
    %v777 = vpop.f32.mrf.mxu0
    %778 = vdwg.mxu0
    %v779 = vld [vmem:[%s2] sm:$0x1]
    %v781 = vlaneseq
    %v782 = vshrl.u32 %v781, 7
    %v783 = vsub.s32 0, %v782
    %v784 = vrot.slane %v779, %v783
    %v786 = vmul.f32 %v411, %v784
    %v787 = vmul.f32 %v416, %v784
    %v788 = vmul.f32 %v421, %v784
    %v789 = vmul.f32 %v426, %v784
    %v790 = vmul.f32 %v431, %v784
    %v791 = vmul.f32 %v436, %v784
    %v792 = vmul.f32 %v441, %v784
    %v793 = vmul.f32 %v446, %v784
    %v794 = vmul.f32 %v451, %v784
    %v795 = vmul.f32 %v456, %v784
    %v796 = vmul.f32 %v461, %v784
    %v797 = vmul.f32 %v466, %v784
    %v798 = vmul.f32 %v471, %v784
    %v799 = vmul.f32 %v476, %v784
    %v800 = vmul.f32 %v481, %v784
    %v801 = vmul.f32 %v486, %v784
    %v802 = vmul.f32 %v491, %v784
    %v803 = vmul.f32 %v496, %v784
    %v804 = vmul.f32 %v501, %v784
    %v805 = vmul.f32 %v506, %v784
    %v806 = vmul.f32 %v511, %v784
    %v807 = vmul.f32 %v516, %v784
    %v808 = vmul.f32 %v521, %v784
    %v809 = vmul.f32 %v526, %v784
    %v810 = vmul.f32 %v531, %v784
    %v811 = vmul.f32 %v536, %v784
    %v812 = vmul.f32 %v541, %v784
    %v813 = vmul.f32 %v546, %v784
    %v814 = vmul.f32 %v551, %v784
    %v815 = vmul.f32 %v556, %v784
    %v816 = vmul.f32 %v561, %v784
    %v817 = vmul.f32 %v566, %v784
    %v818 = vmul.f32 %v571, %v784
    %v819 = vmul.f32 %v576, %v784
    %v820 = vmul.f32 %v581, %v784
    %v821 = vmul.f32 %v586, %v784
    %v822 = vmul.f32 %v591, %v784
    %v823 = vmul.f32 %v596, %v784
    %v824 = vmul.f32 %v601, %v784
    %v825 = vmul.f32 %v606, %v784
    %v826 = vmul.f32 %v611, %v784
    %v827 = vmul.f32 %v616, %v784
    %v828 = vmul.f32 %v621, %v784
    %v829 = vmul.f32 %v626, %v784
    %v830 = vmul.f32 %v631, %v784
    %v831 = vmul.f32 %v636, %v784
    %v832 = vmul.f32 %v641, %v784
    %v833 = vmul.f32 %v646, %v784
    %v834 = vmul.f32 %v651, %v784
    %v835 = vmul.f32 %v656, %v784
    %v836 = vmul.f32 %v661, %v784
    %v837 = vmul.f32 %v666, %v784
    %v838 = vmul.f32 %v671, %v784
    %v839 = vmul.f32 %v676, %v784
    %v840 = vmul.f32 %v681, %v784
    %v841 = vmul.f32 %v686, %v784
    %v842 = vmul.f32 %v691, %v784
    %v843 = vmul.f32 %v696, %v784
    %v844 = vmul.f32 %v701, %v784
    %v845 = vmul.f32 %v706, %v784
    %v846 = vmul.f32 %v711, %v784
    %v847 = vmul.f32 %v716, %v784
    %v848 = vmul.f32 %v721, %v784
    %v849 = vmul.f32 %v726, %v784
    %v850 = vmul.f32 %v731, %v784
    %v851 = vmul.f32 %v736, %v784
    %v852 = vmul.f32 %v741, %v784
    %v853 = vmul.f32 %v746, %v784
    %v854 = vmul.f32 %v751, %v784
    %v855 = vmul.f32 %v756, %v784
    %v856 = vmul.f32 %v761, %v784
    %v857 = vmul.f32 %v766, %v784
    %v858 = vmul.f32 %v771, %v784
    %v859 = vmul.f32 %v776, %v784
    %v860 = vld [vmem:[%s3] sm:$0x1]
    %v862 = vlaneseq
    %v863 = vshrl.u32 %v862, 7
    %v864 = vsub.s32 0, %v863
    %v865 = vrot.slane %v860, %v864
    %v867 = vadd.f32 %v786, %v865
    %v868 = vadd.f32 %v787, %v865
    %v869 = vadd.f32 %v788, %v865
    %v870 = vadd.f32 %v789, %v865
    %v871 = vadd.f32 %v790, %v865
    %v872 = vadd.f32 %v791, %v865
    %v873 = vadd.f32 %v792, %v865
    %v874 = vadd.f32 %v793, %v865
    %v875 = vadd.f32 %v794, %v865
    %v876 = vadd.f32 %v795, %v865
    %v877 = vadd.f32 %v796, %v865
    %v878 = vadd.f32 %v797, %v865
    %v879 = vadd.f32 %v798, %v865
    %v880 = vadd.f32 %v799, %v865
    %v881 = vadd.f32 %v800, %v865
    %v882 = vadd.f32 %v801, %v865
    %v883 = vadd.f32 %v802, %v865
    %v884 = vadd.f32 %v803, %v865
    %v885 = vadd.f32 %v804, %v865
    %v886 = vadd.f32 %v805, %v865
    %v887 = vadd.f32 %v806, %v865
    %v888 = vadd.f32 %v807, %v865
    %v889 = vadd.f32 %v808, %v865
    %v890 = vadd.f32 %v809, %v865
    %v891 = vadd.f32 %v810, %v865
    %v892 = vadd.f32 %v811, %v865
    %v893 = vadd.f32 %v812, %v865
    %v894 = vadd.f32 %v813, %v865
    %v895 = vadd.f32 %v814, %v865
    %v896 = vadd.f32 %v815, %v865
    %v897 = vadd.f32 %v816, %v865
    %v898 = vadd.f32 %v817, %v865
    %v899 = vadd.f32 %v818, %v865
    %v900 = vadd.f32 %v819, %v865
    %v901 = vadd.f32 %v820, %v865
    %v902 = vadd.f32 %v821, %v865
    %v903 = vadd.f32 %v822, %v865
    %v904 = vadd.f32 %v823, %v865
    %v905 = vadd.f32 %v824, %v865
    %v906 = vadd.f32 %v825, %v865
    %v907 = vadd.f32 %v826, %v865
    %v908 = vadd.f32 %v827, %v865
    %v909 = vadd.f32 %v828, %v865
    %v910 = vadd.f32 %v829, %v865
    %v911 = vadd.f32 %v830, %v865
    %v912 = vadd.f32 %v831, %v865
    %v913 = vadd.f32 %v832, %v865
    %v914 = vadd.f32 %v833, %v865
    %v915 = vadd.f32 %v834, %v865
    %v916 = vadd.f32 %v835, %v865
    %v917 = vadd.f32 %v836, %v865
    %v918 = vadd.f32 %v837, %v865
    %v919 = vadd.f32 %v838, %v865
    %v920 = vadd.f32 %v839, %v865
    %v921 = vadd.f32 %v840, %v865
    %v922 = vadd.f32 %v841, %v865
    %v923 = vadd.f32 %v842, %v865
    %v924 = vadd.f32 %v843, %v865
    %v925 = vadd.f32 %v844, %v865
    %v926 = vadd.f32 %v845, %v865
    %v927 = vadd.f32 %v846, %v865
    %v928 = vadd.f32 %v847, %v865
    %v929 = vadd.f32 %v848, %v865
    %v930 = vadd.f32 %v849, %v865
    %v931 = vadd.f32 %v850, %v865
    %v932 = vadd.f32 %v851, %v865
    %v933 = vadd.f32 %v852, %v865
    %v934 = vadd.f32 %v853, %v865
    %v935 = vadd.f32 %v854, %v865
    %v936 = vadd.f32 %v855, %v865
    %v937 = vadd.f32 %v856, %v865
    %v938 = vadd.f32 %v857, %v865
    %v939 = vadd.f32 %v858, %v865
    %v940 = vadd.f32 %v859, %v865
    %v941 = vmax.f32 %v867, 0.0
    %v942 = vmax.f32 %v868, 0.0
    %v943 = vmax.f32 %v869, 0.0
    %v944 = vmax.f32 %v870, 0.0
    %v945 = vmax.f32 %v871, 0.0
    %v946 = vmax.f32 %v872, 0.0
    %v947 = vmax.f32 %v873, 0.0
    %v948 = vmax.f32 %v874, 0.0
    %v949 = vmax.f32 %v875, 0.0
    %v950 = vmax.f32 %v876, 0.0
    %v951 = vmax.f32 %v877, 0.0
    %v952 = vmax.f32 %v878, 0.0
    %v953 = vmax.f32 %v879, 0.0
    %v954 = vmax.f32 %v880, 0.0
    %v955 = vmax.f32 %v881, 0.0
    %v956 = vmax.f32 %v882, 0.0
    %v957 = vmax.f32 %v883, 0.0
    %v958 = vmax.f32 %v884, 0.0
    %v959 = vmax.f32 %v885, 0.0
    %v960 = vmax.f32 %v886, 0.0
    %v961 = vmax.f32 %v887, 0.0
    %v962 = vmax.f32 %v888, 0.0
    %v963 = vmax.f32 %v889, 0.0
    %v964 = vmax.f32 %v890, 0.0
    %v965 = vmax.f32 %v891, 0.0
    %v966 = vmax.f32 %v892, 0.0
    %v967 = vmax.f32 %v893, 0.0
    %v968 = vmax.f32 %v894, 0.0
    %v969 = vmax.f32 %v895, 0.0
    %v970 = vmax.f32 %v896, 0.0
    %v971 = vmax.f32 %v897, 0.0
    %v972 = vmax.f32 %v898, 0.0
    %v973 = vmax.f32 %v899, 0.0
    %v974 = vmax.f32 %v900, 0.0
    %v975 = vmax.f32 %v901, 0.0
    %v976 = vmax.f32 %v902, 0.0
    %v977 = vmax.f32 %v903, 0.0
    %v978 = vmax.f32 %v904, 0.0
    %v979 = vmax.f32 %v905, 0.0
    %v980 = vmax.f32 %v906, 0.0
    %v981 = vmax.f32 %v907, 0.0
    %v982 = vmax.f32 %v908, 0.0
    %v983 = vmax.f32 %v909, 0.0
    %v984 = vmax.f32 %v910, 0.0
    %v985 = vmax.f32 %v911, 0.0
    %v986 = vmax.f32 %v912, 0.0
    %v987 = vmax.f32 %v913, 0.0
    %v988 = vmax.f32 %v914, 0.0
    %v989 = vmax.f32 %v915, 0.0
    %v990 = vmax.f32 %v916, 0.0
    %v991 = vmax.f32 %v917, 0.0
    %v992 = vmax.f32 %v918, 0.0
    %v993 = vmax.f32 %v919, 0.0
    %v994 = vmax.f32 %v920, 0.0
    %v995 = vmax.f32 %v921, 0.0
    %v996 = vmax.f32 %v922, 0.0
    %v997 = vmax.f32 %v923, 0.0
    %v998 = vmax.f32 %v924, 0.0
    %v999 = vmax.f32 %v925, 0.0
    %v1000 = vmax.f32 %v926, 0.0
    %v1001 = vmax.f32 %v927, 0.0
    %v1002 = vmax.f32 %v928, 0.0
    %v1003 = vmax.f32 %v929, 0.0
    %v1004 = vmax.f32 %v930, 0.0
    %v1005 = vmax.f32 %v931, 0.0
    %v1006 = vmax.f32 %v932, 0.0
    %v1007 = vmax.f32 %v933, 0.0
    %v1008 = vmax.f32 %v934, 0.0
    %v1009 = vmax.f32 %v935, 0.0
    %v1010 = vmax.f32 %v936, 0.0
    %v1011 = vmax.f32 %v937, 0.0
    %v1012 = vmax.f32 %v938, 0.0
    %v1013 = vmax.f32 %v939, 0.0
    %v1014 = vmax.f32 %v940, 0.0
    %vm1015 = vcmask 523264
    %1016 = vst.msk [vmem:[#allocation2] sm:$0xff] %vm1015, %v941
    %1017 = vst.msk [vmem:[#allocation2 + $0x8] sm:$0xff] %vm1015, %v942
    %1018 = vst.msk [vmem:[#allocation2 + $0x10] sm:$0xff] %vm1015, %v943
    %1019 = vst.msk [vmem:[#allocation2 + $0x18] sm:$0xff] %vm1015, %v944
    %1020 = vst.msk [vmem:[#allocation2 + $0x20] sm:$0xff] %vm1015, %v945
    %1021 = vst.msk [vmem:[#allocation2 + $0x28] sm:$0xff] %vm1015, %v946
    %1022 = vst.msk [vmem:[#allocation2 + $0x30] sm:$0xff] %vm1015, %v947
    %1023 = vst.msk [vmem:[#allocation2 + $0x38] sm:$0xff] %vm1015, %v948
    %1024 = vst.msk [vmem:[#allocation2 + $0x40] sm:$0xff] %vm1015, %v949
    %1025 = vst.msk [vmem:[#allocation2 + $0x48] sm:$0xff] %vm1015, %v950
    %1026 = vst.msk [vmem:[#allocation2 + $0x50] sm:$0xff] %vm1015, %v951
    %1027 = vst.msk [vmem:[#allocation2 + $0x58] sm:$0xff] %vm1015, %v952
    %1028 = vst.msk [vmem:[#allocation2 + $0x60] sm:$0xff] %vm1015, %v953
    %1029 = vst.msk [vmem:[#allocation2 + $0x68] sm:$0xff] %vm1015, %v954
    %1030 = vst.msk [vmem:[#allocation2 + $0x70] sm:$0xff] %vm1015, %v955
    %1031 = vst.msk [vmem:[#allocation2 + $0x78] sm:$0xff] %vm1015, %v956
    %1032 = vst.msk [vmem:[#allocation2 + $0x80] sm:$0xff] %vm1015, %v957
    %1033 = vst.msk [vmem:[#allocation2 + $0x88] sm:$0xff] %vm1015, %v958
    %1034 = vst.msk [vmem:[#allocation2 + $0x90] sm:$0xff] %vm1015, %v959
    %1035 = vst.msk [vmem:[#allocation2 + $0x98] sm:$0xff] %vm1015, %v960
    %1036 = vst.msk [vmem:[#allocation2 + $0xa0] sm:$0xff] %vm1015, %v961
    %1037 = vst.msk [vmem:[#allocation2 + $0xa8] sm:$0xff] %vm1015, %v962
    %1038 = vst.msk [vmem:[#allocation2 + $0xb0] sm:$0xff] %vm1015, %v963
    %1039 = vst.msk [vmem:[#allocation2 + $0xb8] sm:$0xff] %vm1015, %v964
    %1040 = vst.msk [vmem:[#allocation2 + $0xc0] sm:$0xff] %vm1015, %v965
    %1041 = vst.msk [vmem:[#allocation2 + $0xc8] sm:$0xff] %vm1015, %v966
    %1042 = vst.msk [vmem:[#allocation2 + $0xd0] sm:$0xff] %vm1015, %v967
    %1043 = vst.msk [vmem:[#allocation2 + $0xd8] sm:$0xff] %vm1015, %v968
    %1044 = vst.msk [vmem:[#allocation2 + $0xe0] sm:$0xff] %vm1015, %v969
    %1045 = vst.msk [vmem:[#allocation2 + $0xe8] sm:$0xff] %vm1015, %v970
    %1046 = vst.msk [vmem:[#allocation2 + $0xf0] sm:$0xff] %vm1015, %v971
    %1047 = vst.msk [vmem:[#allocation2 + $0xf8] sm:$0xff] %vm1015, %v972
    %1048 = vst.msk [vmem:[#allocation2 + $0x100] sm:$0xff] %vm1015, %v973
    %1049 = vst.msk [vmem:[#allocation2 + $0x108] sm:$0xff] %vm1015, %v974
    %1050 = vst.msk [vmem:[#allocation2 + $0x110] sm:$0xff] %vm1015, %v975
    %1051 = vst.msk [vmem:[#allocation2 + $0x118] sm:$0xff] %vm1015, %v976
    %1052 = vst.msk [vmem:[#allocation2 + $0x120] sm:$0xff] %vm1015, %v977
    %1053 = vst.msk [vmem:[#allocation2 + $0x128] sm:$0xff] %vm1015, %v978
    %1054 = vst.msk [vmem:[#allocation2 + $0x130] sm:$0xff] %vm1015, %v979
    %1055 = vst.msk [vmem:[#allocation2 + $0x138] sm:$0xff] %vm1015, %v980
    %1056 = vst.msk [vmem:[#allocation2 + $0x140] sm:$0xff] %vm1015, %v981
    %1057 = vst.msk [vmem:[#allocation2 + $0x148] sm:$0xff] %vm1015, %v982
    %1058 = vst.msk [vmem:[#allocation2 + $0x150] sm:$0xff] %vm1015, %v983
    %1059 = vst.msk [vmem:[#allocation2 + $0x158] sm:$0xff] %vm1015, %v984
    %1060 = vst.msk [vmem:[#allocation2 + $0x160] sm:$0xff] %vm1015, %v985
    %1061 = vst.msk [vmem:[#allocation2 + $0x168] sm:$0xff] %vm1015, %v986
    %1062 = vst.msk [vmem:[#allocation2 + $0x170] sm:$0xff] %vm1015, %v987
    %1063 = vst.msk [vmem:[#allocation2 + $0x178] sm:$0xff] %vm1015, %v988
    %1064 = vst.msk [vmem:[#allocation2 + $0x180] sm:$0xff] %vm1015, %v989
    %1065 = vst.msk [vmem:[#allocation2 + $0x188] sm:$0xff] %vm1015, %v990
    %1066 = vst.msk [vmem:[#allocation2 + $0x190] sm:$0xff] %vm1015, %v991
    %1067 = vst.msk [vmem:[#allocation2 + $0x198] sm:$0xff] %vm1015, %v992
    %1068 = vst.msk [vmem:[#allocation2 + $0x1a0] sm:$0xff] %vm1015, %v993
    %1069 = vst.msk [vmem:[#allocation2 + $0x1a8] sm:$0xff] %vm1015, %v994
    %1070 = vst.msk [vmem:[#allocation2 + $0x1b0] sm:$0xff] %vm1015, %v995
    %1071 = vst.msk [vmem:[#allocation2 + $0x1b8] sm:$0xff] %vm1015, %v996
    %1072 = vst.msk [vmem:[#allocation2 + $0x1c0] sm:$0xff] %vm1015, %v997
    %1073 = vst.msk [vmem:[#allocation2 + $0x1c8] sm:$0xff] %vm1015, %v998
    %1074 = vst.msk [vmem:[#allocation2 + $0x1d0] sm:$0xff] %vm1015, %v999
    %1075 = vst.msk [vmem:[#allocation2 + $0x1d8] sm:$0xff] %vm1015, %v1000
    %1076 = vst.msk [vmem:[#allocation2 + $0x1e0] sm:$0xff] %vm1015, %v1001
    %1077 = vst.msk [vmem:[#allocation2 + $0x1e8] sm:$0xff] %vm1015, %v1002
    %1078 = vst.msk [vmem:[#allocation2 + $0x1f0] sm:$0xff] %vm1015, %v1003
    %1079 = vst.msk [vmem:[#allocation2 + $0x1f8] sm:$0xff] %vm1015, %v1004
    %1080 = vst.msk [vmem:[#allocation2 + $0x200] sm:$0xff] %vm1015, %v1005
    %1081 = vst.msk [vmem:[#allocation2 + $0x208] sm:$0xff] %vm1015, %v1006
    %1082 = vst.msk [vmem:[#allocation2 + $0x210] sm:$0xff] %vm1015, %v1007
    %1083 = vst.msk [vmem:[#allocation2 + $0x218] sm:$0xff] %vm1015, %v1008
    %1084 = vst.msk [vmem:[#allocation2 + $0x220] sm:$0xff] %vm1015, %v1009
    %1085 = vst.msk [vmem:[#allocation2 + $0x228] sm:$0xff] %vm1015, %v1010
    %1086 = vst.msk [vmem:[#allocation2 + $0x230] sm:$0xff] %vm1015, %v1011
    %1087 = vst.msk [vmem:[#allocation2 + $0x238] sm:$0xff] %vm1015, %v1012
    %1088 = vst.msk [vmem:[#allocation2 + $0x240] sm:$0xff] %vm1015, %v1013
    %vm1089 = vcmask 519168
    %1090 = vst.msk [vmem:[#allocation2 + $0x248] sm:$0xf] %vm1089, %v1014
    %v1091 = vld [vmem:[#allocation2 + $0x4a] sm:$0xff]
    %v1092 = vld [vmem:[#allocation2 + $0x52] sm:$0xff]
    %v1093 = vld [vmem:[#allocation2 + $0x5a] sm:$0x7f]
    %vm1097 = vcmask 1040384
    %v1098 = vrot.slane %v1091, 7
    %v1099 = vrot.slane %v1092, 7
    %v1100 = vsel %vm1097, %v1098, %v1099
    %v1101 = vrot.slane %v1093, 7
    %v1102 = vsel %vm1097, %v1099, %v1101
    %vm1106 = vcmask 523265
    %1107 = vst.msk [vmem:[#allocation3] sm:$0xfe] %vm1106, %v1098
    %1108 = vst.msk [vmem:[#allocation3 + $0x20] sm:$0xff] %vm1015, %v1100
    %1109 = vst.msk [vmem:[#allocation3 + $0x40] sm:$0xff] %vm1015, %v1102
    %vm1110 = vcmask 516096
    %1111 = vst.msk [vmem:[#allocation3] sm:$0x1] %vm1110, 0.0
    %v1112 = vld [vmem:[#allocation2] sm:$0xff]
    %v1113 = vld [vmem:[#allocation2 + $0x8] sm:$0xff]
    %v1114 = vld [vmem:[#allocation2 + $0x10] sm:$0xff]
    %1118 = vrot.lane.b32.xlu0 %v1112, 64
    %v1119 = vpop.permute.xlu0 %1118
    %1120 = vrot.lane.b32.xlu0 %v1113, 64
    %v1121 = vpop.permute.xlu0 %1120
    %1122 = vrot.lane.b32.xlu0 %v1114, 64
    %v1123 = vpop.permute.xlu0 %1122
    %vm1127 = vcmask 1048064
    %1128 = vst.msk [vmem:[#allocation3] sm:$0xff] %vm1127, %v1119
    %1129 = vst.msk [vmem:[#allocation3 + $0x20] sm:$0xff] %vm1127, %v1121
    %1130 = vst.msk [vmem:[#allocation3 + $0x40] sm:$0xff] %vm1127, %v1123
    %v1131 = vld [vmem:[#allocation2 + $0x19] sm:$0xff]
    %v1132 = vld [vmem:[#allocation2 + $0x21] sm:$0xff]
    %v1133 = vld [vmem:[#allocation2 + $0x29] sm:$0xff]
    %1134 = vst.msk [vmem:[#allocation3 + $0x8] sm:$0xff] %vm1015, %v1131
    %1135 = vst.msk [vmem:[#allocation3 + $0x28] sm:$0xff] %vm1015, %v1132
    %1136 = vst.msk [vmem:[#allocation3 + $0x48] sm:$0xff] %vm1015, %v1133
    %v1137 = vld [vmem:[#allocation2 + $0x32] sm:$0xff]
    %v1138 = vld [vmem:[#allocation2 + $0x3a] sm:$0xff]
    %v1139 = vld [vmem:[#allocation2 + $0x42] sm:$0xff]
    %1143 = vrot.lane.b32.xlu0 %v1137, 64
    %v1144 = vpop.permute.xlu0 %1143
    %1145 = vrot.lane.b32.xlu0 %v1138, 64
    %v1146 = vpop.permute.xlu0 %1145
    %1147 = vrot.lane.b32.xlu0 %v1139, 64
    %v1148 = vpop.permute.xlu0 %1147
    %1152 = vst.msk [vmem:[#allocation3 + $0x8] sm:$0xff] %vm1127, %v1144
    %1153 = vst.msk [vmem:[#allocation3 + $0x28] sm:$0xff] %vm1127, %v1146
    %1154 = vst.msk [vmem:[#allocation3 + $0x48] sm:$0xff] %vm1127, %v1148
    %v1155 = vld [vmem:[#allocation2 + $0x4a] sm:$0xff]
    %v1156 = vld [vmem:[#allocation2 + $0x52] sm:$0xff]
    %v1157 = vld [vmem:[#allocation2 + $0x5a] sm:$0xff]
    %1158 = vst.msk [vmem:[#allocation3 + $0x10] sm:$0xff] %vm1015, %v1155
    %1159 = vst.msk [vmem:[#allocation3 + $0x30] sm:$0xff] %vm1015, %v1156
    %1160 = vst.msk [vmem:[#allocation3 + $0x50] sm:$0xff] %vm1015, %v1157
    %v1161 = vld [vmem:[#allocation2 + $0x1] sm:$0xff]
    %v1162 = vld [vmem:[#allocation2 + $0x9] sm:$0xff]
    %v1163 = vld [vmem:[#allocation2 + $0x11] sm:$0xff]
    %1167 = vrot.lane.b32.xlu0 %v1161, 64
    %v1168 = vpop.permute.xlu0 %1167
    %1169 = vrot.lane.b32.xlu0 %v1162, 64
    %v1170 = vpop.permute.xlu0 %1169
    %1171 = vrot.lane.b32.xlu0 %v1163, 64
    %v1172 = vpop.permute.xlu0 %1171
    %1176 = vst.msk [vmem:[#allocation3 + $0x10] sm:$0xff] %vm1127, %v1168
    %1177 = vst.msk [vmem:[#allocation3 + $0x30] sm:$0xff] %vm1127, %v1170
    %1178 = vst.msk [vmem:[#allocation3 + $0x50] sm:$0xff] %vm1127, %v1172
    %v1179 = vld [vmem:[#allocation2 + $0x1a] sm:$0xff]
    %v1180 = vld [vmem:[#allocation2 + $0x22] sm:$0xff]
    %v1181 = vld [vmem:[#allocation2 + $0x2a] sm:$0xff]
    %1182 = vst.msk [vmem:[#allocation3 + $0x18] sm:$0xff] %vm1015, %v1179
    %1183 = vst.msk [vmem:[#allocation3 + $0x38] sm:$0xff] %vm1015, %v1180
    %1184 = vst.msk [vmem:[#allocation3 + $0x58] sm:$0xff] %vm1015, %v1181
    %v1185 = vld [vmem:[#allocation2 + $0x33] sm:$0xff]
    %v1186 = vld [vmem:[#allocation2 + $0x3b] sm:$0xff]
    %v1187 = vld [vmem:[#allocation2 + $0x43] sm:$0x7f]
    %1191 = vrot.lane.b32.xlu0 %v1185, 64
    %v1192 = vpop.permute.xlu0 %1191
    %1193 = vrot.lane.b32.xlu0 %v1186, 64
    %v1194 = vpop.permute.xlu0 %1193
    %1195 = vrot.lane.b32.xlu0 %v1187, 64
    %v1196 = vpop.permute.xlu0 %1195
    %1200 = vst.msk [vmem:[#allocation3 + $0x18] sm:$0xff] %vm1127, %v1192
    %1201 = vst.msk [vmem:[#allocation3 + $0x38] sm:$0xff] %vm1127, %v1194
    %vm1202 = vcmask 1047040
    %1203 = vst.msk [vmem:[#allocation3 + $0x58] sm:$0x7f] %vm1202, %v1196
    %vm1204 = vcmask 1040896
    %1205 = vst.msk [vmem:[#allocation3 + $0x5f] sm:$0x1] %vm1204, 0.0
    %v1206 = vld [vmem:[#allocation2 + $0x19] sm:$0xff]
    %v1207 = vld [vmem:[#allocation2 + $0x21] sm:$0xff]
    %v1208 = vld [vmem:[#allocation2 + $0x29] sm:$0x7f]
    %1209 = vst.msk [vmem:[#allocation3 + $0x60] sm:$0xff] %vm1015, %v1206
    %1210 = vst.msk [vmem:[#allocation3 + $0x80] sm:$0xff] %vm1015, %v1207
    %vm1211 = vcmask 522240
    %1212 = vst.msk [vmem:[#allocation3 + $0xa0] sm:$0x7f] %vm1211, %v1208
    %v1213 = vld [vmem:[#allocation2 + $0x32] sm:$0xff]
    %v1214 = vld [vmem:[#allocation2 + $0x3a] sm:$0xff]
    %v1215 = vld [vmem:[#allocation2 + $0x42] sm:$0x7f]
    %1219 = vrot.lane.b32.xlu0 %v1213, 64
    %v1220 = vpop.permute.xlu0 %1219
    %1221 = vrot.lane.b32.xlu0 %v1214, 64
    %v1222 = vpop.permute.xlu0 %1221
    %1223 = vrot.lane.b32.xlu0 %v1215, 64
    %v1224 = vpop.permute.xlu0 %1223
    %1228 = vst.msk [vmem:[#allocation3 + $0x60] sm:$0xff] %vm1127, %v1220
    %1229 = vst.msk [vmem:[#allocation3 + $0x80] sm:$0xff] %vm1127, %v1222
    %1230 = vst.msk [vmem:[#allocation3 + $0xa0] sm:$0x7f] %vm1202, %v1224
    %v1231 = vld [vmem:[#allocation2 + $0x4a] sm:$0xff]
    %v1232 = vld [vmem:[#allocation2 + $0x52] sm:$0xff]
    %v1233 = vld [vmem:[#allocation2 + $0x5a] sm:$0x7f]
    %1234 = vst.msk [vmem:[#allocation3 + $0x68] sm:$0xff] %vm1015, %v1231
    %1235 = vst.msk [vmem:[#allocation3 + $0x88] sm:$0xff] %vm1015, %v1232
    %1236 = vst.msk [vmem:[#allocation3 + $0xa8] sm:$0x7f] %vm1211, %v1233
    %v1237 = vld [vmem:[#allocation2 + $0x1] sm:$0xff]
    %v1238 = vld [vmem:[#allocation2 + $0x9] sm:$0xff]
    %v1239 = vld [vmem:[#allocation2 + $0x11] sm:$0x7f]
    %1243 = vrot.lane.b32.xlu0 %v1237, 64
    %v1244 = vpop.permute.xlu0 %1243
    %1245 = vrot.lane.b32.xlu0 %v1238, 64
    %v1246 = vpop.permute.xlu0 %1245
    %1247 = vrot.lane.b32.xlu0 %v1239, 64
    %v1248 = vpop.permute.xlu0 %1247
    %1252 = vst.msk [vmem:[#allocation3 + $0x68] sm:$0xff] %vm1127, %v1244
    %1253 = vst.msk [vmem:[#allocation3 + $0x88] sm:$0xff] %vm1127, %v1246
    %1254 = vst.msk [vmem:[#allocation3 + $0xa8] sm:$0x7f] %vm1202, %v1248
    %v1255 = vld [vmem:[#allocation2 + $0x1a] sm:$0xff]
    %v1256 = vld [vmem:[#allocation2 + $0x22] sm:$0xff]
    %v1257 = vld [vmem:[#allocation2 + $0x2a] sm:$0x7f]
    %1258 = vst.msk [vmem:[#allocation3 + $0x70] sm:$0xff] %vm1015, %v1255
    %1259 = vst.msk [vmem:[#allocation3 + $0x90] sm:$0xff] %vm1015, %v1256
    %1260 = vst.msk [vmem:[#allocation3 + $0xb0] sm:$0x7f] %vm1211, %v1257
    %v1261 = vld [vmem:[#allocation2 + $0x33] sm:$0xff]
    %v1262 = vld [vmem:[#allocation2 + $0x3b] sm:$0xff]
    %v1263 = vld [vmem:[#allocation2 + $0x43] sm:$0x7f]
    %1267 = vrot.lane.b32.xlu0 %v1261, 64
    %v1268 = vpop.permute.xlu0 %1267
    %1269 = vrot.lane.b32.xlu0 %v1262, 64
    %v1270 = vpop.permute.xlu0 %1269
    %1271 = vrot.lane.b32.xlu0 %v1263, 64
    %v1272 = vpop.permute.xlu0 %1271
    %1276 = vst.msk [vmem:[#allocation3 + $0x70] sm:$0xff] %vm1127, %v1268
    %1277 = vst.msk [vmem:[#allocation3 + $0x90] sm:$0xff] %vm1127, %v1270
    %1278 = vst.msk [vmem:[#allocation3 + $0xb0] sm:$0x7f] %vm1202, %v1272
    %v1279 = vld [vmem:[#allocation2 + $0x4b] sm:$0xff]
    %v1280 = vld [vmem:[#allocation2 + $0x53] sm:$0xff]
    %v1281 = vld [vmem:[#allocation2 + $0x5b] sm:$0x7f]
    %1282 = vst.msk [vmem:[#allocation3 + $0x78] sm:$0xff] %vm1015, %v1279
    %1283 = vst.msk [vmem:[#allocation3 + $0x98] sm:$0xff] %vm1015, %v1280
    %1284 = vst.msk [vmem:[#allocation3 + $0xb8] sm:$0x7f] %vm1211, %v1281
    %v1285 = vld [vmem:[#allocation2 + $0x2] sm:$0xff]
    %v1286 = vld [vmem:[#allocation2 + $0xa] sm:$0xff]
    %v1287 = vld [vmem:[#allocation2 + $0x12] sm:$0x7f]
    %1291 = vrot.lane.b32.xlu0 %v1285, 64
    %v1292 = vpop.permute.xlu0 %1291
    %1293 = vrot.lane.b32.xlu0 %v1286, 64
    %v1294 = vpop.permute.xlu0 %1293
    %1295 = vrot.lane.b32.xlu0 %v1287, 64
    %v1296 = vpop.permute.xlu0 %1295
    %1300 = vst.msk [vmem:[#allocation3 + $0x78] sm:$0xff] %vm1127, %v1292
    %1301 = vst.msk [vmem:[#allocation3 + $0x98] sm:$0xff] %vm1127, %v1294
    %1302 = vst.msk [vmem:[#allocation3 + $0xb8] sm:$0x7f] %vm1202, %v1296
    %v1303 = vld [vmem:[#allocation2 + $0xac] sm:$0xff]
    %v1304 = vld [vmem:[#allocation2 + $0xb4] sm:$0xff]
    %v1305 = vld [vmem:[#allocation2 + $0xbc] sm:$0x7f]
    %1306 = vst.msk [vmem:[#allocation3 + $0xc0] sm:$0xff] %vm1015, %v1303
    %1307 = vst.msk [vmem:[#allocation3 + $0xe0] sm:$0xff] %vm1015, %v1304
    %1308 = vst.msk [vmem:[#allocation3 + $0x100] sm:$0x7f] %vm1211, %v1305
    %1309 = vst.msk [vmem:[#allocation3 + $0xa7] sm:$0x1] %vm1110, 0.0
    %v1310 = vld [vmem:[#allocation2 + $0x62] sm:$0xff]
    %v1311 = vld [vmem:[#allocation2 + $0x6a] sm:$0xff]
    %v1312 = vld [vmem:[#allocation2 + $0x72] sm:$0xff]
    %vm1316 = vcmask 1046528
    %v1317 = vrot.slane %v1310, 1
    %v1318 = vrot.slane %v1311, 1
    %v1319 = vsel %vm1316, %v1317, %v1318
    %v1320 = vrot.slane %v1312, 1
    %v1321 = vsel %vm1316, %v1318, %v1320
    %1322 = vrot.lane.b32.xlu0 %v1317, 64
    %v1323 = vpop.permute.xlu0 %1322
    %1324 = vrot.lane.b32.xlu0 %v1319, 64
    %v1325 = vpop.permute.xlu0 %1324
    %1326 = vrot.lane.b32.xlu0 %v1321, 64
    %v1327 = vpop.permute.xlu0 %1326
    %1328 = vrot.lane.b32.xlu0 %v1320, 64
    %v1329 = vpop.permute.xlu0 %1328
    %vm1334 = vcmask 1048071
    %1335 = vst.msk [vmem:[#allocation3 + $0xa0] sm:$0x80] %vm1334, %v1323
    %1336 = vst.msk [vmem:[#allocation3 + $0xc0] sm:$0xff] %vm1127, %v1325
    %1337 = vst.msk [vmem:[#allocation3 + $0xe0] sm:$0xff] %vm1127, %v1327
    %1338 = vst.msk [vmem:[#allocation3 + $0x100] sm:$0x7f] %vm1202, %v1329
    %v1339 = vld [vmem:[#allocation2 + $0x7b] sm:$0xff]
    %v1340 = vld [vmem:[#allocation2 + $0x83] sm:$0xff]
    %v1341 = vld [vmem:[#allocation2 + $0x8b] sm:$0xff]
    %v1345 = vrot.slane %v1339, 1
    %v1346 = vrot.slane %v1340, 1
    %v1347 = vsel %vm1316, %v1345, %v1346
    %v1348 = vrot.slane %v1341, 1
    %v1349 = vsel %vm1316, %v1346, %v1348
    %vm1354 = vcmask 523271
    %1355 = vst.msk [vmem:[#allocation3 + $0xa8] sm:$0x80] %vm1354, %v1345
    %1356 = vst.msk [vmem:[#allocation3 + $0xc8] sm:$0xff] %vm1015, %v1347
    %1357 = vst.msk [vmem:[#allocation3 + $0xe8] sm:$0xff] %vm1015, %v1349
    %1358 = vst.msk [vmem:[#allocation3 + $0x108] sm:$0x7f] %vm1211, %v1348
    %v1359 = vld [vmem:[#allocation2 + $0x94] sm:$0xff]
    %v1360 = vld [vmem:[#allocation2 + $0x9c] sm:$0xff]
    %v1361 = vld [vmem:[#allocation2 + $0xa4] sm:$0xff]
    %v1365 = vrot.slane %v1359, 1
    %v1366 = vrot.slane %v1360, 1
    %v1367 = vsel %vm1316, %v1365, %v1366
    %v1368 = vrot.slane %v1361, 1
    %v1369 = vsel %vm1316, %v1366, %v1368
    %1370 = vrot.lane.b32.xlu0 %v1365, 64
    %v1371 = vpop.permute.xlu0 %1370
    %1372 = vrot.lane.b32.xlu0 %v1367, 64
    %v1373 = vpop.permute.xlu0 %1372
    %1374 = vrot.lane.b32.xlu0 %v1369, 64
    %v1375 = vpop.permute.xlu0 %1374
    %1376 = vrot.lane.b32.xlu0 %v1368, 64
    %v1377 = vpop.permute.xlu0 %1376
    %1382 = vst.msk [vmem:[#allocation3 + $0xa8] sm:$0x80] %vm1334, %v1371
    %1383 = vst.msk [vmem:[#allocation3 + $0xc8] sm:$0xff] %vm1127, %v1373
    %1384 = vst.msk [vmem:[#allocation3 + $0xe8] sm:$0xff] %vm1127, %v1375
    %1385 = vst.msk [vmem:[#allocation3 + $0x108] sm:$0x7f] %vm1202, %v1377
    %v1386 = vld [vmem:[#allocation2 + $0xac] sm:$0xff]
    %v1387 = vld [vmem:[#allocation2 + $0xb4] sm:$0xff]
    %v1388 = vld [vmem:[#allocation2 + $0xbc] sm:$0xff]
    %v1392 = vrot.slane %v1386, 1
    %v1393 = vrot.slane %v1387, 1
    %v1394 = vsel %vm1316, %v1392, %v1393
    %v1395 = vrot.slane %v1388, 1
    %v1396 = vsel %vm1316, %v1393, %v1395
    %1401 = vst.msk [vmem:[#allocation3 + $0xb0] sm:$0x80] %vm1354, %v1392
    %1402 = vst.msk [vmem:[#allocation3 + $0xd0] sm:$0xff] %vm1015, %v1394
    %1403 = vst.msk [vmem:[#allocation3 + $0xf0] sm:$0xff] %vm1015, %v1396
    %1404 = vst.msk [vmem:[#allocation3 + $0x110] sm:$0x7f] %vm1211, %v1395
    %v1405 = vld [vmem:[#allocation2 + $0x63] sm:$0xff]
    %v1406 = vld [vmem:[#allocation2 + $0x6b] sm:$0xff]
    %v1407 = vld [vmem:[#allocation2 + $0x73] sm:$0xff]
    %v1411 = vrot.slane %v1405, 1
    %v1412 = vrot.slane %v1406, 1
    %v1413 = vsel %vm1316, %v1411, %v1412
    %v1414 = vrot.slane %v1407, 1
    %v1415 = vsel %vm1316, %v1412, %v1414
    %1416 = vrot.lane.b32.xlu0 %v1411, 64
    %v1417 = vpop.permute.xlu0 %1416
    %1418 = vrot.lane.b32.xlu0 %v1413, 64
    %v1419 = vpop.permute.xlu0 %1418
    %1420 = vrot.lane.b32.xlu0 %v1415, 64
    %v1421 = vpop.permute.xlu0 %1420
    %1422 = vrot.lane.b32.xlu0 %v1414, 64
    %v1423 = vpop.permute.xlu0 %1422
    %1428 = vst.msk [vmem:[#allocation3 + $0xb0] sm:$0x80] %vm1334, %v1417
    %1429 = vst.msk [vmem:[#allocation3 + $0xd0] sm:$0xff] %vm1127, %v1419
    %1430 = vst.msk [vmem:[#allocation3 + $0xf0] sm:$0xff] %vm1127, %v1421
    %1431 = vst.msk [vmem:[#allocation3 + $0x110] sm:$0x7f] %vm1202, %v1423
    %v1432 = vld [vmem:[#allocation2 + $0x7c] sm:$0xff]
    %v1433 = vld [vmem:[#allocation2 + $0x84] sm:$0xff]
    %v1434 = vld [vmem:[#allocation2 + $0x8c] sm:$0xff]
    %v1438 = vrot.slane %v1432, 1
    %v1439 = vrot.slane %v1433, 1
    %v1440 = vsel %vm1316, %v1438, %v1439
    %v1441 = vrot.slane %v1434, 1
    %v1442 = vsel %vm1316, %v1439, %v1441
    %1447 = vst.msk [vmem:[#allocation3 + $0xb8] sm:$0x80] %vm1354, %v1438
    %1448 = vst.msk [vmem:[#allocation3 + $0xd8] sm:$0xff] %vm1015, %v1440
    %1449 = vst.msk [vmem:[#allocation3 + $0xf8] sm:$0xff] %vm1015, %v1442
    %1450 = vst.msk [vmem:[#allocation3 + $0x118] sm:$0x7f] %vm1211, %v1441
    %v1451 = vld [vmem:[#allocation2 + $0x95] sm:$0xff]
    %v1452 = vld [vmem:[#allocation2 + $0x9d] sm:$0xff]
    %v1453 = vld [vmem:[#allocation2 + $0xa5] sm:$0x7f]
    %v1457 = vrot.slane %v1451, 1
    %v1458 = vrot.slane %v1452, 1
    %v1459 = vsel %vm1316, %v1457, %v1458
    %v1460 = vrot.slane %v1453, 1
    %v1461 = vsel %vm1316, %v1458, %v1460
    %1462 = vrot.lane.b32.xlu0 %v1457, 64
    %v1463 = vpop.permute.xlu0 %1462
    %1464 = vrot.lane.b32.xlu0 %v1459, 64
    %v1465 = vpop.permute.xlu0 %1464
    %1466 = vrot.lane.b32.xlu0 %v1461, 64
    %v1467 = vpop.permute.xlu0 %1466
    %1468 = vrot.lane.b32.xlu0 %v1460, 64
    %v1469 = vpop.permute.xlu0 %1468
    %1474 = vst.msk [vmem:[#allocation3 + $0xb8] sm:$0x80] %vm1334, %v1463
    %1475 = vst.msk [vmem:[#allocation3 + $0xd8] sm:$0xff] %vm1127, %v1465
    %1476 = vst.msk [vmem:[#allocation3 + $0xf8] sm:$0xff] %vm1127, %v1467
    %vm1477 = vcmask 1046016
    %1478 = vst.msk [vmem:[#allocation3 + $0x118] sm:$0x3f] %vm1477, %v1469
    %1479 = vst.msk [vmem:[#allocation3 + $0x11e] sm:$0x1] %vm1204, 0.0
    %v1480 = vld [vmem:[#allocation2 + $0x7b] sm:$0xff]
    %v1481 = vld [vmem:[#allocation2 + $0x83] sm:$0xff]
    %v1482 = vld [vmem:[#allocation2 + $0x8b] sm:$0x7f]
    %v1486 = vrot.slane %v1480, 1
    %v1487 = vrot.slane %v1481, 1
    %v1488 = vsel %vm1316, %v1486, %v1487
    %v1489 = vrot.slane %v1482, 1
    %v1490 = vsel %vm1316, %v1487, %v1489
    %1495 = vst.msk [vmem:[#allocation3 + $0x100] sm:$0x80] %vm1354, %v1486
    %1496 = vst.msk [vmem:[#allocation3 + $0x120] sm:$0xff] %vm1015, %v1488
    %1497 = vst.msk [vmem:[#allocation3 + $0x140] sm:$0xff] %vm1015, %v1490
    %vm1498 = vcmask 521216
    %1499 = vst.msk [vmem:[#allocation3 + $0x160] sm:$0x3f] %vm1498, %v1489
    %v1500 = vld [vmem:[#allocation2 + $0x94] sm:$0xff]
    %v1501 = vld [vmem:[#allocation2 + $0x9c] sm:$0xff]
    %v1502 = vld [vmem:[#allocation2 + $0xa4] sm:$0x7f]
    %v1506 = vrot.slane %v1500, 1
    %v1507 = vrot.slane %v1501, 1
    %v1508 = vsel %vm1316, %v1506, %v1507
    %v1509 = vrot.slane %v1502, 1
    %v1510 = vsel %vm1316, %v1507, %v1509
    %1511 = vrot.lane.b32.xlu0 %v1506, 64
    %v1512 = vpop.permute.xlu0 %1511
    %1513 = vrot.lane.b32.xlu0 %v1508, 64
    %v1514 = vpop.permute.xlu0 %1513
    %1515 = vrot.lane.b32.xlu0 %v1510, 64
    %v1516 = vpop.permute.xlu0 %1515
    %1517 = vrot.lane.b32.xlu0 %v1509, 64
    %v1518 = vpop.permute.xlu0 %1517
    %1523 = vst.msk [vmem:[#allocation3 + $0x100] sm:$0x80] %vm1334, %v1512
    %1524 = vst.msk [vmem:[#allocation3 + $0x120] sm:$0xff] %vm1127, %v1514
    %1525 = vst.msk [vmem:[#allocation3 + $0x140] sm:$0xff] %vm1127, %v1516
    %1526 = vst.msk [vmem:[#allocation3 + $0x160] sm:$0x3f] %vm1477, %v1518
    %v1527 = vld [vmem:[#allocation2 + $0xac] sm:$0xff]
    %v1528 = vld [vmem:[#allocation2 + $0xb4] sm:$0xff]
    %v1529 = vld [vmem:[#allocation2 + $0xbc] sm:$0x7f]
    %v1533 = vrot.slane %v1527, 1
    %v1534 = vrot.slane %v1528, 1
    %v1535 = vsel %vm1316, %v1533, %v1534
    %v1536 = vrot.slane %v1529, 1
    %v1537 = vsel %vm1316, %v1534, %v1536
    %1542 = vst.msk [vmem:[#allocation3 + $0x108] sm:$0x80] %vm1354, %v1533
    %1543 = vst.msk [vmem:[#allocation3 + $0x128] sm:$0xff] %vm1015, %v1535
    %1544 = vst.msk [vmem:[#allocation3 + $0x148] sm:$0xff] %vm1015, %v1537
    %1545 = vst.msk [vmem:[#allocation3 + $0x168] sm:$0x3f] %vm1498, %v1536
    %v1546 = vld [vmem:[#allocation2 + $0x63] sm:$0xff]
    %v1547 = vld [vmem:[#allocation2 + $0x6b] sm:$0xff]
    %v1548 = vld [vmem:[#allocation2 + $0x73] sm:$0x7f]
    %v1552 = vrot.slane %v1546, 1
    %v1553 = vrot.slane %v1547, 1
    %v1554 = vsel %vm1316, %v1552, %v1553
    %v1555 = vrot.slane %v1548, 1
    %v1556 = vsel %vm1316, %v1553, %v1555
    %1557 = vrot.lane.b32.xlu0 %v1552, 64
    %v1558 = vpop.permute.xlu0 %1557
    %1559 = vrot.lane.b32.xlu0 %v1554, 64
    %v1560 = vpop.permute.xlu0 %1559
    %1561 = vrot.lane.b32.xlu0 %v1556, 64
    %v1562 = vpop.permute.xlu0 %1561
    %1563 = vrot.lane.b32.xlu0 %v1555, 64
    %v1564 = vpop.permute.xlu0 %1563
    %1569 = vst.msk [vmem:[#allocation3 + $0x108] sm:$0x80] %vm1334, %v1558
    %1570 = vst.msk [vmem:[#allocation3 + $0x128] sm:$0xff] %vm1127, %v1560
    %1571 = vst.msk [vmem:[#allocation3 + $0x148] sm:$0xff] %vm1127, %v1562
    %1572 = vst.msk [vmem:[#allocation3 + $0x168] sm:$0x3f] %vm1477, %v1564
    %v1573 = vld [vmem:[#allocation2 + $0x7c] sm:$0xff]
    %v1574 = vld [vmem:[#allocation2 + $0x84] sm:$0xff]
    %v1575 = vld [vmem:[#allocation2 + $0x8c] sm:$0x7f]
    %v1579 = vrot.slane %v1573, 1
    %v1580 = vrot.slane %v1574, 1
    %v1581 = vsel %vm1316, %v1579, %v1580
    %v1582 = vrot.slane %v1575, 1
    %v1583 = vsel %vm1316, %v1580, %v1582
    %1588 = vst.msk [vmem:[#allocation3 + $0x110] sm:$0x80] %vm1354, %v1579
    %1589 = vst.msk [vmem:[#allocation3 + $0x130] sm:$0xff] %vm1015, %v1581
    %1590 = vst.msk [vmem:[#allocation3 + $0x150] sm:$0xff] %vm1015, %v1583
    %1591 = vst.msk [vmem:[#allocation3 + $0x170] sm:$0x3f] %vm1498, %v1582
    %v1592 = vld [vmem:[#allocation2 + $0x95] sm:$0xff]
    %v1593 = vld [vmem:[#allocation2 + $0x9d] sm:$0xff]
    %v1594 = vld [vmem:[#allocation2 + $0xa5] sm:$0x7f]
    %v1598 = vrot.slane %v1592, 1
    %v1599 = vrot.slane %v1593, 1
    %v1600 = vsel %vm1316, %v1598, %v1599
    %v1601 = vrot.slane %v1594, 1
    %v1602 = vsel %vm1316, %v1599, %v1601
    %1603 = vrot.lane.b32.xlu0 %v1598, 64
    %v1604 = vpop.permute.xlu0 %1603
    %1605 = vrot.lane.b32.xlu0 %v1600, 64
    %v1606 = vpop.permute.xlu0 %1605
    %1607 = vrot.lane.b32.xlu0 %v1602, 64
    %v1608 = vpop.permute.xlu0 %1607
    %1609 = vrot.lane.b32.xlu0 %v1601, 64
    %v1610 = vpop.permute.xlu0 %1609
    %1615 = vst.msk [vmem:[#allocation3 + $0x110] sm:$0x80] %vm1334, %v1604
    %1616 = vst.msk [vmem:[#allocation3 + $0x130] sm:$0xff] %vm1127, %v1606
    %1617 = vst.msk [vmem:[#allocation3 + $0x150] sm:$0xff] %vm1127, %v1608
    %1618 = vst.msk [vmem:[#allocation3 + $0x170] sm:$0x3f] %vm1477, %v1610
    %v1619 = vld [vmem:[#allocation2 + $0xad] sm:$0xff]
    %v1620 = vld [vmem:[#allocation2 + $0xb5] sm:$0xff]
    %v1621 = vld [vmem:[#allocation2 + $0xbd] sm:$0x7f]
    %v1625 = vrot.slane %v1619, 1
    %v1626 = vrot.slane %v1620, 1
    %v1627 = vsel %vm1316, %v1625, %v1626
    %v1628 = vrot.slane %v1621, 1
    %v1629 = vsel %vm1316, %v1626, %v1628
    %1634 = vst.msk [vmem:[#allocation3 + $0x118] sm:$0x80] %vm1354, %v1625
    %1635 = vst.msk [vmem:[#allocation3 + $0x138] sm:$0xff] %vm1015, %v1627
    %1636 = vst.msk [vmem:[#allocation3 + $0x158] sm:$0xff] %vm1015, %v1629
    %1637 = vst.msk [vmem:[#allocation3 + $0x178] sm:$0x3f] %vm1498, %v1628
    %v1638 = vld [vmem:[#allocation2 + $0x64] sm:$0xff]
    %v1639 = vld [vmem:[#allocation2 + $0x6c] sm:$0xff]
    %v1640 = vld [vmem:[#allocation2 + $0x74] sm:$0x7f]
    %v1644 = vrot.slane %v1638, 1
    %v1645 = vrot.slane %v1639, 1
    %v1646 = vsel %vm1316, %v1644, %v1645
    %v1647 = vrot.slane %v1640, 1
    %v1648 = vsel %vm1316, %v1645, %v1647
    %1649 = vrot.lane.b32.xlu0 %v1644, 64
    %v1650 = vpop.permute.xlu0 %1649
    %1651 = vrot.lane.b32.xlu0 %v1646, 64
    %v1652 = vpop.permute.xlu0 %1651
    %1653 = vrot.lane.b32.xlu0 %v1648, 64
    %v1654 = vpop.permute.xlu0 %1653
    %1655 = vrot.lane.b32.xlu0 %v1647, 64
    %v1656 = vpop.permute.xlu0 %1655
    %1661 = vst.msk [vmem:[#allocation3 + $0x118] sm:$0x80] %vm1334, %v1650
    %1662 = vst.msk [vmem:[#allocation3 + $0x138] sm:$0xff] %vm1127, %v1652
    %1663 = vst.msk [vmem:[#allocation3 + $0x158] sm:$0xff] %vm1127, %v1654
    %1664 = vst.msk [vmem:[#allocation3 + $0x178] sm:$0x3f] %vm1477, %v1656
    %v1665 = vld [vmem:[#allocation2 + $0x10e] sm:$0xff]
    %v1666 = vld [vmem:[#allocation2 + $0x116] sm:$0xff]
    %v1667 = vld [vmem:[#allocation2 + $0x11e] sm:$0x7f]
    %v1671 = vrot.slane %v1665, 1
    %v1672 = vrot.slane %v1666, 1
    %v1673 = vsel %vm1316, %v1671, %v1672
    %v1674 = vrot.slane %v1667, 1
    %v1675 = vsel %vm1316, %v1672, %v1674
    %1680 = vst.msk [vmem:[#allocation3 + $0x160] sm:$0x80] %vm1354, %v1671
    %1681 = vst.msk [vmem:[#allocation3 + $0x180] sm:$0xff] %vm1015, %v1673
    %1682 = vst.msk [vmem:[#allocation3 + $0x1a0] sm:$0xff] %vm1015, %v1675
    %1683 = vst.msk [vmem:[#allocation3 + $0x1c0] sm:$0x3f] %vm1498, %v1674
    %1684 = vst.msk [vmem:[#allocation3 + $0x166] sm:$0x1] %vm1110, 0.0
    %v1685 = vld [vmem:[#allocation2 + $0xc4] sm:$0xff]
    %v1686 = vld [vmem:[#allocation2 + $0xcc] sm:$0xff]
    %v1687 = vld [vmem:[#allocation2 + $0xd4] sm:$0xff]
    %vm1691 = vcmask 1045504
    %v1692 = vrot.slane %v1685, 2
    %v1693 = vrot.slane %v1686, 2
    %v1694 = vsel %vm1691, %v1692, %v1693
    %v1695 = vrot.slane %v1687, 2
    %v1696 = vsel %vm1691, %v1693, %v1695
    %1697 = vrot.lane.b32.xlu0 %v1692, 64
    %v1698 = vpop.permute.xlu0 %1697
    %1699 = vrot.lane.b32.xlu0 %v1694, 64
    %v1700 = vpop.permute.xlu0 %1699
    %1701 = vrot.lane.b32.xlu0 %v1696, 64
    %v1702 = vpop.permute.xlu0 %1701
    %1703 = vrot.lane.b32.xlu0 %v1695, 64
    %v1704 = vpop.permute.xlu0 %1703
    %vm1709 = vcmask 1048070
    %1710 = vst.msk [vmem:[#allocation3 + $0x160] sm:$0xc0] %vm1709, %v1698
    %1711 = vst.msk [vmem:[#allocation3 + $0x180] sm:$0xff] %vm1127, %v1700
    %1712 = vst.msk [vmem:[#allocation3 + $0x1a0] sm:$0xff] %vm1127, %v1702
    %1713 = vst.msk [vmem:[#allocation3 + $0x1c0] sm:$0x3f] %vm1477, %v1704
    %v1714 = vld [vmem:[#allocation2 + $0xdd] sm:$0xff]
    %v1715 = vld [vmem:[#allocation2 + $0xe5] sm:$0xff]
    %v1716 = vld [vmem:[#allocation2 + $0xed] sm:$0xff]
    %v1720 = vrot.slane %v1714, 2
    %v1721 = vrot.slane %v1715, 2
    %v1722 = vsel %vm1691, %v1720, %v1721
    %v1723 = vrot.slane %v1716, 2
    %v1724 = vsel %vm1691, %v1721, %v1723
    %vm1729 = vcmask 523270
    %1730 = vst.msk [vmem:[#allocation3 + $0x168] sm:$0xc0] %vm1729, %v1720
    %1731 = vst.msk [vmem:[#allocation3 + $0x188] sm:$0xff] %vm1015, %v1722
    %1732 = vst.msk [vmem:[#allocation3 + $0x1a8] sm:$0xff] %vm1015, %v1724
    %1733 = vst.msk [vmem:[#allocation3 + $0x1c8] sm:$0x3f] %vm1498, %v1723
    %v1734 = vld [vmem:[#allocation2 + $0xf6] sm:$0xff]
    %v1735 = vld [vmem:[#allocation2 + $0xfe] sm:$0xff]
    %v1736 = vld [vmem:[#allocation2 + $0x106] sm:$0xff]
    %v1740 = vrot.slane %v1734, 2
    %v1741 = vrot.slane %v1735, 2
    %v1742 = vsel %vm1691, %v1740, %v1741
    %v1743 = vrot.slane %v1736, 2
    %v1744 = vsel %vm1691, %v1741, %v1743
    %1745 = vrot.lane.b32.xlu0 %v1740, 64
    %v1746 = vpop.permute.xlu0 %1745
    %1747 = vrot.lane.b32.xlu0 %v1742, 64
    %v1748 = vpop.permute.xlu0 %1747
    %1749 = vrot.lane.b32.xlu0 %v1744, 64
    %v1750 = vpop.permute.xlu0 %1749
    %1751 = vrot.lane.b32.xlu0 %v1743, 64
    %v1752 = vpop.permute.xlu0 %1751
    %1757 = vst.msk [vmem:[#allocation3 + $0x168] sm:$0xc0] %vm1709, %v1746
    %1758 = vst.msk [vmem:[#allocation3 + $0x188] sm:$0xff] %vm1127, %v1748
    %1759 = vst.msk [vmem:[#allocation3 + $0x1a8] sm:$0xff] %vm1127, %v1750
    %1760 = vst.msk [vmem:[#allocation3 + $0x1c8] sm:$0x3f] %vm1477, %v1752
    %v1761 = vld [vmem:[#allocation2 + $0x10e] sm:$0xff]
    %v1762 = vld [vmem:[#allocation2 + $0x116] sm:$0xff]
    %v1763 = vld [vmem:[#allocation2 + $0x11e] sm:$0xff]
    %v1767 = vrot.slane %v1761, 2
    %v1768 = vrot.slane %v1762, 2
    %v1769 = vsel %vm1691, %v1767, %v1768
    %v1770 = vrot.slane %v1763, 2
    %v1771 = vsel %vm1691, %v1768, %v1770
    %1776 = vst.msk [vmem:[#allocation3 + $0x170] sm:$0xc0] %vm1729, %v1767
    %1777 = vst.msk [vmem:[#allocation3 + $0x190] sm:$0xff] %vm1015, %v1769
    %1778 = vst.msk [vmem:[#allocation3 + $0x1b0] sm:$0xff] %vm1015, %v1771
    %1779 = vst.msk [vmem:[#allocation3 + $0x1d0] sm:$0x3f] %vm1498, %v1770
    %v1780 = vld [vmem:[#allocation2 + $0xc5] sm:$0xff]
    %v1781 = vld [vmem:[#allocation2 + $0xcd] sm:$0xff]
    %v1782 = vld [vmem:[#allocation2 + $0xd5] sm:$0xff]
    %v1786 = vrot.slane %v1780, 2
    %v1787 = vrot.slane %v1781, 2
    %v1788 = vsel %vm1691, %v1786, %v1787
    %v1789 = vrot.slane %v1782, 2
    %v1790 = vsel %vm1691, %v1787, %v1789
    %1791 = vrot.lane.b32.xlu0 %v1786, 64
    %v1792 = vpop.permute.xlu0 %1791
    %1793 = vrot.lane.b32.xlu0 %v1788, 64
    %v1794 = vpop.permute.xlu0 %1793
    %1795 = vrot.lane.b32.xlu0 %v1790, 64
    %v1796 = vpop.permute.xlu0 %1795
    %1797 = vrot.lane.b32.xlu0 %v1789, 64
    %v1798 = vpop.permute.xlu0 %1797
    %1803 = vst.msk [vmem:[#allocation3 + $0x170] sm:$0xc0] %vm1709, %v1792
    %1804 = vst.msk [vmem:[#allocation3 + $0x190] sm:$0xff] %vm1127, %v1794
    %1805 = vst.msk [vmem:[#allocation3 + $0x1b0] sm:$0xff] %vm1127, %v1796
    %1806 = vst.msk [vmem:[#allocation3 + $0x1d0] sm:$0x3f] %vm1477, %v1798
    %v1807 = vld [vmem:[#allocation2 + $0xde] sm:$0xff]
    %v1808 = vld [vmem:[#allocation2 + $0xe6] sm:$0xff]
    %v1809 = vld [vmem:[#allocation2 + $0xee] sm:$0xff]
    %v1813 = vrot.slane %v1807, 2
    %v1814 = vrot.slane %v1808, 2
    %v1815 = vsel %vm1691, %v1813, %v1814
    %v1816 = vrot.slane %v1809, 2
    %v1817 = vsel %vm1691, %v1814, %v1816
    %1822 = vst.msk [vmem:[#allocation3 + $0x178] sm:$0xc0] %vm1729, %v1813
    %1823 = vst.msk [vmem:[#allocation3 + $0x198] sm:$0xff] %vm1015, %v1815
    %1824 = vst.msk [vmem:[#allocation3 + $0x1b8] sm:$0xff] %vm1015, %v1817
    %1825 = vst.msk [vmem:[#allocation3 + $0x1d8] sm:$0x3f] %vm1498, %v1816
    %v1826 = vld [vmem:[#allocation2 + $0xf7] sm:$0xff]
    %v1827 = vld [vmem:[#allocation2 + $0xff] sm:$0xff]
    %v1828 = vld [vmem:[#allocation2 + $0x107] sm:$0x7f]
    %v1832 = vrot.slane %v1826, 2
    %v1833 = vrot.slane %v1827, 2
    %v1834 = vsel %vm1691, %v1832, %v1833
    %v1835 = vrot.slane %v1828, 2
    %v1836 = vsel %vm1691, %v1833, %v1835
    %1837 = vrot.lane.b32.xlu0 %v1832, 64
    %v1838 = vpop.permute.xlu0 %1837
    %1839 = vrot.lane.b32.xlu0 %v1834, 64
    %v1840 = vpop.permute.xlu0 %1839
    %1841 = vrot.lane.b32.xlu0 %v1836, 64
    %v1842 = vpop.permute.xlu0 %1841
    %1843 = vrot.lane.b32.xlu0 %v1835, 64
    %v1844 = vpop.permute.xlu0 %1843
    %1849 = vst.msk [vmem:[#allocation3 + $0x178] sm:$0xc0] %vm1709, %v1838
    %1850 = vst.msk [vmem:[#allocation3 + $0x198] sm:$0xff] %vm1127, %v1840
    %1851 = vst.msk [vmem:[#allocation3 + $0x1b8] sm:$0xff] %vm1127, %v1842
    %vm1852 = vcmask 1044992
    %1853 = vst.msk [vmem:[#allocation3 + $0x1d8] sm:$0x1f] %vm1852, %v1844
    %1854 = vst.msk [vmem:[#allocation3 + $0x1dd] sm:$0x1] %vm1204, 0.0
    %v1855 = vld [vmem:[#allocation2 + $0xdd] sm:$0xff]
    %v1856 = vld [vmem:[#allocation2 + $0xe5] sm:$0xff]
    %v1857 = vld [vmem:[#allocation2 + $0xed] sm:$0x7f]
    %v1861 = vrot.slane %v1855, 2
    %v1862 = vrot.slane %v1856, 2
    %v1863 = vsel %vm1691, %v1861, %v1862
    %v1864 = vrot.slane %v1857, 2
    %v1865 = vsel %vm1691, %v1862, %v1864
    %1870 = vst.msk [vmem:[#allocation3 + $0x1c0] sm:$0xc0] %vm1729, %v1861
    %1871 = vst.msk [vmem:[#allocation3 + $0x1e0] sm:$0xff] %vm1015, %v1863
    %1872 = vst.msk [vmem:[#allocation3 + $0x200] sm:$0xff] %vm1015, %v1865
    %vm1873 = vcmask 520192
    %1874 = vst.msk [vmem:[#allocation3 + $0x220] sm:$0x1f] %vm1873, %v1864
    %v1875 = vld [vmem:[#allocation2 + $0xf6] sm:$0xff]
    %v1876 = vld [vmem:[#allocation2 + $0xfe] sm:$0xff]
    %v1877 = vld [vmem:[#allocation2 + $0x106] sm:$0x7f]
    %v1881 = vrot.slane %v1875, 2
    %v1882 = vrot.slane %v1876, 2
    %v1883 = vsel %vm1691, %v1881, %v1882
    %v1884 = vrot.slane %v1877, 2
    %v1885 = vsel %vm1691, %v1882, %v1884
    %1886 = vrot.lane.b32.xlu0 %v1881, 64
    %v1887 = vpop.permute.xlu0 %1886
    %1888 = vrot.lane.b32.xlu0 %v1883, 64
    %v1889 = vpop.permute.xlu0 %1888
    %1890 = vrot.lane.b32.xlu0 %v1885, 64
    %v1891 = vpop.permute.xlu0 %1890
    %1892 = vrot.lane.b32.xlu0 %v1884, 64
    %v1893 = vpop.permute.xlu0 %1892
    %1898 = vst.msk [vmem:[#allocation3 + $0x1c0] sm:$0xc0] %vm1709, %v1887
    %1899 = vst.msk [vmem:[#allocation3 + $0x1e0] sm:$0xff] %vm1127, %v1889
    %1900 = vst.msk [vmem:[#allocation3 + $0x200] sm:$0xff] %vm1127, %v1891
    %1901 = vst.msk [vmem:[#allocation3 + $0x220] sm:$0x1f] %vm1852, %v1893
    %v1902 = vld [vmem:[#allocation2 + $0x10e] sm:$0xff]
    %v1903 = vld [vmem:[#allocation2 + $0x116] sm:$0xff]
    %v1904 = vld [vmem:[#allocation2 + $0x11e] sm:$0x7f]
    %v1908 = vrot.slane %v1902, 2
    %v1909 = vrot.slane %v1903, 2
    %v1910 = vsel %vm1691, %v1908, %v1909
    %v1911 = vrot.slane %v1904, 2
    %v1912 = vsel %vm1691, %v1909, %v1911
    %1917 = vst.msk [vmem:[#allocation3 + $0x1c8] sm:$0xc0] %vm1729, %v1908
    %1918 = vst.msk [vmem:[#allocation3 + $0x1e8] sm:$0xff] %vm1015, %v1910
    %1919 = vst.msk [vmem:[#allocation3 + $0x208] sm:$0xff] %vm1015, %v1912
    %1920 = vst.msk [vmem:[#allocation3 + $0x228] sm:$0x1f] %vm1873, %v1911
    %v1921 = vld [vmem:[#allocation2 + $0xc5] sm:$0xff]
    %v1922 = vld [vmem:[#allocation2 + $0xcd] sm:$0xff]
    %v1923 = vld [vmem:[#allocation2 + $0xd5] sm:$0x7f]
    %v1927 = vrot.slane %v1921, 2
    %v1928 = vrot.slane %v1922, 2
    %v1929 = vsel %vm1691, %v1927, %v1928
    %v1930 = vrot.slane %v1923, 2
    %v1931 = vsel %vm1691, %v1928, %v1930
    %1932 = vrot.lane.b32.xlu0 %v1927, 64
    %v1933 = vpop.permute.xlu0 %1932
    %1934 = vrot.lane.b32.xlu0 %v1929, 64
    %v1935 = vpop.permute.xlu0 %1934
    %1936 = vrot.lane.b32.xlu0 %v1931, 64
    %v1937 = vpop.permute.xlu0 %1936
    %1938 = vrot.lane.b32.xlu0 %v1930, 64
    %v1939 = vpop.permute.xlu0 %1938
    %1944 = vst.msk [vmem:[#allocation3 + $0x1c8] sm:$0xc0] %vm1709, %v1933
    %1945 = vst.msk [vmem:[#allocation3 + $0x1e8] sm:$0xff] %vm1127, %v1935
    %1946 = vst.msk [vmem:[#allocation3 + $0x208] sm:$0xff] %vm1127, %v1937
    %1947 = vst.msk [vmem:[#allocation3 + $0x228] sm:$0x1f] %vm1852, %v1939
    %v1948 = vld [vmem:[#allocation2 + $0xde] sm:$0xff]
    %v1949 = vld [vmem:[#allocation2 + $0xe6] sm:$0xff]
    %v1950 = vld [vmem:[#allocation2 + $0xee] sm:$0x7f]
    %v1954 = vrot.slane %v1948, 2
    %v1955 = vrot.slane %v1949, 2
    %v1956 = vsel %vm1691, %v1954, %v1955
    %v1957 = vrot.slane %v1950, 2
    %v1958 = vsel %vm1691, %v1955, %v1957
    %1963 = vst.msk [vmem:[#allocation3 + $0x1d0] sm:$0xc0] %vm1729, %v1954
    %1964 = vst.msk [vmem:[#allocation3 + $0x1f0] sm:$0xff] %vm1015, %v1956
    %1965 = vst.msk [vmem:[#allocation3 + $0x210] sm:$0xff] %vm1015, %v1958
    %1966 = vst.msk [vmem:[#allocation3 + $0x230] sm:$0x1f] %vm1873, %v1957
    %v1967 = vld [vmem:[#allocation2 + $0xf7] sm:$0xff]
    %v1968 = vld [vmem:[#allocation2 + $0xff] sm:$0xff]
    %v1969 = vld [vmem:[#allocation2 + $0x107] sm:$0x7f]
    %v1973 = vrot.slane %v1967, 2
    %v1974 = vrot.slane %v1968, 2
    %v1975 = vsel %vm1691, %v1973, %v1974
    %v1976 = vrot.slane %v1969, 2
    %v1977 = vsel %vm1691, %v1974, %v1976
    %1978 = vrot.lane.b32.xlu0 %v1973, 64
    %v1979 = vpop.permute.xlu0 %1978
    %1980 = vrot.lane.b32.xlu0 %v1975, 64
    %v1981 = vpop.permute.xlu0 %1980
    %1982 = vrot.lane.b32.xlu0 %v1977, 64
    %v1983 = vpop.permute.xlu0 %1982
    %1984 = vrot.lane.b32.xlu0 %v1976, 64
    %v1985 = vpop.permute.xlu0 %1984
    %1990 = vst.msk [vmem:[#allocation3 + $0x1d0] sm:$0xc0] %vm1709, %v1979
    %1991 = vst.msk [vmem:[#allocation3 + $0x1f0] sm:$0xff] %vm1127, %v1981
    %1992 = vst.msk [vmem:[#allocation3 + $0x210] sm:$0xff] %vm1127, %v1983
    %1993 = vst.msk [vmem:[#allocation3 + $0x230] sm:$0x1f] %vm1852, %v1985
    %v1994 = vld [vmem:[#allocation2 + $0x10f] sm:$0xff]
    %v1995 = vld [vmem:[#allocation2 + $0x117] sm:$0xff]
    %v1996 = vld [vmem:[#allocation2 + $0x11f] sm:$0x7f]
    %v2000 = vrot.slane %v1994, 2
    %v2001 = vrot.slane %v1995, 2
    %v2002 = vsel %vm1691, %v2000, %v2001
    %v2003 = vrot.slane %v1996, 2
    %v2004 = vsel %vm1691, %v2001, %v2003
    %2009 = vst.msk [vmem:[#allocation3 + $0x1d8] sm:$0xc0] %vm1729, %v2000
    %2010 = vst.msk [vmem:[#allocation3 + $0x1f8] sm:$0xff] %vm1015, %v2002
    %2011 = vst.msk [vmem:[#allocation3 + $0x218] sm:$0xff] %vm1015, %v2004
    %2012 = vst.msk [vmem:[#allocation3 + $0x238] sm:$0x1f] %vm1873, %v2003
    %v2013 = vld [vmem:[#allocation2 + $0xc6] sm:$0xff]
    %v2014 = vld [vmem:[#allocation2 + $0xce] sm:$0xff]
    %v2015 = vld [vmem:[#allocation2 + $0xd6] sm:$0x7f]
    %v2019 = vrot.slane %v2013, 2
    %v2020 = vrot.slane %v2014, 2
    %v2021 = vsel %vm1691, %v2019, %v2020
    %v2022 = vrot.slane %v2015, 2
    %v2023 = vsel %vm1691, %v2020, %v2022
    %2024 = vrot.lane.b32.xlu0 %v2019, 64
    %v2025 = vpop.permute.xlu0 %2024
    %2026 = vrot.lane.b32.xlu0 %v2021, 64
    %v2027 = vpop.permute.xlu0 %2026
    %2028 = vrot.lane.b32.xlu0 %v2023, 64
    %v2029 = vpop.permute.xlu0 %2028
    %2030 = vrot.lane.b32.xlu0 %v2022, 64
    %v2031 = vpop.permute.xlu0 %2030
    %2036 = vst.msk [vmem:[#allocation3 + $0x1d8] sm:$0xc0] %vm1709, %v2025
    %2037 = vst.msk [vmem:[#allocation3 + $0x1f8] sm:$0xff] %vm1127, %v2027
    %2038 = vst.msk [vmem:[#allocation3 + $0x218] sm:$0xff] %vm1127, %v2029
    %2039 = vst.msk [vmem:[#allocation3 + $0x238] sm:$0x1f] %vm1852, %v2031
    %v2040 = vld [vmem:[#allocation2 + $0x170] sm:$0xff]
    %v2041 = vld [vmem:[#allocation2 + $0x178] sm:$0xff]
    %v2042 = vld [vmem:[#allocation2 + $0x180] sm:$0x7f]
    %v2046 = vrot.slane %v2040, 2
    %v2047 = vrot.slane %v2041, 2
    %v2048 = vsel %vm1691, %v2046, %v2047
    %v2049 = vrot.slane %v2042, 2
    %v2050 = vsel %vm1691, %v2047, %v2049
    %2055 = vst.msk [vmem:[#allocation3 + $0x220] sm:$0xc0] %vm1729, %v2046
    %2056 = vst.msk [vmem:[#allocation3 + $0x240] sm:$0xff] %vm1015, %v2048
    %2057 = vst.msk [vmem:[#allocation3 + $0x260] sm:$0xff] %vm1015, %v2050
    %2058 = vst.msk [vmem:[#allocation3 + $0x280] sm:$0x1f] %vm1873, %v2049
    %2059 = vst.msk [vmem:[#allocation3 + $0x225] sm:$0x1] %vm1110, 0.0
    %v2060 = vld [vmem:[#allocation2 + $0x126] sm:$0xff]
    %v2061 = vld [vmem:[#allocation2 + $0x12e] sm:$0xff]
    %v2062 = vld [vmem:[#allocation2 + $0x136] sm:$0xff]
    %vm2066 = vcmask 1044480
    %v2067 = vrot.slane %v2060, 3
    %v2068 = vrot.slane %v2061, 3
    %v2069 = vsel %vm2066, %v2067, %v2068
    %v2070 = vrot.slane %v2062, 3
    %v2071 = vsel %vm2066, %v2068, %v2070
    %2072 = vrot.lane.b32.xlu0 %v2067, 64
    %v2073 = vpop.permute.xlu0 %2072
    %2074 = vrot.lane.b32.xlu0 %v2069, 64
    %v2075 = vpop.permute.xlu0 %2074
    %2076 = vrot.lane.b32.xlu0 %v2071, 64
    %v2077 = vpop.permute.xlu0 %2076
    %2078 = vrot.lane.b32.xlu0 %v2070, 64
    %v2079 = vpop.permute.xlu0 %2078
    %vm2084 = vcmask 1048069
    %2085 = vst.msk [vmem:[#allocation3 + $0x220] sm:$0xe0] %vm2084, %v2073
    %2086 = vst.msk [vmem:[#allocation3 + $0x240] sm:$0xff] %vm1127, %v2075
    %2087 = vst.msk [vmem:[#allocation3 + $0x260] sm:$0xff] %vm1127, %v2077
    %2088 = vst.msk [vmem:[#allocation3 + $0x280] sm:$0x1f] %vm1852, %v2079
    %v2089 = vld [vmem:[#allocation2 + $0x13f] sm:$0xff]
    %v2090 = vld [vmem:[#allocation2 + $0x147] sm:$0xff]
    %v2091 = vld [vmem:[#allocation2 + $0x14f] sm:$0xff]
    %v2095 = vrot.slane %v2089, 3
    %v2096 = vrot.slane %v2090, 3
    %v2097 = vsel %vm2066, %v2095, %v2096
    %v2098 = vrot.slane %v2091, 3
    %v2099 = vsel %vm2066, %v2096, %v2098
    %vm2104 = vcmask 523269
    %2105 = vst.msk [vmem:[#allocation3 + $0x228] sm:$0xe0] %vm2104, %v2095
    %2106 = vst.msk [vmem:[#allocation3 + $0x248] sm:$0xff] %vm1015, %v2097
    %2107 = vst.msk [vmem:[#allocation3 + $0x268] sm:$0xff] %vm1015, %v2099
    %2108 = vst.msk [vmem:[#allocation3 + $0x288] sm:$0x1f] %vm1873, %v2098
    %v2109 = vld [vmem:[#allocation2 + $0x158] sm:$0xff]
    %v2110 = vld [vmem:[#allocation2 + $0x160] sm:$0xff]
    %v2111 = vld [vmem:[#allocation2 + $0x168] sm:$0xff]
    %v2115 = vrot.slane %v2109, 3
    %v2116 = vrot.slane %v2110, 3
    %v2117 = vsel %vm2066, %v2115, %v2116
    %v2118 = vrot.slane %v2111, 3
    %v2119 = vsel %vm2066, %v2116, %v2118
    %2120 = vrot.lane.b32.xlu0 %v2115, 64
    %v2121 = vpop.permute.xlu0 %2120
    %2122 = vrot.lane.b32.xlu0 %v2117, 64
    %v2123 = vpop.permute.xlu0 %2122
    %2124 = vrot.lane.b32.xlu0 %v2119, 64
    %v2125 = vpop.permute.xlu0 %2124
    %2126 = vrot.lane.b32.xlu0 %v2118, 64
    %v2127 = vpop.permute.xlu0 %2126
    %2132 = vst.msk [vmem:[#allocation3 + $0x228] sm:$0xe0] %vm2084, %v2121
    %2133 = vst.msk [vmem:[#allocation3 + $0x248] sm:$0xff] %vm1127, %v2123
    %2134 = vst.msk [vmem:[#allocation3 + $0x268] sm:$0xff] %vm1127, %v2125
    %2135 = vst.msk [vmem:[#allocation3 + $0x288] sm:$0x1f] %vm1852, %v2127
    %v2136 = vld [vmem:[#allocation2 + $0x170] sm:$0xff]
    %v2137 = vld [vmem:[#allocation2 + $0x178] sm:$0xff]
    %v2138 = vld [vmem:[#allocation2 + $0x180] sm:$0xff]
    %v2142 = vrot.slane %v2136, 3
    %v2143 = vrot.slane %v2137, 3
    %v2144 = vsel %vm2066, %v2142, %v2143
    %v2145 = vrot.slane %v2138, 3
    %v2146 = vsel %vm2066, %v2143, %v2145
    %2151 = vst.msk [vmem:[#allocation3 + $0x230] sm:$0xe0] %vm2104, %v2142
    %2152 = vst.msk [vmem:[#allocation3 + $0x250] sm:$0xff] %vm1015, %v2144
    %2153 = vst.msk [vmem:[#allocation3 + $0x270] sm:$0xff] %vm1015, %v2146
    %2154 = vst.msk [vmem:[#allocation3 + $0x290] sm:$0x1f] %vm1873, %v2145
    %v2155 = vld [vmem:[#allocation2 + $0x127] sm:$0xff]
    %v2156 = vld [vmem:[#allocation2 + $0x12f] sm:$0xff]
    %v2157 = vld [vmem:[#allocation2 + $0x137] sm:$0xff]
    %v2161 = vrot.slane %v2155, 3
    %v2162 = vrot.slane %v2156, 3
    %v2163 = vsel %vm2066, %v2161, %v2162
    %v2164 = vrot.slane %v2157, 3
    %v2165 = vsel %vm2066, %v2162, %v2164
    %2166 = vrot.lane.b32.xlu0 %v2161, 64
    %v2167 = vpop.permute.xlu0 %2166
    %2168 = vrot.lane.b32.xlu0 %v2163, 64
    %v2169 = vpop.permute.xlu0 %2168
    %2170 = vrot.lane.b32.xlu0 %v2165, 64
    %v2171 = vpop.permute.xlu0 %2170
    %2172 = vrot.lane.b32.xlu0 %v2164, 64
    %v2173 = vpop.permute.xlu0 %2172
    %2178 = vst.msk [vmem:[#allocation3 + $0x230] sm:$0xe0] %vm2084, %v2167
    %2179 = vst.msk [vmem:[#allocation3 + $0x250] sm:$0xff] %vm1127, %v2169
    %2180 = vst.msk [vmem:[#allocation3 + $0x270] sm:$0xff] %vm1127, %v2171
    %2181 = vst.msk [vmem:[#allocation3 + $0x290] sm:$0x1f] %vm1852, %v2173
    %v2182 = vld [vmem:[#allocation2 + $0x140] sm:$0xff]
    %v2183 = vld [vmem:[#allocation2 + $0x148] sm:$0xff]
    %v2184 = vld [vmem:[#allocation2 + $0x150] sm:$0xff]
    %v2188 = vrot.slane %v2182, 3
    %v2189 = vrot.slane %v2183, 3
    %v2190 = vsel %vm2066, %v2188, %v2189
    %v2191 = vrot.slane %v2184, 3
    %v2192 = vsel %vm2066, %v2189, %v2191
    %2197 = vst.msk [vmem:[#allocation3 + $0x238] sm:$0xe0] %vm2104, %v2188
    %2198 = vst.msk [vmem:[#allocation3 + $0x258] sm:$0xff] %vm1015, %v2190
    %2199 = vst.msk [vmem:[#allocation3 + $0x278] sm:$0xff] %vm1015, %v2192
    %2200 = vst.msk [vmem:[#allocation3 + $0x298] sm:$0x1f] %vm1873, %v2191
    %v2201 = vld [vmem:[#allocation2 + $0x159] sm:$0xff]
    %v2202 = vld [vmem:[#allocation2 + $0x161] sm:$0xff]
    %v2203 = vld [vmem:[#allocation2 + $0x169] sm:$0x7f]
    %v2207 = vrot.slane %v2201, 3
    %v2208 = vrot.slane %v2202, 3
    %v2209 = vsel %vm2066, %v2207, %v2208
    %v2210 = vrot.slane %v2203, 3
    %v2211 = vsel %vm2066, %v2208, %v2210
    %2212 = vrot.lane.b32.xlu0 %v2207, 64
    %v2213 = vpop.permute.xlu0 %2212
    %2214 = vrot.lane.b32.xlu0 %v2209, 64
    %v2215 = vpop.permute.xlu0 %2214
    %2216 = vrot.lane.b32.xlu0 %v2211, 64
    %v2217 = vpop.permute.xlu0 %2216
    %2218 = vrot.lane.b32.xlu0 %v2210, 64
    %v2219 = vpop.permute.xlu0 %2218
    %2224 = vst.msk [vmem:[#allocation3 + $0x238] sm:$0xe0] %vm2084, %v2213
    %2225 = vst.msk [vmem:[#allocation3 + $0x258] sm:$0xff] %vm1127, %v2215
    %2226 = vst.msk [vmem:[#allocation3 + $0x278] sm:$0xff] %vm1127, %v2217
    %vm2227 = vcmask 1043968
    %2228 = vst.msk [vmem:[#allocation3 + $0x298] sm:$0xf] %vm2227, %v2219
    %2229 = vst.msk [vmem:[#allocation3 + $0x29c] sm:$0x1] %vm1204, 0.0
    %v2230 = vld [vmem:[#allocation2 + $0x13f] sm:$0xff]
    %v2231 = vld [vmem:[#allocation2 + $0x147] sm:$0xff]
    %v2232 = vld [vmem:[#allocation2 + $0x14f] sm:$0x7f]
    %v2236 = vrot.slane %v2230, 3
    %v2237 = vrot.slane %v2231, 3
    %v2238 = vsel %vm2066, %v2236, %v2237
    %v2239 = vrot.slane %v2232, 3
    %v2240 = vsel %vm2066, %v2237, %v2239
    %2245 = vst.msk [vmem:[#allocation3 + $0x280] sm:$0xe0] %vm2104, %v2236
    %2246 = vst.msk [vmem:[#allocation3 + $0x2a0] sm:$0xff] %vm1015, %v2238
    %2247 = vst.msk [vmem:[#allocation3 + $0x2c0] sm:$0xff] %vm1015, %v2240
    %2248 = vst.msk [vmem:[#allocation3 + $0x2e0] sm:$0xf] %vm1089, %v2239
    %v2249 = vld [vmem:[#allocation2 + $0x158] sm:$0xff]
    %v2250 = vld [vmem:[#allocation2 + $0x160] sm:$0xff]
    %v2251 = vld [vmem:[#allocation2 + $0x168] sm:$0x7f]
    %v2255 = vrot.slane %v2249, 3
    %v2256 = vrot.slane %v2250, 3
    %v2257 = vsel %vm2066, %v2255, %v2256
    %v2258 = vrot.slane %v2251, 3
    %v2259 = vsel %vm2066, %v2256, %v2258
    %2260 = vrot.lane.b32.xlu0 %v2255, 64
    %v2261 = vpop.permute.xlu0 %2260
    %2262 = vrot.lane.b32.xlu0 %v2257, 64
    %v2263 = vpop.permute.xlu0 %2262
    %2264 = vrot.lane.b32.xlu0 %v2259, 64
    %v2265 = vpop.permute.xlu0 %2264
    %2266 = vrot.lane.b32.xlu0 %v2258, 64
    %v2267 = vpop.permute.xlu0 %2266
    %2272 = vst.msk [vmem:[#allocation3 + $0x280] sm:$0xe0] %vm2084, %v2261
    %2273 = vst.msk [vmem:[#allocation3 + $0x2a0] sm:$0xff] %vm1127, %v2263
    %2274 = vst.msk [vmem:[#allocation3 + $0x2c0] sm:$0xff] %vm1127, %v2265
    %2275 = vst.msk [vmem:[#allocation3 + $0x2e0] sm:$0xf] %vm2227, %v2267
    %v2276 = vld [vmem:[#allocation2 + $0x170] sm:$0xff]
    %v2277 = vld [vmem:[#allocation2 + $0x178] sm:$0xff]
    %v2278 = vld [vmem:[#allocation2 + $0x180] sm:$0x7f]
    %v2282 = vrot.slane %v2276, 3
    %v2283 = vrot.slane %v2277, 3
    %v2284 = vsel %vm2066, %v2282, %v2283
    %v2285 = vrot.slane %v2278, 3
    %v2286 = vsel %vm2066, %v2283, %v2285
    %2291 = vst.msk [vmem:[#allocation3 + $0x288] sm:$0xe0] %vm2104, %v2282
    %2292 = vst.msk [vmem:[#allocation3 + $0x2a8] sm:$0xff] %vm1015, %v2284
    %2293 = vst.msk [vmem:[#allocation3 + $0x2c8] sm:$0xff] %vm1015, %v2286
    %2294 = vst.msk [vmem:[#allocation3 + $0x2e8] sm:$0xf] %vm1089, %v2285
    %v2295 = vld [vmem:[#allocation2 + $0x127] sm:$0xff]
    %v2296 = vld [vmem:[#allocation2 + $0x12f] sm:$0xff]
    %v2297 = vld [vmem:[#allocation2 + $0x137] sm:$0x7f]
    %v2301 = vrot.slane %v2295, 3
    %v2302 = vrot.slane %v2296, 3
    %v2303 = vsel %vm2066, %v2301, %v2302
    %v2304 = vrot.slane %v2297, 3
    %v2305 = vsel %vm2066, %v2302, %v2304
    %2306 = vrot.lane.b32.xlu0 %v2301, 64
    %v2307 = vpop.permute.xlu0 %2306
    %2308 = vrot.lane.b32.xlu0 %v2303, 64
    %v2309 = vpop.permute.xlu0 %2308
    %2310 = vrot.lane.b32.xlu0 %v2305, 64
    %v2311 = vpop.permute.xlu0 %2310
    %2312 = vrot.lane.b32.xlu0 %v2304, 64
    %v2313 = vpop.permute.xlu0 %2312
    %2318 = vst.msk [vmem:[#allocation3 + $0x288] sm:$0xe0] %vm2084, %v2307
    %2319 = vst.msk [vmem:[#allocation3 + $0x2a8] sm:$0xff] %vm1127, %v2309
    %2320 = vst.msk [vmem:[#allocation3 + $0x2c8] sm:$0xff] %vm1127, %v2311
    %2321 = vst.msk [vmem:[#allocation3 + $0x2e8] sm:$0xf] %vm2227, %v2313
    %v2322 = vld [vmem:[#allocation2 + $0x140] sm:$0xff]
    %v2323 = vld [vmem:[#allocation2 + $0x148] sm:$0xff]
    %v2324 = vld [vmem:[#allocation2 + $0x150] sm:$0x7f]
    %v2328 = vrot.slane %v2322, 3
    %v2329 = vrot.slane %v2323, 3
    %v2330 = vsel %vm2066, %v2328, %v2329
    %v2331 = vrot.slane %v2324, 3
    %v2332 = vsel %vm2066, %v2329, %v2331
    %2337 = vst.msk [vmem:[#allocation3 + $0x290] sm:$0xe0] %vm2104, %v2328
    %2338 = vst.msk [vmem:[#allocation3 + $0x2b0] sm:$0xff] %vm1015, %v2330
    %2339 = vst.msk [vmem:[#allocation3 + $0x2d0] sm:$0xff] %vm1015, %v2332
    %2340 = vst.msk [vmem:[#allocation3 + $0x2f0] sm:$0xf] %vm1089, %v2331
    %v2341 = vld [vmem:[#allocation2 + $0x159] sm:$0xff]
    %v2342 = vld [vmem:[#allocation2 + $0x161] sm:$0xff]
    %v2343 = vld [vmem:[#allocation2 + $0x169] sm:$0x7f]
    %v2347 = vrot.slane %v2341, 3
    %v2348 = vrot.slane %v2342, 3
    %v2349 = vsel %vm2066, %v2347, %v2348
    %v2350 = vrot.slane %v2343, 3
    %v2351 = vsel %vm2066, %v2348, %v2350
    %2352 = vrot.lane.b32.xlu0 %v2347, 64
    %v2353 = vpop.permute.xlu0 %2352
    %2354 = vrot.lane.b32.xlu0 %v2349, 64
    %v2355 = vpop.permute.xlu0 %2354
    %2356 = vrot.lane.b32.xlu0 %v2351, 64
    %v2357 = vpop.permute.xlu0 %2356
    %2358 = vrot.lane.b32.xlu0 %v2350, 64
    %v2359 = vpop.permute.xlu0 %2358
    %2364 = vst.msk [vmem:[#allocation3 + $0x290] sm:$0xe0] %vm2084, %v2353
    %2365 = vst.msk [vmem:[#allocation3 + $0x2b0] sm:$0xff] %vm1127, %v2355
    %2366 = vst.msk [vmem:[#allocation3 + $0x2d0] sm:$0xff] %vm1127, %v2357
    %2367 = vst.msk [vmem:[#allocation3 + $0x2f0] sm:$0xf] %vm2227, %v2359
    %v2368 = vld [vmem:[#allocation2 + $0x171] sm:$0xff]
    %v2369 = vld [vmem:[#allocation2 + $0x179] sm:$0xff]
    %v2370 = vld [vmem:[#allocation2 + $0x181] sm:$0x7f]
    %v2374 = vrot.slane %v2368, 3
    %v2375 = vrot.slane %v2369, 3
    %v2376 = vsel %vm2066, %v2374, %v2375
    %v2377 = vrot.slane %v2370, 3
    %v2378 = vsel %vm2066, %v2375, %v2377
    %2383 = vst.msk [vmem:[#allocation3 + $0x298] sm:$0xe0] %vm2104, %v2374
    %2384 = vst.msk [vmem:[#allocation3 + $0x2b8] sm:$0xff] %vm1015, %v2376
    %2385 = vst.msk [vmem:[#allocation3 + $0x2d8] sm:$0xff] %vm1015, %v2378
    %2386 = vst.msk [vmem:[#allocation3 + $0x2f8] sm:$0xf] %vm1089, %v2377
    %v2387 = vld [vmem:[#allocation2 + $0x128] sm:$0xff]
    %v2388 = vld [vmem:[#allocation2 + $0x130] sm:$0xff]
    %v2389 = vld [vmem:[#allocation2 + $0x138] sm:$0x7f]
    %v2393 = vrot.slane %v2387, 3
    %v2394 = vrot.slane %v2388, 3
    %v2395 = vsel %vm2066, %v2393, %v2394
    %v2396 = vrot.slane %v2389, 3
    %v2397 = vsel %vm2066, %v2394, %v2396
    %2398 = vrot.lane.b32.xlu0 %v2393, 64
    %v2399 = vpop.permute.xlu0 %2398
    %2400 = vrot.lane.b32.xlu0 %v2395, 64
    %v2401 = vpop.permute.xlu0 %2400
    %2402 = vrot.lane.b32.xlu0 %v2397, 64
    %v2403 = vpop.permute.xlu0 %2402
    %2404 = vrot.lane.b32.xlu0 %v2396, 64
    %v2405 = vpop.permute.xlu0 %2404
    %2410 = vst.msk [vmem:[#allocation3 + $0x298] sm:$0xe0] %vm2084, %v2399
    %2411 = vst.msk [vmem:[#allocation3 + $0x2b8] sm:$0xff] %vm1127, %v2401
    %2412 = vst.msk [vmem:[#allocation3 + $0x2d8] sm:$0xff] %vm1127, %v2403
    %2413 = vst.msk [vmem:[#allocation3 + $0x2f8] sm:$0xf] %vm2227, %v2405
    %v2414 = vld [vmem:[#allocation2 + $0x1d2] sm:$0xff]
    %v2415 = vld [vmem:[#allocation2 + $0x1da] sm:$0xff]
    %v2416 = vld [vmem:[#allocation2 + $0x1e2] sm:$0x7f]
    %v2420 = vrot.slane %v2414, 3
    %v2421 = vrot.slane %v2415, 3
    %v2422 = vsel %vm2066, %v2420, %v2421
    %v2423 = vrot.slane %v2416, 3
    %v2424 = vsel %vm2066, %v2421, %v2423
    %2429 = vst.msk [vmem:[#allocation3 + $0x2e0] sm:$0xe0] %vm2104, %v2420
    %2430 = vst.msk [vmem:[#allocation3 + $0x300] sm:$0xff] %vm1015, %v2422
    %2431 = vst.msk [vmem:[#allocation3 + $0x320] sm:$0xff] %vm1015, %v2424
    %2432 = vst.msk [vmem:[#allocation3 + $0x340] sm:$0xf] %vm1089, %v2423
    %2433 = vst.msk [vmem:[#allocation3 + $0x2e4] sm:$0x1] %vm1110, 0.0
    %v2434 = vld [vmem:[#allocation2 + $0x188] sm:$0xff]
    %v2435 = vld [vmem:[#allocation2 + $0x190] sm:$0xff]
    %v2436 = vld [vmem:[#allocation2 + $0x198] sm:$0xff]
    %vm2440 = vcmask 1043456
    %v2441 = vrot.slane %v2434, 4
    %v2442 = vrot.slane %v2435, 4
    %v2443 = vsel %vm2440, %v2441, %v2442
    %v2444 = vrot.slane %v2436, 4
    %v2445 = vsel %vm2440, %v2442, %v2444
    %2446 = vrot.lane.b32.xlu0 %v2441, 64
    %v2447 = vpop.permute.xlu0 %2446
    %2448 = vrot.lane.b32.xlu0 %v2443, 64
    %v2449 = vpop.permute.xlu0 %2448
    %2450 = vrot.lane.b32.xlu0 %v2445, 64
    %v2451 = vpop.permute.xlu0 %2450
    %2452 = vrot.lane.b32.xlu0 %v2444, 64
    %v2453 = vpop.permute.xlu0 %2452
    %vm2458 = vcmask 1048068
    %2459 = vst.msk [vmem:[#allocation3 + $0x2e0] sm:$0xf0] %vm2458, %v2447
    %2460 = vst.msk [vmem:[#allocation3 + $0x300] sm:$0xff] %vm1127, %v2449
    %2461 = vst.msk [vmem:[#allocation3 + $0x320] sm:$0xff] %vm1127, %v2451
    %2462 = vst.msk [vmem:[#allocation3 + $0x340] sm:$0xf] %vm2227, %v2453
    %v2463 = vld [vmem:[#allocation2 + $0x1a1] sm:$0xff]
    %v2464 = vld [vmem:[#allocation2 + $0x1a9] sm:$0xff]
    %v2465 = vld [vmem:[#allocation2 + $0x1b1] sm:$0xff]
    %v2469 = vrot.slane %v2463, 4
    %v2470 = vrot.slane %v2464, 4
    %v2471 = vsel %vm2440, %v2469, %v2470
    %v2472 = vrot.slane %v2465, 4
    %v2473 = vsel %vm2440, %v2470, %v2472
    %vm2478 = vcmask 523268
    %2479 = vst.msk [vmem:[#allocation3 + $0x2e8] sm:$0xf0] %vm2478, %v2469
    %2480 = vst.msk [vmem:[#allocation3 + $0x308] sm:$0xff] %vm1015, %v2471
    %2481 = vst.msk [vmem:[#allocation3 + $0x328] sm:$0xff] %vm1015, %v2473
    %2482 = vst.msk [vmem:[#allocation3 + $0x348] sm:$0xf] %vm1089, %v2472
    %v2483 = vld [vmem:[#allocation2 + $0x1ba] sm:$0xff]
    %v2484 = vld [vmem:[#allocation2 + $0x1c2] sm:$0xff]
    %v2485 = vld [vmem:[#allocation2 + $0x1ca] sm:$0xff]
    %v2489 = vrot.slane %v2483, 4
    %v2490 = vrot.slane %v2484, 4
    %v2491 = vsel %vm2440, %v2489, %v2490
    %v2492 = vrot.slane %v2485, 4
    %v2493 = vsel %vm2440, %v2490, %v2492
    %2494 = vrot.lane.b32.xlu0 %v2489, 64
    %v2495 = vpop.permute.xlu0 %2494
    %2496 = vrot.lane.b32.xlu0 %v2491, 64
    %v2497 = vpop.permute.xlu0 %2496
    %2498 = vrot.lane.b32.xlu0 %v2493, 64
    %v2499 = vpop.permute.xlu0 %2498
    %2500 = vrot.lane.b32.xlu0 %v2492, 64
    %v2501 = vpop.permute.xlu0 %2500
    %2506 = vst.msk [vmem:[#allocation3 + $0x2e8] sm:$0xf0] %vm2458, %v2495
    %2507 = vst.msk [vmem:[#allocation3 + $0x308] sm:$0xff] %vm1127, %v2497
    %2508 = vst.msk [vmem:[#allocation3 + $0x328] sm:$0xff] %vm1127, %v2499
    %2509 = vst.msk [vmem:[#allocation3 + $0x348] sm:$0xf] %vm2227, %v2501
    %v2510 = vld [vmem:[#allocation2 + $0x1d2] sm:$0xff]
    %v2511 = vld [vmem:[#allocation2 + $0x1da] sm:$0xff]
    %v2512 = vld [vmem:[#allocation2 + $0x1e2] sm:$0xff]
    %v2516 = vrot.slane %v2510, 4
    %v2517 = vrot.slane %v2511, 4
    %v2518 = vsel %vm2440, %v2516, %v2517
    %v2519 = vrot.slane %v2512, 4
    %v2520 = vsel %vm2440, %v2517, %v2519
    %2525 = vst.msk [vmem:[#allocation3 + $0x2f0] sm:$0xf0] %vm2478, %v2516
    %2526 = vst.msk [vmem:[#allocation3 + $0x310] sm:$0xff] %vm1015, %v2518
    %2527 = vst.msk [vmem:[#allocation3 + $0x330] sm:$0xff] %vm1015, %v2520
    %2528 = vst.msk [vmem:[#allocation3 + $0x350] sm:$0xf] %vm1089, %v2519
    %v2529 = vld [vmem:[#allocation2 + $0x189] sm:$0xff]
    %v2530 = vld [vmem:[#allocation2 + $0x191] sm:$0xff]
    %v2531 = vld [vmem:[#allocation2 + $0x199] sm:$0xff]
    %v2535 = vrot.slane %v2529, 4
    %v2536 = vrot.slane %v2530, 4
    %v2537 = vsel %vm2440, %v2535, %v2536
    %v2538 = vrot.slane %v2531, 4
    %v2539 = vsel %vm2440, %v2536, %v2538
    %2540 = vrot.lane.b32.xlu0 %v2535, 64
    %v2541 = vpop.permute.xlu0 %2540
    %2542 = vrot.lane.b32.xlu0 %v2537, 64
    %v2543 = vpop.permute.xlu0 %2542
    %2544 = vrot.lane.b32.xlu0 %v2539, 64
    %v2545 = vpop.permute.xlu0 %2544
    %2546 = vrot.lane.b32.xlu0 %v2538, 64
    %v2547 = vpop.permute.xlu0 %2546
    %2552 = vst.msk [vmem:[#allocation3 + $0x2f0] sm:$0xf0] %vm2458, %v2541
    %2553 = vst.msk [vmem:[#allocation3 + $0x310] sm:$0xff] %vm1127, %v2543
    %2554 = vst.msk [vmem:[#allocation3 + $0x330] sm:$0xff] %vm1127, %v2545
    %2555 = vst.msk [vmem:[#allocation3 + $0x350] sm:$0xf] %vm2227, %v2547
    %v2556 = vld [vmem:[#allocation2 + $0x1a2] sm:$0xff]
    %v2557 = vld [vmem:[#allocation2 + $0x1aa] sm:$0xff]
    %v2558 = vld [vmem:[#allocation2 + $0x1b2] sm:$0xff]
    %v2562 = vrot.slane %v2556, 4
    %v2563 = vrot.slane %v2557, 4
    %v2564 = vsel %vm2440, %v2562, %v2563
    %v2565 = vrot.slane %v2558, 4
    %v2566 = vsel %vm2440, %v2563, %v2565
    %2571 = vst.msk [vmem:[#allocation3 + $0x2f8] sm:$0xf0] %vm2478, %v2562
    %2572 = vst.msk [vmem:[#allocation3 + $0x318] sm:$0xff] %vm1015, %v2564
    %2573 = vst.msk [vmem:[#allocation3 + $0x338] sm:$0xff] %vm1015, %v2566
    %2574 = vst.msk [vmem:[#allocation3 + $0x358] sm:$0xf] %vm1089, %v2565
    %v2575 = vld [vmem:[#allocation2 + $0x1bb] sm:$0xff]
    %v2576 = vld [vmem:[#allocation2 + $0x1c3] sm:$0xff]
    %v2577 = vld [vmem:[#allocation2 + $0x1cb] sm:$0x7f]
    %v2581 = vrot.slane %v2575, 4
    %v2582 = vrot.slane %v2576, 4
    %v2583 = vsel %vm2440, %v2581, %v2582
    %v2584 = vrot.slane %v2577, 4
    %v2585 = vsel %vm2440, %v2582, %v2584
    %2586 = vrot.lane.b32.xlu0 %v2581, 64
    %v2587 = vpop.permute.xlu0 %2586
    %2588 = vrot.lane.b32.xlu0 %v2583, 64
    %v2589 = vpop.permute.xlu0 %2588
    %2590 = vrot.lane.b32.xlu0 %v2585, 64
    %v2591 = vpop.permute.xlu0 %2590
    %2592 = vrot.lane.b32.xlu0 %v2584, 64
    %v2593 = vpop.permute.xlu0 %2592
    %2598 = vst.msk [vmem:[#allocation3 + $0x2f8] sm:$0xf0] %vm2458, %v2587
    %2599 = vst.msk [vmem:[#allocation3 + $0x318] sm:$0xff] %vm1127, %v2589
    %2600 = vst.msk [vmem:[#allocation3 + $0x338] sm:$0xff] %vm1127, %v2591
    %vm2601 = vcmask 1042944
    %2602 = vst.msk [vmem:[#allocation3 + $0x358] sm:$0x7] %vm2601, %v2593
    %2603 = vst.msk [vmem:[#allocation3 + $0x35b] sm:$0x1] %vm1204, 0.0
    %v2604 = vld [vmem:[#allocation2 + $0x1a1] sm:$0xff]
    %v2605 = vld [vmem:[#allocation2 + $0x1a9] sm:$0xff]
    %v2606 = vld [vmem:[#allocation2 + $0x1b1] sm:$0x7f]
    %v2610 = vrot.slane %v2604, 4
    %v2611 = vrot.slane %v2605, 4
    %v2612 = vsel %vm2440, %v2610, %v2611
    %v2613 = vrot.slane %v2606, 4
    %v2614 = vsel %vm2440, %v2611, %v2613
    %2619 = vst.msk [vmem:[#allocation3 + $0x340] sm:$0xf0] %vm2478, %v2610
    %2620 = vst.msk [vmem:[#allocation3 + $0x360] sm:$0xff] %vm1015, %v2612
    %2621 = vst.msk [vmem:[#allocation3 + $0x380] sm:$0xff] %vm1015, %v2614
    %vm2622 = vcmask 518144
    %2623 = vst.msk [vmem:[#allocation3 + $0x3a0] sm:$0x7] %vm2622, %v2613
    %v2624 = vld [vmem:[#allocation2 + $0x1ba] sm:$0xff]
    %v2625 = vld [vmem:[#allocation2 + $0x1c2] sm:$0xff]
    %v2626 = vld [vmem:[#allocation2 + $0x1ca] sm:$0x7f]
    %v2630 = vrot.slane %v2624, 4
    %v2631 = vrot.slane %v2625, 4
    %v2632 = vsel %vm2440, %v2630, %v2631
    %v2633 = vrot.slane %v2626, 4
    %v2634 = vsel %vm2440, %v2631, %v2633
    %2635 = vrot.lane.b32.xlu0 %v2630, 64
    %v2636 = vpop.permute.xlu0 %2635
    %2637 = vrot.lane.b32.xlu0 %v2632, 64
    %v2638 = vpop.permute.xlu0 %2637
    %2639 = vrot.lane.b32.xlu0 %v2634, 64
    %v2640 = vpop.permute.xlu0 %2639
    %2641 = vrot.lane.b32.xlu0 %v2633, 64
    %v2642 = vpop.permute.xlu0 %2641
    %2647 = vst.msk [vmem:[#allocation3 + $0x340] sm:$0xf0] %vm2458, %v2636
    %2648 = vst.msk [vmem:[#allocation3 + $0x360] sm:$0xff] %vm1127, %v2638
    %2649 = vst.msk [vmem:[#allocation3 + $0x380] sm:$0xff] %vm1127, %v2640
    %2650 = vst.msk [vmem:[#allocation3 + $0x3a0] sm:$0x7] %vm2601, %v2642
    %v2651 = vld [vmem:[#allocation2 + $0x1d2] sm:$0xff]
    %v2652 = vld [vmem:[#allocation2 + $0x1da] sm:$0xff]
    %v2653 = vld [vmem:[#allocation2 + $0x1e2] sm:$0x7f]
    %v2657 = vrot.slane %v2651, 4
    %v2658 = vrot.slane %v2652, 4
    %v2659 = vsel %vm2440, %v2657, %v2658
    %v2660 = vrot.slane %v2653, 4
    %v2661 = vsel %vm2440, %v2658, %v2660
    %2666 = vst.msk [vmem:[#allocation3 + $0x348] sm:$0xf0] %vm2478, %v2657
    %2667 = vst.msk [vmem:[#allocation3 + $0x368] sm:$0xff] %vm1015, %v2659
    %2668 = vst.msk [vmem:[#allocation3 + $0x388] sm:$0xff] %vm1015, %v2661
    %2669 = vst.msk [vmem:[#allocation3 + $0x3a8] sm:$0x7] %vm2622, %v2660
    %v2670 = vld [vmem:[#allocation2 + $0x189] sm:$0xff]
    %v2671 = vld [vmem:[#allocation2 + $0x191] sm:$0xff]
    %v2672 = vld [vmem:[#allocation2 + $0x199] sm:$0x7f]
    %v2676 = vrot.slane %v2670, 4
    %v2677 = vrot.slane %v2671, 4
    %v2678 = vsel %vm2440, %v2676, %v2677
    %v2679 = vrot.slane %v2672, 4
    %v2680 = vsel %vm2440, %v2677, %v2679
    %2681 = vrot.lane.b32.xlu0 %v2676, 64
    %v2682 = vpop.permute.xlu0 %2681
    %2683 = vrot.lane.b32.xlu0 %v2678, 64
    %v2684 = vpop.permute.xlu0 %2683
    %2685 = vrot.lane.b32.xlu0 %v2680, 64
    %v2686 = vpop.permute.xlu0 %2685
    %2687 = vrot.lane.b32.xlu0 %v2679, 64
    %v2688 = vpop.permute.xlu0 %2687
    %2693 = vst.msk [vmem:[#allocation3 + $0x348] sm:$0xf0] %vm2458, %v2682
    %2694 = vst.msk [vmem:[#allocation3 + $0x368] sm:$0xff] %vm1127, %v2684
    %2695 = vst.msk [vmem:[#allocation3 + $0x388] sm:$0xff] %vm1127, %v2686
    %2696 = vst.msk [vmem:[#allocation3 + $0x3a8] sm:$0x7] %vm2601, %v2688
    %v2697 = vld [vmem:[#allocation2 + $0x1a2] sm:$0xff]
    %v2698 = vld [vmem:[#allocation2 + $0x1aa] sm:$0xff]
    %v2699 = vld [vmem:[#allocation2 + $0x1b2] sm:$0x7f]
    %v2703 = vrot.slane %v2697, 4
    %v2704 = vrot.slane %v2698, 4
    %v2705 = vsel %vm2440, %v2703, %v2704
    %v2706 = vrot.slane %v2699, 4
    %v2707 = vsel %vm2440, %v2704, %v2706
    %2712 = vst.msk [vmem:[#allocation3 + $0x350] sm:$0xf0] %vm2478, %v2703
    %2713 = vst.msk [vmem:[#allocation3 + $0x370] sm:$0xff] %vm1015, %v2705
    %2714 = vst.msk [vmem:[#allocation3 + $0x390] sm:$0xff] %vm1015, %v2707
    %2715 = vst.msk [vmem:[#allocation3 + $0x3b0] sm:$0x7] %vm2622, %v2706
    %v2716 = vld [vmem:[#allocation2 + $0x1bb] sm:$0xff]
    %v2717 = vld [vmem:[#allocation2 + $0x1c3] sm:$0xff]
    %v2718 = vld [vmem:[#allocation2 + $0x1cb] sm:$0x7f]
    %v2722 = vrot.slane %v2716, 4
    %v2723 = vrot.slane %v2717, 4
    %v2724 = vsel %vm2440, %v2722, %v2723
    %v2725 = vrot.slane %v2718, 4
    %v2726 = vsel %vm2440, %v2723, %v2725
    %2727 = vrot.lane.b32.xlu0 %v2722, 64
    %v2728 = vpop.permute.xlu0 %2727
    %2729 = vrot.lane.b32.xlu0 %v2724, 64
    %v2730 = vpop.permute.xlu0 %2729
    %2731 = vrot.lane.b32.xlu0 %v2726, 64
    %v2732 = vpop.permute.xlu0 %2731
    %2733 = vrot.lane.b32.xlu0 %v2725, 64
    %v2734 = vpop.permute.xlu0 %2733
    %2739 = vst.msk [vmem:[#allocation3 + $0x350] sm:$0xf0] %vm2458, %v2728
    %2740 = vst.msk [vmem:[#allocation3 + $0x370] sm:$0xff] %vm1127, %v2730
    %2741 = vst.msk [vmem:[#allocation3 + $0x390] sm:$0xff] %vm1127, %v2732
    %2742 = vst.msk [vmem:[#allocation3 + $0x3b0] sm:$0x7] %vm2601, %v2734
    %v2743 = vld [vmem:[#allocation2 + $0x1d3] sm:$0xff]
    %v2744 = vld [vmem:[#allocation2 + $0x1db] sm:$0xff]
    %v2745 = vld [vmem:[#allocation2 + $0x1e3] sm:$0x7f]
    %v2749 = vrot.slane %v2743, 4
    %v2750 = vrot.slane %v2744, 4
    %v2751 = vsel %vm2440, %v2749, %v2750
    %v2752 = vrot.slane %v2745, 4
    %v2753 = vsel %vm2440, %v2750, %v2752
    %2758 = vst.msk [vmem:[#allocation3 + $0x358] sm:$0xf0] %vm2478, %v2749
    %2759 = vst.msk [vmem:[#allocation3 + $0x378] sm:$0xff] %vm1015, %v2751
    %2760 = vst.msk [vmem:[#allocation3 + $0x398] sm:$0xff] %vm1015, %v2753
    %2761 = vst.msk [vmem:[#allocation3 + $0x3b8] sm:$0x7] %vm2622, %v2752
    %v2762 = vld [vmem:[#allocation2 + $0x18a] sm:$0xff]
    %v2763 = vld [vmem:[#allocation2 + $0x192] sm:$0xff]
    %v2764 = vld [vmem:[#allocation2 + $0x19a] sm:$0x7f]
    %v2768 = vrot.slane %v2762, 4
    %v2769 = vrot.slane %v2763, 4
    %v2770 = vsel %vm2440, %v2768, %v2769
    %v2771 = vrot.slane %v2764, 4
    %v2772 = vsel %vm2440, %v2769, %v2771
    %2773 = vrot.lane.b32.xlu0 %v2768, 64
    %v2774 = vpop.permute.xlu0 %2773
    %2775 = vrot.lane.b32.xlu0 %v2770, 64
    %v2776 = vpop.permute.xlu0 %2775
    %2777 = vrot.lane.b32.xlu0 %v2772, 64
    %v2778 = vpop.permute.xlu0 %2777
    %2779 = vrot.lane.b32.xlu0 %v2771, 64
    %v2780 = vpop.permute.xlu0 %2779
    %2785 = vst.msk [vmem:[#allocation3 + $0x358] sm:$0xf0] %vm2458, %v2774
    %2786 = vst.msk [vmem:[#allocation3 + $0x378] sm:$0xff] %vm1127, %v2776
    %2787 = vst.msk [vmem:[#allocation3 + $0x398] sm:$0xff] %vm1127, %v2778
    %2788 = vst.msk [vmem:[#allocation3 + $0x3b8] sm:$0x7] %vm2601, %v2780
    %v2789 = vld [vmem:[#allocation2 + $0x234] sm:$0xff]
    %v2790 = vld [vmem:[#allocation2 + $0x23c] sm:$0xff]
    %v2791 = vld [vmem:[#allocation2 + $0x244] sm:$0x7f]
    %v2795 = vrot.slane %v2789, 4
    %v2796 = vrot.slane %v2790, 4
    %v2797 = vsel %vm2440, %v2795, %v2796
    %v2798 = vrot.slane %v2791, 4
    %v2799 = vsel %vm2440, %v2796, %v2798
    %2804 = vst.msk [vmem:[#allocation3 + $0x3a0] sm:$0xf0] %vm2478, %v2795
    %2805 = vst.msk [vmem:[#allocation3 + $0x3c0] sm:$0xff] %vm1015, %v2797
    %2806 = vst.msk [vmem:[#allocation3 + $0x3e0] sm:$0xff] %vm1015, %v2799
    %2807 = vst.msk [vmem:[#allocation3 + $0x400] sm:$0x7] %vm2622, %v2798
    %2808 = vst.msk [vmem:[#allocation3 + $0x3a3] sm:$0x1] %vm1110, 0.0
    %v2809 = vld [vmem:[#allocation2 + $0x1ea] sm:$0xff]
    %v2810 = vld [vmem:[#allocation2 + $0x1f2] sm:$0xff]
    %v2811 = vld [vmem:[#allocation2 + $0x1fa] sm:$0xff]
    %vm2815 = vcmask 1042432
    %v2816 = vrot.slane %v2809, 5
    %v2817 = vrot.slane %v2810, 5
    %v2818 = vsel %vm2815, %v2816, %v2817
    %v2819 = vrot.slane %v2811, 5
    %v2820 = vsel %vm2815, %v2817, %v2819
    %2821 = vrot.lane.b32.xlu0 %v2816, 64
    %v2822 = vpop.permute.xlu0 %2821
    %2823 = vrot.lane.b32.xlu0 %v2818, 64
    %v2824 = vpop.permute.xlu0 %2823
    %2825 = vrot.lane.b32.xlu0 %v2820, 64
    %v2826 = vpop.permute.xlu0 %2825
    %2827 = vrot.lane.b32.xlu0 %v2819, 64
    %v2828 = vpop.permute.xlu0 %2827
    %vm2833 = vcmask 1048067
    %2834 = vst.msk [vmem:[#allocation3 + $0x3a0] sm:$0xf8] %vm2833, %v2822
    %2835 = vst.msk [vmem:[#allocation3 + $0x3c0] sm:$0xff] %vm1127, %v2824
    %2836 = vst.msk [vmem:[#allocation3 + $0x3e0] sm:$0xff] %vm1127, %v2826
    %2837 = vst.msk [vmem:[#allocation3 + $0x400] sm:$0x7] %vm2601, %v2828
    %v2838 = vld [vmem:[#allocation2 + $0x203] sm:$0xff]
    %v2839 = vld [vmem:[#allocation2 + $0x20b] sm:$0xff]
    %v2840 = vld [vmem:[#allocation2 + $0x213] sm:$0xff]
    %v2844 = vrot.slane %v2838, 5
    %v2845 = vrot.slane %v2839, 5
    %v2846 = vsel %vm2815, %v2844, %v2845
    %v2847 = vrot.slane %v2840, 5
    %v2848 = vsel %vm2815, %v2845, %v2847
    %vm2853 = vcmask 523267
    %2854 = vst.msk [vmem:[#allocation3 + $0x3a8] sm:$0xf8] %vm2853, %v2844
    %2855 = vst.msk [vmem:[#allocation3 + $0x3c8] sm:$0xff] %vm1015, %v2846
    %2856 = vst.msk [vmem:[#allocation3 + $0x3e8] sm:$0xff] %vm1015, %v2848
    %2857 = vst.msk [vmem:[#allocation3 + $0x408] sm:$0x7] %vm2622, %v2847
    %v2858 = vld [vmem:[#allocation2 + $0x21c] sm:$0xff]
    %v2859 = vld [vmem:[#allocation2 + $0x224] sm:$0xff]
    %v2860 = vld [vmem:[#allocation2 + $0x22c] sm:$0xff]
    %v2864 = vrot.slane %v2858, 5
    %v2865 = vrot.slane %v2859, 5
    %v2866 = vsel %vm2815, %v2864, %v2865
    %v2867 = vrot.slane %v2860, 5
    %v2868 = vsel %vm2815, %v2865, %v2867
    %2869 = vrot.lane.b32.xlu0 %v2864, 64
    %v2870 = vpop.permute.xlu0 %2869
    %2871 = vrot.lane.b32.xlu0 %v2866, 64
    %v2872 = vpop.permute.xlu0 %2871
    %2873 = vrot.lane.b32.xlu0 %v2868, 64
    %v2874 = vpop.permute.xlu0 %2873
    %2875 = vrot.lane.b32.xlu0 %v2867, 64
    %v2876 = vpop.permute.xlu0 %2875
    %2881 = vst.msk [vmem:[#allocation3 + $0x3a8] sm:$0xf8] %vm2833, %v2870
    %2882 = vst.msk [vmem:[#allocation3 + $0x3c8] sm:$0xff] %vm1127, %v2872
    %2883 = vst.msk [vmem:[#allocation3 + $0x3e8] sm:$0xff] %vm1127, %v2874
    %2884 = vst.msk [vmem:[#allocation3 + $0x408] sm:$0x7] %vm2601, %v2876
    %v2885 = vld [vmem:[#allocation2 + $0x234] sm:$0xff]
    %v2886 = vld [vmem:[#allocation2 + $0x23c] sm:$0xff]
    %v2887 = vld [vmem:[#allocation2 + $0x244] sm:$0xff]
    %v2891 = vrot.slane %v2885, 5
    %v2892 = vrot.slane %v2886, 5
    %v2893 = vsel %vm2815, %v2891, %v2892
    %v2894 = vrot.slane %v2887, 5
    %v2895 = vsel %vm2815, %v2892, %v2894
    %2900 = vst.msk [vmem:[#allocation3 + $0x3b0] sm:$0xf8] %vm2853, %v2891
    %2901 = vst.msk [vmem:[#allocation3 + $0x3d0] sm:$0xff] %vm1015, %v2893
    %2902 = vst.msk [vmem:[#allocation3 + $0x3f0] sm:$0xff] %vm1015, %v2895
    %2903 = vst.msk [vmem:[#allocation3 + $0x410] sm:$0x7] %vm2622, %v2894
    %v2904 = vld [vmem:[#allocation2 + $0x1eb] sm:$0xff]
    %v2905 = vld [vmem:[#allocation2 + $0x1f3] sm:$0xff]
    %v2906 = vld [vmem:[#allocation2 + $0x1fb] sm:$0xff]
    %v2910 = vrot.slane %v2904, 5
    %v2911 = vrot.slane %v2905, 5
    %v2912 = vsel %vm2815, %v2910, %v2911
    %v2913 = vrot.slane %v2906, 5
    %v2914 = vsel %vm2815, %v2911, %v2913
    %2915 = vrot.lane.b32.xlu0 %v2910, 64
    %v2916 = vpop.permute.xlu0 %2915
    %2917 = vrot.lane.b32.xlu0 %v2912, 64
    %v2918 = vpop.permute.xlu0 %2917
    %2919 = vrot.lane.b32.xlu0 %v2914, 64
    %v2920 = vpop.permute.xlu0 %2919
    %2921 = vrot.lane.b32.xlu0 %v2913, 64
    %v2922 = vpop.permute.xlu0 %2921
    %2927 = vst.msk [vmem:[#allocation3 + $0x3b0] sm:$0xf8] %vm2833, %v2916
    %2928 = vst.msk [vmem:[#allocation3 + $0x3d0] sm:$0xff] %vm1127, %v2918
    %2929 = vst.msk [vmem:[#allocation3 + $0x3f0] sm:$0xff] %vm1127, %v2920
    %2930 = vst.msk [vmem:[#allocation3 + $0x410] sm:$0x7] %vm2601, %v2922
    %v2931 = vld [vmem:[#allocation2 + $0x204] sm:$0xff]
    %v2932 = vld [vmem:[#allocation2 + $0x20c] sm:$0xff]
    %v2933 = vld [vmem:[#allocation2 + $0x214] sm:$0xff]
    %v2937 = vrot.slane %v2931, 5
    %v2938 = vrot.slane %v2932, 5
    %v2939 = vsel %vm2815, %v2937, %v2938
    %v2940 = vrot.slane %v2933, 5
    %v2941 = vsel %vm2815, %v2938, %v2940
    %2946 = vst.msk [vmem:[#allocation3 + $0x3b8] sm:$0xf8] %vm2853, %v2937
    %2947 = vst.msk [vmem:[#allocation3 + $0x3d8] sm:$0xff] %vm1015, %v2939
    %2948 = vst.msk [vmem:[#allocation3 + $0x3f8] sm:$0xff] %vm1015, %v2941
    %2949 = vst.msk [vmem:[#allocation3 + $0x418] sm:$0x7] %vm2622, %v2940
    %v2950 = vld [vmem:[#allocation2 + $0x21d] sm:$0xff]
    %v2951 = vld [vmem:[#allocation2 + $0x225] sm:$0xff]
    %v2952 = vld [vmem:[#allocation2 + $0x22d] sm:$0x7f]
    %v2956 = vrot.slane %v2950, 5
    %v2957 = vrot.slane %v2951, 5
    %v2958 = vsel %vm2815, %v2956, %v2957
    %v2959 = vrot.slane %v2952, 5
    %v2960 = vsel %vm2815, %v2957, %v2959
    %2961 = vrot.lane.b32.xlu0 %v2956, 64
    %v2962 = vpop.permute.xlu0 %2961
    %2963 = vrot.lane.b32.xlu0 %v2958, 64
    %v2964 = vpop.permute.xlu0 %2963
    %2965 = vrot.lane.b32.xlu0 %v2960, 64
    %v2966 = vpop.permute.xlu0 %2965
    %2967 = vrot.lane.b32.xlu0 %v2959, 64
    %v2968 = vpop.permute.xlu0 %2967
    %2973 = vst.msk [vmem:[#allocation3 + $0x3b8] sm:$0xf8] %vm2833, %v2962
    %2974 = vst.msk [vmem:[#allocation3 + $0x3d8] sm:$0xff] %vm1127, %v2964
    %2975 = vst.msk [vmem:[#allocation3 + $0x3f8] sm:$0xff] %vm1127, %v2966
    %vm2976 = vcmask 1041920
    %2977 = vst.msk [vmem:[#allocation3 + $0x418] sm:$0x3] %vm2976, %v2968
    %2978 = vst.msk [vmem:[#allocation3 + $0x41a] sm:$0x1] %vm1204, 0.0
    %v2979 = vld [vmem:[#allocation2 + $0x203] sm:$0xff]
    %v2980 = vld [vmem:[#allocation2 + $0x20b] sm:$0xff]
    %v2981 = vld [vmem:[#allocation2 + $0x213] sm:$0x7f]
    %v2985 = vrot.slane %v2979, 5
    %v2986 = vrot.slane %v2980, 5
    %v2987 = vsel %vm2815, %v2985, %v2986
    %v2988 = vrot.slane %v2981, 5
    %v2989 = vsel %vm2815, %v2986, %v2988
    %2994 = vst.msk [vmem:[#allocation3 + $0x400] sm:$0xf8] %vm2853, %v2985
    %2995 = vst.msk [vmem:[#allocation3 + $0x420] sm:$0xff] %vm1015, %v2987
    %2996 = vst.msk [vmem:[#allocation3 + $0x440] sm:$0xff] %vm1015, %v2989
    %vm2997 = vcmask 517120
    %2998 = vst.msk [vmem:[#allocation3 + $0x460] sm:$0x3] %vm2997, %v2988
    %v2999 = vld [vmem:[#allocation2 + $0x21c] sm:$0xff]
    %v3000 = vld [vmem:[#allocation2 + $0x224] sm:$0xff]
    %v3001 = vld [vmem:[#allocation2 + $0x22c] sm:$0x7f]
    %v3005 = vrot.slane %v2999, 5
    %v3006 = vrot.slane %v3000, 5
    %v3007 = vsel %vm2815, %v3005, %v3006
    %v3008 = vrot.slane %v3001, 5
    %v3009 = vsel %vm2815, %v3006, %v3008
    %3010 = vrot.lane.b32.xlu0 %v3005, 64
    %v3011 = vpop.permute.xlu0 %3010
    %3012 = vrot.lane.b32.xlu0 %v3007, 64
    %v3013 = vpop.permute.xlu0 %3012
    %3014 = vrot.lane.b32.xlu0 %v3009, 64
    %v3015 = vpop.permute.xlu0 %3014
    %3016 = vrot.lane.b32.xlu0 %v3008, 64
    %v3017 = vpop.permute.xlu0 %3016
    %3022 = vst.msk [vmem:[#allocation3 + $0x400] sm:$0xf8] %vm2833, %v3011
    %3023 = vst.msk [vmem:[#allocation3 + $0x420] sm:$0xff] %vm1127, %v3013
    %3024 = vst.msk [vmem:[#allocation3 + $0x440] sm:$0xff] %vm1127, %v3015
    %3025 = vst.msk [vmem:[#allocation3 + $0x460] sm:$0x3] %vm2976, %v3017
    %v3026 = vld [vmem:[#allocation2 + $0x234] sm:$0xff]
    %v3027 = vld [vmem:[#allocation2 + $0x23c] sm:$0xff]
    %v3028 = vld [vmem:[#allocation2 + $0x244] sm:$0x7f]
    %v3032 = vrot.slane %v3026, 5
    %v3033 = vrot.slane %v3027, 5
    %v3034 = vsel %vm2815, %v3032, %v3033
    %v3035 = vrot.slane %v3028, 5
    %v3036 = vsel %vm2815, %v3033, %v3035
    %3041 = vst.msk [vmem:[#allocation3 + $0x408] sm:$0xf8] %vm2853, %v3032
    %3042 = vst.msk [vmem:[#allocation3 + $0x428] sm:$0xff] %vm1015, %v3034
    %3043 = vst.msk [vmem:[#allocation3 + $0x448] sm:$0xff] %vm1015, %v3036
    %3044 = vst.msk [vmem:[#allocation3 + $0x468] sm:$0x3] %vm2997, %v3035
    %v3045 = vld [vmem:[#allocation2 + $0x1eb] sm:$0xff]
    %v3046 = vld [vmem:[#allocation2 + $0x1f3] sm:$0xff]
    %v3047 = vld [vmem:[#allocation2 + $0x1fb] sm:$0x7f]
    %v3051 = vrot.slane %v3045, 5
    %v3052 = vrot.slane %v3046, 5
    %v3053 = vsel %vm2815, %v3051, %v3052
    %v3054 = vrot.slane %v3047, 5
    %v3055 = vsel %vm2815, %v3052, %v3054
    %3056 = vrot.lane.b32.xlu0 %v3051, 64
    %v3057 = vpop.permute.xlu0 %3056
    %3058 = vrot.lane.b32.xlu0 %v3053, 64
    %v3059 = vpop.permute.xlu0 %3058
    %3060 = vrot.lane.b32.xlu0 %v3055, 64
    %v3061 = vpop.permute.xlu0 %3060
    %3062 = vrot.lane.b32.xlu0 %v3054, 64
    %v3063 = vpop.permute.xlu0 %3062
    %3068 = vst.msk [vmem:[#allocation3 + $0x408] sm:$0xf8] %vm2833, %v3057
    %3069 = vst.msk [vmem:[#allocation3 + $0x428] sm:$0xff] %vm1127, %v3059
    %3070 = vst.msk [vmem:[#allocation3 + $0x448] sm:$0xff] %vm1127, %v3061
    %3071 = vst.msk [vmem:[#allocation3 + $0x468] sm:$0x3] %vm2976, %v3063
    %v3072 = vld [vmem:[#allocation2 + $0x204] sm:$0xff]
    %v3073 = vld [vmem:[#allocation2 + $0x20c] sm:$0xff]
    %v3074 = vld [vmem:[#allocation2 + $0x214] sm:$0x7f]
    %v3078 = vrot.slane %v3072, 5
    %v3079 = vrot.slane %v3073, 5
    %v3080 = vsel %vm2815, %v3078, %v3079
    %v3081 = vrot.slane %v3074, 5
    %v3082 = vsel %vm2815, %v3079, %v3081
    %3087 = vst.msk [vmem:[#allocation3 + $0x410] sm:$0xf8] %vm2853, %v3078
    %3088 = vst.msk [vmem:[#allocation3 + $0x430] sm:$0xff] %vm1015, %v3080
    %3089 = vst.msk [vmem:[#allocation3 + $0x450] sm:$0xff] %vm1015, %v3082
    %3090 = vst.msk [vmem:[#allocation3 + $0x470] sm:$0x3] %vm2997, %v3081
    %v3091 = vld [vmem:[#allocation2 + $0x21d] sm:$0xff]
    %v3092 = vld [vmem:[#allocation2 + $0x225] sm:$0xff]
    %v3093 = vld [vmem:[#allocation2 + $0x22d] sm:$0x7f]
    %v3097 = vrot.slane %v3091, 5
    %v3098 = vrot.slane %v3092, 5
    %v3099 = vsel %vm2815, %v3097, %v3098
    %v3100 = vrot.slane %v3093, 5
    %v3101 = vsel %vm2815, %v3098, %v3100
    %3102 = vrot.lane.b32.xlu0 %v3097, 64
    %v3103 = vpop.permute.xlu0 %3102
    %3104 = vrot.lane.b32.xlu0 %v3099, 64
    %v3105 = vpop.permute.xlu0 %3104
    %3106 = vrot.lane.b32.xlu0 %v3101, 64
    %v3107 = vpop.permute.xlu0 %3106
    %3108 = vrot.lane.b32.xlu0 %v3100, 64
    %v3109 = vpop.permute.xlu0 %3108
    %3114 = vst.msk [vmem:[#allocation3 + $0x410] sm:$0xf8] %vm2833, %v3103
    %3115 = vst.msk [vmem:[#allocation3 + $0x430] sm:$0xff] %vm1127, %v3105
    %3116 = vst.msk [vmem:[#allocation3 + $0x450] sm:$0xff] %vm1127, %v3107
    %3117 = vst.msk [vmem:[#allocation3 + $0x470] sm:$0x3] %vm2976, %v3109
    %v3118 = vld [vmem:[#allocation2 + $0x235] sm:$0xff]
    %v3119 = vld [vmem:[#allocation2 + $0x23d] sm:$0xff]
    %v3120 = vld [vmem:[#allocation2 + $0x245] sm:$0x7f]
    %v3124 = vrot.slane %v3118, 5
    %v3125 = vrot.slane %v3119, 5
    %v3126 = vsel %vm2815, %v3124, %v3125
    %v3127 = vrot.slane %v3120, 5
    %v3128 = vsel %vm2815, %v3125, %v3127
    %3133 = vst.msk [vmem:[#allocation3 + $0x418] sm:$0xf8] %vm2853, %v3124
    %3134 = vst.msk [vmem:[#allocation3 + $0x438] sm:$0xff] %vm1015, %v3126
    %3135 = vst.msk [vmem:[#allocation3 + $0x458] sm:$0xff] %vm1015, %v3128
    %3136 = vst.msk [vmem:[#allocation3 + $0x478] sm:$0x3] %vm2997, %v3127
    %v3137 = vld [vmem:[#allocation2 + $0x1ec] sm:$0xff]
    %v3138 = vld [vmem:[#allocation2 + $0x1f4] sm:$0xff]
    %v3139 = vld [vmem:[#allocation2 + $0x1fc] sm:$0x7f]
    %v3143 = vrot.slane %v3137, 5
    %v3144 = vrot.slane %v3138, 5
    %v3145 = vsel %vm2815, %v3143, %v3144
    %v3146 = vrot.slane %v3139, 5
    %v3147 = vsel %vm2815, %v3144, %v3146
    %3148 = vrot.lane.b32.xlu0 %v3143, 64
    %v3149 = vpop.permute.xlu0 %3148
    %3150 = vrot.lane.b32.xlu0 %v3145, 64
    %v3151 = vpop.permute.xlu0 %3150
    %3152 = vrot.lane.b32.xlu0 %v3147, 64
    %v3153 = vpop.permute.xlu0 %3152
    %3154 = vrot.lane.b32.xlu0 %v3146, 64
    %v3155 = vpop.permute.xlu0 %3154
    %3160 = vst.msk [vmem:[#allocation3 + $0x418] sm:$0xf8] %vm2833, %v3149
    %3161 = vst.msk [vmem:[#allocation3 + $0x438] sm:$0xff] %vm1127, %v3151
    %3162 = vst.msk [vmem:[#allocation3 + $0x458] sm:$0xff] %vm1127, %v3153
    %3163 = vst.msk [vmem:[#allocation3 + $0x478] sm:$0x3] %vm2976, %v3155
    %v3164 = vld [vmem:[#allocation3] sm:$0xff]
    %v3165 = vld [vmem:[#allocation3 + $0x8] sm:$0xff]
    %v3166 = vld [vmem:[#allocation3 + $0x10] sm:$0xff]
    %v3167 = vld [vmem:[#allocation3 + $0x18] sm:$0xff]
    %v3168 = vld [vmem:[#allocation3 + $0x20] sm:$0xff]
    %v3169 = vld [vmem:[#allocation3 + $0x28] sm:$0xff]
    %v3170 = vld [vmem:[#allocation3 + $0x30] sm:$0xff]
    %v3171 = vld [vmem:[#allocation3 + $0x38] sm:$0xff]
    %v3172 = vld [vmem:[#allocation3 + $0x40] sm:$0xff]
    %v3173 = vld [vmem:[#allocation3 + $0x48] sm:$0xff]
    %v3174 = vld [vmem:[#allocation3 + $0x50] sm:$0xff]
    %v3175 = vld [vmem:[#allocation3 + $0x58] sm:$0xff]
    %v3176 = vld [vmem:[#allocation3 + $0x60] sm:$0xff]
    %v3177 = vld [vmem:[#allocation3 + $0x68] sm:$0xff]
    %v3178 = vld [vmem:[#allocation3 + $0x70] sm:$0xff]
    %v3179 = vld [vmem:[#allocation3 + $0x78] sm:$0xff]
    %v3180 = vld [vmem:[#allocation3 + $0x80] sm:$0xff]
    %v3181 = vld [vmem:[#allocation3 + $0x88] sm:$0xff]
    %v3182 = vld [vmem:[#allocation3 + $0x90] sm:$0xff]
    %v3183 = vld [vmem:[#allocation3 + $0x98] sm:$0xff]
    %v3184 = vld [vmem:[#allocation3 + $0xa0] sm:$0xff]
    %v3185 = vld [vmem:[#allocation3 + $0xa8] sm:$0xff]
    %v3186 = vld [vmem:[#allocation3 + $0xb0] sm:$0xff]
    %v3187 = vld [vmem:[#allocation3 + $0xb8] sm:$0xff]
    %v3188 = vld [vmem:[#allocation3 + $0xc0] sm:$0xff]
    %v3189 = vld [vmem:[#allocation3 + $0xc8] sm:$0xff]
    %v3190 = vld [vmem:[#allocation3 + $0xd0] sm:$0xff]
    %v3191 = vld [vmem:[#allocation3 + $0xd8] sm:$0xff]
    %v3192 = vld [vmem:[#allocation3 + $0xe0] sm:$0xff]
    %v3193 = vld [vmem:[#allocation3 + $0xe8] sm:$0xff]
    %v3194 = vld [vmem:[#allocation3 + $0xf0] sm:$0xff]
    %v3195 = vld [vmem:[#allocation3 + $0xf8] sm:$0xff]
    %v3196 = vld [vmem:[#allocation3 + $0x100] sm:$0xff]
    %v3197 = vld [vmem:[#allocation3 + $0x108] sm:$0xff]
    %v3198 = vld [vmem:[#allocation3 + $0x110] sm:$0xff]
    %v3199 = vld [vmem:[#allocation3 + $0x118] sm:$0xff]
    %v3200 = vld [vmem:[#allocation3 + $0x120] sm:$0xff]
    %v3201 = vld [vmem:[#allocation3 + $0x128] sm:$0xff]
    %v3202 = vld [vmem:[#allocation3 + $0x130] sm:$0xff]
    %v3203 = vld [vmem:[#allocation3 + $0x138] sm:$0xff]
    %v3204 = vld [vmem:[#allocation3 + $0x140] sm:$0xff]
    %v3205 = vld [vmem:[#allocation3 + $0x148] sm:$0xff]
    %v3206 = vld [vmem:[#allocation3 + $0x150] sm:$0xff]
    %v3207 = vld [vmem:[#allocation3 + $0x158] sm:$0xff]
    %v3208 = vld [vmem:[#allocation3 + $0x160] sm:$0xff]
    %v3209 = vld [vmem:[#allocation3 + $0x168] sm:$0xff]
    %v3210 = vld [vmem:[#allocation3 + $0x170] sm:$0xff]
    %v3211 = vld [vmem:[#allocation3 + $0x178] sm:$0xff]
    %v3212 = vld [vmem:[#allocation3 + $0x180] sm:$0xff]
    %v3213 = vld [vmem:[#allocation3 + $0x188] sm:$0xff]
    %v3214 = vld [vmem:[#allocation3 + $0x190] sm:$0xff]
    %v3215 = vld [vmem:[#allocation3 + $0x198] sm:$0xff]
    %v3216 = vld [vmem:[#allocation3 + $0x1a0] sm:$0xff]
    %v3217 = vld [vmem:[#allocation3 + $0x1a8] sm:$0xff]
    %v3218 = vld [vmem:[#allocation3 + $0x1b0] sm:$0xff]
    %v3219 = vld [vmem:[#allocation3 + $0x1b8] sm:$0xff]
    %v3220 = vld [vmem:[#allocation3 + $0x1c0] sm:$0xff]
    %v3221 = vld [vmem:[#allocation3 + $0x1c8] sm:$0xff]
    %v3222 = vld [vmem:[#allocation3 + $0x1d0] sm:$0xff]
    %v3223 = vld [vmem:[#allocation3 + $0x1d8] sm:$0xff]
    %v3224 = vld [vmem:[#allocation3 + $0x1e0] sm:$0xff]
    %v3225 = vld [vmem:[#allocation3 + $0x1e8] sm:$0xff]
    %v3226 = vld [vmem:[#allocation3 + $0x1f0] sm:$0xff]
    %v3227 = vld [vmem:[#allocation3 + $0x1f8] sm:$0xff]
    %v3228 = vld [vmem:[#allocation3 + $0x200] sm:$0xff]
    %v3229 = vld [vmem:[#allocation3 + $0x208] sm:$0xff]
    %v3230 = vld [vmem:[#allocation3 + $0x210] sm:$0xff]
    %v3231 = vld [vmem:[#allocation3 + $0x218] sm:$0xff]
    %v3232 = vld [vmem:[#allocation3 + $0x220] sm:$0xff]
    %v3233 = vld [vmem:[#allocation3 + $0x228] sm:$0xff]
    %v3234 = vld [vmem:[#allocation3 + $0x230] sm:$0xff]
    %v3235 = vld [vmem:[#allocation3 + $0x238] sm:$0xff]
    %v3236 = vld [vmem:[#allocation3 + $0x240] sm:$0xff]
    %v3237 = vld [vmem:[#allocation3 + $0x248] sm:$0xff]
    %v3238 = vld [vmem:[#allocation3 + $0x250] sm:$0xff]
    %v3239 = vld [vmem:[#allocation3 + $0x258] sm:$0xff]
    %v3240 = vld [vmem:[#allocation3 + $0x260] sm:$0xff]
    %v3241 = vld [vmem:[#allocation3 + $0x268] sm:$0xff]
    %v3242 = vld [vmem:[#allocation3 + $0x270] sm:$0xff]
    %v3243 = vld [vmem:[#allocation3 + $0x278] sm:$0xff]
    %v3244 = vld [vmem:[#allocation3 + $0x280] sm:$0xff]
    %v3245 = vld [vmem:[#allocation3 + $0x288] sm:$0xff]
    %v3246 = vld [vmem:[#allocation3 + $0x290] sm:$0xff]
    %v3247 = vld [vmem:[#allocation3 + $0x298] sm:$0xff]
    %v3248 = vld [vmem:[#allocation3 + $0x2a0] sm:$0xff]
    %v3249 = vld [vmem:[#allocation3 + $0x2a8] sm:$0xff]
    %v3250 = vld [vmem:[#allocation3 + $0x2b0] sm:$0xff]
    %v3251 = vld [vmem:[#allocation3 + $0x2b8] sm:$0xff]
    %v3252 = vld [vmem:[#allocation3 + $0x2c0] sm:$0xff]
    %v3253 = vld [vmem:[#allocation3 + $0x2c8] sm:$0xff]
    %v3254 = vld [vmem:[#allocation3 + $0x2d0] sm:$0xff]
    %v3255 = vld [vmem:[#allocation3 + $0x2d8] sm:$0xff]
    %v3256 = vld [vmem:[#allocation3 + $0x2e0] sm:$0xff]
    %v3257 = vld [vmem:[#allocation3 + $0x2e8] sm:$0xff]
    %v3258 = vld [vmem:[#allocation3 + $0x2f0] sm:$0xff]
    %v3259 = vld [vmem:[#allocation3 + $0x2f8] sm:$0xff]
    %v3260 = vld [vmem:[#allocation3 + $0x300] sm:$0xff]
    %v3261 = vld [vmem:[#allocation3 + $0x308] sm:$0xff]
    %v3262 = vld [vmem:[#allocation3 + $0x310] sm:$0xff]
    %v3263 = vld [vmem:[#allocation3 + $0x318] sm:$0xff]
    %v3264 = vld [vmem:[#allocation3 + $0x320] sm:$0xff]
    %v3265 = vld [vmem:[#allocation3 + $0x328] sm:$0xff]
    %v3266 = vld [vmem:[#allocation3 + $0x330] sm:$0xff]
    %v3267 = vld [vmem:[#allocation3 + $0x338] sm:$0xff]
    %v3268 = vld [vmem:[#allocation3 + $0x340] sm:$0xff]
    %v3269 = vld [vmem:[#allocation3 + $0x348] sm:$0xff]
    %v3270 = vld [vmem:[#allocation3 + $0x350] sm:$0xff]
    %v3271 = vld [vmem:[#allocation3 + $0x358] sm:$0xff]
    %v3272 = vld [vmem:[#allocation3 + $0x360] sm:$0xff]
    %v3273 = vld [vmem:[#allocation3 + $0x368] sm:$0xff]
    %v3274 = vld [vmem:[#allocation3 + $0x370] sm:$0xff]
    %v3275 = vld [vmem:[#allocation3 + $0x378] sm:$0xff]
    %v3276 = vld [vmem:[#allocation3 + $0x380] sm:$0xff]
    %v3277 = vld [vmem:[#allocation3 + $0x388] sm:$0xff]
    %v3278 = vld [vmem:[#allocation3 + $0x390] sm:$0xff]
    %v3279 = vld [vmem:[#allocation3 + $0x398] sm:$0xff]
    %v3280 = vld [vmem:[#allocation3 + $0x3a0] sm:$0xff]
    %v3281 = vld [vmem:[#allocation3 + $0x3a8] sm:$0xff]
    %v3282 = vld [vmem:[#allocation3 + $0x3b0] sm:$0xff]
    %v3283 = vld [vmem:[#allocation3 + $0x3b8] sm:$0xff]
    %v3284 = vld [vmem:[#allocation3 + $0x3c0] sm:$0xff]
    %v3285 = vld [vmem:[#allocation3 + $0x3c8] sm:$0xff]
    %v3286 = vld [vmem:[#allocation3 + $0x3d0] sm:$0xff]
    %v3287 = vld [vmem:[#allocation3 + $0x3d8] sm:$0xff]
    %v3288 = vld [vmem:[#allocation3 + $0x3e0] sm:$0xff]
    %v3289 = vld [vmem:[#allocation3 + $0x3e8] sm:$0xff]
    %v3290 = vld [vmem:[#allocation3 + $0x3f0] sm:$0xff]
    %v3291 = vld [vmem:[#allocation3 + $0x3f8] sm:$0xff]
    %v3292 = vld [vmem:[#allocation3 + $0x400] sm:$0xff]
    %v3293 = vld [vmem:[#allocation3 + $0x408] sm:$0xff]
    %v3294 = vld [vmem:[#allocation3 + $0x410] sm:$0xff]
    %v3295 = vld [vmem:[#allocation3 + $0x418] sm:$0xff]
    %v3296 = vld [vmem:[#allocation3 + $0x420] sm:$0xff]
    %v3297 = vld [vmem:[#allocation3 + $0x428] sm:$0xff]
    %v3298 = vld [vmem:[#allocation3 + $0x430] sm:$0xff]
    %v3299 = vld [vmem:[#allocation3 + $0x438] sm:$0xff]
    %v3300 = vld [vmem:[#allocation3 + $0x440] sm:$0xff]
    %v3301 = vld [vmem:[#allocation3 + $0x448] sm:$0xff]
    %v3302 = vld [vmem:[#allocation3 + $0x450] sm:$0xff]
    %v3303 = vld [vmem:[#allocation3 + $0x458] sm:$0xff]
    %v3304 = vld [vmem:[#allocation3 + $0x460] sm:$0x3]
    %v3305 = vld [vmem:[#allocation3 + $0x468] sm:$0x3]
    %v3306 = vld [vmem:[#allocation3 + $0x470] sm:$0x3]
    %v3307 = vld [vmem:[#allocation3 + $0x478] sm:$0x3]
    %v3308 = vpack.c.bf16 %v3168, %v3164
    %v3309 = vpack.c.bf16 %v3169, %v3165
    %v3310 = vpack.c.bf16 %v3170, %v3166
    %v3311 = vpack.c.bf16 %v3171, %v3167
    %v3312 = vpack.c.bf16 %v3176, %v3172
    %v3313 = vpack.c.bf16 %v3177, %v3173
    %v3314 = vpack.c.bf16 %v3178, %v3174
    %v3315 = vpack.c.bf16 %v3179, %v3175
    %v3316 = vpack.c.bf16 %v3184, %v3180
    %v3317 = vpack.c.bf16 %v3185, %v3181
    %v3318 = vpack.c.bf16 %v3186, %v3182
    %v3319 = vpack.c.bf16 %v3187, %v3183
    %v3320 = vpack.c.bf16 %v3192, %v3188
    %v3321 = vpack.c.bf16 %v3193, %v3189
    %v3322 = vpack.c.bf16 %v3194, %v3190
    %v3323 = vpack.c.bf16 %v3195, %v3191
    %v3324 = vpack.c.bf16 %v3200, %v3196
    %v3325 = vpack.c.bf16 %v3201, %v3197
    %v3326 = vpack.c.bf16 %v3202, %v3198
    %v3327 = vpack.c.bf16 %v3203, %v3199
    %v3328 = vpack.c.bf16 %v3208, %v3204
    %v3329 = vpack.c.bf16 %v3209, %v3205
    %v3330 = vpack.c.bf16 %v3210, %v3206
    %v3331 = vpack.c.bf16 %v3211, %v3207
    %v3332 = vpack.c.bf16 %v3216, %v3212
    %v3333 = vpack.c.bf16 %v3217, %v3213
    %v3334 = vpack.c.bf16 %v3218, %v3214
    %v3335 = vpack.c.bf16 %v3219, %v3215
    %v3336 = vpack.c.bf16 %v3224, %v3220
    %v3337 = vpack.c.bf16 %v3225, %v3221
    %v3338 = vpack.c.bf16 %v3226, %v3222
    %v3339 = vpack.c.bf16 %v3227, %v3223
    %v3340 = vpack.c.bf16 %v3232, %v3228
    %v3341 = vpack.c.bf16 %v3233, %v3229
    %v3342 = vpack.c.bf16 %v3234, %v3230
    %v3343 = vpack.c.bf16 %v3235, %v3231
    %v3344 = vpack.c.bf16 %v3240, %v3236
    %v3345 = vpack.c.bf16 %v3241, %v3237
    %v3346 = vpack.c.bf16 %v3242, %v3238
    %v3347 = vpack.c.bf16 %v3243, %v3239
    %v3348 = vpack.c.bf16 %v3248, %v3244
    %v3349 = vpack.c.bf16 %v3249, %v3245
    %v3350 = vpack.c.bf16 %v3250, %v3246
    %v3351 = vpack.c.bf16 %v3251, %v3247
    %v3352 = vpack.c.bf16 %v3256, %v3252
    %v3353 = vpack.c.bf16 %v3257, %v3253
    %v3354 = vpack.c.bf16 %v3258, %v3254
    %v3355 = vpack.c.bf16 %v3259, %v3255
    %v3356 = vpack.c.bf16 %v3264, %v3260
    %v3357 = vpack.c.bf16 %v3265, %v3261
    %v3358 = vpack.c.bf16 %v3266, %v3262
    %v3359 = vpack.c.bf16 %v3267, %v3263
    %v3360 = vpack.c.bf16 %v3272, %v3268
    %v3361 = vpack.c.bf16 %v3273, %v3269
    %v3362 = vpack.c.bf16 %v3274, %v3270
    %v3363 = vpack.c.bf16 %v3275, %v3271
    %v3364 = vpack.c.bf16 %v3280, %v3276
    %v3365 = vpack.c.bf16 %v3281, %v3277
    %v3366 = vpack.c.bf16 %v3282, %v3278
    %v3367 = vpack.c.bf16 %v3283, %v3279
    %v3368 = vpack.c.bf16 %v3288, %v3284
    %v3369 = vpack.c.bf16 %v3289, %v3285
    %v3370 = vpack.c.bf16 %v3290, %v3286
    %v3371 = vpack.c.bf16 %v3291, %v3287
    %v3372 = vpack.c.bf16 %v3296, %v3292
    %v3373 = vpack.c.bf16 %v3297, %v3293
    %v3374 = vpack.c.bf16 %v3298, %v3294
    %v3375 = vpack.c.bf16 %v3299, %v3295
    %v3376 = vpack.c.bf16 %v3304, %v3300
    %v3377 = vpack.c.bf16 %v3305, %v3301
    %v3378 = vpack.c.bf16 %v3306, %v3302
    %v3379 = vpack.c.bf16 %v3307, %v3303
    %v3380 = vld [vmem:[%s4] sm:$0xf]
    %v3381 = vld [vmem:[%s4 + $0x4] sm:$0xf]
    %v3382 = vld [vmem:[%s4 + $0x8] sm:$0xf]
    %v3383 = vld [vmem:[%s4 + $0xc] sm:$0xf]
    %v3384 = vld [vmem:[%s4 + $0x10] sm:$0xf]
    %v3385 = vld [vmem:[%s4 + $0x14] sm:$0xf]
    %v3386 = vld [vmem:[%s4 + $0x18] sm:$0xf]
    %v3387 = vld [vmem:[%s4 + $0x1c] sm:$0xf]
    %v3388 = vld [vmem:[%s4 + $0x20] sm:$0xf]
    %v3389 = vld [vmem:[%s4 + $0x24] sm:$0xf]
    %v3390 = vld [vmem:[%s4 + $0x28] sm:$0xf]
    %v3391 = vld [vmem:[%s4 + $0x2c] sm:$0xf]
    %v3392 = vld [vmem:[%s4 + $0x30] sm:$0xf]
    %v3393 = vld [vmem:[%s4 + $0x34] sm:$0xf]
    %v3394 = vld [vmem:[%s4 + $0x38] sm:$0xf]
    %v3395 = vld [vmem:[%s4 + $0x3c] sm:$0xf]
    %v3396 = vld [vmem:[%s4 + $0x40] sm:$0xf]
    %v3397 = vld [vmem:[%s4 + $0x44] sm:$0xf]
    %v3398 = vld [vmem:[%s4 + $0x48] sm:$0xf]
    %v3399 = vld [vmem:[%s4 + $0x4c] sm:$0xf]
    %v3400 = vld [vmem:[%s4 + $0x50] sm:$0xf]
    %v3401 = vld [vmem:[%s4 + $0x54] sm:$0xf]
    %v3402 = vld [vmem:[%s4 + $0x58] sm:$0xf]
    %v3403 = vld [vmem:[%s4 + $0x5c] sm:$0xf]
    %v3404 = vld [vmem:[%s4 + $0x60] sm:$0xf]
    %v3405 = vld [vmem:[%s4 + $0x64] sm:$0xf]
    %v3406 = vld [vmem:[%s4 + $0x68] sm:$0xf]
    %v3407 = vld [vmem:[%s4 + $0x6c] sm:$0xf]
    %v3408 = vld [vmem:[%s4 + $0x70] sm:$0xf]
    %v3409 = vld [vmem:[%s4 + $0x74] sm:$0xf]
    %v3410 = vld [vmem:[%s4 + $0x78] sm:$0xf]
    %v3411 = vld [vmem:[%s4 + $0x7c] sm:$0xf]
    %v3412 = vld [vmem:[%s4 + $0x80] sm:$0xf]
    %v3413 = vld [vmem:[%s4 + $0x84] sm:$0xf]
    %v3414 = vld [vmem:[%s4 + $0x88] sm:$0xf]
    %v3415 = vld [vmem:[%s4 + $0x8c] sm:$0xf]
    %v3416 = vld [vmem:[%s4 + $0x90] sm:$0xf]
    %v3417 = vld [vmem:[%s4 + $0x94] sm:$0xf]
    %v3418 = vld [vmem:[%s4 + $0x98] sm:$0xf]
    %v3419 = vld [vmem:[%s4 + $0x9c] sm:$0xf]
    %v3420 = vld [vmem:[%s4 + $0xa0] sm:$0xf]
    %v3421 = vld [vmem:[%s4 + $0xa4] sm:$0xf]
    %v3422 = vld [vmem:[%s4 + $0xa8] sm:$0xf]
    %v3423 = vld [vmem:[%s4 + $0xac] sm:$0xf]
    %v3424 = vld [vmem:[%s4 + $0xb0] sm:$0xf]
    %v3425 = vld [vmem:[%s4 + $0xb4] sm:$0xf]
    %v3426 = vld [vmem:[%s4 + $0xb8] sm:$0xf]
    %v3427 = vld [vmem:[%s4 + $0xbc] sm:$0xf]
    %v3428 = vld [vmem:[%s4 + $0xc0] sm:$0xf]
    %v3429 = vld [vmem:[%s4 + $0xc4] sm:$0xf]
    %v3430 = vld [vmem:[%s4 + $0xc8] sm:$0xf]
    %v3431 = vld [vmem:[%s4 + $0xcc] sm:$0xf]
    %v3432 = vld [vmem:[%s4 + $0xd0] sm:$0xf]
    %v3433 = vld [vmem:[%s4 + $0xd4] sm:$0xf]
    %v3434 = vld [vmem:[%s4 + $0xd8] sm:$0xf]
    %v3435 = vld [vmem:[%s4 + $0xdc] sm:$0xf]
    %v3436 = vld [vmem:[%s4 + $0xe0] sm:$0xf]
    %v3437 = vld [vmem:[%s4 + $0xe4] sm:$0xf]
    %v3438 = vld [vmem:[%s4 + $0xe8] sm:$0xf]
    %v3439 = vld [vmem:[%s4 + $0xec] sm:$0xf]
    %v3440 = vld [vmem:[%s4 + $0xf0] sm:$0xf]
    %v3441 = vld [vmem:[%s4 + $0xf4] sm:$0xf]
    %v3442 = vld [vmem:[%s4 + $0xf8] sm:$0xf]
    %v3443 = vld [vmem:[%s4 + $0xfc] sm:$0xf]
    %v3508 = vunpack.c.l.b16 %v3380
    %v3509 = vunpack.c.l.b16 %v3381
    %v3510 = vunpack.c.l.b16 %v3382
    %v3511 = vunpack.c.l.b16 %v3383
    %v3512 = vunpack.c.l.b16 %v3384
    %v3513 = vunpack.c.l.b16 %v3385
    %v3514 = vunpack.c.l.b16 %v3386
    %v3515 = vunpack.c.l.b16 %v3387
    %v3516 = vunpack.c.l.b16 %v3388
    %v3517 = vunpack.c.l.b16 %v3389
    %v3518 = vunpack.c.l.b16 %v3390
    %v3519 = vunpack.c.l.b16 %v3391
    %v3520 = vunpack.c.l.b16 %v3392
    %v3521 = vunpack.c.l.b16 %v3393
    %v3522 = vunpack.c.l.b16 %v3394
    %v3523 = vunpack.c.l.b16 %v3395
    %v3524 = vunpack.c.l.b16 %v3396
    %v3525 = vunpack.c.l.b16 %v3397
    %v3526 = vunpack.c.l.b16 %v3398
    %v3527 = vunpack.c.l.b16 %v3399
    %v3528 = vunpack.c.l.b16 %v3400
    %v3529 = vunpack.c.l.b16 %v3401
    %v3530 = vunpack.c.l.b16 %v3402
    %v3531 = vunpack.c.l.b16 %v3403
    %v3532 = vunpack.c.l.b16 %v3404
    %v3533 = vunpack.c.l.b16 %v3405
    %v3534 = vunpack.c.l.b16 %v3406
    %v3535 = vunpack.c.l.b16 %v3407
    %v3536 = vunpack.c.l.b16 %v3408
    %v3537 = vunpack.c.l.b16 %v3409
    %v3538 = vunpack.c.l.b16 %v3410
    %v3539 = vunpack.c.l.b16 %v3411
    %v3540 = vunpack.c.l.b16 %v3412
    %v3541 = vunpack.c.l.b16 %v3413
    %v3542 = vunpack.c.l.b16 %v3414
    %v3543 = vunpack.c.l.b16 %v3415
    %v3544 = vunpack.c.l.b16 %v3416
    %v3545 = vunpack.c.l.b16 %v3417
    %v3546 = vunpack.c.l.b16 %v3418
    %v3547 = vunpack.c.l.b16 %v3419
    %v3548 = vunpack.c.l.b16 %v3420
    %v3549 = vunpack.c.l.b16 %v3421
    %v3550 = vunpack.c.l.b16 %v3422
    %v3551 = vunpack.c.l.b16 %v3423
    %v3552 = vunpack.c.l.b16 %v3424
    %v3553 = vunpack.c.l.b16 %v3425
    %v3554 = vunpack.c.l.b16 %v3426
    %v3555 = vunpack.c.l.b16 %v3427
    %v3556 = vunpack.c.l.b16 %v3428
    %v3557 = vunpack.c.l.b16 %v3429
    %v3558 = vunpack.c.l.b16 %v3430
    %v3559 = vunpack.c.l.b16 %v3431
    %v3560 = vunpack.c.l.b16 %v3432
    %v3561 = vunpack.c.l.b16 %v3433
    %v3562 = vunpack.c.l.b16 %v3434
    %v3563 = vunpack.c.l.b16 %v3435
    %v3564 = vunpack.c.l.b16 %v3436
    %v3565 = vunpack.c.l.b16 %v3437
    %v3566 = vunpack.c.l.b16 %v3438
    %v3567 = vunpack.c.l.b16 %v3439
    %v3568 = vunpack.c.l.b16 %v3440
    %v3569 = vunpack.c.l.b16 %v3441
    %v3570 = vunpack.c.l.b16 %v3442
    %v3571 = vunpack.c.l.b16 %v3443
    %v3572 = vpack.c.b16 %v3509, %v3508
    %v3573 = vpack.c.b16 %v3511, %v3510
    %v3574 = vpack.c.b16 %v3513, %v3512
    %v3575 = vpack.c.b16 %v3515, %v3514
    %v3576 = vpack.c.b16 %v3517, %v3516
    %v3577 = vpack.c.b16 %v3519, %v3518
    %v3578 = vpack.c.b16 %v3521, %v3520
    %v3579 = vpack.c.b16 %v3523, %v3522
    %v3580 = vpack.c.b16 %v3525, %v3524
    %v3581 = vpack.c.b16 %v3527, %v3526
    %v3582 = vpack.c.b16 %v3529, %v3528
    %v3583 = vpack.c.b16 %v3531, %v3530
    %v3584 = vpack.c.b16 %v3533, %v3532
    %v3585 = vpack.c.b16 %v3535, %v3534
    %v3586 = vpack.c.b16 %v3537, %v3536
    %v3587 = vpack.c.b16 %v3539, %v3538
    %v3588 = vpack.c.b16 %v3541, %v3540
    %v3589 = vpack.c.b16 %v3543, %v3542
    %v3590 = vpack.c.b16 %v3545, %v3544
    %v3591 = vpack.c.b16 %v3547, %v3546
    %v3592 = vpack.c.b16 %v3549, %v3548
    %v3593 = vpack.c.b16 %v3551, %v3550
    %v3594 = vpack.c.b16 %v3553, %v3552
    %v3595 = vpack.c.b16 %v3555, %v3554
    %v3596 = vpack.c.b16 %v3557, %v3556
    %v3597 = vpack.c.b16 %v3559, %v3558
    %v3598 = vpack.c.b16 %v3561, %v3560
    %v3599 = vpack.c.b16 %v3563, %v3562
    %v3600 = vpack.c.b16 %v3565, %v3564
    %v3601 = vpack.c.b16 %v3567, %v3566
    %v3602 = vpack.c.b16 %v3569, %v3568
    %v3603 = vpack.c.b16 %v3571, %v3570
    %3636 = vmatprep.subr.bf16.mxu0 0
    %3637 = vmatpush1.bf16.msra.mxu0 %v3579
    %3638 = vmatprep.subr.bf16.mxu0 0
    %3639 = vmatpush1.bf16.msra.mxu0 %v3578
    %3640 = vmatprep.subr.bf16.mxu0 0
    %3641 = vmatpush1.bf16.msra.mxu0 %v3577
    %3642 = vmatprep.subr.bf16.mxu0 0
    %3643 = vmatpush1.bf16.msra.mxu0 %v3576
    %3644 = vmatprep.subr.bf16.mxu0 0
    %3645 = vmatpush1.bf16.msra.mxu0 %v3575
    %3646 = vmatprep.subr.bf16.mxu0 0
    %3647 = vmatpush1.bf16.msra.mxu0 %v3574
    %3648 = vmatprep.subr.bf16.mxu0 0
    %3649 = vmatpush1.bf16.msra.mxu0 %v3573
    %3650 = vmatprep.subr.bf16.mxu0 0
    %3651 = vmatpush1.bf16.msra.mxu0 %v3572
    %3652 = vmatprep.subr.bf16.mxu0 0
    %3653 = vmatpush2.bf16.msra.mxu0 %v3587
    %3654 = vmatprep.subr.bf16.mxu0 0
    %3655 = vmatpush2.bf16.msra.mxu0 %v3586
    %3656 = vmatprep.subr.bf16.mxu0 0
    %3657 = vmatpush2.bf16.msra.mxu0 %v3585
    %3658 = vmatprep.subr.bf16.mxu0 0
    %3659 = vmatpush2.bf16.msra.mxu0 %v3584
    %3660 = vmatprep.subr.bf16.mxu0 0
    %3661 = vmatpush2.bf16.msra.mxu0 %v3583
    %3662 = vmatprep.subr.bf16.mxu0 0
    %3663 = vmatpush2.bf16.msra.mxu0 %v3582
    %3664 = vmatprep.subr.bf16.mxu0 0
    %3665 = vmatpush2.bf16.msra.mxu0 %v3581
    %3666 = vmatprep.subr.bf16.mxu0 0
    %3667 = vmatpush2.bf16.msra.mxu0 %v3580
    %3668 = vmatprep.mubr.bf16.mxu0 %v3309
    %3669 = vmatmul.mubr.bf16.gmra.mxu0 %v3308
    %v3670 = vpop.f32.mrf.mxu0
    %v3671 = vadd.f32 0.0, %v3670
    %v3672 = vpop.f32.mrf.mxu0
    %v3673 = vpop.f32.mrf.mxu0
    %v3674 = vadd.f32 0.0, %v3673
    %v3675 = vpop.f32.mrf.mxu0
    %3676 = vmatprep.mubr.bf16.mxu0 %v3313
    %3677 = vmatmul.mubr.bf16.gmra.mxu0 %v3312
    %v3678 = vpop.f32.mrf.mxu0
    %v3679 = vadd.f32 0.0, %v3678
    %v3680 = vpop.f32.mrf.mxu0
    %v3681 = vpop.f32.mrf.mxu0
    %v3682 = vadd.f32 0.0, %v3681
    %v3683 = vpop.f32.mrf.mxu0
    %3684 = vmatprep.mubr.bf16.mxu0 %v3317
    %3685 = vmatmul.mubr.bf16.gmra.mxu0 %v3316
    %v3686 = vpop.f32.mrf.mxu0
    %v3687 = vadd.f32 0.0, %v3686
    %v3688 = vpop.f32.mrf.mxu0
    %v3689 = vpop.f32.mrf.mxu0
    %v3690 = vadd.f32 0.0, %v3689
    %v3691 = vpop.f32.mrf.mxu0
    %3692 = vmatprep.mubr.bf16.mxu0 %v3321
    %3693 = vmatmul.mubr.bf16.gmra.mxu0 %v3320
    %v3694 = vpop.f32.mrf.mxu0
    %v3695 = vadd.f32 0.0, %v3694
    %v3696 = vpop.f32.mrf.mxu0
    %v3697 = vpop.f32.mrf.mxu0
    %v3698 = vadd.f32 0.0, %v3697
    %v3699 = vpop.f32.mrf.mxu0
    %3700 = vmatprep.mubr.bf16.mxu0 %v3325
    %3701 = vmatmul.mubr.bf16.gmra.mxu0 %v3324
    %v3702 = vpop.f32.mrf.mxu0
    %v3703 = vadd.f32 0.0, %v3702
    %v3704 = vpop.f32.mrf.mxu0
    %v3705 = vpop.f32.mrf.mxu0
    %v3706 = vadd.f32 0.0, %v3705
    %v3707 = vpop.f32.mrf.mxu0
    %3708 = vmatprep.mubr.bf16.mxu0 %v3329
    %3709 = vmatmul.mubr.bf16.gmra.mxu0 %v3328
    %v3710 = vpop.f32.mrf.mxu0
    %v3711 = vadd.f32 0.0, %v3710
    %v3712 = vpop.f32.mrf.mxu0
    %v3713 = vpop.f32.mrf.mxu0
    %v3714 = vadd.f32 0.0, %v3713
    %v3715 = vpop.f32.mrf.mxu0
    %3716 = vmatprep.mubr.bf16.mxu0 %v3333
    %3717 = vmatmul.mubr.bf16.gmra.mxu0 %v3332
    %v3718 = vpop.f32.mrf.mxu0
    %v3719 = vadd.f32 0.0, %v3718
    %v3720 = vpop.f32.mrf.mxu0
    %v3721 = vpop.f32.mrf.mxu0
    %v3722 = vadd.f32 0.0, %v3721
    %v3723 = vpop.f32.mrf.mxu0
    %3724 = vmatprep.mubr.bf16.mxu0 %v3337
    %3725 = vmatmul.mubr.bf16.gmra.mxu0 %v3336
    %v3726 = vpop.f32.mrf.mxu0
    %v3727 = vadd.f32 0.0, %v3726
    %v3728 = vpop.f32.mrf.mxu0
    %v3729 = vpop.f32.mrf.mxu0
    %v3730 = vadd.f32 0.0, %v3729
    %v3731 = vpop.f32.mrf.mxu0
    %3732 = vmatprep.mubr.bf16.mxu0 %v3341
    %3733 = vmatmul.mubr.bf16.gmra.mxu0 %v3340
    %v3734 = vpop.f32.mrf.mxu0
    %v3735 = vadd.f32 0.0, %v3734
    %v3736 = vpop.f32.mrf.mxu0
    %v3737 = vpop.f32.mrf.mxu0
    %v3738 = vadd.f32 0.0, %v3737
    %v3739 = vpop.f32.mrf.mxu0
    %3740 = vmatprep.mubr.bf16.mxu0 %v3345
    %3741 = vmatmul.mubr.bf16.gmra.mxu0 %v3344
    %v3742 = vpop.f32.mrf.mxu0
    %v3743 = vadd.f32 0.0, %v3742
    %v3744 = vpop.f32.mrf.mxu0
    %v3745 = vpop.f32.mrf.mxu0
    %v3746 = vadd.f32 0.0, %v3745
    %v3747 = vpop.f32.mrf.mxu0
    %3748 = vmatprep.mubr.bf16.mxu0 %v3349
    %3749 = vmatmul.mubr.bf16.gmra.mxu0 %v3348
    %v3750 = vpop.f32.mrf.mxu0
    %v3751 = vadd.f32 0.0, %v3750
    %v3752 = vpop.f32.mrf.mxu0
    %v3753 = vpop.f32.mrf.mxu0
    %v3754 = vadd.f32 0.0, %v3753
    %v3755 = vpop.f32.mrf.mxu0
    %3756 = vmatprep.mubr.bf16.mxu0 %v3353
    %3757 = vmatmul.mubr.bf16.gmra.mxu0 %v3352
    %v3758 = vpop.f32.mrf.mxu0
    %v3759 = vadd.f32 0.0, %v3758
    %v3760 = vpop.f32.mrf.mxu0
    %v3761 = vpop.f32.mrf.mxu0
    %v3762 = vadd.f32 0.0, %v3761
    %v3763 = vpop.f32.mrf.mxu0
    %3764 = vmatprep.mubr.bf16.mxu0 %v3357
    %3765 = vmatmul.mubr.bf16.gmra.mxu0 %v3356
    %v3766 = vpop.f32.mrf.mxu0
    %v3767 = vadd.f32 0.0, %v3766
    %v3768 = vpop.f32.mrf.mxu0
    %v3769 = vpop.f32.mrf.mxu0
    %v3770 = vadd.f32 0.0, %v3769
    %v3771 = vpop.f32.mrf.mxu0
    %3772 = vmatprep.mubr.bf16.mxu0 %v3361
    %3773 = vmatmul.mubr.bf16.gmra.mxu0 %v3360
    %v3774 = vpop.f32.mrf.mxu0
    %v3775 = vadd.f32 0.0, %v3774
    %v3776 = vpop.f32.mrf.mxu0
    %v3777 = vpop.f32.mrf.mxu0
    %v3778 = vadd.f32 0.0, %v3777
    %v3779 = vpop.f32.mrf.mxu0
    %3780 = vmatprep.mubr.bf16.mxu0 %v3365
    %3781 = vmatmul.mubr.bf16.gmra.mxu0 %v3364
    %v3782 = vpop.f32.mrf.mxu0
    %v3783 = vadd.f32 0.0, %v3782
    %v3784 = vpop.f32.mrf.mxu0
    %v3785 = vpop.f32.mrf.mxu0
    %v3786 = vadd.f32 0.0, %v3785
    %v3787 = vpop.f32.mrf.mxu0
    %3788 = vmatprep.mubr.bf16.mxu0 %v3369
    %3789 = vmatmul.mubr.bf16.gmra.mxu0 %v3368
    %v3790 = vpop.f32.mrf.mxu0
    %v3791 = vadd.f32 0.0, %v3790
    %v3792 = vpop.f32.mrf.mxu0
    %v3793 = vpop.f32.mrf.mxu0
    %v3794 = vadd.f32 0.0, %v3793
    %v3795 = vpop.f32.mrf.mxu0
    %3796 = vmatprep.mubr.bf16.mxu0 %v3373
    %3797 = vmatmul.mubr.bf16.gmra.mxu0 %v3372
    %v3798 = vpop.f32.mrf.mxu0
    %v3799 = vadd.f32 0.0, %v3798
    %v3800 = vpop.f32.mrf.mxu0
    %v3801 = vpop.f32.mrf.mxu0
    %v3802 = vadd.f32 0.0, %v3801
    %v3803 = vpop.f32.mrf.mxu0
    %3804 = vmatprep.mubr.bf16.mxu0 %v3377
    %3805 = vmatmul.mubr.bf16.gmra.mxu0 %v3376
    %v3806 = vpop.f32.mrf.mxu0
    %v3807 = vadd.f32 0.0, %v3806
    %v3808 = vpop.f32.mrf.mxu0
    %v3809 = vpop.f32.mrf.mxu0
    %v3810 = vadd.f32 0.0, %v3809
    %v3811 = vpop.f32.mrf.mxu0
    %3812 = vdwg.mxu0
    %3813 = vmatprep.subr.bf16.mxu0 0
    %3814 = vmatpush1.bf16.msra.mxu0 %v3595
    %3815 = vmatprep.subr.bf16.mxu0 0
    %3816 = vmatpush1.bf16.msra.mxu0 %v3594
    %3817 = vmatprep.subr.bf16.mxu0 0
    %3818 = vmatpush1.bf16.msra.mxu0 %v3593
    %3819 = vmatprep.subr.bf16.mxu0 0
    %3820 = vmatpush1.bf16.msra.mxu0 %v3592
    %3821 = vmatprep.subr.bf16.mxu0 0
    %3822 = vmatpush1.bf16.msra.mxu0 %v3591
    %3823 = vmatprep.subr.bf16.mxu0 0
    %3824 = vmatpush1.bf16.msra.mxu0 %v3590
    %3825 = vmatprep.subr.bf16.mxu0 0
    %3826 = vmatpush1.bf16.msra.mxu0 %v3589
    %3827 = vmatprep.subr.bf16.mxu0 0
    %3828 = vmatpush1.bf16.msra.mxu0 %v3588
    %3829 = vmatprep.subr.bf16.mxu0 0
    %3830 = vmatpush2.bf16.msra.mxu0 %v3603
    %3831 = vmatprep.subr.bf16.mxu0 0
    %3832 = vmatpush2.bf16.msra.mxu0 %v3602
    %3833 = vmatprep.subr.bf16.mxu0 0
    %3834 = vmatpush2.bf16.msra.mxu0 %v3601
    %3835 = vmatprep.subr.bf16.mxu0 0
    %3836 = vmatpush2.bf16.msra.mxu0 %v3600
    %3837 = vmatprep.subr.bf16.mxu0 0
    %3838 = vmatpush2.bf16.msra.mxu0 %v3599
    %3839 = vmatprep.subr.bf16.mxu0 0
    %3840 = vmatpush2.bf16.msra.mxu0 %v3598
    %3841 = vmatprep.subr.bf16.mxu0 0
    %3842 = vmatpush2.bf16.msra.mxu0 %v3597
    %3843 = vmatprep.subr.bf16.mxu0 0
    %3844 = vmatpush2.bf16.msra.mxu0 %v3596
    %3845 = vmatprep.mubr.bf16.mxu0 %v3311
    %3846 = vmatmul.mubr.bf16.gmra.mxu0 %v3310
    %v3847 = vpop.f32.mrf.mxu0
    %v3848 = vadd.f32 %v3671, %v3847
    %v3849 = vpop.f32.mrf.mxu0
    %v3850 = vpop.f32.mrf.mxu0
    %v3851 = vadd.f32 %v3674, %v3850
    %v3852 = vpop.f32.mrf.mxu0
    %3853 = vmatprep.mubr.bf16.mxu0 %v3315
    %3854 = vmatmul.mubr.bf16.gmra.mxu0 %v3314
    %v3855 = vpop.f32.mrf.mxu0
    %v3856 = vadd.f32 %v3679, %v3855
    %v3857 = vpop.f32.mrf.mxu0
    %v3858 = vpop.f32.mrf.mxu0
    %v3859 = vadd.f32 %v3682, %v3858
    %v3860 = vpop.f32.mrf.mxu0
    %3861 = vmatprep.mubr.bf16.mxu0 %v3319
    %3862 = vmatmul.mubr.bf16.gmra.mxu0 %v3318
    %v3863 = vpop.f32.mrf.mxu0
    %v3864 = vadd.f32 %v3687, %v3863
    %v3865 = vpop.f32.mrf.mxu0
    %v3866 = vpop.f32.mrf.mxu0
    %v3867 = vadd.f32 %v3690, %v3866
    %v3868 = vpop.f32.mrf.mxu0
    %3869 = vmatprep.mubr.bf16.mxu0 %v3323
    %3870 = vmatmul.mubr.bf16.gmra.mxu0 %v3322
    %v3871 = vpop.f32.mrf.mxu0
    %v3872 = vadd.f32 %v3695, %v3871
    %v3873 = vpop.f32.mrf.mxu0
    %v3874 = vpop.f32.mrf.mxu0
    %v3875 = vadd.f32 %v3698, %v3874
    %v3876 = vpop.f32.mrf.mxu0
    %3877 = vmatprep.mubr.bf16.mxu0 %v3327
    %3878 = vmatmul.mubr.bf16.gmra.mxu0 %v3326
    %v3879 = vpop.f32.mrf.mxu0
    %v3880 = vadd.f32 %v3703, %v3879
    %v3881 = vpop.f32.mrf.mxu0
    %v3882 = vpop.f32.mrf.mxu0
    %v3883 = vadd.f32 %v3706, %v3882
    %v3884 = vpop.f32.mrf.mxu0
    %3885 = vmatprep.mubr.bf16.mxu0 %v3331
    %3886 = vmatmul.mubr.bf16.gmra.mxu0 %v3330
    %v3887 = vpop.f32.mrf.mxu0
    %v3888 = vadd.f32 %v3711, %v3887
    %v3889 = vpop.f32.mrf.mxu0
    %v3890 = vpop.f32.mrf.mxu0
    %v3891 = vadd.f32 %v3714, %v3890
    %v3892 = vpop.f32.mrf.mxu0
    %3893 = vmatprep.mubr.bf16.mxu0 %v3335
    %3894 = vmatmul.mubr.bf16.gmra.mxu0 %v3334
    %v3895 = vpop.f32.mrf.mxu0
    %v3896 = vadd.f32 %v3719, %v3895
    %v3897 = vpop.f32.mrf.mxu0
    %v3898 = vpop.f32.mrf.mxu0
    %v3899 = vadd.f32 %v3722, %v3898
    %v3900 = vpop.f32.mrf.mxu0
    %3901 = vmatprep.mubr.bf16.mxu0 %v3339
    %3902 = vmatmul.mubr.bf16.gmra.mxu0 %v3338
    %v3903 = vpop.f32.mrf.mxu0
    %v3904 = vadd.f32 %v3727, %v3903
    %v3905 = vpop.f32.mrf.mxu0
    %v3906 = vpop.f32.mrf.mxu0
    %v3907 = vadd.f32 %v3730, %v3906
    %v3908 = vpop.f32.mrf.mxu0
    %3909 = vmatprep.mubr.bf16.mxu0 %v3343
    %3910 = vmatmul.mubr.bf16.gmra.mxu0 %v3342
    %v3911 = vpop.f32.mrf.mxu0
    %v3912 = vadd.f32 %v3735, %v3911
    %v3913 = vpop.f32.mrf.mxu0
    %v3914 = vpop.f32.mrf.mxu0
    %v3915 = vadd.f32 %v3738, %v3914
    %v3916 = vpop.f32.mrf.mxu0
    %3917 = vmatprep.mubr.bf16.mxu0 %v3347
    %3918 = vmatmul.mubr.bf16.gmra.mxu0 %v3346
    %v3919 = vpop.f32.mrf.mxu0
    %v3920 = vadd.f32 %v3743, %v3919
    %v3921 = vpop.f32.mrf.mxu0
    %v3922 = vpop.f32.mrf.mxu0
    %v3923 = vadd.f32 %v3746, %v3922
    %v3924 = vpop.f32.mrf.mxu0
    %3925 = vmatprep.mubr.bf16.mxu0 %v3351
    %3926 = vmatmul.mubr.bf16.gmra.mxu0 %v3350
    %v3927 = vpop.f32.mrf.mxu0
    %v3928 = vadd.f32 %v3751, %v3927
    %v3929 = vpop.f32.mrf.mxu0
    %v3930 = vpop.f32.mrf.mxu0
    %v3931 = vadd.f32 %v3754, %v3930
    %v3932 = vpop.f32.mrf.mxu0
    %3933 = vmatprep.mubr.bf16.mxu0 %v3355
    %3934 = vmatmul.mubr.bf16.gmra.mxu0 %v3354
    %v3935 = vpop.f32.mrf.mxu0
    %v3936 = vadd.f32 %v3759, %v3935
    %v3937 = vpop.f32.mrf.mxu0
    %v3938 = vpop.f32.mrf.mxu0
    %v3939 = vadd.f32 %v3762, %v3938
    %v3940 = vpop.f32.mrf.mxu0
    %3941 = vmatprep.mubr.bf16.mxu0 %v3359
    %3942 = vmatmul.mubr.bf16.gmra.mxu0 %v3358
    %v3943 = vpop.f32.mrf.mxu0
    %v3944 = vadd.f32 %v3767, %v3943
    %v3945 = vpop.f32.mrf.mxu0
    %v3946 = vpop.f32.mrf.mxu0
    %v3947 = vadd.f32 %v3770, %v3946
    %v3948 = vpop.f32.mrf.mxu0
    %3949 = vmatprep.mubr.bf16.mxu0 %v3363
    %3950 = vmatmul.mubr.bf16.gmra.mxu0 %v3362
    %v3951 = vpop.f32.mrf.mxu0
    %v3952 = vadd.f32 %v3775, %v3951
    %v3953 = vpop.f32.mrf.mxu0
    %v3954 = vpop.f32.mrf.mxu0
    %v3955 = vadd.f32 %v3778, %v3954
    %v3956 = vpop.f32.mrf.mxu0
    %3957 = vmatprep.mubr.bf16.mxu0 %v3367
    %3958 = vmatmul.mubr.bf16.gmra.mxu0 %v3366
    %v3959 = vpop.f32.mrf.mxu0
    %v3960 = vadd.f32 %v3783, %v3959
    %v3961 = vpop.f32.mrf.mxu0
    %v3962 = vpop.f32.mrf.mxu0
    %v3963 = vadd.f32 %v3786, %v3962
    %v3964 = vpop.f32.mrf.mxu0
    %3965 = vmatprep.mubr.bf16.mxu0 %v3371
    %3966 = vmatmul.mubr.bf16.gmra.mxu0 %v3370
    %v3967 = vpop.f32.mrf.mxu0
    %v3968 = vadd.f32 %v3791, %v3967
    %v3969 = vpop.f32.mrf.mxu0
    %v3970 = vpop.f32.mrf.mxu0
    %v3971 = vadd.f32 %v3794, %v3970
    %v3972 = vpop.f32.mrf.mxu0
    %3973 = vmatprep.mubr.bf16.mxu0 %v3375
    %3974 = vmatmul.mubr.bf16.gmra.mxu0 %v3374
    %v3975 = vpop.f32.mrf.mxu0
    %v3976 = vadd.f32 %v3799, %v3975
    %v3977 = vpop.f32.mrf.mxu0
    %v3978 = vpop.f32.mrf.mxu0
    %v3979 = vadd.f32 %v3802, %v3978
    %v3980 = vpop.f32.mrf.mxu0
    %3981 = vmatprep.mubr.bf16.mxu0 %v3379
    %3982 = vmatmul.mubr.bf16.gmra.mxu0 %v3378
    %v3983 = vpop.f32.mrf.mxu0
    %v3984 = vadd.f32 %v3807, %v3983
    %v3985 = vpop.f32.mrf.mxu0
    %v3986 = vpop.f32.mrf.mxu0
    %v3987 = vadd.f32 %v3810, %v3986
    %v3988 = vpop.f32.mrf.mxu0
    %3989 = vdwg.mxu0
    %v3990 = vld [vmem:[%s5] sm:$0x1]
    %v3992 = vlaneseq
    %v3993 = vshrl.u32 %v3992, 7
    %v3994 = vsub.s32 0, %v3993
    %v3995 = vrot.slane %v3990, %v3994
    %v3997 = vmul.f32 %v3848, %v3995
    %v3998 = vmul.f32 %v3851, %v3995
    %v3999 = vmul.f32 %v3856, %v3995
    %v4000 = vmul.f32 %v3859, %v3995
    %v4001 = vmul.f32 %v3864, %v3995
    %v4002 = vmul.f32 %v3867, %v3995
    %v4003 = vmul.f32 %v3872, %v3995
    %v4004 = vmul.f32 %v3875, %v3995
    %v4005 = vmul.f32 %v3880, %v3995
    %v4006 = vmul.f32 %v3883, %v3995
    %v4007 = vmul.f32 %v3888, %v3995
    %v4008 = vmul.f32 %v3891, %v3995
    %v4009 = vmul.f32 %v3896, %v3995
    %v4010 = vmul.f32 %v3899, %v3995
    %v4011 = vmul.f32 %v3904, %v3995
    %v4012 = vmul.f32 %v3907, %v3995
    %v4013 = vmul.f32 %v3912, %v3995
    %v4014 = vmul.f32 %v3915, %v3995
    %v4015 = vmul.f32 %v3920, %v3995
    %v4016 = vmul.f32 %v3923, %v3995
    %v4017 = vmul.f32 %v3928, %v3995
    %v4018 = vmul.f32 %v3931, %v3995
    %v4019 = vmul.f32 %v3936, %v3995
    %v4020 = vmul.f32 %v3939, %v3995
    %v4021 = vmul.f32 %v3944, %v3995
    %v4022 = vmul.f32 %v3947, %v3995
    %v4023 = vmul.f32 %v3952, %v3995
    %v4024 = vmul.f32 %v3955, %v3995
    %v4025 = vmul.f32 %v3960, %v3995
    %v4026 = vmul.f32 %v3963, %v3995
    %v4027 = vmul.f32 %v3968, %v3995
    %v4028 = vmul.f32 %v3971, %v3995
    %v4029 = vmul.f32 %v3976, %v3995
    %v4030 = vmul.f32 %v3979, %v3995
    %v4031 = vmul.f32 %v3984, %v3995
    %v4032 = vmul.f32 %v3987, %v3995
    %v4033 = vld [vmem:[%s6] sm:$0x1]
    %v4035 = vlaneseq
    %v4036 = vshrl.u32 %v4035, 7
    %v4037 = vsub.s32 0, %v4036
    %v4038 = vrot.slane %v4033, %v4037
    %v4040 = vadd.f32 %v3997, %v4038
    %v4041 = vadd.f32 %v3998, %v4038
    %v4042 = vadd.f32 %v3999, %v4038
    %v4043 = vadd.f32 %v4000, %v4038
    %v4044 = vadd.f32 %v4001, %v4038
    %v4045 = vadd.f32 %v4002, %v4038
    %v4046 = vadd.f32 %v4003, %v4038
    %v4047 = vadd.f32 %v4004, %v4038
    %v4048 = vadd.f32 %v4005, %v4038
    %v4049 = vadd.f32 %v4006, %v4038
    %v4050 = vadd.f32 %v4007, %v4038
    %v4051 = vadd.f32 %v4008, %v4038
    %v4052 = vadd.f32 %v4009, %v4038
    %v4053 = vadd.f32 %v4010, %v4038
    %v4054 = vadd.f32 %v4011, %v4038
    %v4055 = vadd.f32 %v4012, %v4038
    %v4056 = vadd.f32 %v4013, %v4038
    %v4057 = vadd.f32 %v4014, %v4038
    %v4058 = vadd.f32 %v4015, %v4038
    %v4059 = vadd.f32 %v4016, %v4038
    %v4060 = vadd.f32 %v4017, %v4038
    %v4061 = vadd.f32 %v4018, %v4038
    %v4062 = vadd.f32 %v4019, %v4038
    %v4063 = vadd.f32 %v4020, %v4038
    %v4064 = vadd.f32 %v4021, %v4038
    %v4065 = vadd.f32 %v4022, %v4038
    %v4066 = vadd.f32 %v4023, %v4038
    %v4067 = vadd.f32 %v4024, %v4038
    %v4068 = vadd.f32 %v4025, %v4038
    %v4069 = vadd.f32 %v4026, %v4038
    %v4070 = vadd.f32 %v4027, %v4038
    %v4071 = vadd.f32 %v4028, %v4038
    %v4072 = vadd.f32 %v4029, %v4038
    %v4073 = vadd.f32 %v4030, %v4038
    %v4074 = vadd.f32 %v4031, %v4038
    %v4075 = vadd.f32 %v4032, %v4038
    %v4076 = vmax.f32 %v4040, 0.0
    %v4077 = vmax.f32 %v4041, 0.0
    %v4078 = vmax.f32 %v4042, 0.0
    %v4079 = vmax.f32 %v4043, 0.0
    %v4080 = vmax.f32 %v4044, 0.0
    %v4081 = vmax.f32 %v4045, 0.0
    %v4082 = vmax.f32 %v4046, 0.0
    %v4083 = vmax.f32 %v4047, 0.0
    %v4084 = vmax.f32 %v4048, 0.0
    %v4085 = vmax.f32 %v4049, 0.0
    %v4086 = vmax.f32 %v4050, 0.0
    %v4087 = vmax.f32 %v4051, 0.0
    %v4088 = vmax.f32 %v4052, 0.0
    %v4089 = vmax.f32 %v4053, 0.0
    %v4090 = vmax.f32 %v4054, 0.0
    %v4091 = vmax.f32 %v4055, 0.0
    %v4092 = vmax.f32 %v4056, 0.0
    %v4093 = vmax.f32 %v4057, 0.0
    %v4094 = vmax.f32 %v4058, 0.0
    %v4095 = vmax.f32 %v4059, 0.0
    %v4096 = vmax.f32 %v4060, 0.0
    %v4097 = vmax.f32 %v4061, 0.0
    %v4098 = vmax.f32 %v4062, 0.0
    %v4099 = vmax.f32 %v4063, 0.0
    %v4100 = vmax.f32 %v4064, 0.0
    %v4101 = vmax.f32 %v4065, 0.0
    %v4102 = vmax.f32 %v4066, 0.0
    %v4103 = vmax.f32 %v4067, 0.0
    %v4104 = vmax.f32 %v4068, 0.0
    %v4105 = vmax.f32 %v4069, 0.0
    %v4106 = vmax.f32 %v4070, 0.0
    %v4107 = vmax.f32 %v4071, 0.0
    %v4108 = vmax.f32 %v4072, 0.0
    %v4109 = vmax.f32 %v4073, 0.0
    %v4110 = vmax.f32 %v4074, 0.0
    %v4111 = vmax.f32 %v4075, 0.0
    %4112 = vst [vmem:[#allocation4] sm:$0xff] %v4076
    %4113 = vst [vmem:[#allocation4 + $0x8] sm:$0xff] %v4077
    %4114 = vst [vmem:[#allocation4 + $0x10] sm:$0xff] %v4078
    %4115 = vst [vmem:[#allocation4 + $0x18] sm:$0xff] %v4079
    %4116 = vst [vmem:[#allocation4 + $0x20] sm:$0xff] %v4080
    %4117 = vst [vmem:[#allocation4 + $0x28] sm:$0xff] %v4081
    %4118 = vst [vmem:[#allocation4 + $0x30] sm:$0xff] %v4082
    %4119 = vst [vmem:[#allocation4 + $0x38] sm:$0xff] %v4083
    %4120 = vst [vmem:[#allocation4 + $0x40] sm:$0xff] %v4084
    %4121 = vst [vmem:[#allocation4 + $0x48] sm:$0xff] %v4085
    %4122 = vst [vmem:[#allocation4 + $0x50] sm:$0xff] %v4086
    %4123 = vst [vmem:[#allocation4 + $0x58] sm:$0xff] %v4087
    %4124 = vst [vmem:[#allocation4 + $0x60] sm:$0xff] %v4088
    %4125 = vst [vmem:[#allocation4 + $0x68] sm:$0xff] %v4089
    %4126 = vst [vmem:[#allocation4 + $0x70] sm:$0xff] %v4090
    %4127 = vst [vmem:[#allocation4 + $0x78] sm:$0xff] %v4091
    %4128 = vst [vmem:[#allocation4 + $0x80] sm:$0xff] %v4092
    %4129 = vst [vmem:[#allocation4 + $0x88] sm:$0xff] %v4093
    %4130 = vst [vmem:[#allocation4 + $0x90] sm:$0xff] %v4094
    %4131 = vst [vmem:[#allocation4 + $0x98] sm:$0xff] %v4095
    %4132 = vst [vmem:[#allocation4 + $0xa0] sm:$0xff] %v4096
    %4133 = vst [vmem:[#allocation4 + $0xa8] sm:$0xff] %v4097
    %4134 = vst [vmem:[#allocation4 + $0xb0] sm:$0xff] %v4098
    %4135 = vst [vmem:[#allocation4 + $0xb8] sm:$0xff] %v4099
    %4136 = vst [vmem:[#allocation4 + $0xc0] sm:$0xff] %v4100
    %4137 = vst [vmem:[#allocation4 + $0xc8] sm:$0xff] %v4101
    %4138 = vst [vmem:[#allocation4 + $0xd0] sm:$0xff] %v4102
    %4139 = vst [vmem:[#allocation4 + $0xd8] sm:$0xff] %v4103
    %4140 = vst [vmem:[#allocation4 + $0xe0] sm:$0xff] %v4104
    %4141 = vst [vmem:[#allocation4 + $0xe8] sm:$0xff] %v4105
    %4142 = vst [vmem:[#allocation4 + $0xf0] sm:$0xff] %v4106
    %4143 = vst [vmem:[#allocation4 + $0xf8] sm:$0xff] %v4107
    %4144 = vst [vmem:[#allocation4 + $0x100] sm:$0xff] %v4108
    %4145 = vst [vmem:[#allocation4 + $0x108] sm:$0xff] %v4109
    %4146 = vst [vmem:[#allocation4 + $0x110] sm:$0xff] %v4110
    %4147 = vst [vmem:[#allocation4 + $0x118] sm:$0x3] %v4111
    %v4148 = vld [vmem:[#allocation4 + $0x18] sm:$0xff]
    %v4149 = vld [vmem:[#allocation4 + $0x20] sm:$0xff]
    %v4150 = vld [vmem:[#allocation4 + $0x28] sm:$0xf]
    %v4154 = vrot.slane %v4148, 7
    %v4155 = vrot.slane %v4149, 7
    %v4156 = vsel %vm1097, %v4154, %v4155
    %v4157 = vrot.slane %v4150, 7
    %v4158 = vsel %vm1097, %v4155, %v4157
    %4162 = vst [vmem:[#allocation5] sm:$0xfe] %v4154
    %4163 = vst [vmem:[#allocation5 + $0x40] sm:$0xff] %v4156
    %4164 = vst [vmem:[#allocation5 + $0x80] sm:$0x1f] %v4158
    %4165 = vst [vmem:[#allocation5] sm:$0x1] 0.0
    %v4166 = vld [vmem:[#allocation4] sm:$0xff]
    %v4167 = vld [vmem:[#allocation4 + $0x8] sm:$0xff]
    %v4168 = vld [vmem:[#allocation4 + $0x10] sm:$0x1f]
    %4169 = vst [vmem:[#allocation5 + $0x8] sm:$0xff] %v4166
    %4170 = vst [vmem:[#allocation5 + $0x48] sm:$0xff] %v4167
    %4171 = vst [vmem:[#allocation5 + $0x88] sm:$0x1f] %v4168
    %v4172 = vld [vmem:[#allocation4 + $0x18] sm:$0xff]
    %v4173 = vld [vmem:[#allocation4 + $0x20] sm:$0xff]
    %v4174 = vld [vmem:[#allocation4 + $0x28] sm:$0x1f]
    %4175 = vst [vmem:[#allocation5 + $0x10] sm:$0xff] %v4172
    %4176 = vst [vmem:[#allocation5 + $0x50] sm:$0xff] %v4173
    %4177 = vst [vmem:[#allocation5 + $0x90] sm:$0x1f] %v4174
    %v4178 = vld [vmem:[#allocation4 + $0x1] sm:$0xff]
    %v4179 = vld [vmem:[#allocation4 + $0x9] sm:$0xff]
    %v4180 = vld [vmem:[#allocation4 + $0x11] sm:$0x1f]
    %4181 = vst [vmem:[#allocation5 + $0x18] sm:$0xff] %v4178
    %4182 = vst [vmem:[#allocation5 + $0x58] sm:$0xff] %v4179
    %4183 = vst [vmem:[#allocation5 + $0x98] sm:$0x1f] %v4180
    %v4184 = vld [vmem:[#allocation4 + $0x19] sm:$0xff]
    %v4185 = vld [vmem:[#allocation4 + $0x21] sm:$0xff]
    %v4186 = vld [vmem:[#allocation4 + $0x29] sm:$0x1f]
    %4187 = vst [vmem:[#allocation5 + $0x20] sm:$0xff] %v4184
    %4188 = vst [vmem:[#allocation5 + $0x60] sm:$0xff] %v4185
    %4189 = vst [vmem:[#allocation5 + $0xa0] sm:$0x1f] %v4186
    %v4190 = vld [vmem:[#allocation4 + $0x2] sm:$0xff]
    %v4191 = vld [vmem:[#allocation4 + $0xa] sm:$0xff]
    %v4192 = vld [vmem:[#allocation4 + $0x12] sm:$0x1f]
    %4193 = vst [vmem:[#allocation5 + $0x28] sm:$0xff] %v4190
    %4194 = vst [vmem:[#allocation5 + $0x68] sm:$0xff] %v4191
    %4195 = vst [vmem:[#allocation5 + $0xa8] sm:$0x1f] %v4192
    %v4196 = vld [vmem:[#allocation4 + $0x1a] sm:$0xff]
    %v4197 = vld [vmem:[#allocation4 + $0x22] sm:$0xff]
    %v4198 = vld [vmem:[#allocation4 + $0x2a] sm:$0x1f]
    %4199 = vst [vmem:[#allocation5 + $0x30] sm:$0xff] %v4196
    %4200 = vst [vmem:[#allocation5 + $0x70] sm:$0xff] %v4197
    %4201 = vst [vmem:[#allocation5 + $0xb0] sm:$0x1f] %v4198
    %v4202 = vld [vmem:[#allocation4 + $0x3] sm:$0xff]
    %v4203 = vld [vmem:[#allocation4 + $0xb] sm:$0xff]
    %v4204 = vld [vmem:[#allocation4 + $0x13] sm:$0x1f]
    %4205 = vst [vmem:[#allocation5 + $0x38] sm:$0xff] %v4202
    %4206 = vst [vmem:[#allocation5 + $0x78] sm:$0xff] %v4203
    %4207 = vst [vmem:[#allocation5 + $0xb8] sm:$0x1f] %v4204
    %v4208 = vld [vmem:[#allocation4 + $0x47] sm:$0xff]
    %v4209 = vld [vmem:[#allocation4 + $0x4f] sm:$0xff]
    %v4210 = vld [vmem:[#allocation4 + $0x57] sm:$0xf]
    %v4214 = vrot.slane %v4208, 2
    %v4215 = vrot.slane %v4209, 2
    %v4216 = vsel %vm1691, %v4214, %v4215
    %v4217 = vrot.slane %v4210, 2
    %v4218 = vsel %vm1691, %v4215, %v4217
    %4223 = vst [vmem:[#allocation5 + $0x80] sm:$0xc0] %v4214
    %4224 = vst [vmem:[#allocation5 + $0xc0] sm:$0xff] %v4216
    %4225 = vst [vmem:[#allocation5 + $0x100] sm:$0xff] %v4218
    %4226 = vst [vmem:[#allocation5 + $0x140] sm:$0x3] %v4217
    %4227 = vst [vmem:[#allocation5 + $0x85] sm:$0x1] 0.0
    %v4228 = vld [vmem:[#allocation4 + $0x2f] sm:$0xff]
    %v4229 = vld [vmem:[#allocation4 + $0x37] sm:$0xff]
    %v4230 = vld [vmem:[#allocation4 + $0x3f] sm:$0x1f]
    %v4234 = vrot.slane %v4228, 3
    %v4235 = vrot.slane %v4229, 3
    %v4236 = vsel %vm2066, %v4234, %v4235
    %v4237 = vrot.slane %v4230, 3
    %v4238 = vsel %vm2066, %v4235, %v4237
    %4243 = vst [vmem:[#allocation5 + $0x88] sm:$0xe0] %v4234
    %4244 = vst [vmem:[#allocation5 + $0xc8] sm:$0xff] %v4236
    %4245 = vst [vmem:[#allocation5 + $0x108] sm:$0xff] %v4238
    %4246 = vst [vmem:[#allocation5 + $0x148] sm:$0x3] %v4237
    %v4247 = vld [vmem:[#allocation4 + $0x47] sm:$0xff]
    %v4248 = vld [vmem:[#allocation4 + $0x4f] sm:$0xff]
    %v4249 = vld [vmem:[#allocation4 + $0x57] sm:$0x1f]
    %v4253 = vrot.slane %v4247, 3
    %v4254 = vrot.slane %v4248, 3
    %v4255 = vsel %vm2066, %v4253, %v4254
    %v4256 = vrot.slane %v4249, 3
    %v4257 = vsel %vm2066, %v4254, %v4256
    %4262 = vst [vmem:[#allocation5 + $0x90] sm:$0xe0] %v4253
    %4263 = vst [vmem:[#allocation5 + $0xd0] sm:$0xff] %v4255
    %4264 = vst [vmem:[#allocation5 + $0x110] sm:$0xff] %v4257
    %4265 = vst [vmem:[#allocation5 + $0x150] sm:$0x3] %v4256
    %v4266 = vld [vmem:[#allocation4 + $0x30] sm:$0xff]
    %v4267 = vld [vmem:[#allocation4 + $0x38] sm:$0xff]
    %v4268 = vld [vmem:[#allocation4 + $0x40] sm:$0x1f]
    %v4272 = vrot.slane %v4266, 3
    %v4273 = vrot.slane %v4267, 3
    %v4274 = vsel %vm2066, %v4272, %v4273
    %v4275 = vrot.slane %v4268, 3
    %v4276 = vsel %vm2066, %v4273, %v4275
    %4281 = vst [vmem:[#allocation5 + $0x98] sm:$0xe0] %v4272
    %4282 = vst [vmem:[#allocation5 + $0xd8] sm:$0xff] %v4274
    %4283 = vst [vmem:[#allocation5 + $0x118] sm:$0xff] %v4276
    %4284 = vst [vmem:[#allocation5 + $0x158] sm:$0x3] %v4275
    %v4285 = vld [vmem:[#allocation4 + $0x48] sm:$0xff]
    %v4286 = vld [vmem:[#allocation4 + $0x50] sm:$0xff]
    %v4287 = vld [vmem:[#allocation4 + $0x58] sm:$0x1f]
    %v4291 = vrot.slane %v4285, 3
    %v4292 = vrot.slane %v4286, 3
    %v4293 = vsel %vm2066, %v4291, %v4292
    %v4294 = vrot.slane %v4287, 3
    %v4295 = vsel %vm2066, %v4292, %v4294
    %4300 = vst [vmem:[#allocation5 + $0xa0] sm:$0xe0] %v4291
    %4301 = vst [vmem:[#allocation5 + $0xe0] sm:$0xff] %v4293
    %4302 = vst [vmem:[#allocation5 + $0x120] sm:$0xff] %v4295
    %4303 = vst [vmem:[#allocation5 + $0x160] sm:$0x3] %v4294
    %v4304 = vld [vmem:[#allocation4 + $0x31] sm:$0xff]
    %v4305 = vld [vmem:[#allocation4 + $0x39] sm:$0xff]
    %v4306 = vld [vmem:[#allocation4 + $0x41] sm:$0x1f]
    %v4310 = vrot.slane %v4304, 3
    %v4311 = vrot.slane %v4305, 3
    %v4312 = vsel %vm2066, %v4310, %v4311
    %v4313 = vrot.slane %v4306, 3
    %v4314 = vsel %vm2066, %v4311, %v4313
    %4319 = vst [vmem:[#allocation5 + $0xa8] sm:$0xe0] %v4310
    %4320 = vst [vmem:[#allocation5 + $0xe8] sm:$0xff] %v4312
    %4321 = vst [vmem:[#allocation5 + $0x128] sm:$0xff] %v4314
    %4322 = vst [vmem:[#allocation5 + $0x168] sm:$0x3] %v4313
    %v4323 = vld [vmem:[#allocation4 + $0x49] sm:$0xff]
    %v4324 = vld [vmem:[#allocation4 + $0x51] sm:$0xff]
    %v4325 = vld [vmem:[#allocation4 + $0x59] sm:$0x1f]
    %v4329 = vrot.slane %v4323, 3
    %v4330 = vrot.slane %v4324, 3
    %v4331 = vsel %vm2066, %v4329, %v4330
    %v4332 = vrot.slane %v4325, 3
    %v4333 = vsel %vm2066, %v4330, %v4332
    %4338 = vst [vmem:[#allocation5 + $0xb0] sm:$0xe0] %v4329
    %4339 = vst [vmem:[#allocation5 + $0xf0] sm:$0xff] %v4331
    %4340 = vst [vmem:[#allocation5 + $0x130] sm:$0xff] %v4333
    %4341 = vst [vmem:[#allocation5 + $0x170] sm:$0x3] %v4332
    %v4342 = vld [vmem:[#allocation4 + $0x32] sm:$0xff]
    %v4343 = vld [vmem:[#allocation4 + $0x3a] sm:$0xff]
    %v4344 = vld [vmem:[#allocation4 + $0x42] sm:$0x1f]
    %v4348 = vrot.slane %v4342, 3
    %v4349 = vrot.slane %v4343, 3
    %v4350 = vsel %vm2066, %v4348, %v4349
    %v4351 = vrot.slane %v4344, 3
    %v4352 = vsel %vm2066, %v4349, %v4351
    %4357 = vst [vmem:[#allocation5 + $0xb8] sm:$0xe0] %v4348
    %4358 = vst [vmem:[#allocation5 + $0xf8] sm:$0xff] %v4350
    %4359 = vst [vmem:[#allocation5 + $0x138] sm:$0xff] %v4352
    %4360 = vst [vmem:[#allocation5 + $0x178] sm:$0x3] %v4351
    %v4361 = vld [vmem:[#allocation4 + $0x76] sm:$0xff]
    %v4362 = vld [vmem:[#allocation4 + $0x7e] sm:$0xff]
    %v4363 = vld [vmem:[#allocation4 + $0x86] sm:$0xf]
    %v4367 = vrot.slane %v4361, 5
    %v4368 = vrot.slane %v4362, 5
    %v4369 = vsel %vm2815, %v4367, %v4368
    %v4370 = vrot.slane %v4363, 5
    %v4371 = vsel %vm2815, %v4368, %v4370
    %4375 = vst [vmem:[#allocation5 + $0x140] sm:$0xf8] %v4367
    %4376 = vst [vmem:[#allocation5 + $0x180] sm:$0xff] %v4369
    %4377 = vst [vmem:[#allocation5 + $0x1c0] sm:$0x7f] %v4371
    %4378 = vst [vmem:[#allocation5 + $0x142] sm:$0x1] 0.0
    %v4379 = vld [vmem:[#allocation4 + $0x5e] sm:$0xff]
    %v4380 = vld [vmem:[#allocation4 + $0x66] sm:$0xff]
    %v4381 = vld [vmem:[#allocation4 + $0x6e] sm:$0x1f]
    %vm4385 = vcmask 1041408
    %v4386 = vrot.slane %v4379, 6
    %v4387 = vrot.slane %v4380, 6
    %v4388 = vsel %vm4385, %v4386, %v4387
    %v4389 = vrot.slane %v4381, 6
    %v4390 = vsel %vm4385, %v4387, %v4389
    %4394 = vst [vmem:[#allocation5 + $0x148] sm:$0xfc] %v4386
    %4395 = vst [vmem:[#allocation5 + $0x188] sm:$0xff] %v4388
    %4396 = vst [vmem:[#allocation5 + $0x1c8] sm:$0x7f] %v4390
    %v4397 = vld [vmem:[#allocation4 + $0x76] sm:$0xff]
    %v4398 = vld [vmem:[#allocation4 + $0x7e] sm:$0xff]
    %v4399 = vld [vmem:[#allocation4 + $0x86] sm:$0x1f]
    %v4403 = vrot.slane %v4397, 6
    %v4404 = vrot.slane %v4398, 6
    %v4405 = vsel %vm4385, %v4403, %v4404
    %v4406 = vrot.slane %v4399, 6
    %v4407 = vsel %vm4385, %v4404, %v4406
    %4411 = vst [vmem:[#allocation5 + $0x150] sm:$0xfc] %v4403
    %4412 = vst [vmem:[#allocation5 + $0x190] sm:$0xff] %v4405
    %4413 = vst [vmem:[#allocation5 + $0x1d0] sm:$0x7f] %v4407
    %v4414 = vld [vmem:[#allocation4 + $0x5f] sm:$0xff]
    %v4415 = vld [vmem:[#allocation4 + $0x67] sm:$0xff]
    %v4416 = vld [vmem:[#allocation4 + $0x6f] sm:$0x1f]
    %v4420 = vrot.slane %v4414, 6
    %v4421 = vrot.slane %v4415, 6
    %v4422 = vsel %vm4385, %v4420, %v4421
    %v4423 = vrot.slane %v4416, 6
    %v4424 = vsel %vm4385, %v4421, %v4423
    %4428 = vst [vmem:[#allocation5 + $0x158] sm:$0xfc] %v4420
    %4429 = vst [vmem:[#allocation5 + $0x198] sm:$0xff] %v4422
    %4430 = vst [vmem:[#allocation5 + $0x1d8] sm:$0x7f] %v4424
    %v4431 = vld [vmem:[#allocation4 + $0x77] sm:$0xff]
    %v4432 = vld [vmem:[#allocation4 + $0x7f] sm:$0xff]
    %v4433 = vld [vmem:[#allocation4 + $0x87] sm:$0x1f]
    %v4437 = vrot.slane %v4431, 6
    %v4438 = vrot.slane %v4432, 6
    %v4439 = vsel %vm4385, %v4437, %v4438
    %v4440 = vrot.slane %v4433, 6
    %v4441 = vsel %vm4385, %v4438, %v4440
    %4445 = vst [vmem:[#allocation5 + $0x160] sm:$0xfc] %v4437
    %4446 = vst [vmem:[#allocation5 + $0x1a0] sm:$0xff] %v4439
    %4447 = vst [vmem:[#allocation5 + $0x1e0] sm:$0x7f] %v4441
    %v4448 = vld [vmem:[#allocation4 + $0x60] sm:$0xff]
    %v4449 = vld [vmem:[#allocation4 + $0x68] sm:$0xff]
    %v4450 = vld [vmem:[#allocation4 + $0x70] sm:$0x1f]
    %v4454 = vrot.slane %v4448, 6
    %v4455 = vrot.slane %v4449, 6
    %v4456 = vsel %vm4385, %v4454, %v4455
    %v4457 = vrot.slane %v4450, 6
    %v4458 = vsel %vm4385, %v4455, %v4457
    %4462 = vst [vmem:[#allocation5 + $0x168] sm:$0xfc] %v4454
    %4463 = vst [vmem:[#allocation5 + $0x1a8] sm:$0xff] %v4456
    %4464 = vst [vmem:[#allocation5 + $0x1e8] sm:$0x7f] %v4458
    %v4465 = vld [vmem:[#allocation4 + $0x78] sm:$0xff]
    %v4466 = vld [vmem:[#allocation4 + $0x80] sm:$0xff]
    %v4467 = vld [vmem:[#allocation4 + $0x88] sm:$0x1f]
    %v4471 = vrot.slane %v4465, 6
    %v4472 = vrot.slane %v4466, 6
    %v4473 = vsel %vm4385, %v4471, %v4472
    %v4474 = vrot.slane %v4467, 6
    %v4475 = vsel %vm4385, %v4472, %v4474
    %4479 = vst [vmem:[#allocation5 + $0x170] sm:$0xfc] %v4471
    %4480 = vst [vmem:[#allocation5 + $0x1b0] sm:$0xff] %v4473
    %4481 = vst [vmem:[#allocation5 + $0x1f0] sm:$0x7f] %v4475
    %v4482 = vld [vmem:[#allocation4 + $0x61] sm:$0xff]
    %v4483 = vld [vmem:[#allocation4 + $0x69] sm:$0xff]
    %v4484 = vld [vmem:[#allocation4 + $0x71] sm:$0x1f]
    %v4488 = vrot.slane %v4482, 6
    %v4489 = vrot.slane %v4483, 6
    %v4490 = vsel %vm4385, %v4488, %v4489
    %v4491 = vrot.slane %v4484, 6
    %v4492 = vsel %vm4385, %v4489, %v4491
    %4496 = vst [vmem:[#allocation5 + $0x178] sm:$0xfc] %v4488
    %4497 = vst [vmem:[#allocation5 + $0x1b8] sm:$0xff] %v4490
    %4498 = vst [vmem:[#allocation5 + $0x1f8] sm:$0x7f] %v4492
    %v4499 = vld [vmem:[#allocation4 + $0xa5] sm:$0xff]
    %v4500 = vld [vmem:[#allocation4 + $0xad] sm:$0xff]
    %v4501 = vld [vmem:[#allocation4 + $0xb5] sm:$0xf]
    %4502 = vst [vmem:[#allocation5 + $0x200] sm:$0xff] %v4499
    %4503 = vst [vmem:[#allocation5 + $0x240] sm:$0xff] %v4500
    %4504 = vst [vmem:[#allocation5 + $0x280] sm:$0xf] %v4501
    %4505 = vst [vmem:[#allocation5 + $0x1c7] sm:$0x1] 0.0
    %v4506 = vld [vmem:[#allocation4 + $0x8d] sm:$0xff]
    %v4507 = vld [vmem:[#allocation4 + $0x95] sm:$0xff]
    %v4508 = vld [vmem:[#allocation4 + $0x9d] sm:$0x1f]
    %v4512 = vrot.slane %v4506, 1
    %v4513 = vrot.slane %v4507, 1
    %v4514 = vsel %vm1316, %v4512, %v4513
    %v4515 = vrot.slane %v4508, 1
    %v4516 = vsel %vm1316, %v4513, %v4515
    %4521 = vst [vmem:[#allocation5 + $0x1c8] sm:$0x80] %v4512
    %4522 = vst [vmem:[#allocation5 + $0x208] sm:$0xff] %v4514
    %4523 = vst [vmem:[#allocation5 + $0x248] sm:$0xff] %v4516
    %4524 = vst [vmem:[#allocation5 + $0x288] sm:$0xf] %v4515
    %v4525 = vld [vmem:[#allocation4 + $0xa5] sm:$0xff]
    %v4526 = vld [vmem:[#allocation4 + $0xad] sm:$0xff]
    %v4527 = vld [vmem:[#allocation4 + $0xb5] sm:$0x1f]
    %v4531 = vrot.slane %v4525, 1
    %v4532 = vrot.slane %v4526, 1
    %v4533 = vsel %vm1316, %v4531, %v4532
    %v4534 = vrot.slane %v4527, 1
    %v4535 = vsel %vm1316, %v4532, %v4534
    %4540 = vst [vmem:[#allocation5 + $0x1d0] sm:$0x80] %v4531
    %4541 = vst [vmem:[#allocation5 + $0x210] sm:$0xff] %v4533
    %4542 = vst [vmem:[#allocation5 + $0x250] sm:$0xff] %v4535
    %4543 = vst [vmem:[#allocation5 + $0x290] sm:$0xf] %v4534
    %v4544 = vld [vmem:[#allocation4 + $0x8e] sm:$0xff]
    %v4545 = vld [vmem:[#allocation4 + $0x96] sm:$0xff]
    %v4546 = vld [vmem:[#allocation4 + $0x9e] sm:$0x1f]
    %v4550 = vrot.slane %v4544, 1
    %v4551 = vrot.slane %v4545, 1
    %v4552 = vsel %vm1316, %v4550, %v4551
    %v4553 = vrot.slane %v4546, 1
    %v4554 = vsel %vm1316, %v4551, %v4553
    %4559 = vst [vmem:[#allocation5 + $0x1d8] sm:$0x80] %v4550
    %4560 = vst [vmem:[#allocation5 + $0x218] sm:$0xff] %v4552
    %4561 = vst [vmem:[#allocation5 + $0x258] sm:$0xff] %v4554
    %4562 = vst [vmem:[#allocation5 + $0x298] sm:$0xf] %v4553
    %v4563 = vld [vmem:[#allocation4 + $0xa6] sm:$0xff]
    %v4564 = vld [vmem:[#allocation4 + $0xae] sm:$0xff]
    %v4565 = vld [vmem:[#allocation4 + $0xb6] sm:$0x1f]
    %v4569 = vrot.slane %v4563, 1
    %v4570 = vrot.slane %v4564, 1
    %v4571 = vsel %vm1316, %v4569, %v4570
    %v4572 = vrot.slane %v4565, 1
    %v4573 = vsel %vm1316, %v4570, %v4572
    %4578 = vst [vmem:[#allocation5 + $0x1e0] sm:$0x80] %v4569
    %4579 = vst [vmem:[#allocation5 + $0x220] sm:$0xff] %v4571
    %4580 = vst [vmem:[#allocation5 + $0x260] sm:$0xff] %v4573
    %4581 = vst [vmem:[#allocation5 + $0x2a0] sm:$0xf] %v4572
    %v4582 = vld [vmem:[#allocation4 + $0x8f] sm:$0xff]
    %v4583 = vld [vmem:[#allocation4 + $0x97] sm:$0xff]
    %v4584 = vld [vmem:[#allocation4 + $0x9f] sm:$0x1f]
    %v4588 = vrot.slane %v4582, 1
    %v4589 = vrot.slane %v4583, 1
    %v4590 = vsel %vm1316, %v4588, %v4589
    %v4591 = vrot.slane %v4584, 1
    %v4592 = vsel %vm1316, %v4589, %v4591
    %4597 = vst [vmem:[#allocation5 + $0x1e8] sm:$0x80] %v4588
    %4598 = vst [vmem:[#allocation5 + $0x228] sm:$0xff] %v4590
    %4599 = vst [vmem:[#allocation5 + $0x268] sm:$0xff] %v4592
    %4600 = vst [vmem:[#allocation5 + $0x2a8] sm:$0xf] %v4591
    %v4601 = vld [vmem:[#allocation4 + $0xa7] sm:$0xff]
    %v4602 = vld [vmem:[#allocation4 + $0xaf] sm:$0xff]
    %v4603 = vld [vmem:[#allocation4 + $0xb7] sm:$0x1f]
    %v4607 = vrot.slane %v4601, 1
    %v4608 = vrot.slane %v4602, 1
    %v4609 = vsel %vm1316, %v4607, %v4608
    %v4610 = vrot.slane %v4603, 1
    %v4611 = vsel %vm1316, %v4608, %v4610
    %4616 = vst [vmem:[#allocation5 + $0x1f0] sm:$0x80] %v4607
    %4617 = vst [vmem:[#allocation5 + $0x230] sm:$0xff] %v4609
    %4618 = vst [vmem:[#allocation5 + $0x270] sm:$0xff] %v4611
    %4619 = vst [vmem:[#allocation5 + $0x2b0] sm:$0xf] %v4610
    %v4620 = vld [vmem:[#allocation4 + $0x90] sm:$0xff]
    %v4621 = vld [vmem:[#allocation4 + $0x98] sm:$0xff]
    %v4622 = vld [vmem:[#allocation4 + $0xa0] sm:$0x1f]
    %v4626 = vrot.slane %v4620, 1
    %v4627 = vrot.slane %v4621, 1
    %v4628 = vsel %vm1316, %v4626, %v4627
    %v4629 = vrot.slane %v4622, 1
    %v4630 = vsel %vm1316, %v4627, %v4629
    %4635 = vst [vmem:[#allocation5 + $0x1f8] sm:$0x80] %v4626
    %4636 = vst [vmem:[#allocation5 + $0x238] sm:$0xff] %v4628
    %4637 = vst [vmem:[#allocation5 + $0x278] sm:$0xff] %v4630
    %4638 = vst [vmem:[#allocation5 + $0x2b8] sm:$0xf] %v4629
    %v4639 = vld [vmem:[#allocation4 + $0xd4] sm:$0xff]
    %v4640 = vld [vmem:[#allocation4 + $0xdc] sm:$0xff]
    %v4641 = vld [vmem:[#allocation4 + $0xe4] sm:$0xf]
    %v4645 = vrot.slane %v4639, 3
    %v4646 = vrot.slane %v4640, 3
    %v4647 = vsel %vm2066, %v4645, %v4646
    %v4648 = vrot.slane %v4641, 3
    %v4649 = vsel %vm2066, %v4646, %v4648
    %4654 = vst [vmem:[#allocation5 + $0x280] sm:$0xe0] %v4645
    %4655 = vst [vmem:[#allocation5 + $0x2c0] sm:$0xff] %v4647
    %4656 = vst [vmem:[#allocation5 + $0x300] sm:$0xff] %v4649
    %4657 = vst [vmem:[#allocation5 + $0x340] sm:$0x1] %v4648
    %4658 = vst [vmem:[#allocation5 + $0x284] sm:$0x1] 0.0
    %v4659 = vld [vmem:[#allocation4 + $0xbc] sm:$0xff]
    %v4660 = vld [vmem:[#allocation4 + $0xc4] sm:$0xff]
    %v4661 = vld [vmem:[#allocation4 + $0xcc] sm:$0x1f]
    %v4665 = vrot.slane %v4659, 4
    %v4666 = vrot.slane %v4660, 4
    %v4667 = vsel %vm2440, %v4665, %v4666
    %v4668 = vrot.slane %v4661, 4
    %v4669 = vsel %vm2440, %v4666, %v4668
    %4674 = vst [vmem:[#allocation5 + $0x288] sm:$0xf0] %v4665
    %4675 = vst [vmem:[#allocation5 + $0x2c8] sm:$0xff] %v4667
    %4676 = vst [vmem:[#allocation5 + $0x308] sm:$0xff] %v4669
    %4677 = vst [vmem:[#allocation5 + $0x348] sm:$0x1] %v4668
    %v4678 = vld [vmem:[#allocation4 + $0xd4] sm:$0xff]
    %v4679 = vld [vmem:[#allocation4 + $0xdc] sm:$0xff]
    %v4680 = vld [vmem:[#allocation4 + $0xe4] sm:$0x1f]
    %v4684 = vrot.slane %v4678, 4
    %v4685 = vrot.slane %v4679, 4
    %v4686 = vsel %vm2440, %v4684, %v4685
    %v4687 = vrot.slane %v4680, 4
    %v4688 = vsel %vm2440, %v4685, %v4687
    %4693 = vst [vmem:[#allocation5 + $0x290] sm:$0xf0] %v4684
    %4694 = vst [vmem:[#allocation5 + $0x2d0] sm:$0xff] %v4686
    %4695 = vst [vmem:[#allocation5 + $0x310] sm:$0xff] %v4688
    %4696 = vst [vmem:[#allocation5 + $0x350] sm:$0x1] %v4687
    %v4697 = vld [vmem:[#allocation4 + $0xbd] sm:$0xff]
    %v4698 = vld [vmem:[#allocation4 + $0xc5] sm:$0xff]
    %v4699 = vld [vmem:[#allocation4 + $0xcd] sm:$0x1f]
    %v4703 = vrot.slane %v4697, 4
    %v4704 = vrot.slane %v4698, 4
    %v4705 = vsel %vm2440, %v4703, %v4704
    %v4706 = vrot.slane %v4699, 4
    %v4707 = vsel %vm2440, %v4704, %v4706
    %4712 = vst [vmem:[#allocation5 + $0x298] sm:$0xf0] %v4703
    %4713 = vst [vmem:[#allocation5 + $0x2d8] sm:$0xff] %v4705
    %4714 = vst [vmem:[#allocation5 + $0x318] sm:$0xff] %v4707
    %4715 = vst [vmem:[#allocation5 + $0x358] sm:$0x1] %v4706
    %v4716 = vld [vmem:[#allocation4 + $0xd5] sm:$0xff]
    %v4717 = vld [vmem:[#allocation4 + $0xdd] sm:$0xff]
    %v4718 = vld [vmem:[#allocation4 + $0xe5] sm:$0x1f]
    %v4722 = vrot.slane %v4716, 4
    %v4723 = vrot.slane %v4717, 4
    %v4724 = vsel %vm2440, %v4722, %v4723
    %v4725 = vrot.slane %v4718, 4
    %v4726 = vsel %vm2440, %v4723, %v4725
    %4731 = vst [vmem:[#allocation5 + $0x2a0] sm:$0xf0] %v4722
    %4732 = vst [vmem:[#allocation5 + $0x2e0] sm:$0xff] %v4724
    %4733 = vst [vmem:[#allocation5 + $0x320] sm:$0xff] %v4726
    %4734 = vst [vmem:[#allocation5 + $0x360] sm:$0x1] %v4725
    %v4735 = vld [vmem:[#allocation4 + $0xbe] sm:$0xff]
    %v4736 = vld [vmem:[#allocation4 + $0xc6] sm:$0xff]
    %v4737 = vld [vmem:[#allocation4 + $0xce] sm:$0x1f]
    %v4741 = vrot.slane %v4735, 4
    %v4742 = vrot.slane %v4736, 4
    %v4743 = vsel %vm2440, %v4741, %v4742
    %v4744 = vrot.slane %v4737, 4
    %v4745 = vsel %vm2440, %v4742, %v4744
    %4750 = vst [vmem:[#allocation5 + $0x2a8] sm:$0xf0] %v4741
    %4751 = vst [vmem:[#allocation5 + $0x2e8] sm:$0xff] %v4743
    %4752 = vst [vmem:[#allocation5 + $0x328] sm:$0xff] %v4745
    %4753 = vst [vmem:[#allocation5 + $0x368] sm:$0x1] %v4744
    %v4754 = vld [vmem:[#allocation4 + $0xd6] sm:$0xff]
    %v4755 = vld [vmem:[#allocation4 + $0xde] sm:$0xff]
    %v4756 = vld [vmem:[#allocation4 + $0xe6] sm:$0x1f]
    %v4760 = vrot.slane %v4754, 4
    %v4761 = vrot.slane %v4755, 4
    %v4762 = vsel %vm2440, %v4760, %v4761
    %v4763 = vrot.slane %v4756, 4
    %v4764 = vsel %vm2440, %v4761, %v4763
    %4769 = vst [vmem:[#allocation5 + $0x2b0] sm:$0xf0] %v4760
    %4770 = vst [vmem:[#allocation5 + $0x2f0] sm:$0xff] %v4762
    %4771 = vst [vmem:[#allocation5 + $0x330] sm:$0xff] %v4764
    %4772 = vst [vmem:[#allocation5 + $0x370] sm:$0x1] %v4763
    %v4773 = vld [vmem:[#allocation4 + $0xbf] sm:$0xff]
    %v4774 = vld [vmem:[#allocation4 + $0xc7] sm:$0xff]
    %v4775 = vld [vmem:[#allocation4 + $0xcf] sm:$0x1f]
    %v4779 = vrot.slane %v4773, 4
    %v4780 = vrot.slane %v4774, 4
    %v4781 = vsel %vm2440, %v4779, %v4780
    %v4782 = vrot.slane %v4775, 4
    %v4783 = vsel %vm2440, %v4780, %v4782
    %4788 = vst [vmem:[#allocation5 + $0x2b8] sm:$0xf0] %v4779
    %4789 = vst [vmem:[#allocation5 + $0x2f8] sm:$0xff] %v4781
    %4790 = vst [vmem:[#allocation5 + $0x338] sm:$0xff] %v4783
    %4791 = vst [vmem:[#allocation5 + $0x378] sm:$0x1] %v4782
    %v4792 = vld [vmem:[#allocation4 + $0x103] sm:$0xff]
    %v4793 = vld [vmem:[#allocation4 + $0x10b] sm:$0xff]
    %v4794 = vld [vmem:[#allocation4 + $0x113] sm:$0xf]
    %v4798 = vrot.slane %v4792, 6
    %v4799 = vrot.slane %v4793, 6
    %v4800 = vsel %vm4385, %v4798, %v4799
    %v4801 = vrot.slane %v4794, 6
    %v4802 = vsel %vm4385, %v4799, %v4801
    %4806 = vst [vmem:[#allocation5 + $0x340] sm:$0xfc] %v4798
    %4807 = vst [vmem:[#allocation5 + $0x380] sm:$0xff] %v4800
    %4808 = vst [vmem:[#allocation5 + $0x3c0] sm:$0x3f] %v4802
    %4809 = vst [vmem:[#allocation5 + $0x341] sm:$0x1] 0.0
    %v4810 = vld [vmem:[#allocation4 + $0xeb] sm:$0xff]
    %v4811 = vld [vmem:[#allocation4 + $0xf3] sm:$0xff]
    %v4812 = vld [vmem:[#allocation4 + $0xfb] sm:$0x1f]
    %v4816 = vrot.slane %v4810, 7
    %v4817 = vrot.slane %v4811, 7
    %v4818 = vsel %vm1097, %v4816, %v4817
    %v4819 = vrot.slane %v4812, 7
    %v4820 = vsel %vm1097, %v4817, %v4819
    %4824 = vst [vmem:[#allocation5 + $0x348] sm:$0xfe] %v4816
    %4825 = vst [vmem:[#allocation5 + $0x388] sm:$0xff] %v4818
    %4826 = vst [vmem:[#allocation5 + $0x3c8] sm:$0x3f] %v4820
    %v4827 = vld [vmem:[#allocation4 + $0x103] sm:$0xff]
    %v4828 = vld [vmem:[#allocation4 + $0x10b] sm:$0xff]
    %v4829 = vld [vmem:[#allocation4 + $0x113] sm:$0x1f]
    %v4833 = vrot.slane %v4827, 7
    %v4834 = vrot.slane %v4828, 7
    %v4835 = vsel %vm1097, %v4833, %v4834
    %v4836 = vrot.slane %v4829, 7
    %v4837 = vsel %vm1097, %v4834, %v4836
    %4841 = vst [vmem:[#allocation5 + $0x350] sm:$0xfe] %v4833
    %4842 = vst [vmem:[#allocation5 + $0x390] sm:$0xff] %v4835
    %4843 = vst [vmem:[#allocation5 + $0x3d0] sm:$0x3f] %v4837
    %v4844 = vld [vmem:[#allocation4 + $0xec] sm:$0xff]
    %v4845 = vld [vmem:[#allocation4 + $0xf4] sm:$0xff]
    %v4846 = vld [vmem:[#allocation4 + $0xfc] sm:$0x1f]
    %v4850 = vrot.slane %v4844, 7
    %v4851 = vrot.slane %v4845, 7
    %v4852 = vsel %vm1097, %v4850, %v4851
    %v4853 = vrot.slane %v4846, 7
    %v4854 = vsel %vm1097, %v4851, %v4853
    %4858 = vst [vmem:[#allocation5 + $0x358] sm:$0xfe] %v4850
    %4859 = vst [vmem:[#allocation5 + $0x398] sm:$0xff] %v4852
    %4860 = vst [vmem:[#allocation5 + $0x3d8] sm:$0x3f] %v4854
    %v4861 = vld [vmem:[#allocation4 + $0x104] sm:$0xff]
    %v4862 = vld [vmem:[#allocation4 + $0x10c] sm:$0xff]
    %v4863 = vld [vmem:[#allocation4 + $0x114] sm:$0x1f]
    %v4867 = vrot.slane %v4861, 7
    %v4868 = vrot.slane %v4862, 7
    %v4869 = vsel %vm1097, %v4867, %v4868
    %v4870 = vrot.slane %v4863, 7
    %v4871 = vsel %vm1097, %v4868, %v4870
    %4875 = vst [vmem:[#allocation5 + $0x360] sm:$0xfe] %v4867
    %4876 = vst [vmem:[#allocation5 + $0x3a0] sm:$0xff] %v4869
    %4877 = vst [vmem:[#allocation5 + $0x3e0] sm:$0x3f] %v4871
    %v4878 = vld [vmem:[#allocation4 + $0xed] sm:$0xff]
    %v4879 = vld [vmem:[#allocation4 + $0xf5] sm:$0xff]
    %v4880 = vld [vmem:[#allocation4 + $0xfd] sm:$0x1f]
    %v4884 = vrot.slane %v4878, 7
    %v4885 = vrot.slane %v4879, 7
    %v4886 = vsel %vm1097, %v4884, %v4885
    %v4887 = vrot.slane %v4880, 7
    %v4888 = vsel %vm1097, %v4885, %v4887
    %4892 = vst [vmem:[#allocation5 + $0x368] sm:$0xfe] %v4884
    %4893 = vst [vmem:[#allocation5 + $0x3a8] sm:$0xff] %v4886
    %4894 = vst [vmem:[#allocation5 + $0x3e8] sm:$0x3f] %v4888
    %v4895 = vld [vmem:[#allocation4 + $0x105] sm:$0xff]
    %v4896 = vld [vmem:[#allocation4 + $0x10d] sm:$0xff]
    %v4897 = vld [vmem:[#allocation4 + $0x115] sm:$0x1f]
    %v4901 = vrot.slane %v4895, 7
    %v4902 = vrot.slane %v4896, 7
    %v4903 = vsel %vm1097, %v4901, %v4902
    %v4904 = vrot.slane %v4897, 7
    %v4905 = vsel %vm1097, %v4902, %v4904
    %4909 = vst [vmem:[#allocation5 + $0x370] sm:$0xfe] %v4901
    %4910 = vst [vmem:[#allocation5 + $0x3b0] sm:$0xff] %v4903
    %4911 = vst [vmem:[#allocation5 + $0x3f0] sm:$0x3f] %v4905
    %v4912 = vld [vmem:[#allocation4 + $0xee] sm:$0xff]
    %v4913 = vld [vmem:[#allocation4 + $0xf6] sm:$0xff]
    %v4914 = vld [vmem:[#allocation4 + $0xfe] sm:$0x1f]
    %v4918 = vrot.slane %v4912, 7
    %v4919 = vrot.slane %v4913, 7
    %v4920 = vsel %vm1097, %v4918, %v4919
    %v4921 = vrot.slane %v4914, 7
    %v4922 = vsel %vm1097, %v4919, %v4921
    %4926 = vst [vmem:[#allocation5 + $0x378] sm:$0xfe] %v4918
    %4927 = vst [vmem:[#allocation5 + $0x3b8] sm:$0xff] %v4920
    %4928 = vst [vmem:[#allocation5 + $0x3f8] sm:$0x3f] %v4922
    %v4929 = vld [vmem:[#allocation5] sm:$0xff]
    %v4930 = vld [vmem:[#allocation5 + $0x8] sm:$0xff]
    %v4931 = vld [vmem:[#allocation5 + $0x10] sm:$0xff]
    %v4932 = vld [vmem:[#allocation5 + $0x18] sm:$0xff]
    %v4933 = vld [vmem:[#allocation5 + $0x20] sm:$0xff]
    %v4934 = vld [vmem:[#allocation5 + $0x28] sm:$0xff]
    %v4935 = vld [vmem:[#allocation5 + $0x30] sm:$0xff]
    %v4936 = vld [vmem:[#allocation5 + $0x38] sm:$0xff]
    %v4937 = vld [vmem:[#allocation5 + $0x40] sm:$0xff]
    %v4938 = vld [vmem:[#allocation5 + $0x48] sm:$0xff]
    %v4939 = vld [vmem:[#allocation5 + $0x50] sm:$0xff]
    %v4940 = vld [vmem:[#allocation5 + $0x58] sm:$0xff]
    %v4941 = vld [vmem:[#allocation5 + $0x60] sm:$0xff]
    %v4942 = vld [vmem:[#allocation5 + $0x68] sm:$0xff]
    %v4943 = vld [vmem:[#allocation5 + $0x70] sm:$0xff]
    %v4944 = vld [vmem:[#allocation5 + $0x78] sm:$0xff]
    %v4945 = vld [vmem:[#allocation5 + $0x80] sm:$0xff]
    %v4946 = vld [vmem:[#allocation5 + $0x88] sm:$0xff]
    %v4947 = vld [vmem:[#allocation5 + $0x90] sm:$0xff]
    %v4948 = vld [vmem:[#allocation5 + $0x98] sm:$0xff]
    %v4949 = vld [vmem:[#allocation5 + $0xa0] sm:$0xff]
    %v4950 = vld [vmem:[#allocation5 + $0xa8] sm:$0xff]
    %v4951 = vld [vmem:[#allocation5 + $0xb0] sm:$0xff]
    %v4952 = vld [vmem:[#allocation5 + $0xb8] sm:$0xff]
    %v4953 = vld [vmem:[#allocation5 + $0xc0] sm:$0xff]
    %v4954 = vld [vmem:[#allocation5 + $0xc8] sm:$0xff]
    %v4955 = vld [vmem:[#allocation5 + $0xd0] sm:$0xff]
    %v4956 = vld [vmem:[#allocation5 + $0xd8] sm:$0xff]
    %v4957 = vld [vmem:[#allocation5 + $0xe0] sm:$0xff]
    %v4958 = vld [vmem:[#allocation5 + $0xe8] sm:$0xff]
    %v4959 = vld [vmem:[#allocation5 + $0xf0] sm:$0xff]
    %v4960 = vld [vmem:[#allocation5 + $0xf8] sm:$0xff]
    %v4961 = vld [vmem:[#allocation5 + $0x100] sm:$0xff]
    %v4962 = vld [vmem:[#allocation5 + $0x108] sm:$0xff]
    %v4963 = vld [vmem:[#allocation5 + $0x110] sm:$0xff]
    %v4964 = vld [vmem:[#allocation5 + $0x118] sm:$0xff]
    %v4965 = vld [vmem:[#allocation5 + $0x120] sm:$0xff]
    %v4966 = vld [vmem:[#allocation5 + $0x128] sm:$0xff]
    %v4967 = vld [vmem:[#allocation5 + $0x130] sm:$0xff]
    %v4968 = vld [vmem:[#allocation5 + $0x138] sm:$0xff]
    %v4969 = vld [vmem:[#allocation5 + $0x140] sm:$0xff]
    %v4970 = vld [vmem:[#allocation5 + $0x148] sm:$0xff]
    %v4971 = vld [vmem:[#allocation5 + $0x150] sm:$0xff]
    %v4972 = vld [vmem:[#allocation5 + $0x158] sm:$0xff]
    %v4973 = vld [vmem:[#allocation5 + $0x160] sm:$0xff]
    %v4974 = vld [vmem:[#allocation5 + $0x168] sm:$0xff]
    %v4975 = vld [vmem:[#allocation5 + $0x170] sm:$0xff]
    %v4976 = vld [vmem:[#allocation5 + $0x178] sm:$0xff]
    %v4977 = vld [vmem:[#allocation5 + $0x180] sm:$0xff]
    %v4978 = vld [vmem:[#allocation5 + $0x188] sm:$0xff]
    %v4979 = vld [vmem:[#allocation5 + $0x190] sm:$0xff]
    %v4980 = vld [vmem:[#allocation5 + $0x198] sm:$0xff]
    %v4981 = vld [vmem:[#allocation5 + $0x1a0] sm:$0xff]
    %v4982 = vld [vmem:[#allocation5 + $0x1a8] sm:$0xff]
    %v4983 = vld [vmem:[#allocation5 + $0x1b0] sm:$0xff]
    %v4984 = vld [vmem:[#allocation5 + $0x1b8] sm:$0xff]
    %v4985 = vld [vmem:[#allocation5 + $0x1c0] sm:$0xff]
    %v4986 = vld [vmem:[#allocation5 + $0x1c8] sm:$0xff]
    %v4987 = vld [vmem:[#allocation5 + $0x1d0] sm:$0xff]
    %v4988 = vld [vmem:[#allocation5 + $0x1d8] sm:$0xff]
    %v4989 = vld [vmem:[#allocation5 + $0x1e0] sm:$0xff]
    %v4990 = vld [vmem:[#allocation5 + $0x1e8] sm:$0xff]
    %v4991 = vld [vmem:[#allocation5 + $0x1f0] sm:$0xff]
    %v4992 = vld [vmem:[#allocation5 + $0x1f8] sm:$0xff]
    %v4993 = vld [vmem:[#allocation5 + $0x200] sm:$0xff]
    %v4994 = vld [vmem:[#allocation5 + $0x208] sm:$0xff]
    %v4995 = vld [vmem:[#allocation5 + $0x210] sm:$0xff]
    %v4996 = vld [vmem:[#allocation5 + $0x218] sm:$0xff]
    %v4997 = vld [vmem:[#allocation5 + $0x220] sm:$0xff]
    %v4998 = vld [vmem:[#allocation5 + $0x228] sm:$0xff]
    %v4999 = vld [vmem:[#allocation5 + $0x230] sm:$0xff]
    %v5000 = vld [vmem:[#allocation5 + $0x238] sm:$0xff]
    %v5001 = vld [vmem:[#allocation5 + $0x240] sm:$0xff]
    %v5002 = vld [vmem:[#allocation5 + $0x248] sm:$0xff]
    %v5003 = vld [vmem:[#allocation5 + $0x250] sm:$0xff]
    %v5004 = vld [vmem:[#allocation5 + $0x258] sm:$0xff]
    %v5005 = vld [vmem:[#allocation5 + $0x260] sm:$0xff]
    %v5006 = vld [vmem:[#allocation5 + $0x268] sm:$0xff]
    %v5007 = vld [vmem:[#allocation5 + $0x270] sm:$0xff]
    %v5008 = vld [vmem:[#allocation5 + $0x278] sm:$0xff]
    %v5009 = vld [vmem:[#allocation5 + $0x280] sm:$0xff]
    %v5010 = vld [vmem:[#allocation5 + $0x288] sm:$0xff]
    %v5011 = vld [vmem:[#allocation5 + $0x290] sm:$0xff]
    %v5012 = vld [vmem:[#allocation5 + $0x298] sm:$0xff]
    %v5013 = vld [vmem:[#allocation5 + $0x2a0] sm:$0xff]
    %v5014 = vld [vmem:[#allocation5 + $0x2a8] sm:$0xff]
    %v5015 = vld [vmem:[#allocation5 + $0x2b0] sm:$0xff]
    %v5016 = vld [vmem:[#allocation5 + $0x2b8] sm:$0xff]
    %v5017 = vld [vmem:[#allocation5 + $0x2c0] sm:$0xff]
    %v5018 = vld [vmem:[#allocation5 + $0x2c8] sm:$0xff]
    %v5019 = vld [vmem:[#allocation5 + $0x2d0] sm:$0xff]
    %v5020 = vld [vmem:[#allocation5 + $0x2d8] sm:$0xff]
    %v5021 = vld [vmem:[#allocation5 + $0x2e0] sm:$0xff]
    %v5022 = vld [vmem:[#allocation5 + $0x2e8] sm:$0xff]
    %v5023 = vld [vmem:[#allocation5 + $0x2f0] sm:$0xff]
    %v5024 = vld [vmem:[#allocation5 + $0x2f8] sm:$0xff]
    %v5025 = vld [vmem:[#allocation5 + $0x300] sm:$0xff]
    %v5026 = vld [vmem:[#allocation5 + $0x308] sm:$0xff]
    %v5027 = vld [vmem:[#allocation5 + $0x310] sm:$0xff]
    %v5028 = vld [vmem:[#allocation5 + $0x318] sm:$0xff]
    %v5029 = vld [vmem:[#allocation5 + $0x320] sm:$0xff]
    %v5030 = vld [vmem:[#allocation5 + $0x328] sm:$0xff]
    %v5031 = vld [vmem:[#allocation5 + $0x330] sm:$0xff]
    %v5032 = vld [vmem:[#allocation5 + $0x338] sm:$0xff]
    %v5033 = vld [vmem:[#allocation5 + $0x340] sm:$0xff]
    %v5034 = vld [vmem:[#allocation5 + $0x348] sm:$0xff]
    %v5035 = vld [vmem:[#allocation5 + $0x350] sm:$0xff]
    %v5036 = vld [vmem:[#allocation5 + $0x358] sm:$0xff]
    %v5037 = vld [vmem:[#allocation5 + $0x360] sm:$0xff]
    %v5038 = vld [vmem:[#allocation5 + $0x368] sm:$0xff]
    %v5039 = vld [vmem:[#allocation5 + $0x370] sm:$0xff]
    %v5040 = vld [vmem:[#allocation5 + $0x378] sm:$0xff]
    %v5041 = vld [vmem:[#allocation5 + $0x380] sm:$0xff]
    %v5042 = vld [vmem:[#allocation5 + $0x388] sm:$0xff]
    %v5043 = vld [vmem:[#allocation5 + $0x390] sm:$0xff]
    %v5044 = vld [vmem:[#allocation5 + $0x398] sm:$0xff]
    %v5045 = vld [vmem:[#allocation5 + $0x3a0] sm:$0xff]
    %v5046 = vld [vmem:[#allocation5 + $0x3a8] sm:$0xff]
    %v5047 = vld [vmem:[#allocation5 + $0x3b0] sm:$0xff]
    %v5048 = vld [vmem:[#allocation5 + $0x3b8] sm:$0xff]
    %v5049 = vld [vmem:[#allocation5 + $0x3c0] sm:$0x3f]
    %v5050 = vld [vmem:[#allocation5 + $0x3c8] sm:$0x3f]
    %v5051 = vld [vmem:[#allocation5 + $0x3d0] sm:$0x3f]
    %v5052 = vld [vmem:[#allocation5 + $0x3d8] sm:$0x3f]
    %v5053 = vld [vmem:[#allocation5 + $0x3e0] sm:$0x3f]
    %v5054 = vld [vmem:[#allocation5 + $0x3e8] sm:$0x3f]
    %v5055 = vld [vmem:[#allocation5 + $0x3f0] sm:$0x3f]
    %v5056 = vld [vmem:[#allocation5 + $0x3f8] sm:$0x3f]
    %v5057 = vpack.c.bf16 %v4937, %v4929
    %v5058 = vpack.c.bf16 %v4938, %v4930
    %v5059 = vpack.c.bf16 %v4939, %v4931
    %v5060 = vpack.c.bf16 %v4940, %v4932
    %v5061 = vpack.c.bf16 %v4941, %v4933
    %v5062 = vpack.c.bf16 %v4942, %v4934
    %v5063 = vpack.c.bf16 %v4943, %v4935
    %v5064 = vpack.c.bf16 %v4944, %v4936
    %v5065 = vpack.c.bf16 %v4953, %v4945
    %v5066 = vpack.c.bf16 %v4954, %v4946
    %v5067 = vpack.c.bf16 %v4955, %v4947
    %v5068 = vpack.c.bf16 %v4956, %v4948
    %v5069 = vpack.c.bf16 %v4957, %v4949
    %v5070 = vpack.c.bf16 %v4958, %v4950
    %v5071 = vpack.c.bf16 %v4959, %v4951
    %v5072 = vpack.c.bf16 %v4960, %v4952
    %v5073 = vpack.c.bf16 %v4969, %v4961
    %v5074 = vpack.c.bf16 %v4970, %v4962
    %v5075 = vpack.c.bf16 %v4971, %v4963
    %v5076 = vpack.c.bf16 %v4972, %v4964
    %v5077 = vpack.c.bf16 %v4973, %v4965
    %v5078 = vpack.c.bf16 %v4974, %v4966
    %v5079 = vpack.c.bf16 %v4975, %v4967
    %v5080 = vpack.c.bf16 %v4976, %v4968
    %v5081 = vpack.c.bf16 %v4985, %v4977
    %v5082 = vpack.c.bf16 %v4986, %v4978
    %v5083 = vpack.c.bf16 %v4987, %v4979
    %v5084 = vpack.c.bf16 %v4988, %v4980
    %v5085 = vpack.c.bf16 %v4989, %v4981
    %v5086 = vpack.c.bf16 %v4990, %v4982
    %v5087 = vpack.c.bf16 %v4991, %v4983
    %v5088 = vpack.c.bf16 %v4992, %v4984
    %v5089 = vpack.c.bf16 %v5001, %v4993
    %v5090 = vpack.c.bf16 %v5002, %v4994
    %v5091 = vpack.c.bf16 %v5003, %v4995
    %v5092 = vpack.c.bf16 %v5004, %v4996
    %v5093 = vpack.c.bf16 %v5005, %v4997
    %v5094 = vpack.c.bf16 %v5006, %v4998
    %v5095 = vpack.c.bf16 %v5007, %v4999
    %v5096 = vpack.c.bf16 %v5008, %v5000
    %v5097 = vpack.c.bf16 %v5017, %v5009
    %v5098 = vpack.c.bf16 %v5018, %v5010
    %v5099 = vpack.c.bf16 %v5019, %v5011
    %v5100 = vpack.c.bf16 %v5020, %v5012
    %v5101 = vpack.c.bf16 %v5021, %v5013
    %v5102 = vpack.c.bf16 %v5022, %v5014
    %v5103 = vpack.c.bf16 %v5023, %v5015
    %v5104 = vpack.c.bf16 %v5024, %v5016
    %v5105 = vpack.c.bf16 %v5033, %v5025
    %v5106 = vpack.c.bf16 %v5034, %v5026
    %v5107 = vpack.c.bf16 %v5035, %v5027
    %v5108 = vpack.c.bf16 %v5036, %v5028
    %v5109 = vpack.c.bf16 %v5037, %v5029
    %v5110 = vpack.c.bf16 %v5038, %v5030
    %v5111 = vpack.c.bf16 %v5039, %v5031
    %v5112 = vpack.c.bf16 %v5040, %v5032
    %v5113 = vpack.c.bf16 %v5049, %v5041
    %v5114 = vpack.c.bf16 %v5050, %v5042
    %v5115 = vpack.c.bf16 %v5051, %v5043
    %v5116 = vpack.c.bf16 %v5052, %v5044
    %v5117 = vpack.c.bf16 %v5053, %v5045
    %v5118 = vpack.c.bf16 %v5054, %v5046
    %v5119 = vpack.c.bf16 %v5055, %v5047
    %v5120 = vpack.c.bf16 %v5056, %v5048
    %v5121 = vld [vmem:[%s7] sm:$0xff]
    %v5122 = vld [vmem:[%s7 + $0x8] sm:$0xff]
    %v5123 = vld [vmem:[%s7 + $0x10] sm:$0xff]
    %v5124 = vld [vmem:[%s7 + $0x18] sm:$0xff]
    %v5125 = vld [vmem:[%s7 + $0x20] sm:$0xff]
    %v5126 = vld [vmem:[%s7 + $0x28] sm:$0xff]
    %v5127 = vld [vmem:[%s7 + $0x30] sm:$0xff]
    %v5128 = vld [vmem:[%s7 + $0x38] sm:$0xff]
    %v5129 = vld [vmem:[%s7 + $0x40] sm:$0xff]
    %v5130 = vld [vmem:[%s7 + $0x48] sm:$0xff]
    %v5131 = vld [vmem:[%s7 + $0x50] sm:$0xff]
    %v5132 = vld [vmem:[%s7 + $0x58] sm:$0xff]
    %v5133 = vld [vmem:[%s7 + $0x60] sm:$0xff]
    %v5134 = vld [vmem:[%s7 + $0x68] sm:$0xff]
    %v5135 = vld [vmem:[%s7 + $0x70] sm:$0xff]
    %v5136 = vld [vmem:[%s7 + $0x78] sm:$0xff]
    %v5137 = vld [vmem:[%s7 + $0x80] sm:$0xff]
    %v5138 = vld [vmem:[%s7 + $0x88] sm:$0xff]
    %v5139 = vld [vmem:[%s7 + $0x90] sm:$0xff]
    %v5140 = vld [vmem:[%s7 + $0x98] sm:$0xff]
    %v5141 = vld [vmem:[%s7 + $0xa0] sm:$0xff]
    %v5142 = vld [vmem:[%s7 + $0xa8] sm:$0xff]
    %v5143 = vld [vmem:[%s7 + $0xb0] sm:$0xff]
    %v5144 = vld [vmem:[%s7 + $0xb8] sm:$0xff]
    %v5145 = vld [vmem:[%s7 + $0xc0] sm:$0xff]
    %v5146 = vld [vmem:[%s7 + $0xc8] sm:$0xff]
    %v5147 = vld [vmem:[%s7 + $0xd0] sm:$0xff]
    %v5148 = vld [vmem:[%s7 + $0xd8] sm:$0xff]
    %v5149 = vld [vmem:[%s7 + $0xe0] sm:$0xff]
    %v5150 = vld [vmem:[%s7 + $0xe8] sm:$0xff]
    %v5151 = vld [vmem:[%s7 + $0xf0] sm:$0xff]
    %v5152 = vld [vmem:[%s7 + $0xf8] sm:$0xff]
    %v5153 = vld [vmem:[%s7 + $0x100] sm:$0xff]
    %v5154 = vld [vmem:[%s7 + $0x108] sm:$0xff]
    %v5155 = vld [vmem:[%s7 + $0x110] sm:$0xff]
    %v5156 = vld [vmem:[%s7 + $0x118] sm:$0xff]
    %v5157 = vld [vmem:[%s7 + $0x120] sm:$0xff]
    %v5158 = vld [vmem:[%s7 + $0x128] sm:$0xff]
    %v5159 = vld [vmem:[%s7 + $0x130] sm:$0xff]
    %v5160 = vld [vmem:[%s7 + $0x138] sm:$0xff]
    %v5161 = vld [vmem:[%s7 + $0x140] sm:$0xff]
    %v5162 = vld [vmem:[%s7 + $0x148] sm:$0xff]
    %v5163 = vld [vmem:[%s7 + $0x150] sm:$0xff]
    %v5164 = vld [vmem:[%s7 + $0x158] sm:$0xff]
    %v5165 = vld [vmem:[%s7 + $0x160] sm:$0xff]
    %v5166 = vld [vmem:[%s7 + $0x168] sm:$0xff]
    %v5167 = vld [vmem:[%s7 + $0x170] sm:$0xff]
    %v5168 = vld [vmem:[%s7 + $0x178] sm:$0xff]
    %v5169 = vld [vmem:[%s7 + $0x180] sm:$0xff]
    %v5170 = vld [vmem:[%s7 + $0x188] sm:$0xff]
    %v5171 = vld [vmem:[%s7 + $0x190] sm:$0xff]
    %v5172 = vld [vmem:[%s7 + $0x198] sm:$0xff]
    %v5173 = vld [vmem:[%s7 + $0x1a0] sm:$0xff]
    %v5174 = vld [vmem:[%s7 + $0x1a8] sm:$0xff]
    %v5175 = vld [vmem:[%s7 + $0x1b0] sm:$0xff]
    %v5176 = vld [vmem:[%s7 + $0x1b8] sm:$0xff]
    %v5177 = vld [vmem:[%s7 + $0x1c0] sm:$0xff]
    %v5178 = vld [vmem:[%s7 + $0x1c8] sm:$0xff]
    %v5179 = vld [vmem:[%s7 + $0x1d0] sm:$0xff]
    %v5180 = vld [vmem:[%s7 + $0x1d8] sm:$0xff]
    %v5181 = vld [vmem:[%s7 + $0x1e0] sm:$0xff]
    %v5182 = vld [vmem:[%s7 + $0x1e8] sm:$0xff]
    %v5183 = vld [vmem:[%s7 + $0x1f0] sm:$0xff]
    %v5184 = vld [vmem:[%s7 + $0x1f8] sm:$0xff]
    %v5185 = vld [vmem:[%s7 + $0x200] sm:$0xff]
    %v5186 = vld [vmem:[%s7 + $0x208] sm:$0xff]
    %v5187 = vld [vmem:[%s7 + $0x210] sm:$0xff]
    %v5188 = vld [vmem:[%s7 + $0x218] sm:$0xff]
    %v5189 = vld [vmem:[%s7 + $0x220] sm:$0xff]
    %v5190 = vld [vmem:[%s7 + $0x228] sm:$0xff]
    %v5191 = vld [vmem:[%s7 + $0x230] sm:$0xff]
    %v5192 = vld [vmem:[%s7 + $0x238] sm:$0xff]
    %v5193 = vld [vmem:[%s7 + $0x240] sm:$0xff]
    %v5194 = vld [vmem:[%s7 + $0x248] sm:$0xff]
    %v5195 = vld [vmem:[%s7 + $0x250] sm:$0xff]
    %v5196 = vld [vmem:[%s7 + $0x258] sm:$0xff]
    %v5197 = vld [vmem:[%s7 + $0x260] sm:$0xff]
    %v5198 = vld [vmem:[%s7 + $0x268] sm:$0xff]
    %v5199 = vld [vmem:[%s7 + $0x270] sm:$0xff]
    %v5200 = vld [vmem:[%s7 + $0x278] sm:$0xff]
    %v5201 = vld [vmem:[%s7 + $0x280] sm:$0xff]
    %v5202 = vld [vmem:[%s7 + $0x288] sm:$0xff]
    %v5203 = vld [vmem:[%s7 + $0x290] sm:$0xff]
    %v5204 = vld [vmem:[%s7 + $0x298] sm:$0xff]
    %v5205 = vld [vmem:[%s7 + $0x2a0] sm:$0xff]
    %v5206 = vld [vmem:[%s7 + $0x2a8] sm:$0xff]
    %v5207 = vld [vmem:[%s7 + $0x2b0] sm:$0xff]
    %v5208 = vld [vmem:[%s7 + $0x2b8] sm:$0xff]
    %v5209 = vld [vmem:[%s7 + $0x2c0] sm:$0xff]
    %v5210 = vld [vmem:[%s7 + $0x2c8] sm:$0xff]
    %v5211 = vld [vmem:[%s7 + $0x2d0] sm:$0xff]
    %v5212 = vld [vmem:[%s7 + $0x2d8] sm:$0xff]
    %v5213 = vld [vmem:[%s7 + $0x2e0] sm:$0xff]
    %v5214 = vld [vmem:[%s7 + $0x2e8] sm:$0xff]
    %v5215 = vld [vmem:[%s7 + $0x2f0] sm:$0xff]
    %v5216 = vld [vmem:[%s7 + $0x2f8] sm:$0xff]
    %v5217 = vld [vmem:[%s7 + $0x300] sm:$0xff]
    %v5218 = vld [vmem:[%s7 + $0x308] sm:$0xff]
    %v5219 = vld [vmem:[%s7 + $0x310] sm:$0xff]
    %v5220 = vld [vmem:[%s7 + $0x318] sm:$0xff]
    %v5221 = vld [vmem:[%s7 + $0x320] sm:$0xff]
    %v5222 = vld [vmem:[%s7 + $0x328] sm:$0xff]
    %v5223 = vld [vmem:[%s7 + $0x330] sm:$0xff]
    %v5224 = vld [vmem:[%s7 + $0x338] sm:$0xff]
    %v5225 = vld [vmem:[%s7 + $0x340] sm:$0xff]
    %v5226 = vld [vmem:[%s7 + $0x348] sm:$0xff]
    %v5227 = vld [vmem:[%s7 + $0x350] sm:$0xff]
    %v5228 = vld [vmem:[%s7 + $0x358] sm:$0xff]
    %v5229 = vld [vmem:[%s7 + $0x360] sm:$0xff]
    %v5230 = vld [vmem:[%s7 + $0x368] sm:$0xff]
    %v5231 = vld [vmem:[%s7 + $0x370] sm:$0xff]
    %v5232 = vld [vmem:[%s7 + $0x378] sm:$0xff]
    %v5233 = vld [vmem:[%s7 + $0x380] sm:$0xff]
    %v5234 = vld [vmem:[%s7 + $0x388] sm:$0xff]
    %v5235 = vld [vmem:[%s7 + $0x390] sm:$0xff]
    %v5236 = vld [vmem:[%s7 + $0x398] sm:$0xff]
    %v5237 = vld [vmem:[%s7 + $0x3a0] sm:$0xff]
    %v5238 = vld [vmem:[%s7 + $0x3a8] sm:$0xff]
    %v5239 = vld [vmem:[%s7 + $0x3b0] sm:$0xff]
    %v5240 = vld [vmem:[%s7 + $0x3b8] sm:$0xff]
    %v5241 = vld [vmem:[%s7 + $0x3c0] sm:$0xff]
    %v5242 = vld [vmem:[%s7 + $0x3c8] sm:$0xff]
    %v5243 = vld [vmem:[%s7 + $0x3d0] sm:$0xff]
    %v5244 = vld [vmem:[%s7 + $0x3d8] sm:$0xff]
    %v5245 = vld [vmem:[%s7 + $0x3e0] sm:$0xff]
    %v5246 = vld [vmem:[%s7 + $0x3e8] sm:$0xff]
    %v5247 = vld [vmem:[%s7 + $0x3f0] sm:$0xff]
    %v5248 = vld [vmem:[%s7 + $0x3f8] sm:$0xff]
    %v5377 = vunpack.c.l.b16 %v5121
    %v5378 = vunpack.c.h.b16 %v5121
    %v5379 = vunpack.c.l.b16 %v5122
    %v5380 = vunpack.c.h.b16 %v5122
    %v5381 = vunpack.c.l.b16 %v5123
    %v5382 = vunpack.c.h.b16 %v5123
    %v5383 = vunpack.c.l.b16 %v5124
    %v5384 = vunpack.c.h.b16 %v5124
    %v5385 = vunpack.c.l.b16 %v5125
    %v5386 = vunpack.c.h.b16 %v5125
    %v5387 = vunpack.c.l.b16 %v5126
    %v5388 = vunpack.c.h.b16 %v5126
    %v5389 = vunpack.c.l.b16 %v5127
    %v5390 = vunpack.c.h.b16 %v5127
    %v5391 = vunpack.c.l.b16 %v5128
    %v5392 = vunpack.c.h.b16 %v5128
    %v5393 = vunpack.c.l.b16 %v5129
    %v5394 = vunpack.c.h.b16 %v5129
    %v5395 = vunpack.c.l.b16 %v5130
    %v5396 = vunpack.c.h.b16 %v5130
    %v5397 = vunpack.c.l.b16 %v5131
    %v5398 = vunpack.c.h.b16 %v5131
    %v5399 = vunpack.c.l.b16 %v5132
    %v5400 = vunpack.c.h.b16 %v5132
    %v5401 = vunpack.c.l.b16 %v5133
    %v5402 = vunpack.c.h.b16 %v5133
    %v5403 = vunpack.c.l.b16 %v5134
    %v5404 = vunpack.c.h.b16 %v5134
    %v5405 = vunpack.c.l.b16 %v5135
    %v5406 = vunpack.c.h.b16 %v5135
    %v5407 = vunpack.c.l.b16 %v5136
    %v5408 = vunpack.c.h.b16 %v5136
    %v5409 = vunpack.c.l.b16 %v5137
    %v5410 = vunpack.c.h.b16 %v5137
    %v5411 = vunpack.c.l.b16 %v5138
    %v5412 = vunpack.c.h.b16 %v5138
    %v5413 = vunpack.c.l.b16 %v5139
    %v5414 = vunpack.c.h.b16 %v5139
    %v5415 = vunpack.c.l.b16 %v5140
    %v5416 = vunpack.c.h.b16 %v5140
    %v5417 = vunpack.c.l.b16 %v5141
    %v5418 = vunpack.c.h.b16 %v5141
    %v5419 = vunpack.c.l.b16 %v5142
    %v5420 = vunpack.c.h.b16 %v5142
    %v5421 = vunpack.c.l.b16 %v5143
    %v5422 = vunpack.c.h.b16 %v5143
    %v5423 = vunpack.c.l.b16 %v5144
    %v5424 = vunpack.c.h.b16 %v5144
    %v5425 = vunpack.c.l.b16 %v5145
    %v5426 = vunpack.c.h.b16 %v5145
    %v5427 = vunpack.c.l.b16 %v5146
    %v5428 = vunpack.c.h.b16 %v5146
    %v5429 = vunpack.c.l.b16 %v5147
    %v5430 = vunpack.c.h.b16 %v5147
    %v5431 = vunpack.c.l.b16 %v5148
    %v5432 = vunpack.c.h.b16 %v5148
    %v5433 = vunpack.c.l.b16 %v5149
    %v5434 = vunpack.c.h.b16 %v5149
    %v5435 = vunpack.c.l.b16 %v5150
    %v5436 = vunpack.c.h.b16 %v5150
    %v5437 = vunpack.c.l.b16 %v5151
    %v5438 = vunpack.c.h.b16 %v5151
    %v5439 = vunpack.c.l.b16 %v5152
    %v5440 = vunpack.c.h.b16 %v5152
    %v5441 = vunpack.c.l.b16 %v5153
    %v5442 = vunpack.c.h.b16 %v5153
    %v5443 = vunpack.c.l.b16 %v5154
    %v5444 = vunpack.c.h.b16 %v5154
    %v5445 = vunpack.c.l.b16 %v5155
    %v5446 = vunpack.c.h.b16 %v5155
    %v5447 = vunpack.c.l.b16 %v5156
    %v5448 = vunpack.c.h.b16 %v5156
    %v5449 = vunpack.c.l.b16 %v5157
    %v5450 = vunpack.c.h.b16 %v5157
    %v5451 = vunpack.c.l.b16 %v5158
    %v5452 = vunpack.c.h.b16 %v5158
    %v5453 = vunpack.c.l.b16 %v5159
    %v5454 = vunpack.c.h.b16 %v5159
    %v5455 = vunpack.c.l.b16 %v5160
    %v5456 = vunpack.c.h.b16 %v5160
    %v5457 = vunpack.c.l.b16 %v5161
    %v5458 = vunpack.c.h.b16 %v5161
    %v5459 = vunpack.c.l.b16 %v5162
    %v5460 = vunpack.c.h.b16 %v5162
    %v5461 = vunpack.c.l.b16 %v5163
    %v5462 = vunpack.c.h.b16 %v5163
    %v5463 = vunpack.c.l.b16 %v5164
    %v5464 = vunpack.c.h.b16 %v5164
    %v5465 = vunpack.c.l.b16 %v5165
    %v5466 = vunpack.c.h.b16 %v5165
    %v5467 = vunpack.c.l.b16 %v5166
    %v5468 = vunpack.c.h.b16 %v5166
    %v5469 = vunpack.c.l.b16 %v5167
    %v5470 = vunpack.c.h.b16 %v5167
    %v5471 = vunpack.c.l.b16 %v5168
    %v5472 = vunpack.c.h.b16 %v5168
    %v5473 = vunpack.c.l.b16 %v5169
    %v5474 = vunpack.c.h.b16 %v5169
    %v5475 = vunpack.c.l.b16 %v5170
    %v5476 = vunpack.c.h.b16 %v5170
    %v5477 = vunpack.c.l.b16 %v5171
    %v5478 = vunpack.c.h.b16 %v5171
    %v5479 = vunpack.c.l.b16 %v5172
    %v5480 = vunpack.c.h.b16 %v5172
    %v5481 = vunpack.c.l.b16 %v5173
    %v5482 = vunpack.c.h.b16 %v5173
    %v5483 = vunpack.c.l.b16 %v5174
    %v5484 = vunpack.c.h.b16 %v5174
    %v5485 = vunpack.c.l.b16 %v5175
    %v5486 = vunpack.c.h.b16 %v5175
    %v5487 = vunpack.c.l.b16 %v5176
    %v5488 = vunpack.c.h.b16 %v5176
    %v5489 = vunpack.c.l.b16 %v5177
    %v5490 = vunpack.c.h.b16 %v5177
    %v5491 = vunpack.c.l.b16 %v5178
    %v5492 = vunpack.c.h.b16 %v5178
    %v5493 = vunpack.c.l.b16 %v5179
    %v5494 = vunpack.c.h.b16 %v5179
    %v5495 = vunpack.c.l.b16 %v5180
    %v5496 = vunpack.c.h.b16 %v5180
    %v5497 = vunpack.c.l.b16 %v5181
    %v5498 = vunpack.c.h.b16 %v5181
    %v5499 = vunpack.c.l.b16 %v5182
    %v5500 = vunpack.c.h.b16 %v5182
    %v5501 = vunpack.c.l.b16 %v5183
    %v5502 = vunpack.c.h.b16 %v5183
    %v5503 = vunpack.c.l.b16 %v5184
    %v5504 = vunpack.c.h.b16 %v5184
    %v5505 = vunpack.c.l.b16 %v5185
    %v5506 = vunpack.c.h.b16 %v5185
    %v5507 = vunpack.c.l.b16 %v5186
    %v5508 = vunpack.c.h.b16 %v5186
    %v5509 = vunpack.c.l.b16 %v5187
    %v5510 = vunpack.c.h.b16 %v5187
    %v5511 = vunpack.c.l.b16 %v5188
    %v5512 = vunpack.c.h.b16 %v5188
    %v5513 = vunpack.c.l.b16 %v5189
    %v5514 = vunpack.c.h.b16 %v5189
    %v5515 = vunpack.c.l.b16 %v5190
    %v5516 = vunpack.c.h.b16 %v5190
    %v5517 = vunpack.c.l.b16 %v5191
    %v5518 = vunpack.c.h.b16 %v5191
    %v5519 = vunpack.c.l.b16 %v5192
    %v5520 = vunpack.c.h.b16 %v5192
    %v5521 = vunpack.c.l.b16 %v5193
    %v5522 = vunpack.c.h.b16 %v5193
    %v5523 = vunpack.c.l.b16 %v5194
    %v5524 = vunpack.c.h.b16 %v5194
    %v5525 = vunpack.c.l.b16 %v5195
    %v5526 = vunpack.c.h.b16 %v5195
    %v5527 = vunpack.c.l.b16 %v5196
    %v5528 = vunpack.c.h.b16 %v5196
    %v5529 = vunpack.c.l.b16 %v5197
    %v5530 = vunpack.c.h.b16 %v5197
    %v5531 = vunpack.c.l.b16 %v5198
    %v5532 = vunpack.c.h.b16 %v5198
    %v5533 = vunpack.c.l.b16 %v5199
    %v5534 = vunpack.c.h.b16 %v5199
    %v5535 = vunpack.c.l.b16 %v5200
    %v5536 = vunpack.c.h.b16 %v5200
    %v5537 = vunpack.c.l.b16 %v5201
    %v5538 = vunpack.c.h.b16 %v5201
    %v5539 = vunpack.c.l.b16 %v5202
    %v5540 = vunpack.c.h.b16 %v5202
    %v5541 = vunpack.c.l.b16 %v5203
    %v5542 = vunpack.c.h.b16 %v5203
    %v5543 = vunpack.c.l.b16 %v5204
    %v5544 = vunpack.c.h.b16 %v5204
    %v5545 = vunpack.c.l.b16 %v5205
    %v5546 = vunpack.c.h.b16 %v5205
    %v5547 = vunpack.c.l.b16 %v5206
    %v5548 = vunpack.c.h.b16 %v5206
    %v5549 = vunpack.c.l.b16 %v5207
    %v5550 = vunpack.c.h.b16 %v5207
    %v5551 = vunpack.c.l.b16 %v5208
    %v5552 = vunpack.c.h.b16 %v5208
    %v5553 = vunpack.c.l.b16 %v5209
    %v5554 = vunpack.c.h.b16 %v5209
    %v5555 = vunpack.c.l.b16 %v5210
    %v5556 = vunpack.c.h.b16 %v5210
    %v5557 = vunpack.c.l.b16 %v5211
    %v5558 = vunpack.c.h.b16 %v5211
    %v5559 = vunpack.c.l.b16 %v5212
    %v5560 = vunpack.c.h.b16 %v5212
    %v5561 = vunpack.c.l.b16 %v5213
    %v5562 = vunpack.c.h.b16 %v5213
    %v5563 = vunpack.c.l.b16 %v5214
    %v5564 = vunpack.c.h.b16 %v5214
    %v5565 = vunpack.c.l.b16 %v5215
    %v5566 = vunpack.c.h.b16 %v5215
    %v5567 = vunpack.c.l.b16 %v5216
    %v5568 = vunpack.c.h.b16 %v5216
    %v5569 = vunpack.c.l.b16 %v5217
    %v5570 = vunpack.c.h.b16 %v5217
    %v5571 = vunpack.c.l.b16 %v5218
    %v5572 = vunpack.c.h.b16 %v5218
    %v5573 = vunpack.c.l.b16 %v5219
    %v5574 = vunpack.c.h.b16 %v5219
    %v5575 = vunpack.c.l.b16 %v5220
    %v5576 = vunpack.c.h.b16 %v5220
    %v5577 = vunpack.c.l.b16 %v5221
    %v5578 = vunpack.c.h.b16 %v5221
    %v5579 = vunpack.c.l.b16 %v5222
    %v5580 = vunpack.c.h.b16 %v5222
    %v5581 = vunpack.c.l.b16 %v5223
    %v5582 = vunpack.c.h.b16 %v5223
    %v5583 = vunpack.c.l.b16 %v5224
    %v5584 = vunpack.c.h.b16 %v5224
    %v5585 = vunpack.c.l.b16 %v5225
    %v5586 = vunpack.c.h.b16 %v5225
    %v5587 = vunpack.c.l.b16 %v5226
    %v5588 = vunpack.c.h.b16 %v5226
    %v5589 = vunpack.c.l.b16 %v5227
    %v5590 = vunpack.c.h.b16 %v5227
    %v5591 = vunpack.c.l.b16 %v5228
    %v5592 = vunpack.c.h.b16 %v5228
    %v5593 = vunpack.c.l.b16 %v5229
    %v5594 = vunpack.c.h.b16 %v5229
    %v5595 = vunpack.c.l.b16 %v5230
    %v5596 = vunpack.c.h.b16 %v5230
    %v5597 = vunpack.c.l.b16 %v5231
    %v5598 = vunpack.c.h.b16 %v5231
    %v5599 = vunpack.c.l.b16 %v5232
    %v5600 = vunpack.c.h.b16 %v5232
    %v5601 = vunpack.c.l.b16 %v5233
    %v5602 = vunpack.c.h.b16 %v5233
    %v5603 = vunpack.c.l.b16 %v5234
    %v5604 = vunpack.c.h.b16 %v5234
    %v5605 = vunpack.c.l.b16 %v5235
    %v5606 = vunpack.c.h.b16 %v5235
    %v5607 = vunpack.c.l.b16 %v5236
    %v5608 = vunpack.c.h.b16 %v5236
    %v5609 = vunpack.c.l.b16 %v5237
    %v5610 = vunpack.c.h.b16 %v5237
    %v5611 = vunpack.c.l.b16 %v5238
    %v5612 = vunpack.c.h.b16 %v5238
    %v5613 = vunpack.c.l.b16 %v5239
    %v5614 = vunpack.c.h.b16 %v5239
    %v5615 = vunpack.c.l.b16 %v5240
    %v5616 = vunpack.c.h.b16 %v5240
    %v5617 = vunpack.c.l.b16 %v5241
    %v5618 = vunpack.c.h.b16 %v5241
    %v5619 = vunpack.c.l.b16 %v5242
    %v5620 = vunpack.c.h.b16 %v5242
    %v5621 = vunpack.c.l.b16 %v5243
    %v5622 = vunpack.c.h.b16 %v5243
    %v5623 = vunpack.c.l.b16 %v5244
    %v5624 = vunpack.c.h.b16 %v5244
    %v5625 = vunpack.c.l.b16 %v5245
    %v5626 = vunpack.c.h.b16 %v5245
    %v5627 = vunpack.c.l.b16 %v5246
    %v5628 = vunpack.c.h.b16 %v5246
    %v5629 = vunpack.c.l.b16 %v5247
    %v5630 = vunpack.c.h.b16 %v5247
    %v5631 = vunpack.c.l.b16 %v5248
    %v5632 = vunpack.c.h.b16 %v5248
    %v5633 = vpack.c.b16 %v5379, %v5377
    %v5634 = vpack.c.b16 %v5380, %v5378
    %v5635 = vpack.c.b16 %v5383, %v5381
    %v5636 = vpack.c.b16 %v5384, %v5382
    %v5637 = vpack.c.b16 %v5387, %v5385
    %v5638 = vpack.c.b16 %v5388, %v5386
    %v5639 = vpack.c.b16 %v5391, %v5389
    %v5640 = vpack.c.b16 %v5392, %v5390
    %v5641 = vpack.c.b16 %v5395, %v5393
    %v5642 = vpack.c.b16 %v5396, %v5394
    %v5643 = vpack.c.b16 %v5399, %v5397
    %v5644 = vpack.c.b16 %v5400, %v5398
    %v5645 = vpack.c.b16 %v5403, %v5401
    %v5646 = vpack.c.b16 %v5404, %v5402
    %v5647 = vpack.c.b16 %v5407, %v5405
    %v5648 = vpack.c.b16 %v5408, %v5406
    %v5649 = vpack.c.b16 %v5411, %v5409
    %v5650 = vpack.c.b16 %v5412, %v5410
    %v5651 = vpack.c.b16 %v5415, %v5413
    %v5652 = vpack.c.b16 %v5416, %v5414
    %v5653 = vpack.c.b16 %v5419, %v5417
    %v5654 = vpack.c.b16 %v5420, %v5418
    %v5655 = vpack.c.b16 %v5423, %v5421
    %v5656 = vpack.c.b16 %v5424, %v5422
    %v5657 = vpack.c.b16 %v5427, %v5425
    %v5658 = vpack.c.b16 %v5428, %v5426
    %v5659 = vpack.c.b16 %v5431, %v5429
    %v5660 = vpack.c.b16 %v5432, %v5430
    %v5661 = vpack.c.b16 %v5435, %v5433
    %v5662 = vpack.c.b16 %v5436, %v5434
    %v5663 = vpack.c.b16 %v5439, %v5437
    %v5664 = vpack.c.b16 %v5440, %v5438
    %v5665 = vpack.c.b16 %v5443, %v5441
    %v5666 = vpack.c.b16 %v5444, %v5442
    %v5667 = vpack.c.b16 %v5447, %v5445
    %v5668 = vpack.c.b16 %v5448, %v5446
    %v5669 = vpack.c.b16 %v5451, %v5449
    %v5670 = vpack.c.b16 %v5452, %v5450
    %v5671 = vpack.c.b16 %v5455, %v5453
    %v5672 = vpack.c.b16 %v5456, %v5454
    %v5673 = vpack.c.b16 %v5459, %v5457
    %v5674 = vpack.c.b16 %v5460, %v5458
    %v5675 = vpack.c.b16 %v5463, %v5461
    %v5676 = vpack.c.b16 %v5464, %v5462
    %v5677 = vpack.c.b16 %v5467, %v5465
    %v5678 = vpack.c.b16 %v5468, %v5466
    %v5679 = vpack.c.b16 %v5471, %v5469
    %v5680 = vpack.c.b16 %v5472, %v5470
    %v5681 = vpack.c.b16 %v5475, %v5473
    %v5682 = vpack.c.b16 %v5476, %v5474
    %v5683 = vpack.c.b16 %v5479, %v5477
    %v5684 = vpack.c.b16 %v5480, %v5478
    %v5685 = vpack.c.b16 %v5483, %v5481
    %v5686 = vpack.c.b16 %v5484, %v5482
    %v5687 = vpack.c.b16 %v5487, %v5485
    %v5688 = vpack.c.b16 %v5488, %v5486
    %v5689 = vpack.c.b16 %v5491, %v5489
    %v5690 = vpack.c.b16 %v5492, %v5490
    %v5691 = vpack.c.b16 %v5495, %v5493
    %v5692 = vpack.c.b16 %v5496, %v5494
    %v5693 = vpack.c.b16 %v5499, %v5497
    %v5694 = vpack.c.b16 %v5500, %v5498
    %v5695 = vpack.c.b16 %v5503, %v5501
    %v5696 = vpack.c.b16 %v5504, %v5502
    %v5697 = vpack.c.b16 %v5507, %v5505
    %v5698 = vpack.c.b16 %v5508, %v5506
    %v5699 = vpack.c.b16 %v5511, %v5509
    %v5700 = vpack.c.b16 %v5512, %v5510
    %v5701 = vpack.c.b16 %v5515, %v5513
    %v5702 = vpack.c.b16 %v5516, %v5514
    %v5703 = vpack.c.b16 %v5519, %v5517
    %v5704 = vpack.c.b16 %v5520, %v5518
    %v5705 = vpack.c.b16 %v5523, %v5521
    %v5706 = vpack.c.b16 %v5524, %v5522
    %v5707 = vpack.c.b16 %v5527, %v5525
    %v5708 = vpack.c.b16 %v5528, %v5526
    %v5709 = vpack.c.b16 %v5531, %v5529
    %v5710 = vpack.c.b16 %v5532, %v5530
    %v5711 = vpack.c.b16 %v5535, %v5533
    %v5712 = vpack.c.b16 %v5536, %v5534
    %v5713 = vpack.c.b16 %v5539, %v5537
    %v5714 = vpack.c.b16 %v5540, %v5538
    %v5715 = vpack.c.b16 %v5543, %v5541
    %v5716 = vpack.c.b16 %v5544, %v5542
    %v5717 = vpack.c.b16 %v5547, %v5545
    %v5718 = vpack.c.b16 %v5548, %v5546
    %v5719 = vpack.c.b16 %v5551, %v5549
    %v5720 = vpack.c.b16 %v5552, %v5550
    %v5721 = vpack.c.b16 %v5555, %v5553
    %v5722 = vpack.c.b16 %v5556, %v5554
    %v5723 = vpack.c.b16 %v5559, %v5557
    %v5724 = vpack.c.b16 %v5560, %v5558
    %v5725 = vpack.c.b16 %v5563, %v5561
    %v5726 = vpack.c.b16 %v5564, %v5562
    %v5727 = vpack.c.b16 %v5567, %v5565
    %v5728 = vpack.c.b16 %v5568, %v5566
    %v5729 = vpack.c.b16 %v5571, %v5569
    %v5730 = vpack.c.b16 %v5572, %v5570
    %v5731 = vpack.c.b16 %v5575, %v5573
    %v5732 = vpack.c.b16 %v5576, %v5574
    %v5733 = vpack.c.b16 %v5579, %v5577
    %v5734 = vpack.c.b16 %v5580, %v5578
    %v5735 = vpack.c.b16 %v5583, %v5581
    %v5736 = vpack.c.b16 %v5584, %v5582
    %v5737 = vpack.c.b16 %v5587, %v5585
    %v5738 = vpack.c.b16 %v5588, %v5586
    %v5739 = vpack.c.b16 %v5591, %v5589
    %v5740 = vpack.c.b16 %v5592, %v5590
    %v5741 = vpack.c.b16 %v5595, %v5593
    %v5742 = vpack.c.b16 %v5596, %v5594
    %v5743 = vpack.c.b16 %v5599, %v5597
    %v5744 = vpack.c.b16 %v5600, %v5598
    %v5745 = vpack.c.b16 %v5603, %v5601
    %v5746 = vpack.c.b16 %v5604, %v5602
    %v5747 = vpack.c.b16 %v5607, %v5605
    %v5748 = vpack.c.b16 %v5608, %v5606
    %v5749 = vpack.c.b16 %v5611, %v5609
    %v5750 = vpack.c.b16 %v5612, %v5610
    %v5751 = vpack.c.b16 %v5615, %v5613
    %v5752 = vpack.c.b16 %v5616, %v5614
    %v5753 = vpack.c.b16 %v5619, %v5617
    %v5754 = vpack.c.b16 %v5620, %v5618
    %v5755 = vpack.c.b16 %v5623, %v5621
    %v5756 = vpack.c.b16 %v5624, %v5622
    %v5757 = vpack.c.b16 %v5627, %v5625
    %v5758 = vpack.c.b16 %v5628, %v5626
    %v5759 = vpack.c.b16 %v5631, %v5629
    %v5760 = vpack.c.b16 %v5632, %v5630
    %5889 = vmatprep.subr.bf16.mxu0 %v5648
    %5890 = vmatpush1.bf16.msra.mxu0 %v5647
    %5891 = vmatprep.subr.bf16.mxu0 %v5646
    %5892 = vmatpush1.bf16.msra.mxu0 %v5645
    %5893 = vmatprep.subr.bf16.mxu0 %v5644
    %5894 = vmatpush1.bf16.msra.mxu0 %v5643
    %5895 = vmatprep.subr.bf16.mxu0 %v5642
    %5896 = vmatpush1.bf16.msra.mxu0 %v5641
    %5897 = vmatprep.subr.bf16.mxu0 %v5640
    %5898 = vmatpush1.bf16.msra.mxu0 %v5639
    %5899 = vmatprep.subr.bf16.mxu0 %v5638
    %5900 = vmatpush1.bf16.msra.mxu0 %v5637
    %5901 = vmatprep.subr.bf16.mxu0 %v5636
    %5902 = vmatpush1.bf16.msra.mxu0 %v5635
    %5903 = vmatprep.subr.bf16.mxu0 %v5634
    %5904 = vmatpush1.bf16.msra.mxu0 %v5633
    %5905 = vmatprep.subr.bf16.mxu0 %v5664
    %5906 = vmatpush2.bf16.msra.mxu0 %v5663
    %5907 = vmatprep.subr.bf16.mxu0 %v5662
    %5908 = vmatpush2.bf16.msra.mxu0 %v5661
    %5909 = vmatprep.subr.bf16.mxu0 %v5660
    %5910 = vmatpush2.bf16.msra.mxu0 %v5659
    %5911 = vmatprep.subr.bf16.mxu0 %v5658
    %5912 = vmatpush2.bf16.msra.mxu0 %v5657
    %5913 = vmatprep.subr.bf16.mxu0 %v5656
    %5914 = vmatpush2.bf16.msra.mxu0 %v5655
    %5915 = vmatprep.subr.bf16.mxu0 %v5654
    %5916 = vmatpush2.bf16.msra.mxu0 %v5653
    %5917 = vmatprep.subr.bf16.mxu0 %v5652
    %5918 = vmatpush2.bf16.msra.mxu0 %v5651
    %5919 = vmatprep.subr.bf16.mxu0 %v5650
    %5920 = vmatpush2.bf16.msra.mxu0 %v5649
    %5921 = vmatprep.mubr.bf16.mxu0 %v5058
    %5922 = vmatmul.mubr.bf16.gmra.mxu0 %v5057
    %v5923 = vpop.f32.mrf.mxu0
    %v5924 = vadd.f32 0.0, %v5923
    %v5925 = vpop.f32.mrf.mxu0
    %v5926 = vadd.f32 0.0, %v5925
    %v5927 = vpop.f32.mrf.mxu0
    %v5928 = vadd.f32 0.0, %v5927
    %v5929 = vpop.f32.mrf.mxu0
    %v5930 = vadd.f32 0.0, %v5929
    %5931 = vmatprep.mubr.bf16.mxu0 %v5066
    %5932 = vmatmul.mubr.bf16.gmra.mxu0 %v5065
    %v5933 = vpop.f32.mrf.mxu0
    %v5934 = vadd.f32 0.0, %v5933
    %v5935 = vpop.f32.mrf.mxu0
    %v5936 = vadd.f32 0.0, %v5935
    %v5937 = vpop.f32.mrf.mxu0
    %v5938 = vadd.f32 0.0, %v5937
    %v5939 = vpop.f32.mrf.mxu0
    %v5940 = vadd.f32 0.0, %v5939
    %5941 = vmatprep.mubr.bf16.mxu0 %v5074
    %5942 = vmatmul.mubr.bf16.gmra.mxu0 %v5073
    %v5943 = vpop.f32.mrf.mxu0
    %v5944 = vadd.f32 0.0, %v5943
    %v5945 = vpop.f32.mrf.mxu0
    %v5946 = vadd.f32 0.0, %v5945
    %v5947 = vpop.f32.mrf.mxu0
    %v5948 = vadd.f32 0.0, %v5947
    %v5949 = vpop.f32.mrf.mxu0
    %v5950 = vadd.f32 0.0, %v5949
    %5951 = vmatprep.mubr.bf16.mxu0 %v5082
    %5952 = vmatmul.mubr.bf16.gmra.mxu0 %v5081
    %v5953 = vpop.f32.mrf.mxu0
    %v5954 = vadd.f32 0.0, %v5953
    %v5955 = vpop.f32.mrf.mxu0
    %v5956 = vadd.f32 0.0, %v5955
    %v5957 = vpop.f32.mrf.mxu0
    %v5958 = vadd.f32 0.0, %v5957
    %v5959 = vpop.f32.mrf.mxu0
    %v5960 = vadd.f32 0.0, %v5959
    %5961 = vmatprep.mubr.bf16.mxu0 %v5090
    %5962 = vmatmul.mubr.bf16.gmra.mxu0 %v5089
    %v5963 = vpop.f32.mrf.mxu0
    %v5964 = vadd.f32 0.0, %v5963
    %v5965 = vpop.f32.mrf.mxu0
    %v5966 = vadd.f32 0.0, %v5965
    %v5967 = vpop.f32.mrf.mxu0
    %v5968 = vadd.f32 0.0, %v5967
    %v5969 = vpop.f32.mrf.mxu0
    %v5970 = vadd.f32 0.0, %v5969
    %5971 = vmatprep.mubr.bf16.mxu0 %v5098
    %5972 = vmatmul.mubr.bf16.gmra.mxu0 %v5097
    %v5973 = vpop.f32.mrf.mxu0
    %v5974 = vadd.f32 0.0, %v5973
    %v5975 = vpop.f32.mrf.mxu0
    %v5976 = vadd.f32 0.0, %v5975
    %v5977 = vpop.f32.mrf.mxu0
    %v5978 = vadd.f32 0.0, %v5977
    %v5979 = vpop.f32.mrf.mxu0
    %v5980 = vadd.f32 0.0, %v5979
    %5981 = vmatprep.mubr.bf16.mxu0 %v5106
    %5982 = vmatmul.mubr.bf16.gmra.mxu0 %v5105
    %v5983 = vpop.f32.mrf.mxu0
    %v5984 = vadd.f32 0.0, %v5983
    %v5985 = vpop.f32.mrf.mxu0
    %v5986 = vadd.f32 0.0, %v5985
    %v5987 = vpop.f32.mrf.mxu0
    %v5988 = vadd.f32 0.0, %v5987
    %v5989 = vpop.f32.mrf.mxu0
    %v5990 = vadd.f32 0.0, %v5989
    %5991 = vmatprep.mubr.bf16.mxu0 %v5114
    %5992 = vmatmul.mubr.bf16.gmra.mxu0 %v5113
    %v5993 = vpop.f32.mrf.mxu0
    %v5994 = vadd.f32 0.0, %v5993
    %v5995 = vpop.f32.mrf.mxu0
    %v5996 = vadd.f32 0.0, %v5995
    %v5997 = vpop.f32.mrf.mxu0
    %v5998 = vadd.f32 0.0, %v5997
    %v5999 = vpop.f32.mrf.mxu0
    %v6000 = vadd.f32 0.0, %v5999
    %6001 = vdwg.mxu0
    %6002 = vmatprep.subr.bf16.mxu0 %v5680
    %6003 = vmatpush1.bf16.msra.mxu0 %v5679
    %6004 = vmatprep.subr.bf16.mxu0 %v5678
    %6005 = vmatpush1.bf16.msra.mxu0 %v5677
    %6006 = vmatprep.subr.bf16.mxu0 %v5676
    %6007 = vmatpush1.bf16.msra.mxu0 %v5675
    %6008 = vmatprep.subr.bf16.mxu0 %v5674
    %6009 = vmatpush1.bf16.msra.mxu0 %v5673
    %6010 = vmatprep.subr.bf16.mxu0 %v5672
    %6011 = vmatpush1.bf16.msra.mxu0 %v5671
    %6012 = vmatprep.subr.bf16.mxu0 %v5670
    %6013 = vmatpush1.bf16.msra.mxu0 %v5669
    %6014 = vmatprep.subr.bf16.mxu0 %v5668
    %6015 = vmatpush1.bf16.msra.mxu0 %v5667
    %6016 = vmatprep.subr.bf16.mxu0 %v5666
    %6017 = vmatpush1.bf16.msra.mxu0 %v5665
    %6018 = vmatprep.subr.bf16.mxu0 %v5696
    %6019 = vmatpush2.bf16.msra.mxu0 %v5695
    %6020 = vmatprep.subr.bf16.mxu0 %v5694
    %6021 = vmatpush2.bf16.msra.mxu0 %v5693
    %6022 = vmatprep.subr.bf16.mxu0 %v5692
    %6023 = vmatpush2.bf16.msra.mxu0 %v5691
    %6024 = vmatprep.subr.bf16.mxu0 %v5690
    %6025 = vmatpush2.bf16.msra.mxu0 %v5689
    %6026 = vmatprep.subr.bf16.mxu0 %v5688
    %6027 = vmatpush2.bf16.msra.mxu0 %v5687
    %6028 = vmatprep.subr.bf16.mxu0 %v5686
    %6029 = vmatpush2.bf16.msra.mxu0 %v5685
    %6030 = vmatprep.subr.bf16.mxu0 %v5684
    %6031 = vmatpush2.bf16.msra.mxu0 %v5683
    %6032 = vmatprep.subr.bf16.mxu0 %v5682
    %6033 = vmatpush2.bf16.msra.mxu0 %v5681
    %6034 = vmatprep.mubr.bf16.mxu0 %v5060
    %6035 = vmatmul.mubr.bf16.gmra.mxu0 %v5059
    %v6036 = vpop.f32.mrf.mxu0
    %v6037 = vadd.f32 %v5924, %v6036
    %v6038 = vpop.f32.mrf.mxu0
    %v6039 = vadd.f32 %v5926, %v6038
    %v6040 = vpop.f32.mrf.mxu0
    %v6041 = vadd.f32 %v5928, %v6040
    %v6042 = vpop.f32.mrf.mxu0
    %v6043 = vadd.f32 %v5930, %v6042
    %6044 = vmatprep.mubr.bf16.mxu0 %v5068
    %6045 = vmatmul.mubr.bf16.gmra.mxu0 %v5067
    %v6046 = vpop.f32.mrf.mxu0
    %v6047 = vadd.f32 %v5934, %v6046
    %v6048 = vpop.f32.mrf.mxu0
    %v6049 = vadd.f32 %v5936, %v6048
    %v6050 = vpop.f32.mrf.mxu0
    %v6051 = vadd.f32 %v5938, %v6050
    %v6052 = vpop.f32.mrf.mxu0
    %v6053 = vadd.f32 %v5940, %v6052
    %6054 = vmatprep.mubr.bf16.mxu0 %v5076
    %6055 = vmatmul.mubr.bf16.gmra.mxu0 %v5075
    %v6056 = vpop.f32.mrf.mxu0
    %v6057 = vadd.f32 %v5944, %v6056
    %v6058 = vpop.f32.mrf.mxu0
    %v6059 = vadd.f32 %v5946, %v6058
    %v6060 = vpop.f32.mrf.mxu0
    %v6061 = vadd.f32 %v5948, %v6060
    %v6062 = vpop.f32.mrf.mxu0
    %v6063 = vadd.f32 %v5950, %v6062
    %6064 = vmatprep.mubr.bf16.mxu0 %v5084
    %6065 = vmatmul.mubr.bf16.gmra.mxu0 %v5083
    %v6066 = vpop.f32.mrf.mxu0
    %v6067 = vadd.f32 %v5954, %v6066
    %v6068 = vpop.f32.mrf.mxu0
    %v6069 = vadd.f32 %v5956, %v6068
    %v6070 = vpop.f32.mrf.mxu0
    %v6071 = vadd.f32 %v5958, %v6070
    %v6072 = vpop.f32.mrf.mxu0
    %v6073 = vadd.f32 %v5960, %v6072
    %6074 = vmatprep.mubr.bf16.mxu0 %v5092
    %6075 = vmatmul.mubr.bf16.gmra.mxu0 %v5091
    %v6076 = vpop.f32.mrf.mxu0
    %v6077 = vadd.f32 %v5964, %v6076
    %v6078 = vpop.f32.mrf.mxu0
    %v6079 = vadd.f32 %v5966, %v6078
    %v6080 = vpop.f32.mrf.mxu0
    %v6081 = vadd.f32 %v5968, %v6080
    %v6082 = vpop.f32.mrf.mxu0
    %v6083 = vadd.f32 %v5970, %v6082
    %6084 = vmatprep.mubr.bf16.mxu0 %v5100
    %6085 = vmatmul.mubr.bf16.gmra.mxu0 %v5099
    %v6086 = vpop.f32.mrf.mxu0
    %v6087 = vadd.f32 %v5974, %v6086
    %v6088 = vpop.f32.mrf.mxu0
    %v6089 = vadd.f32 %v5976, %v6088
    %v6090 = vpop.f32.mrf.mxu0
    %v6091 = vadd.f32 %v5978, %v6090
    %v6092 = vpop.f32.mrf.mxu0
    %v6093 = vadd.f32 %v5980, %v6092
    %6094 = vmatprep.mubr.bf16.mxu0 %v5108
    %6095 = vmatmul.mubr.bf16.gmra.mxu0 %v5107
    %v6096 = vpop.f32.mrf.mxu0
    %v6097 = vadd.f32 %v5984, %v6096
    %v6098 = vpop.f32.mrf.mxu0
    %v6099 = vadd.f32 %v5986, %v6098
    %v6100 = vpop.f32.mrf.mxu0
    %v6101 = vadd.f32 %v5988, %v6100
    %v6102 = vpop.f32.mrf.mxu0
    %v6103 = vadd.f32 %v5990, %v6102
    %6104 = vmatprep.mubr.bf16.mxu0 %v5116
    %6105 = vmatmul.mubr.bf16.gmra.mxu0 %v5115
    %v6106 = vpop.f32.mrf.mxu0
    %v6107 = vadd.f32 %v5994, %v6106
    %v6108 = vpop.f32.mrf.mxu0
    %v6109 = vadd.f32 %v5996, %v6108
    %v6110 = vpop.f32.mrf.mxu0
    %v6111 = vadd.f32 %v5998, %v6110
    %v6112 = vpop.f32.mrf.mxu0
    %v6113 = vadd.f32 %v6000, %v6112
    %6114 = vdwg.mxu0
    %6115 = vmatprep.subr.bf16.mxu0 %v5712
    %6116 = vmatpush1.bf16.msra.mxu0 %v5711
    %6117 = vmatprep.subr.bf16.mxu0 %v5710
    %6118 = vmatpush1.bf16.msra.mxu0 %v5709
    %6119 = vmatprep.subr.bf16.mxu0 %v5708
    %6120 = vmatpush1.bf16.msra.mxu0 %v5707
    %6121 = vmatprep.subr.bf16.mxu0 %v5706
    %6122 = vmatpush1.bf16.msra.mxu0 %v5705
    %6123 = vmatprep.subr.bf16.mxu0 %v5704
    %6124 = vmatpush1.bf16.msra.mxu0 %v5703
    %6125 = vmatprep.subr.bf16.mxu0 %v5702
    %6126 = vmatpush1.bf16.msra.mxu0 %v5701
    %6127 = vmatprep.subr.bf16.mxu0 %v5700
    %6128 = vmatpush1.bf16.msra.mxu0 %v5699
    %6129 = vmatprep.subr.bf16.mxu0 %v5698
    %6130 = vmatpush1.bf16.msra.mxu0 %v5697
    %6131 = vmatprep.subr.bf16.mxu0 %v5728
    %6132 = vmatpush2.bf16.msra.mxu0 %v5727
    %6133 = vmatprep.subr.bf16.mxu0 %v5726
    %6134 = vmatpush2.bf16.msra.mxu0 %v5725
    %6135 = vmatprep.subr.bf16.mxu0 %v5724
    %6136 = vmatpush2.bf16.msra.mxu0 %v5723
    %6137 = vmatprep.subr.bf16.mxu0 %v5722
    %6138 = vmatpush2.bf16.msra.mxu0 %v5721
    %6139 = vmatprep.subr.bf16.mxu0 %v5720
    %6140 = vmatpush2.bf16.msra.mxu0 %v5719
    %6141 = vmatprep.subr.bf16.mxu0 %v5718
    %6142 = vmatpush2.bf16.msra.mxu0 %v5717
    %6143 = vmatprep.subr.bf16.mxu0 %v5716
    %6144 = vmatpush2.bf16.msra.mxu0 %v5715
    %6145 = vmatprep.subr.bf16.mxu0 %v5714
    %6146 = vmatpush2.bf16.msra.mxu0 %v5713
    %6147 = vmatprep.mubr.bf16.mxu0 %v5062
    %6148 = vmatmul.mubr.bf16.gmra.mxu0 %v5061
    %v6149 = vpop.f32.mrf.mxu0
    %v6150 = vadd.f32 %v6037, %v6149
    %v6151 = vpop.f32.mrf.mxu0
    %v6152 = vadd.f32 %v6039, %v6151
    %v6153 = vpop.f32.mrf.mxu0
    %v6154 = vadd.f32 %v6041, %v6153
    %v6155 = vpop.f32.mrf.mxu0
    %v6156 = vadd.f32 %v6043, %v6155
    %6157 = vmatprep.mubr.bf16.mxu0 %v5070
    %6158 = vmatmul.mubr.bf16.gmra.mxu0 %v5069
    %v6159 = vpop.f32.mrf.mxu0
    %v6160 = vadd.f32 %v6047, %v6159
    %v6161 = vpop.f32.mrf.mxu0
    %v6162 = vadd.f32 %v6049, %v6161
    %v6163 = vpop.f32.mrf.mxu0
    %v6164 = vadd.f32 %v6051, %v6163
    %v6165 = vpop.f32.mrf.mxu0
    %v6166 = vadd.f32 %v6053, %v6165
    %6167 = vmatprep.mubr.bf16.mxu0 %v5078
    %6168 = vmatmul.mubr.bf16.gmra.mxu0 %v5077
    %v6169 = vpop.f32.mrf.mxu0
    %v6170 = vadd.f32 %v6057, %v6169
    %v6171 = vpop.f32.mrf.mxu0
    %v6172 = vadd.f32 %v6059, %v6171
    %v6173 = vpop.f32.mrf.mxu0
    %v6174 = vadd.f32 %v6061, %v6173
    %v6175 = vpop.f32.mrf.mxu0
    %v6176 = vadd.f32 %v6063, %v6175
    %6177 = vmatprep.mubr.bf16.mxu0 %v5086
    %6178 = vmatmul.mubr.bf16.gmra.mxu0 %v5085
    %v6179 = vpop.f32.mrf.mxu0
    %v6180 = vadd.f32 %v6067, %v6179
    %v6181 = vpop.f32.mrf.mxu0
    %v6182 = vadd.f32 %v6069, %v6181
    %v6183 = vpop.f32.mrf.mxu0
    %v6184 = vadd.f32 %v6071, %v6183
    %v6185 = vpop.f32.mrf.mxu0
    %v6186 = vadd.f32 %v6073, %v6185
    %6187 = vmatprep.mubr.bf16.mxu0 %v5094
    %6188 = vmatmul.mubr.bf16.gmra.mxu0 %v5093
    %v6189 = vpop.f32.mrf.mxu0
    %v6190 = vadd.f32 %v6077, %v6189
    %v6191 = vpop.f32.mrf.mxu0
    %v6192 = vadd.f32 %v6079, %v6191
    %v6193 = vpop.f32.mrf.mxu0
    %v6194 = vadd.f32 %v6081, %v6193
    %v6195 = vpop.f32.mrf.mxu0
    %v6196 = vadd.f32 %v6083, %v6195
    %6197 = vmatprep.mubr.bf16.mxu0 %v5102
    %6198 = vmatmul.mubr.bf16.gmra.mxu0 %v5101
    %v6199 = vpop.f32.mrf.mxu0
    %v6200 = vadd.f32 %v6087, %v6199
    %v6201 = vpop.f32.mrf.mxu0
    %v6202 = vadd.f32 %v6089, %v6201
    %v6203 = vpop.f32.mrf.mxu0
    %v6204 = vadd.f32 %v6091, %v6203
    %v6205 = vpop.f32.mrf.mxu0
    %v6206 = vadd.f32 %v6093, %v6205
    %6207 = vmatprep.mubr.bf16.mxu0 %v5110
    %6208 = vmatmul.mubr.bf16.gmra.mxu0 %v5109
    %v6209 = vpop.f32.mrf.mxu0
    %v6210 = vadd.f32 %v6097, %v6209
    %v6211 = vpop.f32.mrf.mxu0
    %v6212 = vadd.f32 %v6099, %v6211
    %v6213 = vpop.f32.mrf.mxu0
    %v6214 = vadd.f32 %v6101, %v6213
    %v6215 = vpop.f32.mrf.mxu0
    %v6216 = vadd.f32 %v6103, %v6215
    %6217 = vmatprep.mubr.bf16.mxu0 %v5118
    %6218 = vmatmul.mubr.bf16.gmra.mxu0 %v5117
    %v6219 = vpop.f32.mrf.mxu0
    %v6220 = vadd.f32 %v6107, %v6219
    %v6221 = vpop.f32.mrf.mxu0
    %v6222 = vadd.f32 %v6109, %v6221
    %v6223 = vpop.f32.mrf.mxu0
    %v6224 = vadd.f32 %v6111, %v6223
    %v6225 = vpop.f32.mrf.mxu0
    %v6226 = vadd.f32 %v6113, %v6225
    %6227 = vdwg.mxu0
    %6228 = vmatprep.subr.bf16.mxu0 %v5744
    %6229 = vmatpush1.bf16.msra.mxu0 %v5743
    %6230 = vmatprep.subr.bf16.mxu0 %v5742
    %6231 = vmatpush1.bf16.msra.mxu0 %v5741
    %6232 = vmatprep.subr.bf16.mxu0 %v5740
    %6233 = vmatpush1.bf16.msra.mxu0 %v5739
    %6234 = vmatprep.subr.bf16.mxu0 %v5738
    %6235 = vmatpush1.bf16.msra.mxu0 %v5737
    %6236 = vmatprep.subr.bf16.mxu0 %v5736
    %6237 = vmatpush1.bf16.msra.mxu0 %v5735
    %6238 = vmatprep.subr.bf16.mxu0 %v5734
    %6239 = vmatpush1.bf16.msra.mxu0 %v5733
    %6240 = vmatprep.subr.bf16.mxu0 %v5732
    %6241 = vmatpush1.bf16.msra.mxu0 %v5731
    %6242 = vmatprep.subr.bf16.mxu0 %v5730
    %6243 = vmatpush1.bf16.msra.mxu0 %v5729
    %6244 = vmatprep.subr.bf16.mxu0 %v5760
    %6245 = vmatpush2.bf16.msra.mxu0 %v5759
    %6246 = vmatprep.subr.bf16.mxu0 %v5758
    %6247 = vmatpush2.bf16.msra.mxu0 %v5757
    %6248 = vmatprep.subr.bf16.mxu0 %v5756
    %6249 = vmatpush2.bf16.msra.mxu0 %v5755
    %6250 = vmatprep.subr.bf16.mxu0 %v5754
    %6251 = vmatpush2.bf16.msra.mxu0 %v5753
    %6252 = vmatprep.subr.bf16.mxu0 %v5752
    %6253 = vmatpush2.bf16.msra.mxu0 %v5751
    %6254 = vmatprep.subr.bf16.mxu0 %v5750
    %6255 = vmatpush2.bf16.msra.mxu0 %v5749
    %6256 = vmatprep.subr.bf16.mxu0 %v5748
    %6257 = vmatpush2.bf16.msra.mxu0 %v5747
    %6258 = vmatprep.subr.bf16.mxu0 %v5746
    %6259 = vmatpush2.bf16.msra.mxu0 %v5745
    %6260 = vmatprep.mubr.bf16.mxu0 %v5064
    %6261 = vmatmul.mubr.bf16.gmra.mxu0 %v5063
    %v6262 = vpop.f32.mrf.mxu0
    %v6263 = vadd.f32 %v6150, %v6262
    %v6264 = vpop.f32.mrf.mxu0
    %v6265 = vadd.f32 %v6152, %v6264
    %v6266 = vpop.f32.mrf.mxu0
    %v6267 = vadd.f32 %v6154, %v6266
    %v6268 = vpop.f32.mrf.mxu0
    %v6269 = vadd.f32 %v6156, %v6268
    %6270 = vmatprep.mubr.bf16.mxu0 %v5072
    %6271 = vmatmul.mubr.bf16.gmra.mxu0 %v5071
    %v6272 = vpop.f32.mrf.mxu0
    %v6273 = vadd.f32 %v6160, %v6272
    %v6274 = vpop.f32.mrf.mxu0
    %v6275 = vadd.f32 %v6162, %v6274
    %v6276 = vpop.f32.mrf.mxu0
    %v6277 = vadd.f32 %v6164, %v6276
    %v6278 = vpop.f32.mrf.mxu0
    %v6279 = vadd.f32 %v6166, %v6278
    %6280 = vmatprep.mubr.bf16.mxu0 %v5080
    %6281 = vmatmul.mubr.bf16.gmra.mxu0 %v5079
    %v6282 = vpop.f32.mrf.mxu0
    %v6283 = vadd.f32 %v6170, %v6282
    %v6284 = vpop.f32.mrf.mxu0
    %v6285 = vadd.f32 %v6172, %v6284
    %v6286 = vpop.f32.mrf.mxu0
    %v6287 = vadd.f32 %v6174, %v6286
    %v6288 = vpop.f32.mrf.mxu0
    %v6289 = vadd.f32 %v6176, %v6288
    %6290 = vmatprep.mubr.bf16.mxu0 %v5088
    %6291 = vmatmul.mubr.bf16.gmra.mxu0 %v5087
    %v6292 = vpop.f32.mrf.mxu0
    %v6293 = vadd.f32 %v6180, %v6292
    %v6294 = vpop.f32.mrf.mxu0
    %v6295 = vadd.f32 %v6182, %v6294
    %v6296 = vpop.f32.mrf.mxu0
    %v6297 = vadd.f32 %v6184, %v6296
    %v6298 = vpop.f32.mrf.mxu0
    %v6299 = vadd.f32 %v6186, %v6298
    %6300 = vmatprep.mubr.bf16.mxu0 %v5096
    %6301 = vmatmul.mubr.bf16.gmra.mxu0 %v5095
    %v6302 = vpop.f32.mrf.mxu0
    %v6303 = vadd.f32 %v6190, %v6302
    %v6304 = vpop.f32.mrf.mxu0
    %v6305 = vadd.f32 %v6192, %v6304
    %v6306 = vpop.f32.mrf.mxu0
    %v6307 = vadd.f32 %v6194, %v6306
    %v6308 = vpop.f32.mrf.mxu0
    %v6309 = vadd.f32 %v6196, %v6308
    %6310 = vmatprep.mubr.bf16.mxu0 %v5104
    %6311 = vmatmul.mubr.bf16.gmra.mxu0 %v5103
    %v6312 = vpop.f32.mrf.mxu0
    %v6313 = vadd.f32 %v6200, %v6312
    %v6314 = vpop.f32.mrf.mxu0
    %v6315 = vadd.f32 %v6202, %v6314
    %v6316 = vpop.f32.mrf.mxu0
    %v6317 = vadd.f32 %v6204, %v6316
    %v6318 = vpop.f32.mrf.mxu0
    %v6319 = vadd.f32 %v6206, %v6318
    %6320 = vmatprep.mubr.bf16.mxu0 %v5112
    %6321 = vmatmul.mubr.bf16.gmra.mxu0 %v5111
    %v6322 = vpop.f32.mrf.mxu0
    %v6323 = vadd.f32 %v6210, %v6322
    %v6324 = vpop.f32.mrf.mxu0
    %v6325 = vadd.f32 %v6212, %v6324
    %v6326 = vpop.f32.mrf.mxu0
    %v6327 = vadd.f32 %v6214, %v6326
    %v6328 = vpop.f32.mrf.mxu0
    %v6329 = vadd.f32 %v6216, %v6328
    %6330 = vmatprep.mubr.bf16.mxu0 %v5120
    %6331 = vmatmul.mubr.bf16.gmra.mxu0 %v5119
    %v6332 = vpop.f32.mrf.mxu0
    %v6333 = vadd.f32 %v6220, %v6332
    %v6334 = vpop.f32.mrf.mxu0
    %v6335 = vadd.f32 %v6222, %v6334
    %v6336 = vpop.f32.mrf.mxu0
    %v6337 = vadd.f32 %v6224, %v6336
    %v6338 = vpop.f32.mrf.mxu0
    %v6339 = vadd.f32 %v6226, %v6338
    %6340 = vdwg.mxu0
    %v6341 = vld [vmem:[%s8] sm:$0x3]
    %v6343 = vlaneseq
    %v6344 = vshrl.u32 %v6343, 7
    %v6345 = vsub.s32 0, %v6344
    %v6346 = vrot.slane %v6341, %v6345
    %v6347 = vlaneseq
    %v6348 = vshrl.u32 %v6347, 7
    %v6349 = vsub.s32 1, %v6348
    %v6350 = vrot.slane %v6341, %v6349
    %v6353 = vmul.f32 %v6263, %v6346
    %v6354 = vmul.f32 %v6265, %v6350
    %v6355 = vmul.f32 %v6267, %v6346
    %v6356 = vmul.f32 %v6269, %v6350
    %v6357 = vmul.f32 %v6273, %v6346
    %v6358 = vmul.f32 %v6275, %v6350
    %v6359 = vmul.f32 %v6277, %v6346
    %v6360 = vmul.f32 %v6279, %v6350
    %v6361 = vmul.f32 %v6283, %v6346
    %v6362 = vmul.f32 %v6285, %v6350
    %v6363 = vmul.f32 %v6287, %v6346
    %v6364 = vmul.f32 %v6289, %v6350
    %v6365 = vmul.f32 %v6293, %v6346
    %v6366 = vmul.f32 %v6295, %v6350
    %v6367 = vmul.f32 %v6297, %v6346
    %v6368 = vmul.f32 %v6299, %v6350
    %v6369 = vmul.f32 %v6303, %v6346
    %v6370 = vmul.f32 %v6305, %v6350
    %v6371 = vmul.f32 %v6307, %v6346
    %v6372 = vmul.f32 %v6309, %v6350
    %v6373 = vmul.f32 %v6313, %v6346
    %v6374 = vmul.f32 %v6315, %v6350
    %v6375 = vmul.f32 %v6317, %v6346
    %v6376 = vmul.f32 %v6319, %v6350
    %v6377 = vmul.f32 %v6323, %v6346
    %v6378 = vmul.f32 %v6325, %v6350
    %v6379 = vmul.f32 %v6327, %v6346
    %v6380 = vmul.f32 %v6329, %v6350
    %v6381 = vmul.f32 %v6333, %v6346
    %v6382 = vmul.f32 %v6335, %v6350
    %v6383 = vmul.f32 %v6337, %v6346
    %v6384 = vmul.f32 %v6339, %v6350
    %v6385 = vld [vmem:[%s9] sm:$0x3]
    %v6387 = vlaneseq
    %v6388 = vshrl.u32 %v6387, 7
    %v6389 = vsub.s32 0, %v6388
    %v6390 = vrot.slane %v6385, %v6389
    %v6391 = vlaneseq
    %v6392 = vshrl.u32 %v6391, 7
    %v6393 = vsub.s32 1, %v6392
    %v6394 = vrot.slane %v6385, %v6393
    %v6397 = vadd.f32 %v6353, %v6390
    %v6398 = vadd.f32 %v6354, %v6394
    %v6399 = vadd.f32 %v6355, %v6390
    %v6400 = vadd.f32 %v6356, %v6394
    %v6401 = vadd.f32 %v6357, %v6390
    %v6402 = vadd.f32 %v6358, %v6394
    %v6403 = vadd.f32 %v6359, %v6390
    %v6404 = vadd.f32 %v6360, %v6394
    %v6405 = vadd.f32 %v6361, %v6390
    %v6406 = vadd.f32 %v6362, %v6394
    %v6407 = vadd.f32 %v6363, %v6390
    %v6408 = vadd.f32 %v6364, %v6394
    %v6409 = vadd.f32 %v6365, %v6390
    %v6410 = vadd.f32 %v6366, %v6394
    %v6411 = vadd.f32 %v6367, %v6390
    %v6412 = vadd.f32 %v6368, %v6394
    %v6413 = vadd.f32 %v6369, %v6390
    %v6414 = vadd.f32 %v6370, %v6394
    %v6415 = vadd.f32 %v6371, %v6390
    %v6416 = vadd.f32 %v6372, %v6394
    %v6417 = vadd.f32 %v6373, %v6390
    %v6418 = vadd.f32 %v6374, %v6394
    %v6419 = vadd.f32 %v6375, %v6390
    %v6420 = vadd.f32 %v6376, %v6394
    %v6421 = vadd.f32 %v6377, %v6390
    %v6422 = vadd.f32 %v6378, %v6394
    %v6423 = vadd.f32 %v6379, %v6390
    %v6424 = vadd.f32 %v6380, %v6394
    %v6425 = vadd.f32 %v6381, %v6390
    %v6426 = vadd.f32 %v6382, %v6394
    %v6427 = vadd.f32 %v6383, %v6390
    %v6428 = vadd.f32 %v6384, %v6394
    %v6429 = vmax.f32 %v6397, 0.0
    %v6430 = vmax.f32 %v6398, 0.0
    %v6431 = vmax.f32 %v6399, 0.0
    %v6432 = vmax.f32 %v6400, 0.0
    %v6433 = vmax.f32 %v6401, 0.0
    %v6434 = vmax.f32 %v6402, 0.0
    %v6435 = vmax.f32 %v6403, 0.0
    %v6436 = vmax.f32 %v6404, 0.0
    %v6437 = vmax.f32 %v6405, 0.0
    %v6438 = vmax.f32 %v6406, 0.0
    %v6439 = vmax.f32 %v6407, 0.0
    %v6440 = vmax.f32 %v6408, 0.0
    %v6441 = vmax.f32 %v6409, 0.0
    %v6442 = vmax.f32 %v6410, 0.0
    %v6443 = vmax.f32 %v6411, 0.0
    %v6444 = vmax.f32 %v6412, 0.0
    %v6445 = vmax.f32 %v6413, 0.0
    %v6446 = vmax.f32 %v6414, 0.0
    %v6447 = vmax.f32 %v6415, 0.0
    %v6448 = vmax.f32 %v6416, 0.0
    %v6449 = vmax.f32 %v6417, 0.0
    %v6450 = vmax.f32 %v6418, 0.0
    %v6451 = vmax.f32 %v6419, 0.0
    %v6452 = vmax.f32 %v6420, 0.0
    %v6453 = vmax.f32 %v6421, 0.0
    %v6454 = vmax.f32 %v6422, 0.0
    %v6455 = vmax.f32 %v6423, 0.0
    %v6456 = vmax.f32 %v6424, 0.0
    %v6457 = vmax.f32 %v6425, 0.0
    %v6458 = vmax.f32 %v6426, 0.0
    %v6459 = vmax.f32 %v6427, 0.0
    %v6460 = vmax.f32 %v6428, 0.0
    %v6461 = vld [vmem:[%s11] sm:$0x3]
    %v6462 = vld [vmem:[%s10] sm:$0xff]
    %v6463 = vld [vmem:[%s10 + $0x8] sm:$0xff]
    %v6464 = vld [vmem:[%s10 + $0x10] sm:$0xff]
    %v6465 = vld [vmem:[%s10 + $0x18] sm:$0xff]
    %v6466 = vld [vmem:[%s10 + $0x20] sm:$0xff]
    %v6467 = vld [vmem:[%s10 + $0x28] sm:$0xff]
    %v6468 = vld [vmem:[%s10 + $0x30] sm:$0xff]
    %v6469 = vld [vmem:[%s10 + $0x38] sm:$0xff]
    %v6470 = vld [vmem:[%s10 + $0x40] sm:$0xff]
    %v6471 = vld [vmem:[%s10 + $0x48] sm:$0xff]
    %v6472 = vld [vmem:[%s10 + $0x50] sm:$0xff]
    %v6473 = vld [vmem:[%s10 + $0x58] sm:$0xff]
    %v6474 = vld [vmem:[%s10 + $0x60] sm:$0xff]
    %v6475 = vld [vmem:[%s10 + $0x68] sm:$0xff]
    %v6476 = vld [vmem:[%s10 + $0x70] sm:$0xff]
    %v6477 = vld [vmem:[%s10 + $0x78] sm:$0xff]
    %v6478 = vld [vmem:[%s10 + $0x80] sm:$0xff]
    %v6479 = vld [vmem:[%s10 + $0x88] sm:$0xff]
    %v6480 = vld [vmem:[%s10 + $0x90] sm:$0xff]
    %v6481 = vld [vmem:[%s10 + $0x98] sm:$0xff]
    %v6482 = vld [vmem:[%s10 + $0xa0] sm:$0xff]
    %v6483 = vld [vmem:[%s10 + $0xa8] sm:$0xff]
    %v6484 = vld [vmem:[%s10 + $0xb0] sm:$0xff]
    %v6485 = vld [vmem:[%s10 + $0xb8] sm:$0xff]
    %v6486 = vld [vmem:[%s10 + $0xc0] sm:$0xff]
    %v6487 = vld [vmem:[%s10 + $0xc8] sm:$0xff]
    %v6488 = vld [vmem:[%s10 + $0xd0] sm:$0xff]
    %v6489 = vld [vmem:[%s10 + $0xd8] sm:$0xff]
    %v6490 = vld [vmem:[%s10 + $0xe0] sm:$0xff]
    %v6491 = vld [vmem:[%s10 + $0xe8] sm:$0xff]
    %v6492 = vld [vmem:[%s10 + $0xf0] sm:$0x3f]
    %v6493 = vld [vmem:[%s10 + $0xf8] sm:$0x3f]
    %v6494 = vmul.f32 %v6429, %v6462
    %v6495 = vmul.f32 %v6430, %v6463
    %v6496 = vmul.f32 %v6431, %v6464
    %v6497 = vmul.f32 %v6432, %v6465
    %v6498 = vmul.f32 %v6433, %v6466
    %v6499 = vmul.f32 %v6434, %v6467
    %v6500 = vmul.f32 %v6435, %v6468
    %v6501 = vmul.f32 %v6436, %v6469
    %v6502 = vmul.f32 %v6437, %v6470
    %v6503 = vmul.f32 %v6438, %v6471
    %v6504 = vmul.f32 %v6439, %v6472
    %v6505 = vmul.f32 %v6440, %v6473
    %v6506 = vmul.f32 %v6441, %v6474
    %v6507 = vmul.f32 %v6442, %v6475
    %v6508 = vmul.f32 %v6443, %v6476
    %v6509 = vmul.f32 %v6444, %v6477
    %v6510 = vmul.f32 %v6445, %v6478
    %v6511 = vmul.f32 %v6446, %v6479
    %v6512 = vmul.f32 %v6447, %v6480
    %v6513 = vmul.f32 %v6448, %v6481
    %v6514 = vmul.f32 %v6449, %v6482
    %v6515 = vmul.f32 %v6450, %v6483
    %v6516 = vmul.f32 %v6451, %v6484
    %v6517 = vmul.f32 %v6452, %v6485
    %v6518 = vmul.f32 %v6453, %v6486
    %v6519 = vmul.f32 %v6454, %v6487
    %v6520 = vmul.f32 %v6455, %v6488
    %v6521 = vmul.f32 %v6456, %v6489
    %v6522 = vmul.f32 %v6457, %v6490
    %v6523 = vmul.f32 %v6458, %v6491
    %v6524 = vmul.f32 %v6459, %v6492
    %v6525 = vmul.f32 %v6460, %v6493
    %vm6526 = vcmask 1031168
    %v6528 = vsel %vm6526, %v6461, 0
    %v6531 = vsel %vm1691, %v6524, 0
    %v6534 = vsel %vm1691, %v6525, 0
    %6536 = vmatprep.subr.mxu0 %v6534
    %6537 = vmatpush1.msra.mxu0 %v6531
    %6538 = vmatprep.subr.mxu0 %v6523
    %6539 = vmatpush1.msra.mxu0 %v6522
    %6540 = vmatprep.subr.mxu0 %v6521
    %6541 = vmatpush1.msra.mxu0 %v6520
    %6542 = vmatprep.subr.mxu0 %v6519
    %6543 = vmatpush1.msra.mxu0 %v6518
    %6544 = vmatprep.subr.mxu0 %v6517
    %6545 = vmatpush1.msra.mxu0 %v6516
    %6546 = vmatprep.subr.mxu0 %v6515
    %6547 = vmatpush1.msra.mxu0 %v6514
    %6548 = vmatprep.subr.mxu0 %v6513
    %6549 = vmatpush1.msra.mxu0 %v6512
    %6550 = vmatprep.subr.mxu0 %v6511
    %6551 = vmatpush1.msra.mxu0 %v6510
    %6552 = vmatprep.subr.mxu0 %v6509
    %6553 = vmatpush1.msra.mxu0 %v6508
    %6554 = vmatprep.subr.mxu0 %v6507
    %6555 = vmatpush1.msra.mxu0 %v6506
    %6556 = vmatprep.subr.mxu0 %v6505
    %6557 = vmatpush1.msra.mxu0 %v6504
    %6558 = vmatprep.subr.mxu0 %v6503
    %6559 = vmatpush1.msra.mxu0 %v6502
    %6560 = vmatprep.subr.mxu0 %v6501
    %6561 = vmatpush1.msra.mxu0 %v6500
    %6562 = vmatprep.subr.mxu0 %v6499
    %6563 = vmatpush1.msra.mxu0 %v6498
    %6564 = vmatprep.subr.mxu0 %v6497
    %6565 = vmatpush1.msra.mxu0 %v6496
    %6566 = vmatprep.subr.mxu0 %v6495
    %6567 = vmatpush1.msra.mxu0 %v6494
    %6568 = vmatprep.subr.mxu0 0.0
    %6569 = vmatpush2.msra.mxu0 0.0
    %6570 = vmatprep.subr.mxu0 0.0
    %6571 = vmatpush2.msra.mxu0 0.0
    %6572 = vmatprep.subr.mxu0 0.0
    %6573 = vmatpush2.msra.mxu0 0.0
    %6574 = vmatprep.subr.mxu0 0.0
    %6575 = vmatpush2.msra.mxu0 0.0
    %6576 = vmatprep.subr.mxu0 0.0
    %6577 = vmatpush2.msra.mxu0 0.0
    %6578 = vmatprep.subr.mxu0 0.0
    %6579 = vmatpush2.msra.mxu0 0.0
    %6580 = vmatprep.subr.mxu0 0.0
    %6581 = vmatpush2.msra.mxu0 0.0
    %6582 = vmatprep.subr.mxu0 0.0
    %6583 = vmatpush2.msra.mxu0 0.0
    %6584 = vmatprep.subr.mxu0 0.0
    %6585 = vmatpush2.msra.mxu0 0.0
    %6586 = vmatprep.subr.mxu0 0.0
    %6587 = vmatpush2.msra.mxu0 0.0
    %6588 = vmatprep.subr.mxu0 0.0
    %6589 = vmatpush2.msra.mxu0 0.0
    %6590 = vmatprep.subr.mxu0 0.0
    %6591 = vmatpush2.msra.mxu0 0.0
    %6592 = vmatprep.subr.mxu0 0.0
    %6593 = vmatpush2.msra.mxu0 0.0
    %6594 = vmatprep.subr.mxu0 0.0
    %6595 = vmatpush2.msra.mxu0 0.0
    %6596 = vmatprep.subr.mxu0 0.0
    %6597 = vmatpush2.msra.mxu0 0.0
    %6598 = vmatprep.subr.mxu0 0.0
    %6599 = vmatpush2.msra.mxu0 0.0
    %6600 = vmatprep.mubr.f32.mxu0 0.0
    %6601 = vmatmul.mubr.f32.gmra.mxu0 %v6528
    %v6602 = vpop.f32.mrf.mxu0
    %v6603 = vadd.f32 0.0, %v6602
    %v6604 = vpop.f32.mrf.mxu0
    %v6605 = vadd.f32 0.0, %v6604
    %6606 = vdwg.mxu0
    %v6607 = vsel %vm4385, %v6603, 0.0
    %v6608 = vsel %vm4385, %v6605, 0.0
    %v6609 = vadd.f32 %v6607, %v6608
    %6610 = vadd.xlane.f32.xlu0 %v6609
    %v6611 = vpop.xlane.xlu0 %6610
    %v6612 = vld [vmem:[%s12] sm:$0x1]
    %v6614 = vlaneseq
    %v6615 = vshrl.u32 %v6614, 7
    %v6616 = vsub.s32 0, %v6615
    %v6617 = vrot.slane %v6612, %v6616
    %v6619 = vadd.f32 %v6611, %v6617
    %vm6620 = vcmask 1024
    %6621 = vst.msk [vmem:[#allocation6] sm:$0x3] %vm6620, %v6619
    %s6622 = scalar_lea.vmem %s10, 256
    %v6623 = vld [vmem:[%s6622] sm:$0xff]
    %v6624 = vld [vmem:[%s6622 + $0x8] sm:$0xff]
    %v6625 = vld [vmem:[%s6622 + $0x10] sm:$0xff]
    %v6626 = vld [vmem:[%s6622 + $0x18] sm:$0xff]
    %v6627 = vld [vmem:[%s6622 + $0x20] sm:$0xff]
    %v6628 = vld [vmem:[%s6622 + $0x28] sm:$0xff]
    %v6629 = vld [vmem:[%s6622 + $0x30] sm:$0xff]
    %v6630 = vld [vmem:[%s6622 + $0x38] sm:$0xff]
    %v6631 = vld [vmem:[%s6622 + $0x40] sm:$0xff]
    %v6632 = vld [vmem:[%s6622 + $0x48] sm:$0xff]
    %v6633 = vld [vmem:[%s6622 + $0x50] sm:$0xff]
    %v6634 = vld [vmem:[%s6622 + $0x58] sm:$0xff]
    %v6635 = vld [vmem:[%s6622 + $0x60] sm:$0xff]
    %v6636 = vld [vmem:[%s6622 + $0x68] sm:$0xff]
    %v6637 = vld [vmem:[%s6622 + $0x70] sm:$0xff]
    %v6638 = vld [vmem:[%s6622 + $0x78] sm:$0xff]
    %v6639 = vld [vmem:[%s6622 + $0x80] sm:$0xff]
    %v6640 = vld [vmem:[%s6622 + $0x88] sm:$0xff]
    %v6641 = vld [vmem:[%s6622 + $0x90] sm:$0xff]
    %v6642 = vld [vmem:[%s6622 + $0x98] sm:$0xff]
    %v6643 = vld [vmem:[%s6622 + $0xa0] sm:$0xff]
    %v6644 = vld [vmem:[%s6622 + $0xa8] sm:$0xff]
    %v6645 = vld [vmem:[%s6622 + $0xb0] sm:$0xff]
    %v6646 = vld [vmem:[%s6622 + $0xb8] sm:$0xff]
    %v6647 = vld [vmem:[%s6622 + $0xc0] sm:$0xff]
    %v6648 = vld [vmem:[%s6622 + $0xc8] sm:$0xff]
    %v6649 = vld [vmem:[%s6622 + $0xd0] sm:$0xff]
    %v6650 = vld [vmem:[%s6622 + $0xd8] sm:$0xff]
    %v6651 = vld [vmem:[%s6622 + $0xe0] sm:$0xff]
    %v6652 = vld [vmem:[%s6622 + $0xe8] sm:$0xff]
    %v6653 = vld [vmem:[%s6622 + $0xf0] sm:$0x3f]
    %v6654 = vld [vmem:[%s6622 + $0xf8] sm:$0x3f]
    %v6655 = vmul.f32 %v6429, %v6623
    %v6656 = vmul.f32 %v6430, %v6624
    %v6657 = vmul.f32 %v6431, %v6625
    %v6658 = vmul.f32 %v6432, %v6626
    %v6659 = vmul.f32 %v6433, %v6627
    %v6660 = vmul.f32 %v6434, %v6628
    %v6661 = vmul.f32 %v6435, %v6629
    %v6662 = vmul.f32 %v6436, %v6630
    %v6663 = vmul.f32 %v6437, %v6631
    %v6664 = vmul.f32 %v6438, %v6632
    %v6665 = vmul.f32 %v6439, %v6633
    %v6666 = vmul.f32 %v6440, %v6634
    %v6667 = vmul.f32 %v6441, %v6635
    %v6668 = vmul.f32 %v6442, %v6636
    %v6669 = vmul.f32 %v6443, %v6637
    %v6670 = vmul.f32 %v6444, %v6638
    %v6671 = vmul.f32 %v6445, %v6639
    %v6672 = vmul.f32 %v6446, %v6640
    %v6673 = vmul.f32 %v6447, %v6641
    %v6674 = vmul.f32 %v6448, %v6642
    %v6675 = vmul.f32 %v6449, %v6643
    %v6676 = vmul.f32 %v6450, %v6644
    %v6677 = vmul.f32 %v6451, %v6645
    %v6678 = vmul.f32 %v6452, %v6646
    %v6679 = vmul.f32 %v6453, %v6647
    %v6680 = vmul.f32 %v6454, %v6648
    %v6681 = vmul.f32 %v6455, %v6649
    %v6682 = vmul.f32 %v6456, %v6650
    %v6683 = vmul.f32 %v6457, %v6651
    %v6684 = vmul.f32 %v6458, %v6652
    %v6685 = vmul.f32 %v6459, %v6653
    %v6686 = vmul.f32 %v6460, %v6654
    %v6688 = vsel %vm1691, %v6685, 0
    %v6691 = vsel %vm1691, %v6686, 0
    %6693 = vmatprep.subr.mxu0 %v6691
    %6694 = vmatpush1.msra.mxu0 %v6688
    %6695 = vmatprep.subr.mxu0 %v6684
    %6696 = vmatpush1.msra.mxu0 %v6683
    %6697 = vmatprep.subr.mxu0 %v6682
    %6698 = vmatpush1.msra.mxu0 %v6681
    %6699 = vmatprep.subr.mxu0 %v6680
    %6700 = vmatpush1.msra.mxu0 %v6679
    %6701 = vmatprep.subr.mxu0 %v6678
    %6702 = vmatpush1.msra.mxu0 %v6677
    %6703 = vmatprep.subr.mxu0 %v6676
    %6704 = vmatpush1.msra.mxu0 %v6675
    %6705 = vmatprep.subr.mxu0 %v6674
    %6706 = vmatpush1.msra.mxu0 %v6673
    %6707 = vmatprep.subr.mxu0 %v6672
    %6708 = vmatpush1.msra.mxu0 %v6671
    %6709 = vmatprep.subr.mxu0 %v6670
    %6710 = vmatpush1.msra.mxu0 %v6669
    %6711 = vmatprep.subr.mxu0 %v6668
    %6712 = vmatpush1.msra.mxu0 %v6667
    %6713 = vmatprep.subr.mxu0 %v6666
    %6714 = vmatpush1.msra.mxu0 %v6665
    %6715 = vmatprep.subr.mxu0 %v6664
    %6716 = vmatpush1.msra.mxu0 %v6663
    %6717 = vmatprep.subr.mxu0 %v6662
    %6718 = vmatpush1.msra.mxu0 %v6661
    %6719 = vmatprep.subr.mxu0 %v6660
    %6720 = vmatpush1.msra.mxu0 %v6659
    %6721 = vmatprep.subr.mxu0 %v6658
    %6722 = vmatpush1.msra.mxu0 %v6657
    %6723 = vmatprep.subr.mxu0 %v6656
    %6724 = vmatpush1.msra.mxu0 %v6655
    %6725 = vmatprep.subr.mxu0 0.0
    %6726 = vmatpush2.msra.mxu0 0.0
    %6727 = vmatprep.subr.mxu0 0.0
    %6728 = vmatpush2.msra.mxu0 0.0
    %6729 = vmatprep.subr.mxu0 0.0
    %6730 = vmatpush2.msra.mxu0 0.0
    %6731 = vmatprep.subr.mxu0 0.0
    %6732 = vmatpush2.msra.mxu0 0.0
    %6733 = vmatprep.subr.mxu0 0.0
    %6734 = vmatpush2.msra.mxu0 0.0
    %6735 = vmatprep.subr.mxu0 0.0
    %6736 = vmatpush2.msra.mxu0 0.0
    %6737 = vmatprep.subr.mxu0 0.0
    %6738 = vmatpush2.msra.mxu0 0.0
    %6739 = vmatprep.subr.mxu0 0.0
    %6740 = vmatpush2.msra.mxu0 0.0
    %6741 = vmatprep.subr.mxu0 0.0
    %6742 = vmatpush2.msra.mxu0 0.0
    %6743 = vmatprep.subr.mxu0 0.0
    %6744 = vmatpush2.msra.mxu0 0.0
    %6745 = vmatprep.subr.mxu0 0.0
    %6746 = vmatpush2.msra.mxu0 0.0
    %6747 = vmatprep.subr.mxu0 0.0
    %6748 = vmatpush2.msra.mxu0 0.0
    %6749 = vmatprep.subr.mxu0 0.0
    %6750 = vmatpush2.msra.mxu0 0.0
    %6751 = vmatprep.subr.mxu0 0.0
    %6752 = vmatpush2.msra.mxu0 0.0
    %6753 = vmatprep.subr.mxu0 0.0
    %6754 = vmatpush2.msra.mxu0 0.0
    %6755 = vmatprep.subr.mxu0 0.0
    %6756 = vmatpush2.msra.mxu0 0.0
    %6757 = vmatprep.mubr.f32.mxu0 0.0
    %6758 = vmatmul.mubr.f32.gmra.mxu0 %v6528
    %v6759 = vpop.f32.mrf.mxu0
    %v6760 = vadd.f32 0.0, %v6759
    %v6761 = vpop.f32.mrf.mxu0
    %v6762 = vadd.f32 0.0, %v6761
    %6763 = vdwg.mxu0
    %v6764 = vsel %vm4385, %v6760, 0.0
    %v6765 = vsel %vm4385, %v6762, 0.0
    %v6766 = vadd.f32 %v6764, %v6765
    %6767 = vadd.xlane.f32.xlu0 %v6766
    %v6768 = vpop.xlane.xlu0 %6767
    %v6769 = vld [vmem:[%s12] sm:$0x1]
    %v6771 = vlaneseq
    %v6772 = vshrl.u32 %v6771, 7
    %v6773 = vsub.s32 0, %v6772
    %v6774 = vrot.slane %v6769, %v6773
    %v6776 = vadd.f32 %v6768, %v6774
    %vm6777 = vcmask 9224
    %6778 = vst.msk [vmem:[#allocation6] sm:$0x3] %vm6777, %v6776
    %s6779 = scalar_lea.vmem %s10, 512
    %v6780 = vld [vmem:[%s6779] sm:$0xff]
    %v6781 = vld [vmem:[%s6779 + $0x8] sm:$0xff]
    %v6782 = vld [vmem:[%s6779 + $0x10] sm:$0xff]
    %v6783 = vld [vmem:[%s6779 + $0x18] sm:$0xff]
    %v6784 = vld [vmem:[%s6779 + $0x20] sm:$0xff]
    %v6785 = vld [vmem:[%s6779 + $0x28] sm:$0xff]
    %v6786 = vld [vmem:[%s6779 + $0x30] sm:$0xff]
    %v6787 = vld [vmem:[%s6779 + $0x38] sm:$0xff]
    %v6788 = vld [vmem:[%s6779 + $0x40] sm:$0xff]
    %v6789 = vld [vmem:[%s6779 + $0x48] sm:$0xff]
    %v6790 = vld [vmem:[%s6779 + $0x50] sm:$0xff]
    %v6791 = vld [vmem:[%s6779 + $0x58] sm:$0xff]
    %v6792 = vld [vmem:[%s6779 + $0x60] sm:$0xff]
    %v6793 = vld [vmem:[%s6779 + $0x68] sm:$0xff]
    %v6794 = vld [vmem:[%s6779 + $0x70] sm:$0xff]
    %v6795 = vld [vmem:[%s6779 + $0x78] sm:$0xff]
    %v6796 = vld [vmem:[%s6779 + $0x80] sm:$0xff]
    %v6797 = vld [vmem:[%s6779 + $0x88] sm:$0xff]
    %v6798 = vld [vmem:[%s6779 + $0x90] sm:$0xff]
    %v6799 = vld [vmem:[%s6779 + $0x98] sm:$0xff]
    %v6800 = vld [vmem:[%s6779 + $0xa0] sm:$0xff]
    %v6801 = vld [vmem:[%s6779 + $0xa8] sm:$0xff]
    %v6802 = vld [vmem:[%s6779 + $0xb0] sm:$0xff]
    %v6803 = vld [vmem:[%s6779 + $0xb8] sm:$0xff]
    %v6804 = vld [vmem:[%s6779 + $0xc0] sm:$0xff]
    %v6805 = vld [vmem:[%s6779 + $0xc8] sm:$0xff]
    %v6806 = vld [vmem:[%s6779 + $0xd0] sm:$0xff]
    %v6807 = vld [vmem:[%s6779 + $0xd8] sm:$0xff]
    %v6808 = vld [vmem:[%s6779 + $0xe0] sm:$0xff]
    %v6809 = vld [vmem:[%s6779 + $0xe8] sm:$0xff]
    %v6810 = vld [vmem:[%s6779 + $0xf0] sm:$0x3f]
    %v6811 = vld [vmem:[%s6779 + $0xf8] sm:$0x3f]
    %v6812 = vmul.f32 %v6429, %v6780
    %v6813 = vmul.f32 %v6430, %v6781
    %v6814 = vmul.f32 %v6431, %v6782
    %v6815 = vmul.f32 %v6432, %v6783
    %v6816 = vmul.f32 %v6433, %v6784
    %v6817 = vmul.f32 %v6434, %v6785
    %v6818 = vmul.f32 %v6435, %v6786
    %v6819 = vmul.f32 %v6436, %v6787
    %v6820 = vmul.f32 %v6437, %v6788
    %v6821 = vmul.f32 %v6438, %v6789
    %v6822 = vmul.f32 %v6439, %v6790
    %v6823 = vmul.f32 %v6440, %v6791
    %v6824 = vmul.f32 %v6441, %v6792
    %v6825 = vmul.f32 %v6442, %v6793
    %v6826 = vmul.f32 %v6443, %v6794
    %v6827 = vmul.f32 %v6444, %v6795
    %v6828 = vmul.f32 %v6445, %v6796
    %v6829 = vmul.f32 %v6446, %v6797
    %v6830 = vmul.f32 %v6447, %v6798
    %v6831 = vmul.f32 %v6448, %v6799
    %v6832 = vmul.f32 %v6449, %v6800
    %v6833 = vmul.f32 %v6450, %v6801
    %v6834 = vmul.f32 %v6451, %v6802
    %v6835 = vmul.f32 %v6452, %v6803
    %v6836 = vmul.f32 %v6453, %v6804
    %v6837 = vmul.f32 %v6454, %v6805
    %v6838 = vmul.f32 %v6455, %v6806
    %v6839 = vmul.f32 %v6456, %v6807
    %v6840 = vmul.f32 %v6457, %v6808
    %v6841 = vmul.f32 %v6458, %v6809
    %v6842 = vmul.f32 %v6459, %v6810
    %v6843 = vmul.f32 %v6460, %v6811
    %v6845 = vsel %vm1691, %v6842, 0
    %v6848 = vsel %vm1691, %v6843, 0
    %6850 = vmatprep.subr.mxu0 %v6848
    %6851 = vmatpush1.msra.mxu0 %v6845
    %6852 = vmatprep.subr.mxu0 %v6841
    %6853 = vmatpush1.msra.mxu0 %v6840
    %6854 = vmatprep.subr.mxu0 %v6839
    %6855 = vmatpush1.msra.mxu0 %v6838
    %6856 = vmatprep.subr.mxu0 %v6837
    %6857 = vmatpush1.msra.mxu0 %v6836
    %6858 = vmatprep.subr.mxu0 %v6835
    %6859 = vmatpush1.msra.mxu0 %v6834
    %6860 = vmatprep.subr.mxu0 %v6833
    %6861 = vmatpush1.msra.mxu0 %v6832
    %6862 = vmatprep.subr.mxu0 %v6831
    %6863 = vmatpush1.msra.mxu0 %v6830
    %6864 = vmatprep.subr.mxu0 %v6829
    %6865 = vmatpush1.msra.mxu0 %v6828
    %6866 = vmatprep.subr.mxu0 %v6827
    %6867 = vmatpush1.msra.mxu0 %v6826
    %6868 = vmatprep.subr.mxu0 %v6825
    %6869 = vmatpush1.msra.mxu0 %v6824
    %6870 = vmatprep.subr.mxu0 %v6823
    %6871 = vmatpush1.msra.mxu0 %v6822
    %6872 = vmatprep.subr.mxu0 %v6821
    %6873 = vmatpush1.msra.mxu0 %v6820
    %6874 = vmatprep.subr.mxu0 %v6819
    %6875 = vmatpush1.msra.mxu0 %v6818
    %6876 = vmatprep.subr.mxu0 %v6817
    %6877 = vmatpush1.msra.mxu0 %v6816
    %6878 = vmatprep.subr.mxu0 %v6815
    %6879 = vmatpush1.msra.mxu0 %v6814
    %6880 = vmatprep.subr.mxu0 %v6813
    %6881 = vmatpush1.msra.mxu0 %v6812
    %6882 = vmatprep.subr.mxu0 0.0
    %6883 = vmatpush2.msra.mxu0 0.0
    %6884 = vmatprep.subr.mxu0 0.0
    %6885 = vmatpush2.msra.mxu0 0.0
    %6886 = vmatprep.subr.mxu0 0.0
    %6887 = vmatpush2.msra.mxu0 0.0
    %6888 = vmatprep.subr.mxu0 0.0
    %6889 = vmatpush2.msra.mxu0 0.0
    %6890 = vmatprep.subr.mxu0 0.0
    %6891 = vmatpush2.msra.mxu0 0.0
    %6892 = vmatprep.subr.mxu0 0.0
    %6893 = vmatpush2.msra.mxu0 0.0
    %6894 = vmatprep.subr.mxu0 0.0
    %6895 = vmatpush2.msra.mxu0 0.0
    %6896 = vmatprep.subr.mxu0 0.0
    %6897 = vmatpush2.msra.mxu0 0.0
    %6898 = vmatprep.subr.mxu0 0.0
    %6899 = vmatpush2.msra.mxu0 0.0
    %6900 = vmatprep.subr.mxu0 0.0
    %6901 = vmatpush2.msra.mxu0 0.0
    %6902 = vmatprep.subr.mxu0 0.0
    %6903 = vmatpush2.msra.mxu0 0.0
    %6904 = vmatprep.subr.mxu0 0.0
    %6905 = vmatpush2.msra.mxu0 0.0
    %6906 = vmatprep.subr.mxu0 0.0
    %6907 = vmatpush2.msra.mxu0 0.0
    %6908 = vmatprep.subr.mxu0 0.0
    %6909 = vmatpush2.msra.mxu0 0.0
    %6910 = vmatprep.subr.mxu0 0.0
    %6911 = vmatpush2.msra.mxu0 0.0
    %6912 = vmatprep.subr.mxu0 0.0
    %6913 = vmatpush2.msra.mxu0 0.0
    %6914 = vmatprep.mubr.f32.mxu0 0.0
    %6915 = vmatmul.mubr.f32.gmra.mxu0 %v6528
    %v6916 = vpop.f32.mrf.mxu0
    %v6917 = vadd.f32 0.0, %v6916
    %v6918 = vpop.f32.mrf.mxu0
    %v6919 = vadd.f32 0.0, %v6918
    %6920 = vdwg.mxu0
    %v6921 = vsel %vm4385, %v6917, 0.0
    %v6922 = vsel %vm4385, %v6919, 0.0
    %v6923 = vadd.f32 %v6921, %v6922
    %6924 = vadd.xlane.f32.xlu0 %v6923
    %v6925 = vpop.xlane.xlu0 %6924
    %v6926 = vld [vmem:[%s12] sm:$0x1]
    %v6928 = vlaneseq
    %v6929 = vshrl.u32 %v6928, 7
    %v6930 = vsub.s32 0, %v6929
    %v6931 = vrot.slane %v6926, %v6930
    %v6933 = vadd.f32 %v6925, %v6931
    %vm6934 = vcmask 17424
    %6935 = vst.msk [vmem:[#allocation6] sm:$0x3] %vm6934, %v6933
    %s6936 = scalar_lea.vmem %s10, 768
    %v6937 = vld [vmem:[%s6936] sm:$0xff]
    %v6938 = vld [vmem:[%s6936 + $0x8] sm:$0xff]
    %v6939 = vld [vmem:[%s6936 + $0x10] sm:$0xff]
    %v6940 = vld [vmem:[%s6936 + $0x18] sm:$0xff]
    %v6941 = vld [vmem:[%s6936 + $0x20] sm:$0xff]
    %v6942 = vld [vmem:[%s6936 + $0x28] sm:$0xff]
    %v6943 = vld [vmem:[%s6936 + $0x30] sm:$0xff]
    %v6944 = vld [vmem:[%s6936 + $0x38] sm:$0xff]
    %v6945 = vld [vmem:[%s6936 + $0x40] sm:$0xff]
    %v6946 = vld [vmem:[%s6936 + $0x48] sm:$0xff]
    %v6947 = vld [vmem:[%s6936 + $0x50] sm:$0xff]
    %v6948 = vld [vmem:[%s6936 + $0x58] sm:$0xff]
    %v6949 = vld [vmem:[%s6936 + $0x60] sm:$0xff]
    %v6950 = vld [vmem:[%s6936 + $0x68] sm:$0xff]
    %v6951 = vld [vmem:[%s6936 + $0x70] sm:$0xff]
    %v6952 = vld [vmem:[%s6936 + $0x78] sm:$0xff]
    %v6953 = vld [vmem:[%s6936 + $0x80] sm:$0xff]
    %v6954 = vld [vmem:[%s6936 + $0x88] sm:$0xff]
    %v6955 = vld [vmem:[%s6936 + $0x90] sm:$0xff]
    %v6956 = vld [vmem:[%s6936 + $0x98] sm:$0xff]
    %v6957 = vld [vmem:[%s6936 + $0xa0] sm:$0xff]
    %v6958 = vld [vmem:[%s6936 + $0xa8] sm:$0xff]
    %v6959 = vld [vmem:[%s6936 + $0xb0] sm:$0xff]
    %v6960 = vld [vmem:[%s6936 + $0xb8] sm:$0xff]
    %v6961 = vld [vmem:[%s6936 + $0xc0] sm:$0xff]
    %v6962 = vld [vmem:[%s6936 + $0xc8] sm:$0xff]
    %v6963 = vld [vmem:[%s6936 + $0xd0] sm:$0xff]
    %v6964 = vld [vmem:[%s6936 + $0xd8] sm:$0xff]
    %v6965 = vld [vmem:[%s6936 + $0xe0] sm:$0xff]
    %v6966 = vld [vmem:[%s6936 + $0xe8] sm:$0xff]
    %v6967 = vld [vmem:[%s6936 + $0xf0] sm:$0x3f]
    %v6968 = vld [vmem:[%s6936 + $0xf8] sm:$0x3f]
    %v6969 = vmul.f32 %v6429, %v6937
    %v6970 = vmul.f32 %v6430, %v6938
    %v6971 = vmul.f32 %v6431, %v6939
    %v6972 = vmul.f32 %v6432, %v6940
    %v6973 = vmul.f32 %v6433, %v6941
    %v6974 = vmul.f32 %v6434, %v6942
    %v6975 = vmul.f32 %v6435, %v6943
    %v6976 = vmul.f32 %v6436, %v6944
    %v6977 = vmul.f32 %v6437, %v6945
    %v6978 = vmul.f32 %v6438, %v6946
    %v6979 = vmul.f32 %v6439, %v6947
    %v6980 = vmul.f32 %v6440, %v6948
    %v6981 = vmul.f32 %v6441, %v6949
    %v6982 = vmul.f32 %v6442, %v6950
    %v6983 = vmul.f32 %v6443, %v6951
    %v6984 = vmul.f32 %v6444, %v6952
    %v6985 = vmul.f32 %v6445, %v6953
    %v6986 = vmul.f32 %v6446, %v6954
    %v6987 = vmul.f32 %v6447, %v6955
    %v6988 = vmul.f32 %v6448, %v6956
    %v6989 = vmul.f32 %v6449, %v6957
    %v6990 = vmul.f32 %v6450, %v6958
    %v6991 = vmul.f32 %v6451, %v6959
    %v6992 = vmul.f32 %v6452, %v6960
    %v6993 = vmul.f32 %v6453, %v6961
    %v6994 = vmul.f32 %v6454, %v6962
    %v6995 = vmul.f32 %v6455, %v6963
    %v6996 = vmul.f32 %v6456, %v6964
    %v6997 = vmul.f32 %v6457, %v6965
    %v6998 = vmul.f32 %v6458, %v6966
    %v6999 = vmul.f32 %v6459, %v6967
    %v7000 = vmul.f32 %v6460, %v6968
    %v7002 = vsel %vm1691, %v6999, 0
    %v7005 = vsel %vm1691, %v7000, 0
    %7007 = vmatprep.subr.mxu0 %v7005
    %7008 = vmatpush1.msra.mxu0 %v7002
    %7009 = vmatprep.subr.mxu0 %v6998
    %7010 = vmatpush1.msra.mxu0 %v6997
    %7011 = vmatprep.subr.mxu0 %v6996
    %7012 = vmatpush1.msra.mxu0 %v6995
    %7013 = vmatprep.subr.mxu0 %v6994
    %7014 = vmatpush1.msra.mxu0 %v6993
    %7015 = vmatprep.subr.mxu0 %v6992
    %7016 = vmatpush1.msra.mxu0 %v6991
    %7017 = vmatprep.subr.mxu0 %v6990
    %7018 = vmatpush1.msra.mxu0 %v6989
    %7019 = vmatprep.subr.mxu0 %v6988
    %7020 = vmatpush1.msra.mxu0 %v6987
    %7021 = vmatprep.subr.mxu0 %v6986
    %7022 = vmatpush1.msra.mxu0 %v6985
    %7023 = vmatprep.subr.mxu0 %v6984
    %7024 = vmatpush1.msra.mxu0 %v6983
    %7025 = vmatprep.subr.mxu0 %v6982
    %7026 = vmatpush1.msra.mxu0 %v6981
    %7027 = vmatprep.subr.mxu0 %v6980
    %7028 = vmatpush1.msra.mxu0 %v6979
    %7029 = vmatprep.subr.mxu0 %v6978
    %7030 = vmatpush1.msra.mxu0 %v6977
    %7031 = vmatprep.subr.mxu0 %v6976
    %7032 = vmatpush1.msra.mxu0 %v6975
    %7033 = vmatprep.subr.mxu0 %v6974
    %7034 = vmatpush1.msra.mxu0 %v6973
    %7035 = vmatprep.subr.mxu0 %v6972
    %7036 = vmatpush1.msra.mxu0 %v6971
    %7037 = vmatprep.subr.mxu0 %v6970
    %7038 = vmatpush1.msra.mxu0 %v6969
    %7039 = vmatprep.subr.mxu0 0.0
    %7040 = vmatpush2.msra.mxu0 0.0
    %7041 = vmatprep.subr.mxu0 0.0
    %7042 = vmatpush2.msra.mxu0 0.0
    %7043 = vmatprep.subr.mxu0 0.0
    %7044 = vmatpush2.msra.mxu0 0.0
    %7045 = vmatprep.subr.mxu0 0.0
    %7046 = vmatpush2.msra.mxu0 0.0
    %7047 = vmatprep.subr.mxu0 0.0
    %7048 = vmatpush2.msra.mxu0 0.0
    %7049 = vmatprep.subr.mxu0 0.0
    %7050 = vmatpush2.msra.mxu0 0.0
    %7051 = vmatprep.subr.mxu0 0.0
    %7052 = vmatpush2.msra.mxu0 0.0
    %7053 = vmatprep.subr.mxu0 0.0
    %7054 = vmatpush2.msra.mxu0 0.0
    %7055 = vmatprep.subr.mxu0 0.0
    %7056 = vmatpush2.msra.mxu0 0.0
    %7057 = vmatprep.subr.mxu0 0.0
    %7058 = vmatpush2.msra.mxu0 0.0
    %7059 = vmatprep.subr.mxu0 0.0
    %7060 = vmatpush2.msra.mxu0 0.0
    %7061 = vmatprep.subr.mxu0 0.0
    %7062 = vmatpush2.msra.mxu0 0.0
    %7063 = vmatprep.subr.mxu0 0.0
    %7064 = vmatpush2.msra.mxu0 0.0
    %7065 = vmatprep.subr.mxu0 0.0
    %7066 = vmatpush2.msra.mxu0 0.0
    %7067 = vmatprep.subr.mxu0 0.0
    %7068 = vmatpush2.msra.mxu0 0.0
    %7069 = vmatprep.subr.mxu0 0.0
    %7070 = vmatpush2.msra.mxu0 0.0
    %7071 = vmatprep.mubr.f32.mxu0 0.0
    %7072 = vmatmul.mubr.f32.gmra.mxu0 %v6528
    %v7073 = vpop.f32.mrf.mxu0
    %v7074 = vadd.f32 0.0, %v7073
    %v7075 = vpop.f32.mrf.mxu0
    %v7076 = vadd.f32 0.0, %v7075
    %7077 = vdwg.mxu0
    %v7078 = vsel %vm4385, %v7074, 0.0
    %v7079 = vsel %vm4385, %v7076, 0.0
    %v7080 = vadd.f32 %v7078, %v7079
    %7081 = vadd.xlane.f32.xlu0 %v7080
    %v7082 = vpop.xlane.xlu0 %7081
    %v7083 = vld [vmem:[%s12] sm:$0x1]
    %v7085 = vlaneseq
    %v7086 = vshrl.u32 %v7085, 7
    %v7087 = vsub.s32 0, %v7086
    %v7088 = vrot.slane %v7083, %v7087
    %v7090 = vadd.f32 %v7082, %v7088
    %vm7091 = vcmask 25624
    %7092 = vst.msk [vmem:[#allocation6] sm:$0x3] %vm7091, %v7090
    %s7093 = scalar_lea.vmem %s10, 1024
    %v7094 = vld [vmem:[%s7093] sm:$0xff]
    %v7095 = vld [vmem:[%s7093 + $0x8] sm:$0xff]
    %v7096 = vld [vmem:[%s7093 + $0x10] sm:$0xff]
    %v7097 = vld [vmem:[%s7093 + $0x18] sm:$0xff]
    %v7098 = vld [vmem:[%s7093 + $0x20] sm:$0xff]
    %v7099 = vld [vmem:[%s7093 + $0x28] sm:$0xff]
    %v7100 = vld [vmem:[%s7093 + $0x30] sm:$0xff]
    %v7101 = vld [vmem:[%s7093 + $0x38] sm:$0xff]
    %v7102 = vld [vmem:[%s7093 + $0x40] sm:$0xff]
    %v7103 = vld [vmem:[%s7093 + $0x48] sm:$0xff]
    %v7104 = vld [vmem:[%s7093 + $0x50] sm:$0xff]
    %v7105 = vld [vmem:[%s7093 + $0x58] sm:$0xff]
    %v7106 = vld [vmem:[%s7093 + $0x60] sm:$0xff]
    %v7107 = vld [vmem:[%s7093 + $0x68] sm:$0xff]
    %v7108 = vld [vmem:[%s7093 + $0x70] sm:$0xff]
    %v7109 = vld [vmem:[%s7093 + $0x78] sm:$0xff]
    %v7110 = vld [vmem:[%s7093 + $0x80] sm:$0xff]
    %v7111 = vld [vmem:[%s7093 + $0x88] sm:$0xff]
    %v7112 = vld [vmem:[%s7093 + $0x90] sm:$0xff]
    %v7113 = vld [vmem:[%s7093 + $0x98] sm:$0xff]
    %v7114 = vld [vmem:[%s7093 + $0xa0] sm:$0xff]
    %v7115 = vld [vmem:[%s7093 + $0xa8] sm:$0xff]
    %v7116 = vld [vmem:[%s7093 + $0xb0] sm:$0xff]
    %v7117 = vld [vmem:[%s7093 + $0xb8] sm:$0xff]
    %v7118 = vld [vmem:[%s7093 + $0xc0] sm:$0xff]
    %v7119 = vld [vmem:[%s7093 + $0xc8] sm:$0xff]
    %v7120 = vld [vmem:[%s7093 + $0xd0] sm:$0xff]
    %v7121 = vld [vmem:[%s7093 + $0xd8] sm:$0xff]
    %v7122 = vld [vmem:[%s7093 + $0xe0] sm:$0xff]
    %v7123 = vld [vmem:[%s7093 + $0xe8] sm:$0xff]
    %v7124 = vld [vmem:[%s7093 + $0xf0] sm:$0x3f]
    %v7125 = vld [vmem:[%s7093 + $0xf8] sm:$0x3f]
    %v7126 = vmul.f32 %v6429, %v7094
    %v7127 = vmul.f32 %v6430, %v7095
    %v7128 = vmul.f32 %v6431, %v7096
    %v7129 = vmul.f32 %v6432, %v7097
    %v7130 = vmul.f32 %v6433, %v7098
    %v7131 = vmul.f32 %v6434, %v7099
    %v7132 = vmul.f32 %v6435, %v7100
    %v7133 = vmul.f32 %v6436, %v7101
    %v7134 = vmul.f32 %v6437, %v7102
    %v7135 = vmul.f32 %v6438, %v7103
    %v7136 = vmul.f32 %v6439, %v7104
    %v7137 = vmul.f32 %v6440, %v7105
    %v7138 = vmul.f32 %v6441, %v7106
    %v7139 = vmul.f32 %v6442, %v7107
    %v7140 = vmul.f32 %v6443, %v7108
    %v7141 = vmul.f32 %v6444, %v7109
    %v7142 = vmul.f32 %v6445, %v7110
    %v7143 = vmul.f32 %v6446, %v7111
    %v7144 = vmul.f32 %v6447, %v7112
    %v7145 = vmul.f32 %v6448, %v7113
    %v7146 = vmul.f32 %v6449, %v7114
    %v7147 = vmul.f32 %v6450, %v7115
    %v7148 = vmul.f32 %v6451, %v7116
    %v7149 = vmul.f32 %v6452, %v7117
    %v7150 = vmul.f32 %v6453, %v7118
    %v7151 = vmul.f32 %v6454, %v7119
    %v7152 = vmul.f32 %v6455, %v7120
    %v7153 = vmul.f32 %v6456, %v7121
    %v7154 = vmul.f32 %v6457, %v7122
    %v7155 = vmul.f32 %v6458, %v7123
    %v7156 = vmul.f32 %v6459, %v7124
    %v7157 = vmul.f32 %v6460, %v7125
    %v7159 = vsel %vm1691, %v7156, 0
    %v7162 = vsel %vm1691, %v7157, 0
    %7164 = vmatprep.subr.mxu0 %v7162
    %7165 = vmatpush1.msra.mxu0 %v7159
    %7166 = vmatprep.subr.mxu0 %v7155
    %7167 = vmatpush1.msra.mxu0 %v7154
    %7168 = vmatprep.subr.mxu0 %v7153
    %7169 = vmatpush1.msra.mxu0 %v7152
    %7170 = vmatprep.subr.mxu0 %v7151
    %7171 = vmatpush1.msra.mxu0 %v7150
    %7172 = vmatprep.subr.mxu0 %v7149
    %7173 = vmatpush1.msra.mxu0 %v7148
    %7174 = vmatprep.subr.mxu0 %v7147
    %7175 = vmatpush1.msra.mxu0 %v7146
    %7176 = vmatprep.subr.mxu0 %v7145
    %7177 = vmatpush1.msra.mxu0 %v7144
    %7178 = vmatprep.subr.mxu0 %v7143
    %7179 = vmatpush1.msra.mxu0 %v7142
    %7180 = vmatprep.subr.mxu0 %v7141
    %7181 = vmatpush1.msra.mxu0 %v7140
    %7182 = vmatprep.subr.mxu0 %v7139
    %7183 = vmatpush1.msra.mxu0 %v7138
    %7184 = vmatprep.subr.mxu0 %v7137
    %7185 = vmatpush1.msra.mxu0 %v7136
    %7186 = vmatprep.subr.mxu0 %v7135
    %7187 = vmatpush1.msra.mxu0 %v7134
    %7188 = vmatprep.subr.mxu0 %v7133
    %7189 = vmatpush1.msra.mxu0 %v7132
    %7190 = vmatprep.subr.mxu0 %v7131
    %7191 = vmatpush1.msra.mxu0 %v7130
    %7192 = vmatprep.subr.mxu0 %v7129
    %7193 = vmatpush1.msra.mxu0 %v7128
    %7194 = vmatprep.subr.mxu0 %v7127
    %7195 = vmatpush1.msra.mxu0 %v7126
    %7196 = vmatprep.subr.mxu0 0.0
    %7197 = vmatpush2.msra.mxu0 0.0
    %7198 = vmatprep.subr.mxu0 0.0
    %7199 = vmatpush2.msra.mxu0 0.0
    %7200 = vmatprep.subr.mxu0 0.0
    %7201 = vmatpush2.msra.mxu0 0.0
    %7202 = vmatprep.subr.mxu0 0.0
    %7203 = vmatpush2.msra.mxu0 0.0
    %7204 = vmatprep.subr.mxu0 0.0
    %7205 = vmatpush2.msra.mxu0 0.0
    %7206 = vmatprep.subr.mxu0 0.0
    %7207 = vmatpush2.msra.mxu0 0.0
    %7208 = vmatprep.subr.mxu0 0.0
    %7209 = vmatpush2.msra.mxu0 0.0
    %7210 = vmatprep.subr.mxu0 0.0
    %7211 = vmatpush2.msra.mxu0 0.0
    %7212 = vmatprep.subr.mxu0 0.0
    %7213 = vmatpush2.msra.mxu0 0.0
    %7214 = vmatprep.subr.mxu0 0.0
    %7215 = vmatpush2.msra.mxu0 0.0
    %7216 = vmatprep.subr.mxu0 0.0
    %7217 = vmatpush2.msra.mxu0 0.0
    %7218 = vmatprep.subr.mxu0 0.0
    %7219 = vmatpush2.msra.mxu0 0.0
    %7220 = vmatprep.subr.mxu0 0.0
    %7221 = vmatpush2.msra.mxu0 0.0
    %7222 = vmatprep.subr.mxu0 0.0
    %7223 = vmatpush2.msra.mxu0 0.0
    %7224 = vmatprep.subr.mxu0 0.0
    %7225 = vmatpush2.msra.mxu0 0.0
    %7226 = vmatprep.subr.mxu0 0.0
    %7227 = vmatpush2.msra.mxu0 0.0
    %7228 = vmatprep.mubr.f32.mxu0 0.0
    %7229 = vmatmul.mubr.f32.gmra.mxu0 %v6528
    %v7230 = vpop.f32.mrf.mxu0
    %v7231 = vadd.f32 0.0, %v7230
    %v7232 = vpop.f32.mrf.mxu0
    %v7233 = vadd.f32 0.0, %v7232
    %7234 = vdwg.mxu0
    %v7235 = vsel %vm4385, %v7231, 0.0
    %v7236 = vsel %vm4385, %v7233, 0.0
    %v7237 = vadd.f32 %v7235, %v7236
    %7238 = vadd.xlane.f32.xlu0 %v7237
    %v7239 = vpop.xlane.xlu0 %7238
    %v7240 = vld [vmem:[%s12] sm:$0x1]
    %v7242 = vlaneseq
    %v7243 = vshrl.u32 %v7242, 7
    %v7244 = vsub.s32 0, %v7243
    %v7245 = vrot.slane %v7240, %v7244
    %v7247 = vadd.f32 %v7239, %v7245
    %vm7248 = vcmask 33824
    %7249 = vst.msk [vmem:[#allocation6] sm:$0x3] %vm7248, %v7247
    %s7250 = scalar_lea.vmem %s10, 1280
    %v7251 = vld [vmem:[%s7250] sm:$0xff]
    %v7252 = vld [vmem:[%s7250 + $0x8] sm:$0xff]
    %v7253 = vld [vmem:[%s7250 + $0x10] sm:$0xff]
    %v7254 = vld [vmem:[%s7250 + $0x18] sm:$0xff]
    %v7255 = vld [vmem:[%s7250 + $0x20] sm:$0xff]
    %v7256 = vld [vmem:[%s7250 + $0x28] sm:$0xff]
    %v7257 = vld [vmem:[%s7250 + $0x30] sm:$0xff]
    %v7258 = vld [vmem:[%s7250 + $0x38] sm:$0xff]
    %v7259 = vld [vmem:[%s7250 + $0x40] sm:$0xff]
    %v7260 = vld [vmem:[%s7250 + $0x48] sm:$0xff]
    %v7261 = vld [vmem:[%s7250 + $0x50] sm:$0xff]
    %v7262 = vld [vmem:[%s7250 + $0x58] sm:$0xff]
    %v7263 = vld [vmem:[%s7250 + $0x60] sm:$0xff]
    %v7264 = vld [vmem:[%s7250 + $0x68] sm:$0xff]
    %v7265 = vld [vmem:[%s7250 + $0x70] sm:$0xff]
    %v7266 = vld [vmem:[%s7250 + $0x78] sm:$0xff]
    %v7267 = vld [vmem:[%s7250 + $0x80] sm:$0xff]
    %v7268 = vld [vmem:[%s7250 + $0x88] sm:$0xff]
    %v7269 = vld [vmem:[%s7250 + $0x90] sm:$0xff]
    %v7270 = vld [vmem:[%s7250 + $0x98] sm:$0xff]
    %v7271 = vld [vmem:[%s7250 + $0xa0] sm:$0xff]
    %v7272 = vld [vmem:[%s7250 + $0xa8] sm:$0xff]
    %v7273 = vld [vmem:[%s7250 + $0xb0] sm:$0xff]
    %v7274 = vld [vmem:[%s7250 + $0xb8] sm:$0xff]
    %v7275 = vld [vmem:[%s7250 + $0xc0] sm:$0xff]
    %v7276 = vld [vmem:[%s7250 + $0xc8] sm:$0xff]
    %v7277 = vld [vmem:[%s7250 + $0xd0] sm:$0xff]
    %v7278 = vld [vmem:[%s7250 + $0xd8] sm:$0xff]
    %v7279 = vld [vmem:[%s7250 + $0xe0] sm:$0xff]
    %v7280 = vld [vmem:[%s7250 + $0xe8] sm:$0xff]
    %v7281 = vld [vmem:[%s7250 + $0xf0] sm:$0x3f]
    %v7282 = vld [vmem:[%s7250 + $0xf8] sm:$0x3f]
    %v7283 = vmul.f32 %v6429, %v7251
    %v7284 = vmul.f32 %v6430, %v7252
    %v7285 = vmul.f32 %v6431, %v7253
    %v7286 = vmul.f32 %v6432, %v7254
    %v7287 = vmul.f32 %v6433, %v7255
    %v7288 = vmul.f32 %v6434, %v7256
    %v7289 = vmul.f32 %v6435, %v7257
    %v7290 = vmul.f32 %v6436, %v7258
    %v7291 = vmul.f32 %v6437, %v7259
    %v7292 = vmul.f32 %v6438, %v7260
    %v7293 = vmul.f32 %v6439, %v7261
    %v7294 = vmul.f32 %v6440, %v7262
    %v7295 = vmul.f32 %v6441, %v7263
    %v7296 = vmul.f32 %v6442, %v7264
    %v7297 = vmul.f32 %v6443, %v7265
    %v7298 = vmul.f32 %v6444, %v7266
    %v7299 = vmul.f32 %v6445, %v7267
    %v7300 = vmul.f32 %v6446, %v7268
    %v7301 = vmul.f32 %v6447, %v7269
    %v7302 = vmul.f32 %v6448, %v7270
    %v7303 = vmul.f32 %v6449, %v7271
    %v7304 = vmul.f32 %v6450, %v7272
    %v7305 = vmul.f32 %v6451, %v7273
    %v7306 = vmul.f32 %v6452, %v7274
    %v7307 = vmul.f32 %v6453, %v7275
    %v7308 = vmul.f32 %v6454, %v7276
    %v7309 = vmul.f32 %v6455, %v7277
    %v7310 = vmul.f32 %v6456, %v7278
    %v7311 = vmul.f32 %v6457, %v7279
    %v7312 = vmul.f32 %v6458, %v7280
    %v7313 = vmul.f32 %v6459, %v7281
    %v7314 = vmul.f32 %v6460, %v7282
    %v7316 = vsel %vm1691, %v7313, 0
    %v7319 = vsel %vm1691, %v7314, 0
    %7321 = vmatprep.subr.mxu0 %v7319
    %7322 = vmatpush1.msra.mxu0 %v7316
    %7323 = vmatprep.subr.mxu0 %v7312
    %7324 = vmatpush1.msra.mxu0 %v7311
    %7325 = vmatprep.subr.mxu0 %v7310
    %7326 = vmatpush1.msra.mxu0 %v7309
    %7327 = vmatprep.subr.mxu0 %v7308
    %7328 = vmatpush1.msra.mxu0 %v7307
    %7329 = vmatprep.subr.mxu0 %v7306
    %7330 = vmatpush1.msra.mxu0 %v7305
    %7331 = vmatprep.subr.mxu0 %v7304
    %7332 = vmatpush1.msra.mxu0 %v7303
    %7333 = vmatprep.subr.mxu0 %v7302
    %7334 = vmatpush1.msra.mxu0 %v7301
    %7335 = vmatprep.subr.mxu0 %v7300
    %7336 = vmatpush1.msra.mxu0 %v7299
    %7337 = vmatprep.subr.mxu0 %v7298
    %7338 = vmatpush1.msra.mxu0 %v7297
    %7339 = vmatprep.subr.mxu0 %v7296
    %7340 = vmatpush1.msra.mxu0 %v7295
    %7341 = vmatprep.subr.mxu0 %v7294
    %7342 = vmatpush1.msra.mxu0 %v7293
    %7343 = vmatprep.subr.mxu0 %v7292
    %7344 = vmatpush1.msra.mxu0 %v7291
    %7345 = vmatprep.subr.mxu0 %v7290
    %7346 = vmatpush1.msra.mxu0 %v7289
    %7347 = vmatprep.subr.mxu0 %v7288
    %7348 = vmatpush1.msra.mxu0 %v7287
    %7349 = vmatprep.subr.mxu0 %v7286
    %7350 = vmatpush1.msra.mxu0 %v7285
    %7351 = vmatprep.subr.mxu0 %v7284
    %7352 = vmatpush1.msra.mxu0 %v7283
    %7353 = vmatprep.subr.mxu0 0.0
    %7354 = vmatpush2.msra.mxu0 0.0
    %7355 = vmatprep.subr.mxu0 0.0
    %7356 = vmatpush2.msra.mxu0 0.0
    %7357 = vmatprep.subr.mxu0 0.0
    %7358 = vmatpush2.msra.mxu0 0.0
    %7359 = vmatprep.subr.mxu0 0.0
    %7360 = vmatpush2.msra.mxu0 0.0
    %7361 = vmatprep.subr.mxu0 0.0
    %7362 = vmatpush2.msra.mxu0 0.0
    %7363 = vmatprep.subr.mxu0 0.0
    %7364 = vmatpush2.msra.mxu0 0.0
    %7365 = vmatprep.subr.mxu0 0.0
    %7366 = vmatpush2.msra.mxu0 0.0
    %7367 = vmatprep.subr.mxu0 0.0
    %7368 = vmatpush2.msra.mxu0 0.0
    %7369 = vmatprep.subr.mxu0 0.0
    %7370 = vmatpush2.msra.mxu0 0.0
    %7371 = vmatprep.subr.mxu0 0.0
    %7372 = vmatpush2.msra.mxu0 0.0
    %7373 = vmatprep.subr.mxu0 0.0
    %7374 = vmatpush2.msra.mxu0 0.0
    %7375 = vmatprep.subr.mxu0 0.0
    %7376 = vmatpush2.msra.mxu0 0.0
    %7377 = vmatprep.subr.mxu0 0.0
    %7378 = vmatpush2.msra.mxu0 0.0
    %7379 = vmatprep.subr.mxu0 0.0
    %7380 = vmatpush2.msra.mxu0 0.0
    %7381 = vmatprep.subr.mxu0 0.0
    %7382 = vmatpush2.msra.mxu0 0.0
    %7383 = vmatprep.subr.mxu0 0.0
    %7384 = vmatpush2.msra.mxu0 0.0
    %7385 = vmatprep.mubr.f32.mxu0 0.0
    %7386 = vmatmul.mubr.f32.gmra.mxu0 %v6528
    %v7387 = vpop.f32.mrf.mxu0
    %v7388 = vadd.f32 0.0, %v7387
    %v7389 = vpop.f32.mrf.mxu0
    %v7390 = vadd.f32 0.0, %v7389
    %7391 = vdwg.mxu0
    %v7392 = vsel %vm4385, %v7388, 0.0
    %v7393 = vsel %vm4385, %v7390, 0.0
    %v7394 = vadd.f32 %v7392, %v7393
    %7395 = vadd.xlane.f32.xlu0 %v7394
    %v7396 = vpop.xlane.xlu0 %7395
    %v7397 = vld [vmem:[%s12] sm:$0x1]
    %v7399 = vlaneseq
    %v7400 = vshrl.u32 %v7399, 7
    %v7401 = vsub.s32 0, %v7400
    %v7402 = vrot.slane %v7397, %v7401
    %v7404 = vadd.f32 %v7396, %v7402
    %vm7405 = vcmask 42024
    %7406 = vst.msk [vmem:[#allocation6] sm:$0x3] %vm7405, %v7404
    // Predicated region
    $region54: #{cnn_forward.1} parent=1 // pred_check
      _
    $region55: #{cnn_forward.1} parent=1 // pred_check_branch
      %7408 = sbr.rel (0) target = $region57
    $region56: #{cnn_forward.1} parent=1 // pred_region
      %s7410 = ssub.s32 32, 32
      %7411 = vsyncadd [#allocation7], %s7410
      %s7413 = sshll.u32 [#allocation6], 4
      %s7414 = int_to_ptr.vmem [resolvable:$true] %s7413
      %7416 = dma.vmem_to_hbm [thread:$0]  %s7414, 32, %s13, [#allocation7]
    $region57: #{cnn_forward.1} parent=1 // pred_fallthru
      _
    // Predicated region
    $region58: #{cnn_forward.1} parent=1 // pred_check
      _
    $region59: #{cnn_forward.1} parent=1 // pred_check_branch
      %7418 = sbr.rel (0) target = $region61
    $region60: #{cnn_forward.1} parent=1 // pred_region
      %7419 = dma.done [#allocation7], 32
    $region61: #{cnn_forward.1} parent=1 // pred_fallthru
      _
    %7420 = vsyncpa [#allocation7], 1

</llo_original>
